<compile_context>
chip_gen: v7x
topology: tpu7x:2x2x1
jax: 0.10.0
libtpu: 0.0.40
codegen_flags: <defaults>
</compile_context>

<pallas_src>
import jax
import jax.numpy as jnp
from jax.experimental import pallas as pl
from jax.experimental.pallas import tpu as pltpu

# Below this many channels the contraction is too shallow for the MXU, so we
# pack an im2col / phase slab.  At or above it we use direct accumulated dots
# (no slab copies, no large col scratch).
_PACK_THRESHOLD = 128


# --------------------------------------------------------------------------- #
# Fused kernel:                                                               #
#   BatchNorm(+ReLU, pre-folded scale/shift)                                  #
#   -> Conv2d 3x3 pad=1 + bias + ReLU                                         #
#   -> ConvTranspose2d(k=4, s=2, p=1) + bias + ReLU  (polyphase form)         #
#      out[2h+a, 2w+b] = sum_{t,s in {0,1}} x[h+a+t-1, w+b+s-1] @ wf[a+2t,b+2s]#
#      with wf the spatially flipped HWIO kernel (exactly PyTorch's deconv).  #
# --------------------------------------------------------------------------- #
def _make_fused_kernel(H, W, Cin, Cmid, Cout, use_col1, use_col2):
    def kernel(x_ref, scale_ref, shift_ref, w1_ref, b1_ref, w2_ref, b2_ref,
               o_ref, *scratch):
        # x_ref      : (1, H, W, Cin)        f32  raw concatenated input
        # scale/shift: (1, Cin)              f32  folded BN affine (batch stats)
        # w1_ref     : (9*Cin, Cmid)         bf16 HWIO conv weight, im2col order
        # b1_ref     : (1, Cmid)             f32
        # w2_ref     : (4, 4*Cmid, Cout)     bf16 per-phase deconv weights
        # b2_ref     : (1, Cout)             f32
        # o_ref      : (1, 4, H, W, Cout)    f32  phase-planar output
        it = iter(scratch)
        xpad_ref = next(it)                       # VMEM (H+2, W+2, Cin)  bf16
        hpad_ref = next(it)                       # VMEM (H+2, W+2, Cmid) bf16
        col1_ref = next(it) if use_col1 else None  # VMEM (H*W, 9*Cin)    bf16
        col2_ref = next(it) if use_col2 else None  # VMEM (H*W, 4*Cmid)   bf16

        # Zero the halo scratch ONCE (borders only matter; interiors are fully
        # overwritten every step and scratch persists across grid iterations).
        @pl.when(pl.program_id(0) == 0)
        def _init():
            xpad_ref[...] = jnp.zeros_like(xpad_ref)
            hpad_ref[...] = jnp.zeros_like(hpad_ref)

        # --- Stage 1: fused BatchNorm (pre-folded) + ReLU on the VPU; cast to
        # bf16 for the MXU and place into the 1-px halo pad (no HBM pad pass).
        y = jnp.maximum(x_ref[0] * scale_ref[...] + shift_ref[...], 0.0)
        xpad_ref[1:H + 1, 1:W + 1, :] = y.astype(xpad_ref.dtype)

        # --- Stage 2: 3x3 conv (pad=1) + bias + ReLU.
        if use_col1:
            # Small Cin: one deep (H*W, 9*Cin) im2col contraction.
            for dy in range(3):
                for dx in range(3):
                    c0 = (dy * 3 + dx) * Cin
                    col1_ref[:, c0:c0 + Cin] = (
                        xpad_ref[dy:dy + H, dx:dx + W, :].reshape(H * W, Cin))
            acc1 = jnp.dot(col1_ref[...], w1_ref[...],
                           preferred_element_type=jnp.float32)   # (H*W, Cmid)
        else:
            # Large Cin: 9 direct dots accumulated in f32 (no slab copies).
            acc1 = jnp.zeros((H * W, Cmid), jnp.float32)
            for dy in range(3):
                for dx in range(3):
                    c0 = (dy * 3 + dx) * Cin
                    acc1 = acc1 + jnp.dot(
                        xpad_ref[dy:dy + H, dx:dx + W, :].reshape(H * W, Cin),
                        w1_ref[c0:c0 + Cin, :],
                        preferred_element_type=jnp.float32)
        h1 = jnp.maximum(acc1 + b1_ref[...], 0.0)                # (H*W, Cmid)

        # h1 never leaves VMEM: written (bf16) straight into the deconv's
        # halo-padded scratch -- no intermediate HBM round trip.
        hpad_ref[1:H + 1, 1:W + 1, :] = (
            h1.reshape(H, W, Cmid).astype(hpad_ref.dtype))

        # --- Stage 3: ConvTranspose2d(4, 2, 1) + bias + ReLU, polyphase.
        for a in (0, 1):          # output row parity
            for b in (0, 1):      # output column parity
                phase = a * 2 + b
                if use_col2:
                    # Small Cmid: pack 4 taps -> one (H*W, 4*Cmid) contraction.
                    for t in (0, 1):
                        for s in (0, 1):
                            c0 = (t * 2 + s) * Cmid
                            col2_ref[:, c0:c0 + Cmid] = (
                                hpad_ref[a + t:a + t + H, b + s:b + s + W, :]
                                .reshape(H * W, Cmid))
                    acc2 = jnp.dot(col2_ref[...], w2_ref[phase],
                                   preferred_element_type=jnp.float32)
                else:
                    # Large Cmid: 4 direct dots accumulated in f32.
                    acc2 = jnp.zeros((H * W, Cout), jnp.float32)
                    for t in (0, 1):
                        for s in (0, 1):
                            c0 = (t * 2 + s) * Cmid
                            acc2 = acc2 + jnp.dot(
                                hpad_ref[a + t:a + t + H, b + s:b + s + W, :]
                                .reshape(H * W, Cmid),
                                w2_ref[phase, c0:c0 + Cmid, :],
                                preferred_element_type=jnp.float32)
                ph = jnp.maximum(acc2 + b2_ref[...], 0.0)        # (H*W, Cout)
                o_ref[0, phase] = ph.reshape(H, W, Cout).astype(o_ref.dtype)

    return kernel


# ------------------------------ Pallas wrapper ------------------------------ #
def _nbytes(shape, itemsize):
    n = 1
    for d in shape:
        n *= d
    return n * itemsize


def _fused_decoder_block(x, scale, shift, w1, b1, w2, b2):
    N, H, W, Cin = x.shape
    Cmid = w1.shape[1]
    Cout = w2.shape[-1]
    use_col1 = Cin < _PACK_THRESHOLD
    use_col2 = Cmid < _PACK_THRESHOLD

    scratch_shapes = [
        pltpu.VMEM((H + 2, W + 2, Cin), jnp.bfloat16),    # BN'd input + halo
        pltpu.VMEM((H + 2, W + 2, Cmid), jnp.bfloat16),   # conv output + halo
    ]
    if use_col1:
        scratch_shapes.append(pltpu.VMEM((H * W, 9 * Cin), jnp.bfloat16))
    if use_col2:
        scratch_shapes.append(pltpu.VMEM((H * W, 4 * Cmid), jnp.bfloat16))

    # VMEM budget from the actual footprint: double-buffered blocks + scratch
    # + headroom (caps well below physical for the shapes used here; raises
    # the 16/32 MiB default scoped limits on v5e/v6e when sizes grow).
    block_bytes = (
        _nbytes((1, H, W, Cin), 4)            # x block (f32)
        + 2 * _nbytes((1, Cin), 4)            # scale, shift
        + _nbytes((9 * Cin, Cmid), 2)         # w1 (bf16)
        + _nbytes((1, Cmid), 4)               # b1
        + _nbytes((4, 4 * Cmid, Cout), 2)     # w2 (bf16)
        + _nbytes((1, Cout), 4)               # b2
        + _nbytes((1, 4, H, W, Cout), 4)      # output block (f32)
    )
    scratch_bytes = (
        _nbytes((H + 2, W + 2, Cin), 2)
        + _nbytes((H + 2, W + 2, Cmid), 2)
        + (_nbytes((H * W, 9 * Cin), 2) if use_col1 else 0)
        + (_nbytes((H * W, 4 * Cmid), 2) if use_col2 else 0)
    )
    vmem_limit = int(min(2 * block_bytes + scratch_bytes + (4 << 20),
                         128 << 20))

    kernel = _make_fused_kernel(H, W, Cin, Cmid, Cout, use_col1, use_col2)
    return pl.pallas_call(
        kernel,
        out_shape=jax.ShapeDtypeStruct((N, 4, H, W, Cout), jnp.float32),
        grid_spec=pltpu.PrefetchScalarGridSpec(
            num_scalar_prefetch=0,
            grid=(N,),
            in_specs=[
                pl.BlockSpec((1, H, W, Cin), lambda n: (n, 0, 0, 0)),
                pl.BlockSpec((1, Cin), lambda n: (0, 0)),
                pl.BlockSpec((1, Cin), lambda n: (0, 0)),
                pl.BlockSpec((9 * Cin, Cmid), lambda n: (0, 0)),
                pl.BlockSpec((1, Cmid), lambda n: (0, 0)),
                pl.BlockSpec((4, 4 * Cmid, Cout), lambda n: (0, 0, 0)),
                pl.BlockSpec((1, Cout), lambda n: (0, 0)),
            ],
            out_specs=pl.BlockSpec((1, 4, H, W, Cout),
                                   lambda n: (n, 0, 0, 0, 0)),
            scratch_shapes=scratch_shapes),
        compiler_params=pltpu.CompilerParams(
            dimension_semantics=("parallel",),
            vmem_limit_bytes=vmem_limit),
    )(x, scale, shift, w1, b1, w2, b2)


# ------------------------------- DecoderBlock ------------------------------- #
def init_params(key, in_ch, mid_ch, out_ch):
    k = jax.random.split(key, 6)
    return {
        "bn_gamma": 1.0 + 0.1 * jax.random.normal(k[0], (in_ch,), jnp.float32),
        "bn_beta": 0.1 * jax.random.normal(k[1], (in_ch,), jnp.float32),
        # Conv2d weight, PyTorch OIHW layout: (mid, in, 3, 3)
        "conv1_w": 0.1 * jax.random.normal(k[2], (mid_ch, in_ch, 3, 3), jnp.float32),
        "conv1_b": 0.1 * jax.random.normal(k[3], (mid_ch,), jnp.float32),
        # ConvTranspose2d weight, PyTorch layout: (in=mid, out, 4, 4)
        "deconv_w": 0.1 * jax.random.normal(k[4], (mid_ch, out_ch, 4, 4), jnp.float32),
        "deconv_b": 0.1 * jax.random.normal(k[5], (out_ch,), jnp.float32),
    }


def decoder_block_forward(params, ptfeat, ufeat=None):
    feats = ptfeat if isinstance(ptfeat, tuple) else (ptfeat,)
    if ufeat is not None:
        feats = feats + (ufeat,)
    x_nchw = jnp.concatenate(feats, axis=1) if len(feats) > 1 else feats[0]
    x = jnp.transpose(x_nchw, (0, 2, 3, 1)).astype(jnp.float32)      # NHWC
    N, H, W, Cin = x.shape
    Cmid = params["conv1_w"].shape[0]
    Cout = params["deconv_w"].shape[1]

    # --- BatchNorm2d train-mode batch statistics, folded to scale/shift.
    # Cheap XLA reduction; the normalize+ReLU itself is fused into the kernel
    # so the normalized tensor never touches HBM.
    # TODO(synk): running_mean/running_var buffer updates (training state) are
    # not emitted; forward numerics only.
    mean = jnp.mean(x, axis=(0, 1, 2))
    var = jnp.var(x, axis=(0, 1, 2))                 # biased (PyTorch fwd)
    inv = jax.lax.rsqrt(var + 1e-3)
    scale = (params["bn_gamma"] * inv).reshape(1, Cin).astype(jnp.float32)
    shift = (params["bn_beta"] - mean * params["bn_gamma"] * inv
             ).reshape(1, Cin).astype(jnp.float32)

    # --- ConvRelu: 3x3 weight in im2col order (9*Cin, Cmid), bf16 for the MXU.
    w1 = (jnp.transpose(params["conv1_w"], (2, 3, 1, 0))     # OIHW -> HWIO
          .reshape(9 * Cin, Cmid).astype(jnp.bfloat16))
    b1 = params["conv1_b"].reshape(1, Cmid).astype(jnp.float32)

    # --- ConvTranspose2d(k=4, s=2, p=1): polyphase weights.
    # wf[p,q,ci,co] = w[ci,co,3-p,3-q]; phase (a,b) uses taps wf[a+2t, b+2s].
    wf = jnp.transpose(params["deconv_w"][:, :, ::-1, ::-1], (2, 3, 0, 1))
    w_ph = (jnp.transpose(wf.reshape(2, 2, 2, 2, Cmid, Cout),  # (t,a,s,b,ci,co)
                          (1, 3, 0, 2, 4, 5))                  # (a,b,t,s,ci,co)
            .reshape(4, 4 * Cmid, Cout).astype(jnp.bfloat16))
    b2 = params["deconv_b"].reshape(1, Cout).astype(jnp.float32)

    # Single fused kernel: BN+ReLU -> conv3x3+ReLU -> polyphase deconv+ReLU.
    y = _fused_decoder_block(x, scale, shift, w1, b1, w_ph, b2)  # (N,4,H,W,Cout)

    # Single final transpose de-interleaves the phases AND converts to NCHW.
    y = y.reshape(N, 2, 2, H, W, Cout)                       # (N, a, b, h, w, c)
    y = jnp.transpose(y, (0, 5, 3, 1, 4, 2))                 # (N, c, h, a, w, b)
    return y.reshape(N, Cout, 2 * H, 2 * W)


# ----------------------------------- main ----------------------------------- #
if __name__ == "__main__":
    key = jax.random.PRNGKey(0)
    kx1, kx2, ku, kp = jax.random.split(key, 4)

    N, H, W = 2, 16, 16
    in_ch, mid_ch, out_ch = 4, 8, 4

    # ptfeat tuple + ufeat concatenate to in_ch channels.
    x1 = jax.random.normal(kx1, (N, 2, H, W), jnp.float32)
    x2 = jax.random.normal(kx2, (N, 1, H, W), jnp.float32)
    uf = jax.random.normal(ku, (N, 1, H, W), jnp.float32)

    params = init_params(kp, in_ch, mid_ch, out_ch)

    fwd = jax.jit(decoder_block_forward)
    out = jax.block_until_ready(fwd(params, (x1, x2), uf))
    assert out.shape == (N, out_ch, 2 * H, 2 * W), out.shape
    assert out.dtype == jnp.float32
    print("KERNEL_OK")
</pallas_src>

<mosaic_0001>
module attributes {stable_mosaic.version = 11 : i64} {
  func.func @kernel(%arg0: i32, %arg1: memref<1x16x16x4xf32, #tpu.memory_space<vmem>>, %arg2: memref<1x4xf32, #tpu.memory_space<vmem>>, %arg3: memref<1x4xf32, #tpu.memory_space<vmem>>, %arg4: memref<36x8xbf16, #tpu.memory_space<vmem>>, %arg5: memref<1x8xf32, #tpu.memory_space<vmem>>, %arg6: memref<4x32x4xbf16, #tpu.memory_space<vmem>>, %arg7: memref<1x4xf32, #tpu.memory_space<vmem>>, %arg8: memref<1x4x16x16x4xf32, #tpu.memory_space<vmem>>, %arg9: memref<18x18x4xbf16, #tpu.memory_space<vmem>>, %arg10: memref<18x18x8xbf16, #tpu.memory_space<vmem>>, %arg11: memref<256x36xbf16, #tpu.memory_space<vmem>>, %arg12: memref<256x32xbf16, #tpu.memory_space<vmem>>) attributes {dimension_semantics = [#tpu.dimension_semantics<parallel>], iteration_bounds = array<i64: 2>, scalar_prefetch = 0 : i64, scratch_operands = 4 : i64, tpu.core_type = #tpu.core_type<tc>, window_params = [{transform_indices = @transform_0, window_bounds = array<i64: 1, 16, 16, 4>}, {pipeline_mode = #tpu.pipeline_mode<synchronous>, transform_indices = @transform_1, window_bounds = array<i64: 1, 4>}, {pipeline_mode = #tpu.pipeline_mode<synchronous>, transform_indices = @transform_2, window_bounds = array<i64: 1, 4>}, {pipeline_mode = #tpu.pipeline_mode<synchronous>, transform_indices = @transform_3, window_bounds = array<i64: 36, 8>}, {pipeline_mode = #tpu.pipeline_mode<synchronous>, transform_indices = @transform_4, window_bounds = array<i64: 1, 8>}, {pipeline_mode = #tpu.pipeline_mode<synchronous>, transform_indices = @transform_5, window_bounds = array<i64: 4, 32, 4>}, {pipeline_mode = #tpu.pipeline_mode<synchronous>, transform_indices = @transform_6, window_bounds = array<i64: 1, 4>}, {transform_indices = @transform_7, window_bounds = array<i64: 1, 4, 16, 16, 4>}]} {
    %c0_i32 = arith.constant 0 : i32
    %0 = arith.cmpi eq, %arg0, %c0_i32 : i32
    %1 = arith.extui %0 : i1 to i32
    %c0_i32_0 = arith.constant 0 : i32
    %2 = arith.cmpi ne, %1, %c0_i32_0 : i32
    scf.if %2 {
      %cst_192 = arith.constant 0.000000e+00 : bf16
      %155 = vector.broadcast %cst_192 : bf16 to vector<18x18x4xbf16>
      %c0_193 = arith.constant 0 : index
      %c0_194 = arith.constant 0 : index
      %c0_195 = arith.constant 0 : index
      %156 = vector.load %arg9[%c0_193, %c0_194, %c0_195] : memref<18x18x4xbf16, #tpu.memory_space<vmem>>, vector<18x18x4xbf16>
      tpu.vector_store %arg9[%c0_193, %c0_194, %c0_195], %155 {strides = array<i32>} : memref<18x18x4xbf16, #tpu.memory_space<vmem>>, vector<18x18x4xbf16>,
      %cst_196 = arith.constant 0.000000e+00 : bf16
      %157 = vector.broadcast %cst_196 : bf16 to vector<18x18x8xbf16>
      %c0_197 = arith.constant 0 : index
      %c0_198 = arith.constant 0 : index
      %c0_199 = arith.constant 0 : index
      %158 = vector.load %arg10[%c0_197, %c0_198, %c0_199] : memref<18x18x8xbf16, #tpu.memory_space<vmem>>, vector<18x18x8xbf16>
      tpu.vector_store %arg10[%c0_197, %c0_198, %c0_199], %157 {strides = array<i32>} : memref<18x18x8xbf16, #tpu.memory_space<vmem>>, vector<18x18x8xbf16>,
    } else {
    }
    %c0 = arith.constant 0 : index
    %c0_1 = arith.constant 0 : index
    %c0_2 = arith.constant 0 : index
    %c0_3 = arith.constant 0 : index
    %3 = vector.load %arg1[%c0, %c0_1, %c0_2, %c0_3] : memref<1x16x16x4xf32, #tpu.memory_space<vmem>>, vector<1x16x16x4xf32>
    %4 = vector.shape_cast %3 : vector<1x16x16x4xf32> to vector<16x16x4xf32>
    %c0_4 = arith.constant 0 : index
    %c0_5 = arith.constant 0 : index
    %5 = vector.load %arg2[%c0_4, %c0_5] : memref<1x4xf32, #tpu.memory_space<vmem>>, vector<1x4xf32>
    %6 = vector.shape_cast %5 : vector<1x4xf32> to vector<1x1x4xf32>
    %7 = vector.broadcast %6 : vector<1x1x4xf32> to vector<16x16x4xf32>
    %8 = arith.mulf %4, %7 : vector<16x16x4xf32>
    %c0_6 = arith.constant 0 : index
    %c0_7 = arith.constant 0 : index
    %9 = vector.load %arg3[%c0_6, %c0_7] : memref<1x4xf32, #tpu.memory_space<vmem>>, vector<1x4xf32>
    %10 = vector.shape_cast %9 : vector<1x4xf32> to vector<1x1x4xf32>
    %11 = vector.broadcast %10 : vector<1x1x4xf32> to vector<16x16x4xf32>
    %12 = arith.addf %8, %11 : vector<16x16x4xf32>
    %cst = arith.constant 0.000000e+00 : f32
    %13 = vector.broadcast %cst : f32 to vector<16x16x4xf32>
    %14 = arith.maximumf %12, %13 : vector<16x16x4xf32>
    %15 = arith.truncf %14 : vector<16x16x4xf32> to vector<16x16x4xbf16>
    %c1 = arith.constant 1 : index
    %c1_8 = arith.constant 1 : index
    %c0_9 = arith.constant 0 : index
    %16 = vector.load %arg9[%c1, %c1_8, %c0_9] : memref<18x18x4xbf16, #tpu.memory_space<vmem>>, vector<16x16x4xbf16>
    tpu.vector_store %arg9[%c1, %c1_8, %c0_9], %15 {strides = array<i32>} : memref<18x18x4xbf16, #tpu.memory_space<vmem>>, vector<16x16x4xbf16>,
    %c0_10 = arith.constant 0 : index
    %c0_11 = arith.constant 0 : index
    %c0_12 = arith.constant 0 : index
    %17 = vector.load %arg9[%c0_10, %c0_11, %c0_12] : memref<18x18x4xbf16, #tpu.memory_space<vmem>>, vector<16x16x4xbf16>
    %18 = vector.shape_cast %17 : vector<16x16x4xbf16> to vector<256x4xbf16>
    %c0_13 = arith.constant 0 : index
    %c0_14 = arith.constant 0 : index
    %19 = vector.load %arg11[%c0_13, %c0_14] : memref<256x36xbf16, #tpu.memory_space<vmem>>, vector<256x4xbf16>
    tpu.vector_store %arg11[%c0_13, %c0_14], %18 {strides = array<i32>} : memref<256x36xbf16, #tpu.memory_space<vmem>>, vector<256x4xbf16>,
    %c0_15 = arith.constant 0 : index
    %c1_16 = arith.constant 1 : index
    %c0_17 = arith.constant 0 : index
    %20 = vector.load %arg9[%c0_15, %c1_16, %c0_17] : memref<18x18x4xbf16, #tpu.memory_space<vmem>>, vector<16x16x4xbf16>
    %21 = vector.shape_cast %20 : vector<16x16x4xbf16> to vector<256x4xbf16>
    %c0_18 = arith.constant 0 : index
    %c4 = arith.constant 4 : index
    %22 = vector.load %arg11[%c0_18, %c4] : memref<256x36xbf16, #tpu.memory_space<vmem>>, vector<256x4xbf16>
    tpu.vector_store %arg11[%c0_18, %c4], %21 {strides = array<i32>} : memref<256x36xbf16, #tpu.memory_space<vmem>>, vector<256x4xbf16>,
    %c0_19 = arith.constant 0 : index
    %c2 = arith.constant 2 : index
    %c0_20 = arith.constant 0 : index
    %23 = vector.load %arg9[%c0_19, %c2, %c0_20] : memref<18x18x4xbf16, #tpu.memory_space<vmem>>, vector<16x16x4xbf16>
    %24 = vector.shape_cast %23 : vector<16x16x4xbf16> to vector<256x4xbf16>
    %c0_21 = arith.constant 0 : index
    %c8 = arith.constant 8 : index
    %25 = vector.load %arg11[%c0_21, %c8] : memref<256x36xbf16, #tpu.memory_space<vmem>>, vector<256x4xbf16>
    tpu.vector_store %arg11[%c0_21, %c8], %24 {strides = array<i32>} : memref<256x36xbf16, #tpu.memory_space<vmem>>, vector<256x4xbf16>,
    %c1_22 = arith.constant 1 : index
    %c0_23 = arith.constant 0 : index
    %c0_24 = arith.constant 0 : index
    %26 = vector.load %arg9[%c1_22, %c0_23, %c0_24] : memref<18x18x4xbf16, #tpu.memory_space<vmem>>, vector<16x16x4xbf16>
    %27 = vector.shape_cast %26 : vector<16x16x4xbf16> to vector<256x4xbf16>
    %c0_25 = arith.constant 0 : index
    %c12 = arith.constant 12 : index
    %28 = vector.load %arg11[%c0_25, %c12] : memref<256x36xbf16, #tpu.memory_space<vmem>>, vector<256x4xbf16>
    tpu.vector_store %arg11[%c0_25, %c12], %27 {strides = array<i32>} : memref<256x36xbf16, #tpu.memory_space<vmem>>, vector<256x4xbf16>,
    %c1_26 = arith.constant 1 : index
    %c1_27 = arith.constant 1 : index
    %c0_28 = arith.constant 0 : index
    %29 = vector.load %arg9[%c1_26, %c1_27, %c0_28] : memref<18x18x4xbf16, #tpu.memory_space<vmem>>, vector<16x16x4xbf16>
    %30 = vector.shape_cast %29 : vector<16x16x4xbf16> to vector<256x4xbf16>
    %c0_29 = arith.constant 0 : index
    %c16 = arith.constant 16 : index
    %31 = vector.load %arg11[%c0_29, %c16] : memref<256x36xbf16, #tpu.memory_space<vmem>>, vector<256x4xbf16>
    tpu.vector_store %arg11[%c0_29, %c16], %30 {strides = array<i32>} : memref<256x36xbf16, #tpu.memory_space<vmem>>, vector<256x4xbf16>,
    %c1_30 = arith.constant 1 : index
    %c2_31 = arith.constant 2 : index
    %c0_32 = arith.constant 0 : index
    %32 = vector.load %arg9[%c1_30, %c2_31, %c0_32] : memref<18x18x4xbf16, #tpu.memory_space<vmem>>, vector<16x16x4xbf16>
    %33 = vector.shape_cast %32 : vector<16x16x4xbf16> to vector<256x4xbf16>
    %c0_33 = arith.constant 0 : index
    %c20 = arith.constant 20 : index
    %34 = vector.load %arg11[%c0_33, %c20] : memref<256x36xbf16, #tpu.memory_space<vmem>>, vector<256x4xbf16>
    tpu.vector_store %arg11[%c0_33, %c20], %33 {strides = array<i32>} : memref<256x36xbf16, #tpu.memory_space<vmem>>, vector<256x4xbf16>,
    %c2_34 = arith.constant 2 : index
    %c0_35 = arith.constant 0 : index
    %c0_36 = arith.constant 0 : index
    %35 = vector.load %arg9[%c2_34, %c0_35, %c0_36] : memref<18x18x4xbf16, #tpu.memory_space<vmem>>, vector<16x16x4xbf16>
    %36 = vector.shape_cast %35 : vector<16x16x4xbf16> to vector<256x4xbf16>
    %c0_37 = arith.constant 0 : index
    %c24 = arith.constant 24 : index
    %37 = vector.load %arg11[%c0_37, %c24] : memref<256x36xbf16, #tpu.memory_space<vmem>>, vector<256x4xbf16>
    tpu.vector_store %arg11[%c0_37, %c24], %36 {strides = array<i32>} : memref<256x36xbf16, #tpu.memory_space<vmem>>, vector<256x4xbf16>,
    %c2_38 = arith.constant 2 : index
    %c1_39 = arith.constant 1 : index
    %c0_40 = arith.constant 0 : index
    %38 = vector.load %arg9[%c2_38, %c1_39, %c0_40] : memref<18x18x4xbf16, #tpu.memory_space<vmem>>, vector<16x16x4xbf16>
    %39 = vector.shape_cast %38 : vector<16x16x4xbf16> to vector<256x4xbf16>
    %c0_41 = arith.constant 0 : index
    %c28 = arith.constant 28 : index
    %40 = vector.load %arg11[%c0_41, %c28] : memref<256x36xbf16, #tpu.memory_space<vmem>>, vector<256x4xbf16>
    tpu.vector_store %arg11[%c0_41, %c28], %39 {strides = array<i32>} : memref<256x36xbf16, #tpu.memory_space<vmem>>, vector<256x4xbf16>,
    %c2_42 = arith.constant 2 : index
    %c2_43 = arith.constant 2 : index
    %c0_44 = arith.constant 0 : index
    %41 = vector.load %arg9[%c2_42, %c2_43, %c0_44] : memref<18x18x4xbf16, #tpu.memory_space<vmem>>, vector<16x16x4xbf16>
    %42 = vector.shape_cast %41 : vector<16x16x4xbf16> to vector<256x4xbf16>
    %c0_45 = arith.constant 0 : index
    %c32 = arith.constant 32 : index
    %43 = vector.load %arg11[%c0_45, %c32] : memref<256x36xbf16, #tpu.memory_space<vmem>>, vector<256x4xbf16>
    tpu.vector_store %arg11[%c0_45, %c32], %42 {strides = array<i32>} : memref<256x36xbf16, #tpu.memory_space<vmem>>, vector<256x4xbf16>,
    %c0_46 = arith.constant 0 : index
    %c0_47 = arith.constant 0 : index
    %44 = vector.load %arg11[%c0_46, %c0_47] : memref<256x36xbf16, #tpu.memory_space<vmem>>, vector<256x36xbf16>
    %c0_48 = arith.constant 0 : index
    %c0_49 = arith.constant 0 : index
    %45 = vector.load %arg4[%c0_48, %c0_49] : memref<36x8xbf16, #tpu.memory_space<vmem>>, vector<36x8xbf16>
    %cst_50 = arith.constant dense<0.000000e+00> : vector<256x8xf32>
    %46 = tpu.matmul %44, %45, %cst_50 {dimension_numbers = #tpu.dot_dimension_numbers<[1], [0], [0], [1], [0, 0, 1, 1], [], []>} : vector<256x36xbf16>, vector<36x8xbf16>, vector<256x8xf32> -> vector<256x8xf32>
    %c0_51 = arith.constant 0 : index
    %c0_52 = arith.constant 0 : index
    %47 = vector.load %arg5[%c0_51, %c0_52] : memref<1x8xf32, #tpu.memory_space<vmem>>, vector<1x8xf32>
    %48 = vector.broadcast %47 : vector<1x8xf32> to vector<256x8xf32>
    %49 = arith.addf %46, %48 : vector<256x8xf32>
    %cst_53 = arith.constant 0.000000e+00 : f32
    %50 = vector.broadcast %cst_53 : f32 to vector<256x8xf32>
    %51 = arith.maximumf %49, %50 : vector<256x8xf32>
    %52 = vector.shape_cast %51 : vector<256x8xf32> to vector<16x16x8xf32>
    %53 = arith.truncf %52 : vector<16x16x8xf32> to vector<16x16x8xbf16>
    %c1_54 = arith.constant 1 : index
    %c1_55 = arith.constant 1 : index
    %c0_56 = arith.constant 0 : index
    %54 = vector.load %arg10[%c1_54, %c1_55, %c0_56] : memref<18x18x8xbf16, #tpu.memory_space<vmem>>, vector<16x16x8xbf16>
    tpu.vector_store %arg10[%c1_54, %c1_55, %c0_56], %53 {strides = array<i32>} : memref<18x18x8xbf16, #tpu.memory_space<vmem>>, vector<16x16x8xbf16>,
    %c0_57 = arith.constant 0 : index
    %c0_58 = arith.constant 0 : index
    %c0_59 = arith.constant 0 : index
    %55 = vector.load %arg10[%c0_57, %c0_58, %c0_59] : memref<18x18x8xbf16, #tpu.memory_space<vmem>>, vector<16x16x8xbf16>
    %56 = vector.shape_cast %55 : vector<16x16x8xbf16> to vector<256x8xbf16>
    %c0_60 = arith.constant 0 : index
    %c0_61 = arith.constant 0 : index
    %57 = vector.load %arg12[%c0_60, %c0_61] : memref<256x32xbf16, #tpu.memory_space<vmem>>, vector<256x8xbf16>
    tpu.vector_store %arg12[%c0_60, %c0_61], %56 {strides = array<i32>} : memref<256x32xbf16, #tpu.memory_space<vmem>>, vector<256x8xbf16>,
    %c0_62 = arith.constant 0 : index
    %c1_63 = arith.constant 1 : index
    %c0_64 = arith.constant 0 : index
    %58 = vector.load %arg10[%c0_62, %c1_63, %c0_64] : memref<18x18x8xbf16, #tpu.memory_space<vmem>>, vector<16x16x8xbf16>
    %59 = vector.shape_cast %58 : vector<16x16x8xbf16> to vector<256x8xbf16>
    %c0_65 = arith.constant 0 : index
    %c8_66 = arith.constant 8 : index
    %60 = vector.load %arg12[%c0_65, %c8_66] : memref<256x32xbf16, #tpu.memory_space<vmem>>, vector<256x8xbf16>
    tpu.vector_store %arg12[%c0_65, %c8_66], %59 {strides = array<i32>} : memref<256x32xbf16, #tpu.memory_space<vmem>>, vector<256x8xbf16>,
    %c1_67 = arith.constant 1 : index
    %c0_68 = arith.constant 0 : index
    %c0_69 = arith.constant 0 : index
    %61 = vector.load %arg10[%c1_67, %c0_68, %c0_69] : memref<18x18x8xbf16, #tpu.memory_space<vmem>>, vector<16x16x8xbf16>
    %62 = vector.shape_cast %61 : vector<16x16x8xbf16> to vector<256x8xbf16>
    %c0_70 = arith.constant 0 : index
    %c16_71 = arith.constant 16 : index
    %63 = vector.load %arg12[%c0_70, %c16_71] : memref<256x32xbf16, #tpu.memory_space<vmem>>, vector<256x8xbf16>
    tpu.vector_store %arg12[%c0_70, %c16_71], %62 {strides = array<i32>} : memref<256x32xbf16, #tpu.memory_space<vmem>>, vector<256x8xbf16>,
    %c1_72 = arith.constant 1 : index
    %c1_73 = arith.constant 1 : index
    %c0_74 = arith.constant 0 : index
    %64 = vector.load %arg10[%c1_72, %c1_73, %c0_74] : memref<18x18x8xbf16, #tpu.memory_space<vmem>>, vector<16x16x8xbf16>
    %65 = vector.shape_cast %64 : vector<16x16x8xbf16> to vector<256x8xbf16>
    %c0_75 = arith.constant 0 : index
    %c24_76 = arith.constant 24 : index
    %66 = vector.load %arg12[%c0_75, %c24_76] : memref<256x32xbf16, #tpu.memory_space<vmem>>, vector<256x8xbf16>
    tpu.vector_store %arg12[%c0_75, %c24_76], %65 {strides = array<i32>} : memref<256x32xbf16, #tpu.memory_space<vmem>>, vector<256x8xbf16>,
    %c0_77 = arith.constant 0 : index
    %c0_78 = arith.constant 0 : index
    %67 = vector.load %arg12[%c0_77, %c0_78] : memref<256x32xbf16, #tpu.memory_space<vmem>>, vector<256x32xbf16>
    %c0_79 = arith.constant 0 : index
    %c0_80 = arith.constant 0 : index
    %c0_81 = arith.constant 0 : index
    %68 = vector.load %arg6[%c0_79, %c0_80, %c0_81] : memref<4x32x4xbf16, #tpu.memory_space<vmem>>, vector<1x32x4xbf16>
    %69 = vector.shape_cast %68 : vector<1x32x4xbf16> to vector<32x4xbf16>
    %cst_82 = arith.constant dense<0.000000e+00> : vector<256x4xf32>
    %70 = tpu.matmul %67, %69, %cst_82 {dimension_numbers = #tpu.dot_dimension_numbers<[1], [0], [0], [1], [0, 0, 1, 1], [], []>} : vector<256x32xbf16>, vector<32x4xbf16>, vector<256x4xf32> -> vector<256x4xf32>
    %c0_83 = arith.constant 0 : index
    %c0_84 = arith.constant 0 : index
    %71 = vector.load %arg7[%c0_83, %c0_84] : memref<1x4xf32, #tpu.memory_space<vmem>>, vector<1x4xf32>
    %72 = vector.broadcast %71 : vector<1x4xf32> to vector<256x4xf32>
    %73 = arith.addf %70, %72 : vector<256x4xf32>
    %cst_85 = arith.constant 0.000000e+00 : f32
    %74 = vector.broadcast %cst_85 : f32 to vector<256x4xf32>
    %75 = arith.maximumf %73, %74 : vector<256x4xf32>
    %76 = vector.shape_cast %75 : vector<256x4xf32> to vector<16x16x4xf32>
    %c0_86 = arith.constant 0 : index
    %c0_87 = arith.constant 0 : index
    %c0_88 = arith.constant 0 : index
    %c0_89 = arith.constant 0 : index
    %c0_90 = arith.constant 0 : index
    %77 = vector.load %arg8[%c0_86, %c0_87, %c0_88, %c0_89, %c0_90] : memref<1x4x16x16x4xf32, #tpu.memory_space<vmem>>, vector<1x1x16x16x4xf32>
    %78 = vector.shape_cast %77 : vector<1x1x16x16x4xf32> to vector<16x16x4xf32>
    %79 = vector.shape_cast %76 : vector<16x16x4xf32> to vector<1x1x16x16x4xf32>
    tpu.vector_store %arg8[%c0_86, %c0_87, %c0_88, %c0_89, %c0_90], %79 {strides = array<i32>} : memref<1x4x16x16x4xf32, #tpu.memory_space<vmem>>, vector<1x1x16x16x4xf32>,
    %c0_91 = arith.constant 0 : index
    %c1_92 = arith.constant 1 : index
    %c0_93 = arith.constant 0 : index
    %80 = vector.load %arg10[%c0_91, %c1_92, %c0_93] : memref<18x18x8xbf16, #tpu.memory_space<vmem>>, vector<16x16x8xbf16>
    %81 = vector.shape_cast %80 : vector<16x16x8xbf16> to vector<256x8xbf16>
    %c0_94 = arith.constant 0 : index
    %c0_95 = arith.constant 0 : index
    %82 = vector.load %arg12[%c0_94, %c0_95] : memref<256x32xbf16, #tpu.memory_space<vmem>>, vector<256x8xbf16>
    tpu.vector_store %arg12[%c0_94, %c0_95], %81 {strides = array<i32>} : memref<256x32xbf16, #tpu.memory_space<vmem>>, vector<256x8xbf16>,
    %c0_96 = arith.constant 0 : index
    %c2_97 = arith.constant 2 : index
    %c0_98 = arith.constant 0 : index
    %83 = vector.load %arg10[%c0_96, %c2_97, %c0_98] : memref<18x18x8xbf16, #tpu.memory_space<vmem>>, vector<16x16x8xbf16>
    %84 = vector.shape_cast %83 : vector<16x16x8xbf16> to vector<256x8xbf16>
    %c0_99 = arith.constant 0 : index
    %c8_100 = arith.constant 8 : index
    %85 = vector.load %arg12[%c0_99, %c8_100] : memref<256x32xbf16, #tpu.memory_space<vmem>>, vector<256x8xbf16>
    tpu.vector_store %arg12[%c0_99, %c8_100], %84 {strides = array<i32>} : memref<256x32xbf16, #tpu.memory_space<vmem>>, vector<256x8xbf16>,
    %c1_101 = arith.constant 1 : index
    %c1_102 = arith.constant 1 : index
    %c0_103 = arith.constant 0 : index
    %86 = vector.load %arg10[%c1_101, %c1_102, %c0_103] : memref<18x18x8xbf16, #tpu.memory_space<vmem>>, vector<16x16x8xbf16>
    %87 = vector.shape_cast %86 : vector<16x16x8xbf16> to vector<256x8xbf16>
    %c0_104 = arith.constant 0 : index
    %c16_105 = arith.constant 16 : index
    %88 = vector.load %arg12[%c0_104, %c16_105] : memref<256x32xbf16, #tpu.memory_space<vmem>>, vector<256x8xbf16>
    tpu.vector_store %arg12[%c0_104, %c16_105], %87 {strides = array<i32>} : memref<256x32xbf16, #tpu.memory_space<vmem>>, vector<256x8xbf16>,
    %c1_106 = arith.constant 1 : index
    %c2_107 = arith.constant 2 : index
    %c0_108 = arith.constant 0 : index
    %89 = vector.load %arg10[%c1_106, %c2_107, %c0_108] : memref<18x18x8xbf16, #tpu.memory_space<vmem>>, vector<16x16x8xbf16>
    %90 = vector.shape_cast %89 : vector<16x16x8xbf16> to vector<256x8xbf16>
    %c0_109 = arith.constant 0 : index
    %c24_110 = arith.constant 24 : index
    %91 = vector.load %arg12[%c0_109, %c24_110] : memref<256x32xbf16, #tpu.memory_space<vmem>>, vector<256x8xbf16>
    tpu.vector_store %arg12[%c0_109, %c24_110], %90 {strides = array<i32>} : memref<256x32xbf16, #tpu.memory_space<vmem>>, vector<256x8xbf16>,
    %c0_111 = arith.constant 0 : index
    %c0_112 = arith.constant 0 : index
    %92 = vector.load %arg12[%c0_111, %c0_112] : memref<256x32xbf16, #tpu.memory_space<vmem>>, vector<256x32xbf16>
    %c1_113 = arith.constant 1 : index
    %c0_114 = arith.constant 0 : index
    %c0_115 = arith.constant 0 : index
    %93 = vector.load %arg6[%c1_113, %c0_114, %c0_115] : memref<4x32x4xbf16, #tpu.memory_space<vmem>>, vector<1x32x4xbf16>
    %94 = vector.shape_cast %93 : vector<1x32x4xbf16> to vector<32x4xbf16>
    %cst_116 = arith.constant dense<0.000000e+00> : vector<256x4xf32>
    %95 = tpu.matmul %92, %94, %cst_116 {dimension_numbers = #tpu.dot_dimension_numbers<[1], [0], [0], [1], [0, 0, 1, 1], [], []>} : vector<256x32xbf16>, vector<32x4xbf16>, vector<256x4xf32> -> vector<256x4xf32>
    %c0_117 = arith.constant 0 : index
    %c0_118 = arith.constant 0 : index
    %96 = vector.load %arg7[%c0_117, %c0_118] : memref<1x4xf32, #tpu.memory_space<vmem>>, vector<1x4xf32>
    %97 = vector.broadcast %96 : vector<1x4xf32> to vector<256x4xf32>
    %98 = arith.addf %95, %97 : vector<256x4xf32>
    %cst_119 = arith.constant 0.000000e+00 : f32
    %99 = vector.broadcast %cst_119 : f32 to vector<256x4xf32>
    %100 = arith.maximumf %98, %99 : vector<256x4xf32>
    %101 = vector.shape_cast %100 : vector<256x4xf32> to vector<16x16x4xf32>
    %c0_120 = arith.constant 0 : index
    %c1_121 = arith.constant 1 : index
    %c0_122 = arith.constant 0 : index
    %c0_123 = arith.constant 0 : index
    %c0_124 = arith.constant 0 : index
    %102 = vector.load %arg8[%c0_120, %c1_121, %c0_122, %c0_123, %c0_124] : memref<1x4x16x16x4xf32, #tpu.memory_space<vmem>>, vector<1x1x16x16x4xf32>
    %103 = vector.shape_cast %102 : vector<1x1x16x16x4xf32> to vector<16x16x4xf32>
    %104 = vector.shape_cast %101 : vector<16x16x4xf32> to vector<1x1x16x16x4xf32>
    tpu.vector_store %arg8[%c0_120, %c1_121, %c0_122, %c0_123, %c0_124], %104 {strides = array<i32>} : memref<1x4x16x16x4xf32, #tpu.memory_space<vmem>>, vector<1x1x16x16x4xf32>,
    %c1_125 = arith.constant 1 : index
    %c0_126 = arith.constant 0 : index
    %c0_127 = arith.constant 0 : index
    %105 = vector.load %arg10[%c1_125, %c0_126, %c0_127] : memref<18x18x8xbf16, #tpu.memory_space<vmem>>, vector<16x16x8xbf16>
    %106 = vector.shape_cast %105 : vector<16x16x8xbf16> to vector<256x8xbf16>
    %c0_128 = arith.constant 0 : index
    %c0_129 = arith.constant 0 : index
    %107 = vector.load %arg12[%c0_128, %c0_129] : memref<256x32xbf16, #tpu.memory_space<vmem>>, vector<256x8xbf16>
    tpu.vector_store %arg12[%c0_128, %c0_129], %106 {strides = array<i32>} : memref<256x32xbf16, #tpu.memory_space<vmem>>, vector<256x8xbf16>,
    %c1_130 = arith.constant 1 : index
    %c1_131 = arith.constant 1 : index
    %c0_132 = arith.constant 0 : index
    %108 = vector.load %arg10[%c1_130, %c1_131, %c0_132] : memref<18x18x8xbf16, #tpu.memory_space<vmem>>, vector<16x16x8xbf16>
    %109 = vector.shape_cast %108 : vector<16x16x8xbf16> to vector<256x8xbf16>
    %c0_133 = arith.constant 0 : index
    %c8_134 = arith.constant 8 : index
    %110 = vector.load %arg12[%c0_133, %c8_134] : memref<256x32xbf16, #tpu.memory_space<vmem>>, vector<256x8xbf16>
    tpu.vector_store %arg12[%c0_133, %c8_134], %109 {strides = array<i32>} : memref<256x32xbf16, #tpu.memory_space<vmem>>, vector<256x8xbf16>,
    %c2_135 = arith.constant 2 : index
    %c0_136 = arith.constant 0 : index
    %c0_137 = arith.constant 0 : index
    %111 = vector.load %arg10[%c2_135, %c0_136, %c0_137] : memref<18x18x8xbf16, #tpu.memory_space<vmem>>, vector<16x16x8xbf16>
    %112 = vector.shape_cast %111 : vector<16x16x8xbf16> to vector<256x8xbf16>
    %c0_138 = arith.constant 0 : index
    %c16_139 = arith.constant 16 : index
    %113 = vector.load %arg12[%c0_138, %c16_139] : memref<256x32xbf16, #tpu.memory_space<vmem>>, vector<256x8xbf16>
    tpu.vector_store %arg12[%c0_138, %c16_139], %112 {strides = array<i32>} : memref<256x32xbf16, #tpu.memory_space<vmem>>, vector<256x8xbf16>,
    %c2_140 = arith.constant 2 : index
    %c1_141 = arith.constant 1 : index
    %c0_142 = arith.constant 0 : index
    %114 = vector.load %arg10[%c2_140, %c1_141, %c0_142] : memref<18x18x8xbf16, #tpu.memory_space<vmem>>, vector<16x16x8xbf16>
    %115 = vector.shape_cast %114 : vector<16x16x8xbf16> to vector<256x8xbf16>
    %c0_143 = arith.constant 0 : index
    %c24_144 = arith.constant 24 : index
    %116 = vector.load %arg12[%c0_143, %c24_144] : memref<256x32xbf16, #tpu.memory_space<vmem>>, vector<256x8xbf16>
    tpu.vector_store %arg12[%c0_143, %c24_144], %115 {strides = array<i32>} : memref<256x32xbf16, #tpu.memory_space<vmem>>, vector<256x8xbf16>,
    %c0_145 = arith.constant 0 : index
    %c0_146 = arith.constant 0 : index
    %117 = vector.load %arg12[%c0_145, %c0_146] : memref<256x32xbf16, #tpu.memory_space<vmem>>, vector<256x32xbf16>
    %c2_147 = arith.constant 2 : index
    %c0_148 = arith.constant 0 : index
    %c0_149 = arith.constant 0 : index
    %118 = vector.load %arg6[%c2_147, %c0_148, %c0_149] : memref<4x32x4xbf16, #tpu.memory_space<vmem>>, vector<1x32x4xbf16>
    %119 = vector.shape_cast %118 : vector<1x32x4xbf16> to vector<32x4xbf16>
    %cst_150 = arith.constant dense<0.000000e+00> : vector<256x4xf32>
    %120 = tpu.matmul %117, %119, %cst_150 {dimension_numbers = #tpu.dot_dimension_numbers<[1], [0], [0], [1], [0, 0, 1, 1], [], []>} : vector<256x32xbf16>, vector<32x4xbf16>, vector<256x4xf32> -> vector<256x4xf32>
    %c0_151 = arith.constant 0 : index
    %c0_152 = arith.constant 0 : index
    %121 = vector.load %arg7[%c0_151, %c0_152] : memref<1x4xf32, #tpu.memory_space<vmem>>, vector<1x4xf32>
    %122 = vector.broadcast %121 : vector<1x4xf32> to vector<256x4xf32>
    %123 = arith.addf %120, %122 : vector<256x4xf32>
    %cst_153 = arith.constant 0.000000e+00 : f32
    %124 = vector.broadcast %cst_153 : f32 to vector<256x4xf32>
    %125 = arith.maximumf %123, %124 : vector<256x4xf32>
    %126 = vector.shape_cast %125 : vector<256x4xf32> to vector<16x16x4xf32>
    %c0_154 = arith.constant 0 : index
    %c2_155 = arith.constant 2 : index
    %c0_156 = arith.constant 0 : index
    %c0_157 = arith.constant 0 : index
    %c0_158 = arith.constant 0 : index
    %127 = vector.load %arg8[%c0_154, %c2_155, %c0_156, %c0_157, %c0_158] : memref<1x4x16x16x4xf32, #tpu.memory_space<vmem>>, vector<1x1x16x16x4xf32>
    %128 = vector.shape_cast %127 : vector<1x1x16x16x4xf32> to vector<16x16x4xf32>
    %129 = vector.shape_cast %126 : vector<16x16x4xf32> to vector<1x1x16x16x4xf32>
    tpu.vector_store %arg8[%c0_154, %c2_155, %c0_156, %c0_157, %c0_158], %129 {strides = array<i32>} : memref<1x4x16x16x4xf32, #tpu.memory_space<vmem>>, vector<1x1x16x16x4xf32>,
    %c1_159 = arith.constant 1 : index
    %c1_160 = arith.constant 1 : index
    %c0_161 = arith.constant 0 : index
    %130 = vector.load %arg10[%c1_159, %c1_160, %c0_161] : memref<18x18x8xbf16, #tpu.memory_space<vmem>>, vector<16x16x8xbf16>
    %131 = vector.shape_cast %130 : vector<16x16x8xbf16> to vector<256x8xbf16>
    %c0_162 = arith.constant 0 : index
    %c0_163 = arith.constant 0 : index
    %132 = vector.load %arg12[%c0_162, %c0_163] : memref<256x32xbf16, #tpu.memory_space<vmem>>, vector<256x8xbf16>
    tpu.vector_store %arg12[%c0_162, %c0_163], %131 {strides = array<i32>} : memref<256x32xbf16, #tpu.memory_space<vmem>>, vector<256x8xbf16>,
    %c1_164 = arith.constant 1 : index
    %c2_165 = arith.constant 2 : index
    %c0_166 = arith.constant 0 : index
    %133 = vector.load %arg10[%c1_164, %c2_165, %c0_166] : memref<18x18x8xbf16, #tpu.memory_space<vmem>>, vector<16x16x8xbf16>
    %134 = vector.shape_cast %133 : vector<16x16x8xbf16> to vector<256x8xbf16>
    %c0_167 = arith.constant 0 : index
    %c8_168 = arith.constant 8 : index
    %135 = vector.load %arg12[%c0_167, %c8_168] : memref<256x32xbf16, #tpu.memory_space<vmem>>, vector<256x8xbf16>
    tpu.vector_store %arg12[%c0_167, %c8_168], %134 {strides = array<i32>} : memref<256x32xbf16, #tpu.memory_space<vmem>>, vector<256x8xbf16>,
    %c2_169 = arith.constant 2 : index
    %c1_170 = arith.constant 1 : index
    %c0_171 = arith.constant 0 : index
    %136 = vector.load %arg10[%c2_169, %c1_170, %c0_171] : memref<18x18x8xbf16, #tpu.memory_space<vmem>>, vector<16x16x8xbf16>
    %137 = vector.shape_cast %136 : vector<16x16x8xbf16> to vector<256x8xbf16>
    %c0_172 = arith.constant 0 : index
    %c16_173 = arith.constant 16 : index
    %138 = vector.load %arg12[%c0_172, %c16_173] : memref<256x32xbf16, #tpu.memory_space<vmem>>, vector<256x8xbf16>
    tpu.vector_store %arg12[%c0_172, %c16_173], %137 {strides = array<i32>} : memref<256x32xbf16, #tpu.memory_space<vmem>>, vector<256x8xbf16>,
    %c2_174 = arith.constant 2 : index
    %c2_175 = arith.constant 2 : index
    %c0_176 = arith.constant 0 : index
    %139 = vector.load %arg10[%c2_174, %c2_175, %c0_176] : memref<18x18x8xbf16, #tpu.memory_space<vmem>>, vector<16x16x8xbf16>
    %140 = vector.shape_cast %139 : vector<16x16x8xbf16> to vector<256x8xbf16>
    %c0_177 = arith.constant 0 : index
    %c24_178 = arith.constant 24 : index
    %141 = vector.load %arg12[%c0_177, %c24_178] : memref<256x32xbf16, #tpu.memory_space<vmem>>, vector<256x8xbf16>
    tpu.vector_store %arg12[%c0_177, %c24_178], %140 {strides = array<i32>} : memref<256x32xbf16, #tpu.memory_space<vmem>>, vector<256x8xbf16>,
    %c0_179 = arith.constant 0 : index
    %c0_180 = arith.constant 0 : index
    %142 = vector.load %arg12[%c0_179, %c0_180] : memref<256x32xbf16, #tpu.memory_space<vmem>>, vector<256x32xbf16>
    %c3 = arith.constant 3 : index
    %c0_181 = arith.constant 0 : index
    %c0_182 = arith.constant 0 : index
    %143 = vector.load %arg6[%c3, %c0_181, %c0_182] : memref<4x32x4xbf16, #tpu.memory_space<vmem>>, vector<1x32x4xbf16>
    %144 = vector.shape_cast %143 : vector<1x32x4xbf16> to vector<32x4xbf16>
    %cst_183 = arith.constant dense<0.000000e+00> : vector<256x4xf32>
    %145 = tpu.matmul %142, %144, %cst_183 {dimension_numbers = #tpu.dot_dimension_numbers<[1], [0], [0], [1], [0, 0, 1, 1], [], []>} : vector<256x32xbf16>, vector<32x4xbf16>, vector<256x4xf32> -> vector<256x4xf32>
    %c0_184 = arith.constant 0 : index
    %c0_185 = arith.constant 0 : index
    %146 = vector.load %arg7[%c0_184, %c0_185] : memref<1x4xf32, #tpu.memory_space<vmem>>, vector<1x4xf32>
    %147 = vector.broadcast %146 : vector<1x4xf32> to vector<256x4xf32>
    %148 = arith.addf %145, %147 : vector<256x4xf32>
    %cst_186 = arith.constant 0.000000e+00 : f32
    %149 = vector.broadcast %cst_186 : f32 to vector<256x4xf32>
    %150 = arith.maximumf %148, %149 : vector<256x4xf32>
    %151 = vector.shape_cast %150 : vector<256x4xf32> to vector<16x16x4xf32>
    %c0_187 = arith.constant 0 : index
    %c3_188 = arith.constant 3 : index
    %c0_189 = arith.constant 0 : index
    %c0_190 = arith.constant 0 : index
    %c0_191 = arith.constant 0 : index
    %152 = vector.load %arg8[%c0_187, %c3_188, %c0_189, %c0_190, %c0_191] : memref<1x4x16x16x4xf32, #tpu.memory_space<vmem>>, vector<1x1x16x16x4xf32>
    %153 = vector.shape_cast %152 : vector<1x1x16x16x4xf32> to vector<16x16x4xf32>
    %154 = vector.shape_cast %151 : vector<16x16x4xf32> to vector<1x1x16x16x4xf32>
    tpu.vector_store %arg8[%c0_187, %c3_188, %c0_189, %c0_190, %c0_191], %154 {strides = array<i32>} : memref<1x4x16x16x4xf32, #tpu.memory_space<vmem>>, vector<1x1x16x16x4xf32>,
    return
  }
  func.func @transform_0(%arg0: i32) -> (i32, i32, i32, i32) {
    %c0_i32 = arith.constant 0 : i32
    %c0_i32_0 = arith.constant 0 : i32
    %c0_i32_1 = arith.constant 0 : i32
    %c0_i32_2 = arith.constant 0 : i32
    return %arg0, %c0_i32, %c0_i32_0, %c0_i32_1 : i32, i32, i32, i32
  }
  func.func @transform_1(%arg0: i32) -> (i32, i32) {
    %c0_i32 = arith.constant 0 : i32
    %c0_i32_0 = arith.constant 0 : i32
    %c0_i32_1 = arith.constant 0 : i32
    return %c0_i32, %c0_i32_0 : i32, i32
  }
  func.func @transform_2(%arg0: i32) -> (i32, i32) {
    %c0_i32 = arith.constant 0 : i32
    %c0_i32_0 = arith.constant 0 : i32
    %c0_i32_1 = arith.constant 0 : i32
    return %c0_i32, %c0_i32_0 : i32, i32
  }
  func.func @transform_3(%arg0: i32) -> (i32, i32) {
    %c0_i32 = arith.constant 0 : i32
    %c0_i32_0 = arith.constant 0 : i32
    %c0_i32_1 = arith.constant 0 : i32
    return %c0_i32, %c0_i32_0 : i32, i32
  }
  func.func @transform_4(%arg0: i32) -> (i32, i32) {
    %c0_i32 = arith.constant 0 : i32
    %c0_i32_0 = arith.constant 0 : i32
    %c0_i32_1 = arith.constant 0 : i32
    return %c0_i32, %c0_i32_0 : i32, i32
  }
  func.func @transform_5(%arg0: i32) -> (i32, i32, i32) {
    %c0_i32 = arith.constant 0 : i32
    %c0_i32_0 = arith.constant 0 : i32
    %c0_i32_1 = arith.constant 0 : i32
    %c0_i32_2 = arith.constant 0 : i32
    return %c0_i32, %c0_i32_0, %c0_i32_1 : i32, i32, i32
  }
  func.func @transform_6(%arg0: i32) -> (i32, i32) {
    %c0_i32 = arith.constant 0 : i32
    %c0_i32_0 = arith.constant 0 : i32
    %c0_i32_1 = arith.constant 0 : i32
    return %c0_i32, %c0_i32_0 : i32, i32
  }
  func.func @transform_7(%arg0: i32) -> (i32, i32, i32, i32, i32) {
    %c0_i32 = arith.constant 0 : i32
    %c0_i32_0 = arith.constant 0 : i32
    %c0_i32_1 = arith.constant 0 : i32
    %c0_i32_2 = arith.constant 0 : i32
    %c0_i32_3 = arith.constant 0 : i32
    return %arg0, %c0_i32, %c0_i32_0, %c0_i32_1, %c0_i32_2 : i32, i32, i32, i32, i32
  }
}

</mosaic_0001>

<llo_original>
// kernel: decoder_block_forward.1
$region0: #{decoder_block_forward.1}
  #allocation0 [shape = 'u32[]', space=smem, size = 0x4, offset = 0x4, fixed_abs, tag = 'smem constant byte address 0x4 - core index']
  #allocation1 [shape = 'u32[144,128]{1,0:T(1,128)}', space=vmem, size = 0x12000, scoped, tag = 'internal scratch']
  #allocation2 [shape = 'bf16[18,18,4]{2,1,0:T(8,128)(2,1)}', space=vmem, size = 0x1b000, scoped, tag = 'scratch operand']
  #allocation3 [shape = 'bf16[18,18,8]{2,1,0:T(8,128)(2,1)}', space=vmem, size = 0x1b000, scoped, tag = 'scratch operand']
  #allocation4 [shape = 'bf16[256,36]{1,0:T(16,128)(2,1)}', space=vmem, size = 0x10000, scoped, tag = 'scratch operand']
  #allocation5 [shape = 'bf16[256,32]{1,0:T(16,128)(2,1)}', space=vmem, size = 0x10000, scoped, tag = 'scratch operand']
  %s0 = inlined_call_operand.vmem [shape: f32[2,16,16,4], index: 0, kind: input, shape index: {}]
  %s1 = inlined_call_operand.vmem [shape: f32[1,4], index: 1, kind: input, shape index: {}]
  %s2 = inlined_call_operand.vmem [shape: f32[1,4], index: 2, kind: input, shape index: {}]
  %s3 = inlined_call_operand.vmem [shape: bf16[36,8], index: 3, kind: input, shape index: {}]
  %s4 = inlined_call_operand.vmem [shape: f32[1,8], index: 4, kind: input, shape index: {}]
  %s5 = inlined_call_operand.vmem [shape: bf16[4,32,4], index: 5, kind: input, shape index: {}]
  %s6 = inlined_call_operand.vmem [shape: f32[1,4], index: 6, kind: input, shape index: {}]
  %s7 = inlined_call_operand.vmem [shape: f32[2,4,16,16,4], index: 7, kind: output, shape index: {}]
  %s8 = sld [smem:[#allocation0]]
  $region65: #{decoder_block_forward.1} parent=0
    _
  %s10 = ssub.s32 1, %s8
  %s11 = scalar_select 0, %s10, %s8
  loop: start=0, step=1, limit=4
  $region2: #{decoder_block_forward.1} parent=0 // loop_pre_header
    _
  $region3: #{decoder_block_forward.1} parent=0 // loop_header
    %s13 = sphi 0, %s17
    %p14 = scmp.ge.s32.totalorder %s13, 4
    %s23 = sphi 0, %s25
    %s26 = sphi 0, %s23
    %s27 = sphi 0, %s26
    %s43 = sphi 0, %s27
    %s47 = sphi 0, %s47
    %s49 = sphi 0, %s47
    %s50 = sphi 0, %s49
    %s64 = sphi 0, %s50
    %s68 = sphi 0, %s68
    %s70 = sphi 0, %s68
    %s71 = sphi 0, %s70
    %s85 = sphi 0, %s71
    %s89 = sphi 0, %s89
    %s91 = sphi 0, %s89
    %s92 = sphi 0, %s91
    %s106 = sphi 0, %s92
    %s110 = sphi 0, %s110
    %s112 = sphi 0, %s110
    %s113 = sphi 0, %s112
    %s127 = sphi 0, %s113
    %s131 = sphi 0, %s131
    %s133 = sphi 0, %s131
    %s134 = sphi 0, %s133
    %s148 = sphi 0, %s134
    %s152 = sphi 0, %s152
    %s154 = sphi 0, %s152
    %s155 = sphi 0, %s154
    %s169 = sphi 0, %s155
    %s175 = sphi 0, %s177
    %s178 = sphi 0, %s175
    %s179 = sphi 0, %s178
    %s195 = sphi 0, %s179
  $region4: #{decoder_block_forward.1} parent=0 // loop_header_branch
    %16 = sbr.rel (%p14) target = $region8
  $region5: #{decoder_block_forward.1} parent=0 // loop_body
    %s18 = ssub.s32 %s13, 1
    %s19 = ssub.s32 %s13, 2
    %s20 = sadd.s32 %s13, 1
    %s21 = ssub.s32 %s13, %s20
    %p22 = scmp.eq.s32.totalorder %s21, 0
    %s24 = sadd.s32 %s23, 1
    %s25 = scalar_select %p22, %s23, %s24
    %p28 = pneg %p22
    %p29 = scmp.eq.s32.totalorder %s13, 1
    %p30 = por %p28, %p29
    %p31 = scmp.ne.s32.totalorder %s23, %s26
    %p32 = scmp.eq.s32.totalorder %s13, 0
    %p33 = por %p31, %p32
    %p34 = scmp.ne.s32.totalorder %s23, %s26
    %p35 = scmp.eq.s32.totalorder %s18, 1
    %p36 = por %p34, %p35
    %p37 = scmp.ne.s32.totalorder %s26, %s27
    %p38 = scmp.eq.s32.totalorder %s18, 0
    %p39 = por %p37, %p38
    %p40 = scmp.ne.s32.totalorder %s26, %s27
    %p41 = scmp.eq.s32.totalorder %s19, 1
    %p42 = por %p40, %p41
    %p44 = scmp.ne.s32.totalorder %s27, %s43
    %p45 = scmp.eq.s32.totalorder %s19, 0
    %p46 = por %p44, %p45
    %s48 = sadd.s32 %s47, 1
    %p51 = scmp.eq.s32.totalorder %s13, 1
    %p52 = scmp.ne.s32.totalorder %s47, %s49
    %p53 = scmp.eq.s32.totalorder %s13, 0
    %p54 = por %p52, %p53
    %p55 = scmp.ne.s32.totalorder %s47, %s49
    %p56 = scmp.eq.s32.totalorder %s18, 1
    %p57 = por %p55, %p56
    %p58 = scmp.ne.s32.totalorder %s49, %s50
    %p59 = scmp.eq.s32.totalorder %s18, 0
    %p60 = por %p58, %p59
    %p61 = scmp.ne.s32.totalorder %s49, %s50
    %p62 = scmp.eq.s32.totalorder %s19, 1
    %p63 = por %p61, %p62
    %p65 = scmp.ne.s32.totalorder %s50, %s64
    %p66 = scmp.eq.s32.totalorder %s19, 0
    %p67 = por %p65, %p66
    %s69 = sadd.s32 %s68, 1
    %p72 = scmp.eq.s32.totalorder %s13, 1
    %p73 = scmp.ne.s32.totalorder %s68, %s70
    %p74 = scmp.eq.s32.totalorder %s13, 0
    %p75 = por %p73, %p74
    %p76 = scmp.ne.s32.totalorder %s68, %s70
    %p77 = scmp.eq.s32.totalorder %s18, 1
    %p78 = por %p76, %p77
    %p79 = scmp.ne.s32.totalorder %s70, %s71
    %p80 = scmp.eq.s32.totalorder %s18, 0
    %p81 = por %p79, %p80
    %p82 = scmp.ne.s32.totalorder %s70, %s71
    %p83 = scmp.eq.s32.totalorder %s19, 1
    %p84 = por %p82, %p83
    %p86 = scmp.ne.s32.totalorder %s71, %s85
    %p87 = scmp.eq.s32.totalorder %s19, 0
    %p88 = por %p86, %p87
    %s90 = sadd.s32 %s89, 1
    %p93 = scmp.eq.s32.totalorder %s13, 1
    %p94 = scmp.ne.s32.totalorder %s89, %s91
    %p95 = scmp.eq.s32.totalorder %s13, 0
    %p96 = por %p94, %p95
    %p97 = scmp.ne.s32.totalorder %s89, %s91
    %p98 = scmp.eq.s32.totalorder %s18, 1
    %p99 = por %p97, %p98
    %p100 = scmp.ne.s32.totalorder %s91, %s92
    %p101 = scmp.eq.s32.totalorder %s18, 0
    %p102 = por %p100, %p101
    %p103 = scmp.ne.s32.totalorder %s91, %s92
    %p104 = scmp.eq.s32.totalorder %s19, 1
    %p105 = por %p103, %p104
    %p107 = scmp.ne.s32.totalorder %s92, %s106
    %p108 = scmp.eq.s32.totalorder %s19, 0
    %p109 = por %p107, %p108
    %s111 = sadd.s32 %s110, 1
    %p114 = scmp.eq.s32.totalorder %s13, 1
    %p115 = scmp.ne.s32.totalorder %s110, %s112
    %p116 = scmp.eq.s32.totalorder %s13, 0
    %p117 = por %p115, %p116
    %p118 = scmp.ne.s32.totalorder %s110, %s112
    %p119 = scmp.eq.s32.totalorder %s18, 1
    %p120 = por %p118, %p119
    %p121 = scmp.ne.s32.totalorder %s112, %s113
    %p122 = scmp.eq.s32.totalorder %s18, 0
    %p123 = por %p121, %p122
    %p124 = scmp.ne.s32.totalorder %s112, %s113
    %p125 = scmp.eq.s32.totalorder %s19, 1
    %p126 = por %p124, %p125
    %p128 = scmp.ne.s32.totalorder %s113, %s127
    %p129 = scmp.eq.s32.totalorder %s19, 0
    %p130 = por %p128, %p129
    %s132 = sadd.s32 %s131, 1
    %p135 = scmp.eq.s32.totalorder %s13, 1
    %p136 = scmp.ne.s32.totalorder %s131, %s133
    %p137 = scmp.eq.s32.totalorder %s13, 0
    %p138 = por %p136, %p137
    %p139 = scmp.ne.s32.totalorder %s131, %s133
    %p140 = scmp.eq.s32.totalorder %s18, 1
    %p141 = por %p139, %p140
    %p142 = scmp.ne.s32.totalorder %s133, %s134
    %p143 = scmp.eq.s32.totalorder %s18, 0
    %p144 = por %p142, %p143
    %p145 = scmp.ne.s32.totalorder %s133, %s134
    %p146 = scmp.eq.s32.totalorder %s19, 1
    %p147 = por %p145, %p146
    %p149 = scmp.ne.s32.totalorder %s134, %s148
    %p150 = scmp.eq.s32.totalorder %s19, 0
    %p151 = por %p149, %p150
    %s153 = sadd.s32 %s152, 1
    %p156 = scmp.eq.s32.totalorder %s13, 1
    %p157 = scmp.ne.s32.totalorder %s152, %s154
    %p158 = scmp.eq.s32.totalorder %s13, 0
    %p159 = por %p157, %p158
    %p160 = scmp.ne.s32.totalorder %s152, %s154
    %p161 = scmp.eq.s32.totalorder %s18, 1
    %p162 = por %p160, %p161
    %p163 = scmp.ne.s32.totalorder %s154, %s155
    %p164 = scmp.eq.s32.totalorder %s18, 0
    %p165 = por %p163, %p164
    %p166 = scmp.ne.s32.totalorder %s154, %s155
    %p167 = scmp.eq.s32.totalorder %s19, 1
    %p168 = por %p166, %p167
    %p170 = scmp.ne.s32.totalorder %s155, %s169
    %p171 = scmp.eq.s32.totalorder %s19, 0
    %p172 = por %p170, %p171
    %s173 = ssub.s32 %s13, %s20
    %p174 = scmp.eq.s32.totalorder %s173, 0
    %s176 = sadd.s32 %s175, 1
    %s177 = scalar_select %p174, %s175, %s176
    %p180 = pneg %p174
    %p181 = scmp.eq.s32.totalorder %s13, 1
    %p182 = por %p180, %p181
    %p183 = scmp.ne.s32.totalorder %s175, %s178
    %p184 = scmp.eq.s32.totalorder %s13, 0
    %p185 = por %p183, %p184
    %p186 = scmp.ne.s32.totalorder %s175, %s178
    %p187 = scmp.eq.s32.totalorder %s18, 1
    %p188 = por %p186, %p187
    %p189 = scmp.ne.s32.totalorder %s178, %s179
    %p190 = scmp.eq.s32.totalorder %s18, 0
    %p191 = por %p189, %p190
    %p192 = scmp.ne.s32.totalorder %s178, %s179
    %p193 = scmp.eq.s32.totalorder %s19, 1
    %p194 = por %p192, %p193
    %p196 = scmp.ne.s32.totalorder %s179, %s195
    %p197 = scmp.eq.s32.totalorder %s19, 0
    %p198 = por %p196, %p197
    %p199 = scmp.le.s32.totalorder 1, %s13
    %p200 = scmp.lt.s32.totalorder %s13, 3
    %p201 = pnand %p199, %p200
    %p202 = pneg %p201
    // Predicated region
    $region9: #{decoder_block_forward.1} parent=5 // pred_check
      _
    $region10: #{decoder_block_forward.1} parent=5 // pred_check_branch
      %204 = sbr.rel (%p201) target = $region12
    $region11: #{decoder_block_forward.1} parent=5 // pred_region
      %s205 = ssub.s32 %s13, 1
      // Predicated region
      $region13: #{decoder_block_forward.1} parent=11 // pred_check
        %p206 = pneg %p60
      $region14: #{decoder_block_forward.1} parent=11 // pred_check_branch
        %208 = sbr.rel (%p206) target = $region16
      $region15: #{decoder_block_forward.1} parent=11 // pred_region
        _
      $region16: #{decoder_block_forward.1} parent=11 // pred_fallthru
        _
      // Predicated region
      $region17: #{decoder_block_forward.1} parent=11 // pred_check
        %p209 = pneg %p81
      $region18: #{decoder_block_forward.1} parent=11 // pred_check_branch
        %211 = sbr.rel (%p209) target = $region20
      $region19: #{decoder_block_forward.1} parent=11 // pred_region
        _
      $region20: #{decoder_block_forward.1} parent=11 // pred_fallthru
        _
      // Predicated region
      $region21: #{decoder_block_forward.1} parent=11 // pred_check
        %p212 = pneg %p102
      $region22: #{decoder_block_forward.1} parent=11 // pred_check_branch
        %214 = sbr.rel (%p212) target = $region24
      $region23: #{decoder_block_forward.1} parent=11 // pred_region
        _
      $region24: #{decoder_block_forward.1} parent=11 // pred_fallthru
        _
      // Predicated region
      $region25: #{decoder_block_forward.1} parent=11 // pred_check
        %p215 = pneg %p123
      $region26: #{decoder_block_forward.1} parent=11 // pred_check_branch
        %217 = sbr.rel (%p215) target = $region28
      $region27: #{decoder_block_forward.1} parent=11 // pred_region
        _
      $region28: #{decoder_block_forward.1} parent=11 // pred_fallthru
        _
      // Predicated region
      $region29: #{decoder_block_forward.1} parent=11 // pred_check
        %p218 = pneg %p144
      $region30: #{decoder_block_forward.1} parent=11 // pred_check_branch
        %220 = sbr.rel (%p218) target = $region32
      $region31: #{decoder_block_forward.1} parent=11 // pred_region
        _
      $region32: #{decoder_block_forward.1} parent=11 // pred_fallthru
        _
      // Predicated region
      $region33: #{decoder_block_forward.1} parent=11 // pred_check
        %p221 = pneg %p165
      $region34: #{decoder_block_forward.1} parent=11 // pred_check_branch
        %223 = sbr.rel (%p221) target = $region36
      $region35: #{decoder_block_forward.1} parent=11 // pred_region
        _
      $region36: #{decoder_block_forward.1} parent=11 // pred_fallthru
        _
    $region12: #{decoder_block_forward.1} parent=5 // pred_fallthru
      _
    %p224 = scmp.lt.s32.totalorder %s13, 2
    // Predicated region
    $region37: #{decoder_block_forward.1} parent=5 // pred_check
      %p225 = pneg %p224
    $region38: #{decoder_block_forward.1} parent=5 // pred_check_branch
      %227 = sbr.rel (%p225) target = $region40
    $region39: #{decoder_block_forward.1} parent=5 // pred_region
      // Predicated region
      $region41: #{decoder_block_forward.1} parent=39 // pred_check
        %p228 = pneg %p33
      $region42: #{decoder_block_forward.1} parent=39 // pred_check_branch
        %230 = sbr.rel (%p228) target = $region44
      $region43: #{decoder_block_forward.1} parent=39 // pred_region
        %p231 = scmp.lt.s32.totalorder %s13, 1
        %s232 = scalar_select %p231, %s13, 1
        %s233 = smul.addr %s232, 32
        %s234 = smul.addr %s233, 8
        %s235 = scalar_lea.vmem %s0, %s234
      $region44: #{decoder_block_forward.1} parent=39 // pred_fallthru
        _
    $region40: #{decoder_block_forward.1} parent=5 // pred_fallthru
      _
    %p236 = scmp.le.s32.totalorder 1, %s13
    %p237 = scmp.lt.s32.totalorder %s13, 3
    %p238 = pnand %p236, %p237
    %p239 = pneg %p238
    // Predicated region
    $region45: #{decoder_block_forward.1} parent=5 // pred_check
      _
    $region46: #{decoder_block_forward.1} parent=5 // pred_check_branch
      %241 = sbr.rel (%p238) target = $region48
    $region47: #{decoder_block_forward.1} parent=5 // pred_region
      %s242 = ssub.s32 %s13, 1
      %p243 = scmp.lt.s32.totalorder %s18, 1
      %s244 = scalar_select %p243, %s18, 1
      %s245 = smul.addr %s244, 32
      %s246 = smul.addr %s245, 8
      %s247 = scalar_lea.vmem %s0, %s246
      %p248 = pneg %p39
      %p249 = pneg %p36
      %p250 = pneg %p60
      %p251 = pneg %p57
      %p252 = pneg %p81
      %p253 = pneg %p78
      %p254 = pneg %p102
      %p255 = pneg %p99
      %p256 = pneg %p123
      %p257 = pneg %p120
      %p258 = pneg %p144
      %p259 = pneg %p141
      %p260 = pneg %p165
      %p261 = pneg %p162
      %p262 = pneg %p191
      %p263 = pneg %p188
      %p264 = scmp.lt.s32.totalorder %s18, 1
      %s265 = scalar_select %p264, %s18, 1
      %s266 = smul.addr %s265, 128
      %s267 = smul.addr %s266, 8
      %s268 = scalar_lea.vmem %s7, %s267
      %p269 = scmp.lt.s32.totalorder %s18, 1
      %s270 = scalar_select %p269, %s18, 1
      %s271 = smul.addr %s270, 32
      %s272 = smul.addr %s271, 8
      %s273 = scalar_lea.vmem %s0, %s272
      %p274 = scmp.lt.s32.totalorder %s18, 1
      %s275 = scalar_select %p274, %s18, 1
      %s276 = smul.addr %s275, 128
      %s277 = smul.addr %s276, 8
      %s278 = scalar_lea.vmem %s7, %s277
      %p280 = scmp.eq.s32.totalorder %s18, 0
      // Predicated region
      $region49: #{decoder_block_forward.1} parent=47 // pred_check
        %p281 = pneg %p280
      $region50: #{decoder_block_forward.1} parent=47 // pred_check_branch
        %283 = sbr.rel (%p281) target = $region52
      $region51: #{decoder_block_forward.1} parent=47 // pred_region
        %vm284 = vcmask 27648
        %285 = vst.msk [vmem:[#allocation2] sm:$0xf] %vm284, 0
        %286 = vst.msk [vmem:[#allocation2 + $0x4] sm:$0xf] %vm284, 0
        %vm287 = vcmask 24576
        %288 = vst.msk [vmem:[#allocation2 + $0x8] sm:$0x1] %vm287, 0
        %289 = vst.msk [vmem:[#allocation2 + $0xc] sm:$0xf] %vm284, 0
        %290 = vst.msk [vmem:[#allocation2 + $0x10] sm:$0xf] %vm284, 0
        %291 = vst.msk [vmem:[#allocation2 + $0x14] sm:$0x1] %vm287, 0
        %292 = vst.msk [vmem:[#allocation2 + $0x18] sm:$0xf] %vm284, 0
        %293 = vst.msk [vmem:[#allocation2 + $0x1c] sm:$0xf] %vm284, 0
        %294 = vst.msk [vmem:[#allocation2 + $0x20] sm:$0x1] %vm287, 0
        %295 = vst.msk [vmem:[#allocation2 + $0x24] sm:$0xf] %vm284, 0
        %296 = vst.msk [vmem:[#allocation2 + $0x28] sm:$0xf] %vm284, 0
        %297 = vst.msk [vmem:[#allocation2 + $0x2c] sm:$0x1] %vm287, 0
        %298 = vst.msk [vmem:[#allocation2 + $0x30] sm:$0xf] %vm284, 0
        %299 = vst.msk [vmem:[#allocation2 + $0x34] sm:$0xf] %vm284, 0
        %300 = vst.msk [vmem:[#allocation2 + $0x38] sm:$0x1] %vm287, 0
        %301 = vst.msk [vmem:[#allocation2 + $0x3c] sm:$0xf] %vm284, 0
        %302 = vst.msk [vmem:[#allocation2 + $0x40] sm:$0xf] %vm284, 0
        %303 = vst.msk [vmem:[#allocation2 + $0x44] sm:$0x1] %vm287, 0
        %304 = vst.msk [vmem:[#allocation2 + $0x48] sm:$0xf] %vm284, 0
        %305 = vst.msk [vmem:[#allocation2 + $0x4c] sm:$0xf] %vm284, 0
        %306 = vst.msk [vmem:[#allocation2 + $0x50] sm:$0x1] %vm287, 0
        %307 = vst.msk [vmem:[#allocation2 + $0x54] sm:$0xf] %vm284, 0
        %308 = vst.msk [vmem:[#allocation2 + $0x58] sm:$0xf] %vm284, 0
        %309 = vst.msk [vmem:[#allocation2 + $0x5c] sm:$0x1] %vm287, 0
        %310 = vst.msk [vmem:[#allocation2 + $0x60] sm:$0xf] %vm284, 0
        %311 = vst.msk [vmem:[#allocation2 + $0x64] sm:$0xf] %vm284, 0
        %312 = vst.msk [vmem:[#allocation2 + $0x68] sm:$0x1] %vm287, 0
        %313 = vst.msk [vmem:[#allocation2 + $0x6c] sm:$0xf] %vm284, 0
        %314 = vst.msk [vmem:[#allocation2 + $0x70] sm:$0xf] %vm284, 0
        %315 = vst.msk [vmem:[#allocation2 + $0x74] sm:$0x1] %vm287, 0
        %316 = vst.msk [vmem:[#allocation2 + $0x78] sm:$0xf] %vm284, 0
        %317 = vst.msk [vmem:[#allocation2 + $0x7c] sm:$0xf] %vm284, 0
        %318 = vst.msk [vmem:[#allocation2 + $0x80] sm:$0x1] %vm287, 0
        %319 = vst.msk [vmem:[#allocation2 + $0x84] sm:$0xf] %vm284, 0
        %320 = vst.msk [vmem:[#allocation2 + $0x88] sm:$0xf] %vm284, 0
        %321 = vst.msk [vmem:[#allocation2 + $0x8c] sm:$0x1] %vm287, 0
        %322 = vst.msk [vmem:[#allocation2 + $0x90] sm:$0xf] %vm284, 0
        %323 = vst.msk [vmem:[#allocation2 + $0x94] sm:$0xf] %vm284, 0
        %324 = vst.msk [vmem:[#allocation2 + $0x98] sm:$0x1] %vm287, 0
        %325 = vst.msk [vmem:[#allocation2 + $0x9c] sm:$0xf] %vm284, 0
        %326 = vst.msk [vmem:[#allocation2 + $0xa0] sm:$0xf] %vm284, 0
        %327 = vst.msk [vmem:[#allocation2 + $0xa4] sm:$0x1] %vm287, 0
        %328 = vst.msk [vmem:[#allocation2 + $0xa8] sm:$0xf] %vm284, 0
        %329 = vst.msk [vmem:[#allocation2 + $0xac] sm:$0xf] %vm284, 0
        %330 = vst.msk [vmem:[#allocation2 + $0xb0] sm:$0x1] %vm287, 0
        %331 = vst.msk [vmem:[#allocation2 + $0xb4] sm:$0xf] %vm284, 0
        %332 = vst.msk [vmem:[#allocation2 + $0xb8] sm:$0xf] %vm284, 0
        %333 = vst.msk [vmem:[#allocation2 + $0xbc] sm:$0x1] %vm287, 0
        %334 = vst.msk [vmem:[#allocation2 + $0xc0] sm:$0xf] %vm284, 0
        %335 = vst.msk [vmem:[#allocation2 + $0xc4] sm:$0xf] %vm284, 0
        %336 = vst.msk [vmem:[#allocation2 + $0xc8] sm:$0x1] %vm287, 0
        %337 = vst.msk [vmem:[#allocation2 + $0xcc] sm:$0xf] %vm284, 0
        %338 = vst.msk [vmem:[#allocation2 + $0xd0] sm:$0xf] %vm284, 0
        %339 = vst.msk [vmem:[#allocation2 + $0xd4] sm:$0x1] %vm287, 0
        %vm340 = vcmask 60416
        %341 = vst.msk [vmem:[#allocation3] sm:$0xf] %vm340, 0
        %342 = vst.msk [vmem:[#allocation3 + $0x4] sm:$0xf] %vm340, 0
        %vm343 = vcmask 57344
        %344 = vst.msk [vmem:[#allocation3 + $0x8] sm:$0x1] %vm343, 0
        %345 = vst.msk [vmem:[#allocation3 + $0xc] sm:$0xf] %vm340, 0
        %346 = vst.msk [vmem:[#allocation3 + $0x10] sm:$0xf] %vm340, 0
        %347 = vst.msk [vmem:[#allocation3 + $0x14] sm:$0x1] %vm343, 0
        %348 = vst.msk [vmem:[#allocation3 + $0x18] sm:$0xf] %vm340, 0
        %349 = vst.msk [vmem:[#allocation3 + $0x1c] sm:$0xf] %vm340, 0
        %350 = vst.msk [vmem:[#allocation3 + $0x20] sm:$0x1] %vm343, 0
        %351 = vst.msk [vmem:[#allocation3 + $0x24] sm:$0xf] %vm340, 0
        %352 = vst.msk [vmem:[#allocation3 + $0x28] sm:$0xf] %vm340, 0
        %353 = vst.msk [vmem:[#allocation3 + $0x2c] sm:$0x1] %vm343, 0
        %354 = vst.msk [vmem:[#allocation3 + $0x30] sm:$0xf] %vm340, 0
        %355 = vst.msk [vmem:[#allocation3 + $0x34] sm:$0xf] %vm340, 0
        %356 = vst.msk [vmem:[#allocation3 + $0x38] sm:$0x1] %vm343, 0
        %357 = vst.msk [vmem:[#allocation3 + $0x3c] sm:$0xf] %vm340, 0
        %358 = vst.msk [vmem:[#allocation3 + $0x40] sm:$0xf] %vm340, 0
        %359 = vst.msk [vmem:[#allocation3 + $0x44] sm:$0x1] %vm343, 0
        %360 = vst.msk [vmem:[#allocation3 + $0x48] sm:$0xf] %vm340, 0
        %361 = vst.msk [vmem:[#allocation3 + $0x4c] sm:$0xf] %vm340, 0
        %362 = vst.msk [vmem:[#allocation3 + $0x50] sm:$0x1] %vm343, 0
        %363 = vst.msk [vmem:[#allocation3 + $0x54] sm:$0xf] %vm340, 0
        %364 = vst.msk [vmem:[#allocation3 + $0x58] sm:$0xf] %vm340, 0
        %365 = vst.msk [vmem:[#allocation3 + $0x5c] sm:$0x1] %vm343, 0
        %366 = vst.msk [vmem:[#allocation3 + $0x60] sm:$0xf] %vm340, 0
        %367 = vst.msk [vmem:[#allocation3 + $0x64] sm:$0xf] %vm340, 0
        %368 = vst.msk [vmem:[#allocation3 + $0x68] sm:$0x1] %vm343, 0
        %369 = vst.msk [vmem:[#allocation3 + $0x6c] sm:$0xf] %vm340, 0
        %370 = vst.msk [vmem:[#allocation3 + $0x70] sm:$0xf] %vm340, 0
        %371 = vst.msk [vmem:[#allocation3 + $0x74] sm:$0x1] %vm343, 0
        %372 = vst.msk [vmem:[#allocation3 + $0x78] sm:$0xf] %vm340, 0
        %373 = vst.msk [vmem:[#allocation3 + $0x7c] sm:$0xf] %vm340, 0
        %374 = vst.msk [vmem:[#allocation3 + $0x80] sm:$0x1] %vm343, 0
        %375 = vst.msk [vmem:[#allocation3 + $0x84] sm:$0xf] %vm340, 0
        %376 = vst.msk [vmem:[#allocation3 + $0x88] sm:$0xf] %vm340, 0
        %377 = vst.msk [vmem:[#allocation3 + $0x8c] sm:$0x1] %vm343, 0
        %378 = vst.msk [vmem:[#allocation3 + $0x90] sm:$0xf] %vm340, 0
        %379 = vst.msk [vmem:[#allocation3 + $0x94] sm:$0xf] %vm340, 0
        %380 = vst.msk [vmem:[#allocation3 + $0x98] sm:$0x1] %vm343, 0
        %381 = vst.msk [vmem:[#allocation3 + $0x9c] sm:$0xf] %vm340, 0
        %382 = vst.msk [vmem:[#allocation3 + $0xa0] sm:$0xf] %vm340, 0
        %383 = vst.msk [vmem:[#allocation3 + $0xa4] sm:$0x1] %vm343, 0
        %384 = vst.msk [vmem:[#allocation3 + $0xa8] sm:$0xf] %vm340, 0
        %385 = vst.msk [vmem:[#allocation3 + $0xac] sm:$0xf] %vm340, 0
        %386 = vst.msk [vmem:[#allocation3 + $0xb0] sm:$0x1] %vm343, 0
        %387 = vst.msk [vmem:[#allocation3 + $0xb4] sm:$0xf] %vm340, 0
        %388 = vst.msk [vmem:[#allocation3 + $0xb8] sm:$0xf] %vm340, 0
        %389 = vst.msk [vmem:[#allocation3 + $0xbc] sm:$0x1] %vm343, 0
        %390 = vst.msk [vmem:[#allocation3 + $0xc0] sm:$0xf] %vm340, 0
        %391 = vst.msk [vmem:[#allocation3 + $0xc4] sm:$0xf] %vm340, 0
        %392 = vst.msk [vmem:[#allocation3 + $0xc8] sm:$0x1] %vm343, 0
        %393 = vst.msk [vmem:[#allocation3 + $0xcc] sm:$0xf] %vm340, 0
        %394 = vst.msk [vmem:[#allocation3 + $0xd0] sm:$0xf] %vm340, 0
        %395 = vst.msk [vmem:[#allocation3 + $0xd4] sm:$0x1] %vm343, 0
      $region52: #{decoder_block_forward.1} parent=47 // pred_fallthru
        _
      %v396 = vld [vmem:[%s273] sm:$0xff]
      %v397 = vld [vmem:[%s273 + $0x8] sm:$0xff]
      %v398 = vld [vmem:[%s273 + $0x10] sm:$0xff]
      %v399 = vld [vmem:[%s273 + $0x18] sm:$0xff]
      %v400 = vld [vmem:[%s273 + $0x20] sm:$0xff]
      %v401 = vld [vmem:[%s273 + $0x28] sm:$0xff]
      %v402 = vld [vmem:[%s273 + $0x30] sm:$0xff]
      %v403 = vld [vmem:[%s273 + $0x38] sm:$0xff]
      %v404 = vld [vmem:[%s273 + $0x40] sm:$0xff]
      %v405 = vld [vmem:[%s273 + $0x48] sm:$0xff]
      %v406 = vld [vmem:[%s273 + $0x50] sm:$0xff]
      %v407 = vld [vmem:[%s273 + $0x58] sm:$0xff]
      %v408 = vld [vmem:[%s273 + $0x60] sm:$0xff]
      %v409 = vld [vmem:[%s273 + $0x68] sm:$0xff]
      %v410 = vld [vmem:[%s273 + $0x70] sm:$0xff]
      %v411 = vld [vmem:[%s273 + $0x78] sm:$0xff]
      %v412 = vld [vmem:[%s273 + $0x80] sm:$0xff]
      %v413 = vld [vmem:[%s273 + $0x88] sm:$0xff]
      %v414 = vld [vmem:[%s273 + $0x90] sm:$0xff]
      %v415 = vld [vmem:[%s273 + $0x98] sm:$0xff]
      %v416 = vld [vmem:[%s273 + $0xa0] sm:$0xff]
      %v417 = vld [vmem:[%s273 + $0xa8] sm:$0xff]
      %v418 = vld [vmem:[%s273 + $0xb0] sm:$0xff]
      %v419 = vld [vmem:[%s273 + $0xb8] sm:$0xff]
      %v420 = vld [vmem:[%s273 + $0xc0] sm:$0xff]
      %v421 = vld [vmem:[%s273 + $0xc8] sm:$0xff]
      %v422 = vld [vmem:[%s273 + $0xd0] sm:$0xff]
      %v423 = vld [vmem:[%s273 + $0xd8] sm:$0xff]
      %v424 = vld [vmem:[%s273 + $0xe0] sm:$0xff]
      %v425 = vld [vmem:[%s273 + $0xe8] sm:$0xff]
      %v426 = vld [vmem:[%s273 + $0xf0] sm:$0xff]
      %v427 = vld [vmem:[%s273 + $0xf8] sm:$0xff]
      %v428 = vld [vmem:[%s1] sm:$0x1]
      %v430 = vlaneseq
      %v431 = vshrl.u32 %v430, 7
      %v432 = vsub.s32 0, %v431
      %v433 = vrot.slane %v428, %v432
      %v435 = vmul.f32 %v396, %v433
      %v436 = vmul.f32 %v397, %v433
      %v437 = vmul.f32 %v398, %v433
      %v438 = vmul.f32 %v399, %v433
      %v439 = vmul.f32 %v400, %v433
      %v440 = vmul.f32 %v401, %v433
      %v441 = vmul.f32 %v402, %v433
      %v442 = vmul.f32 %v403, %v433
      %v443 = vmul.f32 %v404, %v433
      %v444 = vmul.f32 %v405, %v433
      %v445 = vmul.f32 %v406, %v433
      %v446 = vmul.f32 %v407, %v433
      %v447 = vmul.f32 %v408, %v433
      %v448 = vmul.f32 %v409, %v433
      %v449 = vmul.f32 %v410, %v433
      %v450 = vmul.f32 %v411, %v433
      %v451 = vmul.f32 %v412, %v433
      %v452 = vmul.f32 %v413, %v433
      %v453 = vmul.f32 %v414, %v433
      %v454 = vmul.f32 %v415, %v433
      %v455 = vmul.f32 %v416, %v433
      %v456 = vmul.f32 %v417, %v433
      %v457 = vmul.f32 %v418, %v433
      %v458 = vmul.f32 %v419, %v433
      %v459 = vmul.f32 %v420, %v433
      %v460 = vmul.f32 %v421, %v433
      %v461 = vmul.f32 %v422, %v433
      %v462 = vmul.f32 %v423, %v433
      %v463 = vmul.f32 %v424, %v433
      %v464 = vmul.f32 %v425, %v433
      %v465 = vmul.f32 %v426, %v433
      %v466 = vmul.f32 %v427, %v433
      %v467 = vld [vmem:[%s2] sm:$0x1]
      %v469 = vlaneseq
      %v470 = vshrl.u32 %v469, 7
      %v471 = vsub.s32 0, %v470
      %v472 = vrot.slane %v467, %v471
      %v474 = vadd.f32 %v435, %v472
      %v475 = vadd.f32 %v436, %v472
      %v476 = vadd.f32 %v437, %v472
      %v477 = vadd.f32 %v438, %v472
      %v478 = vadd.f32 %v439, %v472
      %v479 = vadd.f32 %v440, %v472
      %v480 = vadd.f32 %v441, %v472
      %v481 = vadd.f32 %v442, %v472
      %v482 = vadd.f32 %v443, %v472
      %v483 = vadd.f32 %v444, %v472
      %v484 = vadd.f32 %v445, %v472
      %v485 = vadd.f32 %v446, %v472
      %v486 = vadd.f32 %v447, %v472
      %v487 = vadd.f32 %v448, %v472
      %v488 = vadd.f32 %v449, %v472
      %v489 = vadd.f32 %v450, %v472
      %v490 = vadd.f32 %v451, %v472
      %v491 = vadd.f32 %v452, %v472
      %v492 = vadd.f32 %v453, %v472
      %v493 = vadd.f32 %v454, %v472
      %v494 = vadd.f32 %v455, %v472
      %v495 = vadd.f32 %v456, %v472
      %v496 = vadd.f32 %v457, %v472
      %v497 = vadd.f32 %v458, %v472
      %v498 = vadd.f32 %v459, %v472
      %v499 = vadd.f32 %v460, %v472
      %v500 = vadd.f32 %v461, %v472
      %v501 = vadd.f32 %v462, %v472
      %v502 = vadd.f32 %v463, %v472
      %v503 = vadd.f32 %v464, %v472
      %v504 = vadd.f32 %v465, %v472
      %v505 = vadd.f32 %v466, %v472
      %v506 = vmax.f32 %v474, 0.0
      %v507 = vmax.f32 %v475, 0.0
      %v508 = vmax.f32 %v476, 0.0
      %v509 = vmax.f32 %v477, 0.0
      %v510 = vmax.f32 %v478, 0.0
      %v511 = vmax.f32 %v479, 0.0
      %v512 = vmax.f32 %v480, 0.0
      %v513 = vmax.f32 %v481, 0.0
      %v514 = vmax.f32 %v482, 0.0
      %v515 = vmax.f32 %v483, 0.0
      %v516 = vmax.f32 %v484, 0.0
      %v517 = vmax.f32 %v485, 0.0
      %v518 = vmax.f32 %v486, 0.0
      %v519 = vmax.f32 %v487, 0.0
      %v520 = vmax.f32 %v488, 0.0
      %v521 = vmax.f32 %v489, 0.0
      %v522 = vmax.f32 %v490, 0.0
      %v523 = vmax.f32 %v491, 0.0
      %v524 = vmax.f32 %v492, 0.0
      %v525 = vmax.f32 %v493, 0.0
      %v526 = vmax.f32 %v494, 0.0
      %v527 = vmax.f32 %v495, 0.0
      %v528 = vmax.f32 %v496, 0.0
      %v529 = vmax.f32 %v497, 0.0
      %v530 = vmax.f32 %v498, 0.0
      %v531 = vmax.f32 %v499, 0.0
      %v532 = vmax.f32 %v500, 0.0
      %v533 = vmax.f32 %v501, 0.0
      %v534 = vmax.f32 %v502, 0.0
      %v535 = vmax.f32 %v503, 0.0
      %v536 = vmax.f32 %v504, 0.0
      %v537 = vmax.f32 %v505, 0.0
      %v538 = vpack.c.bf16 %v507, %v506
      %v539 = vpack.c.bf16 %v509, %v508
      %v540 = vpack.c.bf16 %v511, %v510
      %v541 = vpack.c.bf16 %v513, %v512
      %v542 = vpack.c.bf16 %v515, %v514
      %v543 = vpack.c.bf16 %v517, %v516
      %v544 = vpack.c.bf16 %v519, %v518
      %v545 = vpack.c.bf16 %v521, %v520
      %v546 = vpack.c.bf16 %v523, %v522
      %v547 = vpack.c.bf16 %v525, %v524
      %v548 = vpack.c.bf16 %v527, %v526
      %v549 = vpack.c.bf16 %v529, %v528
      %v550 = vpack.c.bf16 %v531, %v530
      %v551 = vpack.c.bf16 %v533, %v532
      %v552 = vpack.c.bf16 %v535, %v534
      %v553 = vpack.c.bf16 %v537, %v536
      %v570 = vunpack.c.l.b16 %v538
      %v571 = vunpack.c.h.b16 %v538
      %v572 = vunpack.c.l.b16 %v539
      %v573 = vunpack.c.h.b16 %v539
      %v574 = vunpack.c.l.b16 %v540
      %v575 = vunpack.c.h.b16 %v540
      %v576 = vunpack.c.l.b16 %v541
      %v577 = vunpack.c.h.b16 %v541
      %v578 = vunpack.c.l.b16 %v542
      %v579 = vunpack.c.h.b16 %v542
      %v580 = vunpack.c.l.b16 %v543
      %v581 = vunpack.c.h.b16 %v543
      %v582 = vunpack.c.l.b16 %v544
      %v583 = vunpack.c.h.b16 %v544
      %v584 = vunpack.c.l.b16 %v545
      %v585 = vunpack.c.h.b16 %v545
      %v586 = vunpack.c.l.b16 %v546
      %v587 = vunpack.c.h.b16 %v546
      %v588 = vunpack.c.l.b16 %v547
      %v589 = vunpack.c.h.b16 %v547
      %v590 = vunpack.c.l.b16 %v548
      %v591 = vunpack.c.h.b16 %v548
      %v592 = vunpack.c.l.b16 %v549
      %v593 = vunpack.c.h.b16 %v549
      %v594 = vunpack.c.l.b16 %v550
      %v595 = vunpack.c.h.b16 %v550
      %v596 = vunpack.c.l.b16 %v551
      %v597 = vunpack.c.h.b16 %v551
      %v598 = vunpack.c.l.b16 %v552
      %v599 = vunpack.c.h.b16 %v552
      %v600 = vunpack.c.l.b16 %v553
      %v601 = vunpack.c.h.b16 %v553
      %v602 = vpack.c.b16 %v570, %v570
      %v603 = vpack.c.b16 %v571, %v571
      %v604 = vpack.c.b16 %v572, %v572
      %v605 = vpack.c.b16 %v573, %v573
      %v606 = vpack.c.b16 %v574, %v574
      %v607 = vpack.c.b16 %v575, %v575
      %v608 = vpack.c.b16 %v576, %v576
      %v609 = vpack.c.b16 %v577, %v577
      %v610 = vpack.c.b16 %v578, %v578
      %v611 = vpack.c.b16 %v579, %v579
      %v612 = vpack.c.b16 %v580, %v580
      %v613 = vpack.c.b16 %v581, %v581
      %v614 = vpack.c.b16 %v582, %v582
      %v615 = vpack.c.b16 %v583, %v583
      %v616 = vpack.c.b16 %v584, %v584
      %v617 = vpack.c.b16 %v585, %v585
      %v618 = vpack.c.b16 %v586, %v586
      %v619 = vpack.c.b16 %v587, %v587
      %v620 = vpack.c.b16 %v588, %v588
      %v621 = vpack.c.b16 %v589, %v589
      %v622 = vpack.c.b16 %v590, %v590
      %v623 = vpack.c.b16 %v591, %v591
      %v624 = vpack.c.b16 %v592, %v592
      %v625 = vpack.c.b16 %v593, %v593
      %v626 = vpack.c.b16 %v594, %v594
      %v627 = vpack.c.b16 %v595, %v595
      %v628 = vpack.c.b16 %v596, %v596
      %v629 = vpack.c.b16 %v597, %v597
      %v630 = vpack.c.b16 %v598, %v598
      %v631 = vpack.c.b16 %v599, %v599
      %v632 = vpack.c.b16 %v600, %v600
      %v633 = vpack.c.b16 %v601, %v601
      %vm634 = vsmask.f32 256
      %vm635 = vsmask.f32 4368
      %vm636 = vmor %vm634, %vm635
      %v638 = vshrl.u32 %v602, 16
      %v640 = vrot.slane %v638, 7
      %v641 = vshll.u32 %v602, 16
      %v643 = vor.u32 %v640, %v641
      %v644 = vrot.slane %v640, 4
      %v646 = vshrl.u32 %v603, 16
      %v648 = vrot.slane %v646, 7
      %v649 = vshll.u32 %v603, 16
      %v651 = vor.u32 %v648, %v649
      %v652 = vsel %vm636, %v644, %v651
      %v653 = vrot.slane %v648, 4
      %v655 = vshrl.u32 %v604, 16
      %v657 = vrot.slane %v655, 7
      %v658 = vshll.u32 %v604, 16
      %v660 = vor.u32 %v657, %v658
      %v661 = vrot.slane %v657, 4
      %v663 = vshrl.u32 %v605, 16
      %v665 = vrot.slane %v663, 7
      %v666 = vshll.u32 %v605, 16
      %v668 = vor.u32 %v665, %v666
      %v669 = vsel %vm636, %v661, %v668
      %v670 = vrot.slane %v665, 4
      %v672 = vshrl.u32 %v606, 16
      %v674 = vrot.slane %v672, 7
      %v675 = vshll.u32 %v606, 16
      %v677 = vor.u32 %v674, %v675
      %v678 = vrot.slane %v674, 4
      %v680 = vshrl.u32 %v607, 16
      %v682 = vrot.slane %v680, 7
      %v683 = vshll.u32 %v607, 16
      %v685 = vor.u32 %v682, %v683
      %v686 = vsel %vm636, %v678, %v685
      %v687 = vrot.slane %v682, 4
      %v689 = vshrl.u32 %v608, 16
      %v691 = vrot.slane %v689, 7
      %v692 = vshll.u32 %v608, 16
      %v694 = vor.u32 %v691, %v692
      %v695 = vrot.slane %v691, 4
      %v697 = vshrl.u32 %v609, 16
      %v699 = vrot.slane %v697, 7
      %v700 = vshll.u32 %v609, 16
      %v702 = vor.u32 %v699, %v700
      %v703 = vsel %vm636, %v695, %v702
      %v704 = vrot.slane %v699, 4
      %v706 = vshrl.u32 %v610, 16
      %v708 = vrot.slane %v706, 7
      %v709 = vshll.u32 %v610, 16
      %v711 = vor.u32 %v708, %v709
      %v712 = vrot.slane %v708, 4
      %v714 = vshrl.u32 %v611, 16
      %v716 = vrot.slane %v714, 7
      %v717 = vshll.u32 %v611, 16
      %v719 = vor.u32 %v716, %v717
      %v720 = vsel %vm636, %v712, %v719
      %v721 = vrot.slane %v716, 4
      %v723 = vshrl.u32 %v612, 16
      %v725 = vrot.slane %v723, 7
      %v726 = vshll.u32 %v612, 16
      %v728 = vor.u32 %v725, %v726
      %v729 = vrot.slane %v725, 4
      %v731 = vshrl.u32 %v613, 16
      %v733 = vrot.slane %v731, 7
      %v734 = vshll.u32 %v613, 16
      %v736 = vor.u32 %v733, %v734
      %v737 = vsel %vm636, %v729, %v736
      %v738 = vrot.slane %v733, 4
      %v740 = vshrl.u32 %v614, 16
      %v742 = vrot.slane %v740, 7
      %v743 = vshll.u32 %v614, 16
      %v745 = vor.u32 %v742, %v743
      %v746 = vrot.slane %v742, 4
      %v748 = vshrl.u32 %v615, 16
      %v750 = vrot.slane %v748, 7
      %v751 = vshll.u32 %v615, 16
      %v753 = vor.u32 %v750, %v751
      %v754 = vsel %vm636, %v746, %v753
      %v755 = vrot.slane %v750, 4
      %v757 = vshrl.u32 %v616, 16
      %v759 = vrot.slane %v757, 7
      %v760 = vshll.u32 %v616, 16
      %v762 = vor.u32 %v759, %v760
      %v763 = vrot.slane %v759, 4
      %v765 = vshrl.u32 %v617, 16
      %v767 = vrot.slane %v765, 7
      %v768 = vshll.u32 %v617, 16
      %v770 = vor.u32 %v767, %v768
      %v771 = vsel %vm636, %v763, %v770
      %v772 = vrot.slane %v767, 4
      %v774 = vshrl.u32 %v618, 16
      %v776 = vrot.slane %v774, 7
      %v777 = vshll.u32 %v618, 16
      %v779 = vor.u32 %v776, %v777
      %v780 = vrot.slane %v776, 4
      %v782 = vshrl.u32 %v619, 16
      %v784 = vrot.slane %v782, 7
      %v785 = vshll.u32 %v619, 16
      %v787 = vor.u32 %v784, %v785
      %v788 = vsel %vm636, %v780, %v787
      %v789 = vrot.slane %v784, 4
      %v791 = vshrl.u32 %v620, 16
      %v793 = vrot.slane %v791, 7
      %v794 = vshll.u32 %v620, 16
      %v796 = vor.u32 %v793, %v794
      %v797 = vrot.slane %v793, 4
      %v799 = vshrl.u32 %v621, 16
      %v801 = vrot.slane %v799, 7
      %v802 = vshll.u32 %v621, 16
      %v804 = vor.u32 %v801, %v802
      %v805 = vsel %vm636, %v797, %v804
      %v806 = vrot.slane %v801, 4
      %v808 = vshrl.u32 %v622, 16
      %v810 = vrot.slane %v808, 7
      %v811 = vshll.u32 %v622, 16
      %v813 = vor.u32 %v810, %v811
      %v814 = vrot.slane %v810, 4
      %v816 = vshrl.u32 %v623, 16
      %v818 = vrot.slane %v816, 7
      %v819 = vshll.u32 %v623, 16
      %v821 = vor.u32 %v818, %v819
      %v822 = vsel %vm636, %v814, %v821
      %v823 = vrot.slane %v818, 4
      %v825 = vshrl.u32 %v624, 16
      %v827 = vrot.slane %v825, 7
      %v828 = vshll.u32 %v624, 16
      %v830 = vor.u32 %v827, %v828
      %v831 = vrot.slane %v827, 4
      %v833 = vshrl.u32 %v625, 16
      %v835 = vrot.slane %v833, 7
      %v836 = vshll.u32 %v625, 16
      %v838 = vor.u32 %v835, %v836
      %v839 = vsel %vm636, %v831, %v838
      %v840 = vrot.slane %v835, 4
      %v842 = vshrl.u32 %v626, 16
      %v844 = vrot.slane %v842, 7
      %v845 = vshll.u32 %v626, 16
      %v847 = vor.u32 %v844, %v845
      %v848 = vrot.slane %v844, 4
      %v850 = vshrl.u32 %v627, 16
      %v852 = vrot.slane %v850, 7
      %v853 = vshll.u32 %v627, 16
      %v855 = vor.u32 %v852, %v853
      %v856 = vsel %vm636, %v848, %v855
      %v857 = vrot.slane %v852, 4
      %v859 = vshrl.u32 %v628, 16
      %v861 = vrot.slane %v859, 7
      %v862 = vshll.u32 %v628, 16
      %v864 = vor.u32 %v861, %v862
      %v865 = vrot.slane %v861, 4
      %v867 = vshrl.u32 %v629, 16
      %v869 = vrot.slane %v867, 7
      %v870 = vshll.u32 %v629, 16
      %v872 = vor.u32 %v869, %v870
      %v873 = vsel %vm636, %v865, %v872
      %v874 = vrot.slane %v869, 4
      %v876 = vshrl.u32 %v630, 16
      %v878 = vrot.slane %v876, 7
      %v879 = vshll.u32 %v630, 16
      %v881 = vor.u32 %v878, %v879
      %v882 = vrot.slane %v878, 4
      %v884 = vshrl.u32 %v631, 16
      %v886 = vrot.slane %v884, 7
      %v887 = vshll.u32 %v631, 16
      %v889 = vor.u32 %v886, %v887
      %v890 = vsel %vm636, %v882, %v889
      %v891 = vrot.slane %v886, 4
      %v893 = vshrl.u32 %v632, 16
      %v895 = vrot.slane %v893, 7
      %v896 = vshll.u32 %v632, 16
      %v898 = vor.u32 %v895, %v896
      %v899 = vrot.slane %v895, 4
      %v901 = vshrl.u32 %v633, 16
      %v903 = vrot.slane %v901, 7
      %v904 = vshll.u32 %v633, 16
      %v906 = vor.u32 %v903, %v904
      %v907 = vsel %vm636, %v899, %v906
      %v908 = vrot.slane %v903, 4
      %s957 = scalar_lea.vmem [#allocation2], 12
      %vm958 = vcmask 27648
      %vm959 = vsmask.f32 7938
      %vm960 = vmand %vm958, %vm959
      %v961 = vld [vmem:[%s957] sm:$0xf]
      %v962 = vsel %vm960, %v643, %v961
      %963 = vst [vmem:[%s957] sm:$0xf] %v962
      %vm964 = vcmask 27648
      %965 = vst.msk [vmem:[%s957 + $0x4] sm:$0xf] %vm964, %v652
      %vm966 = vcmask 24576
      %vm967 = vmand %vm966, %vm634
      %v968 = vld [vmem:[%s957 + $0x8] sm:$0x1]
      %v969 = vsel %vm967, %v653, %v968
      %970 = vst [vmem:[%s957 + $0x8] sm:$0x1] %v969
      %v971 = vld [vmem:[%s957 + $0xc] sm:$0xf]
      %v972 = vsel %vm960, %v660, %v971
      %973 = vst [vmem:[%s957 + $0xc] sm:$0xf] %v972
      %974 = vst.msk [vmem:[%s957 + $0x10] sm:$0xf] %vm964, %v669
      %v975 = vld [vmem:[%s957 + $0x14] sm:$0x1]
      %v976 = vsel %vm967, %v670, %v975
      %977 = vst [vmem:[%s957 + $0x14] sm:$0x1] %v976
      %v978 = vld [vmem:[%s957 + $0x18] sm:$0xf]
      %v979 = vsel %vm960, %v677, %v978
      %980 = vst [vmem:[%s957 + $0x18] sm:$0xf] %v979
      %981 = vst.msk [vmem:[%s957 + $0x1c] sm:$0xf] %vm964, %v686
      %v982 = vld [vmem:[%s957 + $0x20] sm:$0x1]
      %v983 = vsel %vm967, %v687, %v982
      %984 = vst [vmem:[%s957 + $0x20] sm:$0x1] %v983
      %v985 = vld [vmem:[%s957 + $0x24] sm:$0xf]
      %v986 = vsel %vm960, %v694, %v985
      %987 = vst [vmem:[%s957 + $0x24] sm:$0xf] %v986
      %988 = vst.msk [vmem:[%s957 + $0x28] sm:$0xf] %vm964, %v703
      %v989 = vld [vmem:[%s957 + $0x2c] sm:$0x1]
      %v990 = vsel %vm967, %v704, %v989
      %991 = vst [vmem:[%s957 + $0x2c] sm:$0x1] %v990
      %v992 = vld [vmem:[%s957 + $0x30] sm:$0xf]
      %v993 = vsel %vm960, %v711, %v992
      %994 = vst [vmem:[%s957 + $0x30] sm:$0xf] %v993
      %995 = vst.msk [vmem:[%s957 + $0x34] sm:$0xf] %vm964, %v720
      %v996 = vld [vmem:[%s957 + $0x38] sm:$0x1]
      %v997 = vsel %vm967, %v721, %v996
      %998 = vst [vmem:[%s957 + $0x38] sm:$0x1] %v997
      %v999 = vld [vmem:[%s957 + $0x3c] sm:$0xf]
      %v1000 = vsel %vm960, %v728, %v999
      %1001 = vst [vmem:[%s957 + $0x3c] sm:$0xf] %v1000
      %1002 = vst.msk [vmem:[%s957 + $0x40] sm:$0xf] %vm964, %v737
      %v1003 = vld [vmem:[%s957 + $0x44] sm:$0x1]
      %v1004 = vsel %vm967, %v738, %v1003
      %1005 = vst [vmem:[%s957 + $0x44] sm:$0x1] %v1004
      %v1006 = vld [vmem:[%s957 + $0x48] sm:$0xf]
      %v1007 = vsel %vm960, %v745, %v1006
      %1008 = vst [vmem:[%s957 + $0x48] sm:$0xf] %v1007
      %1009 = vst.msk [vmem:[%s957 + $0x4c] sm:$0xf] %vm964, %v754
      %v1010 = vld [vmem:[%s957 + $0x50] sm:$0x1]
      %v1011 = vsel %vm967, %v755, %v1010
      %1012 = vst [vmem:[%s957 + $0x50] sm:$0x1] %v1011
      %v1013 = vld [vmem:[%s957 + $0x54] sm:$0xf]
      %v1014 = vsel %vm960, %v762, %v1013
      %1015 = vst [vmem:[%s957 + $0x54] sm:$0xf] %v1014
      %1016 = vst.msk [vmem:[%s957 + $0x58] sm:$0xf] %vm964, %v771
      %v1017 = vld [vmem:[%s957 + $0x5c] sm:$0x1]
      %v1018 = vsel %vm967, %v772, %v1017
      %1019 = vst [vmem:[%s957 + $0x5c] sm:$0x1] %v1018
      %v1020 = vld [vmem:[%s957 + $0x60] sm:$0xf]
      %v1021 = vsel %vm960, %v779, %v1020
      %1022 = vst [vmem:[%s957 + $0x60] sm:$0xf] %v1021
      %1023 = vst.msk [vmem:[%s957 + $0x64] sm:$0xf] %vm964, %v788
      %v1024 = vld [vmem:[%s957 + $0x68] sm:$0x1]
      %v1025 = vsel %vm967, %v789, %v1024
      %1026 = vst [vmem:[%s957 + $0x68] sm:$0x1] %v1025
      %v1027 = vld [vmem:[%s957 + $0x6c] sm:$0xf]
      %v1028 = vsel %vm960, %v796, %v1027
      %1029 = vst [vmem:[%s957 + $0x6c] sm:$0xf] %v1028
      %1030 = vst.msk [vmem:[%s957 + $0x70] sm:$0xf] %vm964, %v805
      %v1031 = vld [vmem:[%s957 + $0x74] sm:$0x1]
      %v1032 = vsel %vm967, %v806, %v1031
      %1033 = vst [vmem:[%s957 + $0x74] sm:$0x1] %v1032
      %v1034 = vld [vmem:[%s957 + $0x78] sm:$0xf]
      %v1035 = vsel %vm960, %v813, %v1034
      %1036 = vst [vmem:[%s957 + $0x78] sm:$0xf] %v1035
      %1037 = vst.msk [vmem:[%s957 + $0x7c] sm:$0xf] %vm964, %v822
      %v1038 = vld [vmem:[%s957 + $0x80] sm:$0x1]
      %v1039 = vsel %vm967, %v823, %v1038
      %1040 = vst [vmem:[%s957 + $0x80] sm:$0x1] %v1039
      %v1041 = vld [vmem:[%s957 + $0x84] sm:$0xf]
      %v1042 = vsel %vm960, %v830, %v1041
      %1043 = vst [vmem:[%s957 + $0x84] sm:$0xf] %v1042
      %1044 = vst.msk [vmem:[%s957 + $0x88] sm:$0xf] %vm964, %v839
      %v1045 = vld [vmem:[%s957 + $0x8c] sm:$0x1]
      %v1046 = vsel %vm967, %v840, %v1045
      %1047 = vst [vmem:[%s957 + $0x8c] sm:$0x1] %v1046
      %v1048 = vld [vmem:[%s957 + $0x90] sm:$0xf]
      %v1049 = vsel %vm960, %v847, %v1048
      %1050 = vst [vmem:[%s957 + $0x90] sm:$0xf] %v1049
      %1051 = vst.msk [vmem:[%s957 + $0x94] sm:$0xf] %vm964, %v856
      %v1052 = vld [vmem:[%s957 + $0x98] sm:$0x1]
      %v1053 = vsel %vm967, %v857, %v1052
      %1054 = vst [vmem:[%s957 + $0x98] sm:$0x1] %v1053
      %v1055 = vld [vmem:[%s957 + $0x9c] sm:$0xf]
      %v1056 = vsel %vm960, %v864, %v1055
      %1057 = vst [vmem:[%s957 + $0x9c] sm:$0xf] %v1056
      %1058 = vst.msk [vmem:[%s957 + $0xa0] sm:$0xf] %vm964, %v873
      %v1059 = vld [vmem:[%s957 + $0xa4] sm:$0x1]
      %v1060 = vsel %vm967, %v874, %v1059
      %1061 = vst [vmem:[%s957 + $0xa4] sm:$0x1] %v1060
      %v1062 = vld [vmem:[%s957 + $0xa8] sm:$0xf]
      %v1063 = vsel %vm960, %v881, %v1062
      %1064 = vst [vmem:[%s957 + $0xa8] sm:$0xf] %v1063
      %1065 = vst.msk [vmem:[%s957 + $0xac] sm:$0xf] %vm964, %v890
      %v1066 = vld [vmem:[%s957 + $0xb0] sm:$0x1]
      %v1067 = vsel %vm967, %v891, %v1066
      %1068 = vst [vmem:[%s957 + $0xb0] sm:$0x1] %v1067
      %v1069 = vld [vmem:[%s957 + $0xb4] sm:$0xf]
      %v1070 = vsel %vm960, %v898, %v1069
      %1071 = vst [vmem:[%s957 + $0xb4] sm:$0xf] %v1070
      %1072 = vst.msk [vmem:[%s957 + $0xb8] sm:$0xf] %vm964, %v907
      %v1073 = vld [vmem:[%s957 + $0xbc] sm:$0x1]
      %v1074 = vsel %vm967, %v908, %v1073
      %1075 = vst [vmem:[%s957 + $0xbc] sm:$0x1] %v1074
      %v1076 = vld [vmem:[#allocation2] sm:$0xf]
      %v1077 = vld [vmem:[#allocation2 + $0x4] sm:$0xf]
      %v1078 = vld [vmem:[#allocation2 + $0xc] sm:$0xf]
      %v1079 = vld [vmem:[#allocation2 + $0x10] sm:$0xf]
      %v1080 = vld [vmem:[#allocation2 + $0x18] sm:$0xf]
      %v1081 = vld [vmem:[#allocation2 + $0x1c] sm:$0xf]
      %v1082 = vld [vmem:[#allocation2 + $0x24] sm:$0xf]
      %v1083 = vld [vmem:[#allocation2 + $0x28] sm:$0xf]
      %v1084 = vld [vmem:[#allocation2 + $0x30] sm:$0xf]
      %v1085 = vld [vmem:[#allocation2 + $0x34] sm:$0xf]
      %v1086 = vld [vmem:[#allocation2 + $0x3c] sm:$0xf]
      %v1087 = vld [vmem:[#allocation2 + $0x40] sm:$0xf]
      %v1088 = vld [vmem:[#allocation2 + $0x48] sm:$0xf]
      %v1089 = vld [vmem:[#allocation2 + $0x4c] sm:$0xf]
      %v1090 = vld [vmem:[#allocation2 + $0x54] sm:$0xf]
      %v1091 = vld [vmem:[#allocation2 + $0x58] sm:$0xf]
      %v1092 = vld [vmem:[#allocation2 + $0x60] sm:$0xf]
      %v1093 = vld [vmem:[#allocation2 + $0x64] sm:$0xf]
      %v1094 = vld [vmem:[#allocation2 + $0x6c] sm:$0xf]
      %v1095 = vld [vmem:[#allocation2 + $0x70] sm:$0xf]
      %v1096 = vld [vmem:[#allocation2 + $0x78] sm:$0xf]
      %v1097 = vld [vmem:[#allocation2 + $0x7c] sm:$0xf]
      %v1098 = vld [vmem:[#allocation2 + $0x84] sm:$0xf]
      %v1099 = vld [vmem:[#allocation2 + $0x88] sm:$0xf]
      %v1100 = vld [vmem:[#allocation2 + $0x90] sm:$0xf]
      %v1101 = vld [vmem:[#allocation2 + $0x94] sm:$0xf]
      %v1102 = vld [vmem:[#allocation2 + $0x9c] sm:$0xf]
      %v1103 = vld [vmem:[#allocation2 + $0xa0] sm:$0xf]
      %v1104 = vld [vmem:[#allocation2 + $0xa8] sm:$0xf]
      %v1105 = vld [vmem:[#allocation2 + $0xac] sm:$0xf]
      %v1106 = vld [vmem:[#allocation2 + $0xb4] sm:$0xf]
      %v1107 = vld [vmem:[#allocation2 + $0xb8] sm:$0xf]
      %v1140 = vunpack.c.l.b16 %v1076
      %v1141 = vunpack.c.l.b16 %v1077
      %v1142 = vunpack.c.l.b16 %v1078
      %v1143 = vunpack.c.l.b16 %v1079
      %v1144 = vunpack.c.l.b16 %v1080
      %v1145 = vunpack.c.l.b16 %v1081
      %v1146 = vunpack.c.l.b16 %v1082
      %v1147 = vunpack.c.l.b16 %v1083
      %v1148 = vunpack.c.l.b16 %v1084
      %v1149 = vunpack.c.l.b16 %v1085
      %v1150 = vunpack.c.l.b16 %v1086
      %v1151 = vunpack.c.l.b16 %v1087
      %v1152 = vunpack.c.l.b16 %v1088
      %v1153 = vunpack.c.l.b16 %v1089
      %v1154 = vunpack.c.l.b16 %v1090
      %v1155 = vunpack.c.l.b16 %v1091
      %v1156 = vunpack.c.l.b16 %v1092
      %v1157 = vunpack.c.l.b16 %v1093
      %v1158 = vunpack.c.l.b16 %v1094
      %v1159 = vunpack.c.l.b16 %v1095
      %v1160 = vunpack.c.l.b16 %v1096
      %v1161 = vunpack.c.l.b16 %v1097
      %v1162 = vunpack.c.l.b16 %v1098
      %v1163 = vunpack.c.l.b16 %v1099
      %v1164 = vunpack.c.l.b16 %v1100
      %v1165 = vunpack.c.l.b16 %v1101
      %v1166 = vunpack.c.l.b16 %v1102
      %v1167 = vunpack.c.l.b16 %v1103
      %v1168 = vunpack.c.l.b16 %v1104
      %v1169 = vunpack.c.l.b16 %v1105
      %v1170 = vunpack.c.l.b16 %v1106
      %v1171 = vunpack.c.l.b16 %v1107
      %v1172 = vpack.c.b16 %v1141, %v1140
      %v1173 = vpack.c.b16 %v1143, %v1142
      %v1174 = vpack.c.b16 %v1145, %v1144
      %v1175 = vpack.c.b16 %v1147, %v1146
      %v1176 = vpack.c.b16 %v1149, %v1148
      %v1177 = vpack.c.b16 %v1151, %v1150
      %v1178 = vpack.c.b16 %v1153, %v1152
      %v1179 = vpack.c.b16 %v1155, %v1154
      %v1180 = vpack.c.b16 %v1157, %v1156
      %v1181 = vpack.c.b16 %v1159, %v1158
      %v1182 = vpack.c.b16 %v1161, %v1160
      %v1183 = vpack.c.b16 %v1163, %v1162
      %v1184 = vpack.c.b16 %v1165, %v1164
      %v1185 = vpack.c.b16 %v1167, %v1166
      %v1186 = vpack.c.b16 %v1169, %v1168
      %v1187 = vpack.c.b16 %v1171, %v1170
      %vm1204 = vcmask 31744
      %1205 = vst.msk [vmem:[#allocation4] sm:$0xff] %vm1204, %v1172
      %1206 = vst.msk [vmem:[#allocation4 + $0x8] sm:$0xff] %vm1204, %v1173
      %1207 = vst.msk [vmem:[#allocation4 + $0x10] sm:$0xff] %vm1204, %v1174
      %1208 = vst.msk [vmem:[#allocation4 + $0x18] sm:$0xff] %vm1204, %v1175
      %1209 = vst.msk [vmem:[#allocation4 + $0x20] sm:$0xff] %vm1204, %v1176
      %1210 = vst.msk [vmem:[#allocation4 + $0x28] sm:$0xff] %vm1204, %v1177
      %1211 = vst.msk [vmem:[#allocation4 + $0x30] sm:$0xff] %vm1204, %v1178
      %1212 = vst.msk [vmem:[#allocation4 + $0x38] sm:$0xff] %vm1204, %v1179
      %1213 = vst.msk [vmem:[#allocation4 + $0x40] sm:$0xff] %vm1204, %v1180
      %1214 = vst.msk [vmem:[#allocation4 + $0x48] sm:$0xff] %vm1204, %v1181
      %1215 = vst.msk [vmem:[#allocation4 + $0x50] sm:$0xff] %vm1204, %v1182
      %1216 = vst.msk [vmem:[#allocation4 + $0x58] sm:$0xff] %vm1204, %v1183
      %1217 = vst.msk [vmem:[#allocation4 + $0x60] sm:$0xff] %vm1204, %v1184
      %1218 = vst.msk [vmem:[#allocation4 + $0x68] sm:$0xff] %vm1204, %v1185
      %1219 = vst.msk [vmem:[#allocation4 + $0x70] sm:$0xff] %vm1204, %v1186
      %1220 = vst.msk [vmem:[#allocation4 + $0x78] sm:$0xff] %vm1204, %v1187
      %v1221 = vld [vmem:[#allocation2] sm:$0xf]
      %v1222 = vld [vmem:[#allocation2 + $0x4] sm:$0xf]
      %v1223 = vld [vmem:[#allocation2 + $0x8] sm:$0x1]
      %v1224 = vld [vmem:[#allocation2 + $0xc] sm:$0xf]
      %v1225 = vld [vmem:[#allocation2 + $0x10] sm:$0xf]
      %v1226 = vld [vmem:[#allocation2 + $0x14] sm:$0x1]
      %v1227 = vld [vmem:[#allocation2 + $0x18] sm:$0xf]
      %v1228 = vld [vmem:[#allocation2 + $0x1c] sm:$0xf]
      %v1229 = vld [vmem:[#allocation2 + $0x20] sm:$0x1]
      %v1230 = vld [vmem:[#allocation2 + $0x24] sm:$0xf]
      %v1231 = vld [vmem:[#allocation2 + $0x28] sm:$0xf]
      %v1232 = vld [vmem:[#allocation2 + $0x2c] sm:$0x1]
      %v1233 = vld [vmem:[#allocation2 + $0x30] sm:$0xf]
      %v1234 = vld [vmem:[#allocation2 + $0x34] sm:$0xf]
      %v1235 = vld [vmem:[#allocation2 + $0x38] sm:$0x1]
      %v1236 = vld [vmem:[#allocation2 + $0x3c] sm:$0xf]
      %v1237 = vld [vmem:[#allocation2 + $0x40] sm:$0xf]
      %v1238 = vld [vmem:[#allocation2 + $0x44] sm:$0x1]
      %v1239 = vld [vmem:[#allocation2 + $0x48] sm:$0xf]
      %v1240 = vld [vmem:[#allocation2 + $0x4c] sm:$0xf]
      %v1241 = vld [vmem:[#allocation2 + $0x50] sm:$0x1]
      %v1242 = vld [vmem:[#allocation2 + $0x54] sm:$0xf]
      %v1243 = vld [vmem:[#allocation2 + $0x58] sm:$0xf]
      %v1244 = vld [vmem:[#allocation2 + $0x5c] sm:$0x1]
      %v1245 = vld [vmem:[#allocation2 + $0x60] sm:$0xf]
      %v1246 = vld [vmem:[#allocation2 + $0x64] sm:$0xf]
      %v1247 = vld [vmem:[#allocation2 + $0x68] sm:$0x1]
      %v1248 = vld [vmem:[#allocation2 + $0x6c] sm:$0xf]
      %v1249 = vld [vmem:[#allocation2 + $0x70] sm:$0xf]
      %v1250 = vld [vmem:[#allocation2 + $0x74] sm:$0x1]
      %v1251 = vld [vmem:[#allocation2 + $0x78] sm:$0xf]
      %v1252 = vld [vmem:[#allocation2 + $0x7c] sm:$0xf]
      %v1253 = vld [vmem:[#allocation2 + $0x80] sm:$0x1]
      %v1254 = vld [vmem:[#allocation2 + $0x84] sm:$0xf]
      %v1255 = vld [vmem:[#allocation2 + $0x88] sm:$0xf]
      %v1256 = vld [vmem:[#allocation2 + $0x8c] sm:$0x1]
      %v1257 = vld [vmem:[#allocation2 + $0x90] sm:$0xf]
      %v1258 = vld [vmem:[#allocation2 + $0x94] sm:$0xf]
      %v1259 = vld [vmem:[#allocation2 + $0x98] sm:$0x1]
      %v1260 = vld [vmem:[#allocation2 + $0x9c] sm:$0xf]
      %v1261 = vld [vmem:[#allocation2 + $0xa0] sm:$0xf]
      %v1262 = vld [vmem:[#allocation2 + $0xa4] sm:$0x1]
      %v1263 = vld [vmem:[#allocation2 + $0xa8] sm:$0xf]
      %v1264 = vld [vmem:[#allocation2 + $0xac] sm:$0xf]
      %v1265 = vld [vmem:[#allocation2 + $0xb0] sm:$0x1]
      %v1266 = vld [vmem:[#allocation2 + $0xb4] sm:$0xf]
      %v1267 = vld [vmem:[#allocation2 + $0xb8] sm:$0xf]
      %v1268 = vld [vmem:[#allocation2 + $0xbc] sm:$0x1]
      %vm1269 = vsmask.f32 3328
      %vm1270 = vsmask.f32 7440
      %vm1271 = vmor %vm1269, %vm1270
      %v1273 = vshrl.u32 %v1221, 16
      %v1275 = vrot.slane %v1273, 4
      %v1276 = vshll.u32 %v1221, 16
      %v1278 = vrot.slane %v1276, 5
      %v1279 = vor.u32 %v1275, %v1278
      %v1280 = vrot.slane %v1279, 4
      %v1282 = vshll.u32 %v1222, 16
      %v1284 = vrot.slane %v1282, 5
      %v1285 = vsel %vm1271, %v1280, %v1284
      %v1286 = vshrl.u32 %v1222, 16
      %v1288 = vrot.slane %v1286, 4
      %v1289 = vor.u32 %v1288, %v1284
      %v1290 = vrot.slane %v1289, 4
      %v1292 = vshll.u32 %v1223, 16
      %v1294 = vrot.slane %v1292, 5
      %v1295 = vsel %vm1271, %v1290, %v1294
      %v1297 = vshrl.u32 %v1224, 16
      %v1299 = vrot.slane %v1297, 4
      %v1300 = vshll.u32 %v1224, 16
      %v1302 = vrot.slane %v1300, 5
      %v1303 = vor.u32 %v1299, %v1302
      %v1304 = vrot.slane %v1303, 4
      %v1306 = vshll.u32 %v1225, 16
      %v1308 = vrot.slane %v1306, 5
      %v1309 = vsel %vm1271, %v1304, %v1308
      %v1310 = vshrl.u32 %v1225, 16
      %v1312 = vrot.slane %v1310, 4
      %v1313 = vor.u32 %v1312, %v1308
      %v1314 = vrot.slane %v1313, 4
      %v1316 = vshll.u32 %v1226, 16
      %v1318 = vrot.slane %v1316, 5
      %v1319 = vsel %vm1271, %v1314, %v1318
      %v1321 = vshrl.u32 %v1227, 16
      %v1323 = vrot.slane %v1321, 4
      %v1324 = vshll.u32 %v1227, 16
      %v1326 = vrot.slane %v1324, 5
      %v1327 = vor.u32 %v1323, %v1326
      %v1328 = vrot.slane %v1327, 4
      %v1330 = vshll.u32 %v1228, 16
      %v1332 = vrot.slane %v1330, 5
      %v1333 = vsel %vm1271, %v1328, %v1332
      %v1334 = vshrl.u32 %v1228, 16
      %v1336 = vrot.slane %v1334, 4
      %v1337 = vor.u32 %v1336, %v1332
      %v1338 = vrot.slane %v1337, 4
      %v1340 = vshll.u32 %v1229, 16
      %v1342 = vrot.slane %v1340, 5
      %v1343 = vsel %vm1271, %v1338, %v1342
      %v1345 = vshrl.u32 %v1230, 16
      %v1347 = vrot.slane %v1345, 4
      %v1348 = vshll.u32 %v1230, 16
      %v1350 = vrot.slane %v1348, 5
      %v1351 = vor.u32 %v1347, %v1350
      %v1352 = vrot.slane %v1351, 4
      %v1354 = vshll.u32 %v1231, 16
      %v1356 = vrot.slane %v1354, 5
      %v1357 = vsel %vm1271, %v1352, %v1356
      %v1358 = vshrl.u32 %v1231, 16
      %v1360 = vrot.slane %v1358, 4
      %v1361 = vor.u32 %v1360, %v1356
      %v1362 = vrot.slane %v1361, 4
      %v1364 = vshll.u32 %v1232, 16
      %v1366 = vrot.slane %v1364, 5
      %v1367 = vsel %vm1271, %v1362, %v1366
      %v1369 = vshrl.u32 %v1233, 16
      %v1371 = vrot.slane %v1369, 4
      %v1372 = vshll.u32 %v1233, 16
      %v1374 = vrot.slane %v1372, 5
      %v1375 = vor.u32 %v1371, %v1374
      %v1376 = vrot.slane %v1375, 4
      %v1378 = vshll.u32 %v1234, 16
      %v1380 = vrot.slane %v1378, 5
      %v1381 = vsel %vm1271, %v1376, %v1380
      %v1382 = vshrl.u32 %v1234, 16
      %v1384 = vrot.slane %v1382, 4
      %v1385 = vor.u32 %v1384, %v1380
      %v1386 = vrot.slane %v1385, 4
      %v1388 = vshll.u32 %v1235, 16
      %v1390 = vrot.slane %v1388, 5
      %v1391 = vsel %vm1271, %v1386, %v1390
      %v1393 = vshrl.u32 %v1236, 16
      %v1395 = vrot.slane %v1393, 4
      %v1396 = vshll.u32 %v1236, 16
      %v1398 = vrot.slane %v1396, 5
      %v1399 = vor.u32 %v1395, %v1398
      %v1400 = vrot.slane %v1399, 4
      %v1402 = vshll.u32 %v1237, 16
      %v1404 = vrot.slane %v1402, 5
      %v1405 = vsel %vm1271, %v1400, %v1404
      %v1406 = vshrl.u32 %v1237, 16
      %v1408 = vrot.slane %v1406, 4
      %v1409 = vor.u32 %v1408, %v1404
      %v1410 = vrot.slane %v1409, 4
      %v1412 = vshll.u32 %v1238, 16
      %v1414 = vrot.slane %v1412, 5
      %v1415 = vsel %vm1271, %v1410, %v1414
      %v1417 = vshrl.u32 %v1239, 16
      %v1419 = vrot.slane %v1417, 4
      %v1420 = vshll.u32 %v1239, 16
      %v1422 = vrot.slane %v1420, 5
      %v1423 = vor.u32 %v1419, %v1422
      %v1424 = vrot.slane %v1423, 4
      %v1426 = vshll.u32 %v1240, 16
      %v1428 = vrot.slane %v1426, 5
      %v1429 = vsel %vm1271, %v1424, %v1428
      %v1430 = vshrl.u32 %v1240, 16
      %v1432 = vrot.slane %v1430, 4
      %v1433 = vor.u32 %v1432, %v1428
      %v1434 = vrot.slane %v1433, 4
      %v1436 = vshll.u32 %v1241, 16
      %v1438 = vrot.slane %v1436, 5
      %v1439 = vsel %vm1271, %v1434, %v1438
      %v1441 = vshrl.u32 %v1242, 16
      %v1443 = vrot.slane %v1441, 4
      %v1444 = vshll.u32 %v1242, 16
      %v1446 = vrot.slane %v1444, 5
      %v1447 = vor.u32 %v1443, %v1446
      %v1448 = vrot.slane %v1447, 4
      %v1450 = vshll.u32 %v1243, 16
      %v1452 = vrot.slane %v1450, 5
      %v1453 = vsel %vm1271, %v1448, %v1452
      %v1454 = vshrl.u32 %v1243, 16
      %v1456 = vrot.slane %v1454, 4
      %v1457 = vor.u32 %v1456, %v1452
      %v1458 = vrot.slane %v1457, 4
      %v1460 = vshll.u32 %v1244, 16
      %v1462 = vrot.slane %v1460, 5
      %v1463 = vsel %vm1271, %v1458, %v1462
      %v1465 = vshrl.u32 %v1245, 16
      %v1467 = vrot.slane %v1465, 4
      %v1468 = vshll.u32 %v1245, 16
      %v1470 = vrot.slane %v1468, 5
      %v1471 = vor.u32 %v1467, %v1470
      %v1472 = vrot.slane %v1471, 4
      %v1474 = vshll.u32 %v1246, 16
      %v1476 = vrot.slane %v1474, 5
      %v1477 = vsel %vm1271, %v1472, %v1476
      %v1478 = vshrl.u32 %v1246, 16
      %v1480 = vrot.slane %v1478, 4
      %v1481 = vor.u32 %v1480, %v1476
      %v1482 = vrot.slane %v1481, 4
      %v1484 = vshll.u32 %v1247, 16
      %v1486 = vrot.slane %v1484, 5
      %v1487 = vsel %vm1271, %v1482, %v1486
      %v1489 = vshrl.u32 %v1248, 16
      %v1491 = vrot.slane %v1489, 4
      %v1492 = vshll.u32 %v1248, 16
      %v1494 = vrot.slane %v1492, 5
      %v1495 = vor.u32 %v1491, %v1494
      %v1496 = vrot.slane %v1495, 4
      %v1498 = vshll.u32 %v1249, 16
      %v1500 = vrot.slane %v1498, 5
      %v1501 = vsel %vm1271, %v1496, %v1500
      %v1502 = vshrl.u32 %v1249, 16
      %v1504 = vrot.slane %v1502, 4
      %v1505 = vor.u32 %v1504, %v1500
      %v1506 = vrot.slane %v1505, 4
      %v1508 = vshll.u32 %v1250, 16
      %v1510 = vrot.slane %v1508, 5
      %v1511 = vsel %vm1271, %v1506, %v1510
      %v1513 = vshrl.u32 %v1251, 16
      %v1515 = vrot.slane %v1513, 4
      %v1516 = vshll.u32 %v1251, 16
      %v1518 = vrot.slane %v1516, 5
      %v1519 = vor.u32 %v1515, %v1518
      %v1520 = vrot.slane %v1519, 4
      %v1522 = vshll.u32 %v1252, 16
      %v1524 = vrot.slane %v1522, 5
      %v1525 = vsel %vm1271, %v1520, %v1524
      %v1526 = vshrl.u32 %v1252, 16
      %v1528 = vrot.slane %v1526, 4
      %v1529 = vor.u32 %v1528, %v1524
      %v1530 = vrot.slane %v1529, 4
      %v1532 = vshll.u32 %v1253, 16
      %v1534 = vrot.slane %v1532, 5
      %v1535 = vsel %vm1271, %v1530, %v1534
      %v1537 = vshrl.u32 %v1254, 16
      %v1539 = vrot.slane %v1537, 4
      %v1540 = vshll.u32 %v1254, 16
      %v1542 = vrot.slane %v1540, 5
      %v1543 = vor.u32 %v1539, %v1542
      %v1544 = vrot.slane %v1543, 4
      %v1546 = vshll.u32 %v1255, 16
      %v1548 = vrot.slane %v1546, 5
      %v1549 = vsel %vm1271, %v1544, %v1548
      %v1550 = vshrl.u32 %v1255, 16
      %v1552 = vrot.slane %v1550, 4
      %v1553 = vor.u32 %v1552, %v1548
      %v1554 = vrot.slane %v1553, 4
      %v1556 = vshll.u32 %v1256, 16
      %v1558 = vrot.slane %v1556, 5
      %v1559 = vsel %vm1271, %v1554, %v1558
      %v1561 = vshrl.u32 %v1257, 16
      %v1563 = vrot.slane %v1561, 4
      %v1564 = vshll.u32 %v1257, 16
      %v1566 = vrot.slane %v1564, 5
      %v1567 = vor.u32 %v1563, %v1566
      %v1568 = vrot.slane %v1567, 4
      %v1570 = vshll.u32 %v1258, 16
      %v1572 = vrot.slane %v1570, 5
      %v1573 = vsel %vm1271, %v1568, %v1572
      %v1574 = vshrl.u32 %v1258, 16
      %v1576 = vrot.slane %v1574, 4
      %v1577 = vor.u32 %v1576, %v1572
      %v1578 = vrot.slane %v1577, 4
      %v1580 = vshll.u32 %v1259, 16
      %v1582 = vrot.slane %v1580, 5
      %v1583 = vsel %vm1271, %v1578, %v1582
      %v1585 = vshrl.u32 %v1260, 16
      %v1587 = vrot.slane %v1585, 4
      %v1588 = vshll.u32 %v1260, 16
      %v1590 = vrot.slane %v1588, 5
      %v1591 = vor.u32 %v1587, %v1590
      %v1592 = vrot.slane %v1591, 4
      %v1594 = vshll.u32 %v1261, 16
      %v1596 = vrot.slane %v1594, 5
      %v1597 = vsel %vm1271, %v1592, %v1596
      %v1598 = vshrl.u32 %v1261, 16
      %v1600 = vrot.slane %v1598, 4
      %v1601 = vor.u32 %v1600, %v1596
      %v1602 = vrot.slane %v1601, 4
      %v1604 = vshll.u32 %v1262, 16
      %v1606 = vrot.slane %v1604, 5
      %v1607 = vsel %vm1271, %v1602, %v1606
      %v1609 = vshrl.u32 %v1263, 16
      %v1611 = vrot.slane %v1609, 4
      %v1612 = vshll.u32 %v1263, 16
      %v1614 = vrot.slane %v1612, 5
      %v1615 = vor.u32 %v1611, %v1614
      %v1616 = vrot.slane %v1615, 4
      %v1618 = vshll.u32 %v1264, 16
      %v1620 = vrot.slane %v1618, 5
      %v1621 = vsel %vm1271, %v1616, %v1620
      %v1622 = vshrl.u32 %v1264, 16
      %v1624 = vrot.slane %v1622, 4
      %v1625 = vor.u32 %v1624, %v1620
      %v1626 = vrot.slane %v1625, 4
      %v1628 = vshll.u32 %v1265, 16
      %v1630 = vrot.slane %v1628, 5
      %v1631 = vsel %vm1271, %v1626, %v1630
      %v1633 = vshrl.u32 %v1266, 16
      %v1635 = vrot.slane %v1633, 4
      %v1636 = vshll.u32 %v1266, 16
      %v1638 = vrot.slane %v1636, 5
      %v1639 = vor.u32 %v1635, %v1638
      %v1640 = vrot.slane %v1639, 4
      %v1642 = vshll.u32 %v1267, 16
      %v1644 = vrot.slane %v1642, 5
      %v1645 = vsel %vm1271, %v1640, %v1644
      %v1646 = vshrl.u32 %v1267, 16
      %v1648 = vrot.slane %v1646, 4
      %v1649 = vor.u32 %v1648, %v1644
      %v1650 = vrot.slane %v1649, 4
      %v1652 = vshll.u32 %v1268, 16
      %v1654 = vrot.slane %v1652, 5
      %v1655 = vsel %vm1271, %v1650, %v1654
      %v1656 = vunpack.c.l.b16 %v1285
      %v1657 = vunpack.c.l.b16 %v1295
      %v1658 = vunpack.c.l.b16 %v1309
      %v1659 = vunpack.c.l.b16 %v1319
      %v1660 = vunpack.c.l.b16 %v1333
      %v1661 = vunpack.c.l.b16 %v1343
      %v1662 = vunpack.c.l.b16 %v1357
      %v1663 = vunpack.c.l.b16 %v1367
      %v1664 = vunpack.c.l.b16 %v1381
      %v1665 = vunpack.c.l.b16 %v1391
      %v1666 = vunpack.c.l.b16 %v1405
      %v1667 = vunpack.c.l.b16 %v1415
      %v1668 = vunpack.c.l.b16 %v1429
      %v1669 = vunpack.c.l.b16 %v1439
      %v1670 = vunpack.c.l.b16 %v1453
      %v1671 = vunpack.c.l.b16 %v1463
      %v1672 = vunpack.c.l.b16 %v1477
      %v1673 = vunpack.c.l.b16 %v1487
      %v1674 = vunpack.c.l.b16 %v1501
      %v1675 = vunpack.c.l.b16 %v1511
      %v1676 = vunpack.c.l.b16 %v1525
      %v1677 = vunpack.c.l.b16 %v1535
      %v1678 = vunpack.c.l.b16 %v1549
      %v1679 = vunpack.c.l.b16 %v1559
      %v1680 = vunpack.c.l.b16 %v1573
      %v1681 = vunpack.c.l.b16 %v1583
      %v1682 = vunpack.c.l.b16 %v1597
      %v1683 = vunpack.c.l.b16 %v1607
      %v1684 = vunpack.c.l.b16 %v1621
      %v1685 = vunpack.c.l.b16 %v1631
      %v1686 = vunpack.c.l.b16 %v1645
      %v1687 = vunpack.c.l.b16 %v1655
      %v1688 = vpack.c.b16 %v1657, %v1656
      %v1689 = vpack.c.b16 %v1659, %v1658
      %v1690 = vpack.c.b16 %v1661, %v1660
      %v1691 = vpack.c.b16 %v1663, %v1662
      %v1692 = vpack.c.b16 %v1665, %v1664
      %v1693 = vpack.c.b16 %v1667, %v1666
      %v1694 = vpack.c.b16 %v1669, %v1668
      %v1695 = vpack.c.b16 %v1671, %v1670
      %v1696 = vpack.c.b16 %v1673, %v1672
      %v1697 = vpack.c.b16 %v1675, %v1674
      %v1698 = vpack.c.b16 %v1677, %v1676
      %v1699 = vpack.c.b16 %v1679, %v1678
      %v1700 = vpack.c.b16 %v1681, %v1680
      %v1701 = vpack.c.b16 %v1683, %v1682
      %v1702 = vpack.c.b16 %v1685, %v1684
      %v1703 = vpack.c.b16 %v1687, %v1686
      %1704 = vrot.lane.b32.xlu0 %v1688, 4
      %v1705 = vpop.permute.xlu0 %1704
      %1706 = vrot.lane.b32.xlu0 %v1689, 4
      %v1707 = vpop.permute.xlu0 %1706
      %1708 = vrot.lane.b32.xlu0 %v1690, 4
      %v1709 = vpop.permute.xlu0 %1708
      %1710 = vrot.lane.b32.xlu0 %v1691, 4
      %v1711 = vpop.permute.xlu0 %1710
      %1712 = vrot.lane.b32.xlu0 %v1692, 4
      %v1713 = vpop.permute.xlu0 %1712
      %1714 = vrot.lane.b32.xlu0 %v1693, 4
      %v1715 = vpop.permute.xlu0 %1714
      %1716 = vrot.lane.b32.xlu0 %v1694, 4
      %v1717 = vpop.permute.xlu0 %1716
      %1718 = vrot.lane.b32.xlu0 %v1695, 4
      %v1719 = vpop.permute.xlu0 %1718
      %1720 = vrot.lane.b32.xlu0 %v1696, 4
      %v1721 = vpop.permute.xlu0 %1720
      %1722 = vrot.lane.b32.xlu0 %v1697, 4
      %v1723 = vpop.permute.xlu0 %1722
      %1724 = vrot.lane.b32.xlu0 %v1698, 4
      %v1725 = vpop.permute.xlu0 %1724
      %1726 = vrot.lane.b32.xlu0 %v1699, 4
      %v1727 = vpop.permute.xlu0 %1726
      %1728 = vrot.lane.b32.xlu0 %v1700, 4
      %v1729 = vpop.permute.xlu0 %1728
      %1730 = vrot.lane.b32.xlu0 %v1701, 4
      %v1731 = vpop.permute.xlu0 %1730
      %1732 = vrot.lane.b32.xlu0 %v1702, 4
      %v1733 = vpop.permute.xlu0 %1732
      %1734 = vrot.lane.b32.xlu0 %v1703, 4
      %v1735 = vpop.permute.xlu0 %1734
      %vm1752 = vcmask 64544
      %1753 = vst.msk [vmem:[#allocation4] sm:$0xff] %vm1752, %v1705
      %1754 = vst.msk [vmem:[#allocation4 + $0x8] sm:$0xff] %vm1752, %v1707
      %1755 = vst.msk [vmem:[#allocation4 + $0x10] sm:$0xff] %vm1752, %v1709
      %1756 = vst.msk [vmem:[#allocation4 + $0x18] sm:$0xff] %vm1752, %v1711
      %1757 = vst.msk [vmem:[#allocation4 + $0x20] sm:$0xff] %vm1752, %v1713
      %1758 = vst.msk [vmem:[#allocation4 + $0x28] sm:$0xff] %vm1752, %v1715
      %1759 = vst.msk [vmem:[#allocation4 + $0x30] sm:$0xff] %vm1752, %v1717
      %1760 = vst.msk [vmem:[#allocation4 + $0x38] sm:$0xff] %vm1752, %v1719
      %1761 = vst.msk [vmem:[#allocation4 + $0x40] sm:$0xff] %vm1752, %v1721
      %1762 = vst.msk [vmem:[#allocation4 + $0x48] sm:$0xff] %vm1752, %v1723
      %1763 = vst.msk [vmem:[#allocation4 + $0x50] sm:$0xff] %vm1752, %v1725
      %1764 = vst.msk [vmem:[#allocation4 + $0x58] sm:$0xff] %vm1752, %v1727
      %1765 = vst.msk [vmem:[#allocation4 + $0x60] sm:$0xff] %vm1752, %v1729
      %1766 = vst.msk [vmem:[#allocation4 + $0x68] sm:$0xff] %vm1752, %v1731
      %1767 = vst.msk [vmem:[#allocation4 + $0x70] sm:$0xff] %vm1752, %v1733
      %1768 = vst.msk [vmem:[#allocation4 + $0x78] sm:$0xff] %vm1752, %v1735
      %v1769 = vld [vmem:[#allocation2] sm:$0xe]
      %v1770 = vld [vmem:[#allocation2 + $0x4] sm:$0xf]
      %v1771 = vld [vmem:[#allocation2 + $0x8] sm:$0x1]
      %v1772 = vld [vmem:[#allocation2 + $0xc] sm:$0xe]
      %v1773 = vld [vmem:[#allocation2 + $0x10] sm:$0xf]
      %v1774 = vld [vmem:[#allocation2 + $0x14] sm:$0x1]
      %v1775 = vld [vmem:[#allocation2 + $0x18] sm:$0xe]
      %v1776 = vld [vmem:[#allocation2 + $0x1c] sm:$0xf]
      %v1777 = vld [vmem:[#allocation2 + $0x20] sm:$0x1]
      %v1778 = vld [vmem:[#allocation2 + $0x24] sm:$0xe]
      %v1779 = vld [vmem:[#allocation2 + $0x28] sm:$0xf]
      %v1780 = vld [vmem:[#allocation2 + $0x2c] sm:$0x1]
      %v1781 = vld [vmem:[#allocation2 + $0x30] sm:$0xe]
      %v1782 = vld [vmem:[#allocation2 + $0x34] sm:$0xf]
      %v1783 = vld [vmem:[#allocation2 + $0x38] sm:$0x1]
      %v1784 = vld [vmem:[#allocation2 + $0x3c] sm:$0xe]
      %v1785 = vld [vmem:[#allocation2 + $0x40] sm:$0xf]
      %v1786 = vld [vmem:[#allocation2 + $0x44] sm:$0x1]
      %v1787 = vld [vmem:[#allocation2 + $0x48] sm:$0xe]
      %v1788 = vld [vmem:[#allocation2 + $0x4c] sm:$0xf]
      %v1789 = vld [vmem:[#allocation2 + $0x50] sm:$0x1]
      %v1790 = vld [vmem:[#allocation2 + $0x54] sm:$0xe]
      %v1791 = vld [vmem:[#allocation2 + $0x58] sm:$0xf]
      %v1792 = vld [vmem:[#allocation2 + $0x5c] sm:$0x1]
      %v1793 = vld [vmem:[#allocation2 + $0x60] sm:$0xe]
      %v1794 = vld [vmem:[#allocation2 + $0x64] sm:$0xf]
      %v1795 = vld [vmem:[#allocation2 + $0x68] sm:$0x1]
      %v1796 = vld [vmem:[#allocation2 + $0x6c] sm:$0xe]
      %v1797 = vld [vmem:[#allocation2 + $0x70] sm:$0xf]
      %v1798 = vld [vmem:[#allocation2 + $0x74] sm:$0x1]
      %v1799 = vld [vmem:[#allocation2 + $0x78] sm:$0xe]
      %v1800 = vld [vmem:[#allocation2 + $0x7c] sm:$0xf]
      %v1801 = vld [vmem:[#allocation2 + $0x80] sm:$0x1]
      %v1802 = vld [vmem:[#allocation2 + $0x84] sm:$0xe]
      %v1803 = vld [vmem:[#allocation2 + $0x88] sm:$0xf]
      %v1804 = vld [vmem:[#allocation2 + $0x8c] sm:$0x1]
      %v1805 = vld [vmem:[#allocation2 + $0x90] sm:$0xe]
      %v1806 = vld [vmem:[#allocation2 + $0x94] sm:$0xf]
      %v1807 = vld [vmem:[#allocation2 + $0x98] sm:$0x1]
      %v1808 = vld [vmem:[#allocation2 + $0x9c] sm:$0xe]
      %v1809 = vld [vmem:[#allocation2 + $0xa0] sm:$0xf]
      %v1810 = vld [vmem:[#allocation2 + $0xa4] sm:$0x1]
      %v1811 = vld [vmem:[#allocation2 + $0xa8] sm:$0xe]
      %v1812 = vld [vmem:[#allocation2 + $0xac] sm:$0xf]
      %v1813 = vld [vmem:[#allocation2 + $0xb0] sm:$0x1]
      %v1814 = vld [vmem:[#allocation2 + $0xb4] sm:$0xe]
      %v1815 = vld [vmem:[#allocation2 + $0xb8] sm:$0xf]
      %v1816 = vld [vmem:[#allocation2 + $0xbc] sm:$0x1]
      %vm1865 = vcmask 1042432
      %vm1866 = vcmask 1046532
      %vm1867 = vmor %vm1865, %vm1866
      %v1868 = vrot.slane %v1769, 5
      %v1869 = vrot.slane %v1868, 4
      %v1870 = vrot.slane %v1770, 5
      %v1871 = vsel %vm1867, %v1869, %v1870
      %v1872 = vrot.slane %v1870, 4
      %v1873 = vrot.slane %v1771, 5
      %v1874 = vsel %vm1867, %v1872, %v1873
      %v1875 = vrot.slane %v1772, 5
      %v1876 = vrot.slane %v1875, 4
      %v1877 = vrot.slane %v1773, 5
      %v1878 = vsel %vm1867, %v1876, %v1877
      %v1879 = vrot.slane %v1877, 4
      %v1880 = vrot.slane %v1774, 5
      %v1881 = vsel %vm1867, %v1879, %v1880
      %v1882 = vrot.slane %v1775, 5
      %v1883 = vrot.slane %v1882, 4
      %v1884 = vrot.slane %v1776, 5
      %v1885 = vsel %vm1867, %v1883, %v1884
      %v1886 = vrot.slane %v1884, 4
      %v1887 = vrot.slane %v1777, 5
      %v1888 = vsel %vm1867, %v1886, %v1887
      %v1889 = vrot.slane %v1778, 5
      %v1890 = vrot.slane %v1889, 4
      %v1891 = vrot.slane %v1779, 5
      %v1892 = vsel %vm1867, %v1890, %v1891
      %v1893 = vrot.slane %v1891, 4
      %v1894 = vrot.slane %v1780, 5
      %v1895 = vsel %vm1867, %v1893, %v1894
      %v1896 = vrot.slane %v1781, 5
      %v1897 = vrot.slane %v1896, 4
      %v1898 = vrot.slane %v1782, 5
      %v1899 = vsel %vm1867, %v1897, %v1898
      %v1900 = vrot.slane %v1898, 4
      %v1901 = vrot.slane %v1783, 5
      %v1902 = vsel %vm1867, %v1900, %v1901
      %v1903 = vrot.slane %v1784, 5
      %v1904 = vrot.slane %v1903, 4
      %v1905 = vrot.slane %v1785, 5
      %v1906 = vsel %vm1867, %v1904, %v1905
      %v1907 = vrot.slane %v1905, 4
      %v1908 = vrot.slane %v1786, 5
      %v1909 = vsel %vm1867, %v1907, %v1908
      %v1910 = vrot.slane %v1787, 5
      %v1911 = vrot.slane %v1910, 4
      %v1912 = vrot.slane %v1788, 5
      %v1913 = vsel %vm1867, %v1911, %v1912
      %v1914 = vrot.slane %v1912, 4
      %v1915 = vrot.slane %v1789, 5
      %v1916 = vsel %vm1867, %v1914, %v1915
      %v1917 = vrot.slane %v1790, 5
      %v1918 = vrot.slane %v1917, 4
      %v1919 = vrot.slane %v1791, 5
      %v1920 = vsel %vm1867, %v1918, %v1919
      %v1921 = vrot.slane %v1919, 4
      %v1922 = vrot.slane %v1792, 5
      %v1923 = vsel %vm1867, %v1921, %v1922
      %v1924 = vrot.slane %v1793, 5
      %v1925 = vrot.slane %v1924, 4
      %v1926 = vrot.slane %v1794, 5
      %v1927 = vsel %vm1867, %v1925, %v1926
      %v1928 = vrot.slane %v1926, 4
      %v1929 = vrot.slane %v1795, 5
      %v1930 = vsel %vm1867, %v1928, %v1929
      %v1931 = vrot.slane %v1796, 5
      %v1932 = vrot.slane %v1931, 4
      %v1933 = vrot.slane %v1797, 5
      %v1934 = vsel %vm1867, %v1932, %v1933
      %v1935 = vrot.slane %v1933, 4
      %v1936 = vrot.slane %v1798, 5
      %v1937 = vsel %vm1867, %v1935, %v1936
      %v1938 = vrot.slane %v1799, 5
      %v1939 = vrot.slane %v1938, 4
      %v1940 = vrot.slane %v1800, 5
      %v1941 = vsel %vm1867, %v1939, %v1940
      %v1942 = vrot.slane %v1940, 4
      %v1943 = vrot.slane %v1801, 5
      %v1944 = vsel %vm1867, %v1942, %v1943
      %v1945 = vrot.slane %v1802, 5
      %v1946 = vrot.slane %v1945, 4
      %v1947 = vrot.slane %v1803, 5
      %v1948 = vsel %vm1867, %v1946, %v1947
      %v1949 = vrot.slane %v1947, 4
      %v1950 = vrot.slane %v1804, 5
      %v1951 = vsel %vm1867, %v1949, %v1950
      %v1952 = vrot.slane %v1805, 5
      %v1953 = vrot.slane %v1952, 4
      %v1954 = vrot.slane %v1806, 5
      %v1955 = vsel %vm1867, %v1953, %v1954
      %v1956 = vrot.slane %v1954, 4
      %v1957 = vrot.slane %v1807, 5
      %v1958 = vsel %vm1867, %v1956, %v1957
      %v1959 = vrot.slane %v1808, 5
      %v1960 = vrot.slane %v1959, 4
      %v1961 = vrot.slane %v1809, 5
      %v1962 = vsel %vm1867, %v1960, %v1961
      %v1963 = vrot.slane %v1961, 4
      %v1964 = vrot.slane %v1810, 5
      %v1965 = vsel %vm1867, %v1963, %v1964
      %v1966 = vrot.slane %v1811, 5
      %v1967 = vrot.slane %v1966, 4
      %v1968 = vrot.slane %v1812, 5
      %v1969 = vsel %vm1867, %v1967, %v1968
      %v1970 = vrot.slane %v1968, 4
      %v1971 = vrot.slane %v1813, 5
      %v1972 = vsel %vm1867, %v1970, %v1971
      %v1973 = vrot.slane %v1814, 5
      %v1974 = vrot.slane %v1973, 4
      %v1975 = vrot.slane %v1815, 5
      %v1976 = vsel %vm1867, %v1974, %v1975
      %v1977 = vrot.slane %v1975, 4
      %v1978 = vrot.slane %v1816, 5
      %v1979 = vsel %vm1867, %v1977, %v1978
      %v1980 = vunpack.c.l.b16 %v1871
      %v1981 = vunpack.c.l.b16 %v1874
      %v1982 = vunpack.c.l.b16 %v1878
      %v1983 = vunpack.c.l.b16 %v1881
      %v1984 = vunpack.c.l.b16 %v1885
      %v1985 = vunpack.c.l.b16 %v1888
      %v1986 = vunpack.c.l.b16 %v1892
      %v1987 = vunpack.c.l.b16 %v1895
      %v1988 = vunpack.c.l.b16 %v1899
      %v1989 = vunpack.c.l.b16 %v1902
      %v1990 = vunpack.c.l.b16 %v1906
      %v1991 = vunpack.c.l.b16 %v1909
      %v1992 = vunpack.c.l.b16 %v1913
      %v1993 = vunpack.c.l.b16 %v1916
      %v1994 = vunpack.c.l.b16 %v1920
      %v1995 = vunpack.c.l.b16 %v1923
      %v1996 = vunpack.c.l.b16 %v1927
      %v1997 = vunpack.c.l.b16 %v1930
      %v1998 = vunpack.c.l.b16 %v1934
      %v1999 = vunpack.c.l.b16 %v1937
      %v2000 = vunpack.c.l.b16 %v1941
      %v2001 = vunpack.c.l.b16 %v1944
      %v2002 = vunpack.c.l.b16 %v1948
      %v2003 = vunpack.c.l.b16 %v1951
      %v2004 = vunpack.c.l.b16 %v1955
      %v2005 = vunpack.c.l.b16 %v1958
      %v2006 = vunpack.c.l.b16 %v1962
      %v2007 = vunpack.c.l.b16 %v1965
      %v2008 = vunpack.c.l.b16 %v1969
      %v2009 = vunpack.c.l.b16 %v1972
      %v2010 = vunpack.c.l.b16 %v1976
      %v2011 = vunpack.c.l.b16 %v1979
      %v2012 = vpack.c.b16 %v1981, %v1980
      %v2013 = vpack.c.b16 %v1983, %v1982
      %v2014 = vpack.c.b16 %v1985, %v1984
      %v2015 = vpack.c.b16 %v1987, %v1986
      %v2016 = vpack.c.b16 %v1989, %v1988
      %v2017 = vpack.c.b16 %v1991, %v1990
      %v2018 = vpack.c.b16 %v1993, %v1992
      %v2019 = vpack.c.b16 %v1995, %v1994
      %v2020 = vpack.c.b16 %v1997, %v1996
      %v2021 = vpack.c.b16 %v1999, %v1998
      %v2022 = vpack.c.b16 %v2001, %v2000
      %v2023 = vpack.c.b16 %v2003, %v2002
      %v2024 = vpack.c.b16 %v2005, %v2004
      %v2025 = vpack.c.b16 %v2007, %v2006
      %v2026 = vpack.c.b16 %v2009, %v2008
      %v2027 = vpack.c.b16 %v2011, %v2010
      %2028 = vrot.lane.b32.xlu0 %v2012, 8
      %v2029 = vpop.permute.xlu0 %2028
      %2030 = vrot.lane.b32.xlu0 %v2013, 8
      %v2031 = vpop.permute.xlu0 %2030
      %2032 = vrot.lane.b32.xlu0 %v2014, 8
      %v2033 = vpop.permute.xlu0 %2032
      %2034 = vrot.lane.b32.xlu0 %v2015, 8
      %v2035 = vpop.permute.xlu0 %2034
      %2036 = vrot.lane.b32.xlu0 %v2016, 8
      %v2037 = vpop.permute.xlu0 %2036
      %2038 = vrot.lane.b32.xlu0 %v2017, 8
      %v2039 = vpop.permute.xlu0 %2038
      %2040 = vrot.lane.b32.xlu0 %v2018, 8
      %v2041 = vpop.permute.xlu0 %2040
      %2042 = vrot.lane.b32.xlu0 %v2019, 8
      %v2043 = vpop.permute.xlu0 %2042
      %2044 = vrot.lane.b32.xlu0 %v2020, 8
      %v2045 = vpop.permute.xlu0 %2044
      %2046 = vrot.lane.b32.xlu0 %v2021, 8
      %v2047 = vpop.permute.xlu0 %2046
      %2048 = vrot.lane.b32.xlu0 %v2022, 8
      %v2049 = vpop.permute.xlu0 %2048
      %2050 = vrot.lane.b32.xlu0 %v2023, 8
      %v2051 = vpop.permute.xlu0 %2050
      %2052 = vrot.lane.b32.xlu0 %v2024, 8
      %v2053 = vpop.permute.xlu0 %2052
      %2054 = vrot.lane.b32.xlu0 %v2025, 8
      %v2055 = vpop.permute.xlu0 %2054
      %2056 = vrot.lane.b32.xlu0 %v2026, 8
      %v2057 = vpop.permute.xlu0 %2056
      %2058 = vrot.lane.b32.xlu0 %v2027, 8
      %v2059 = vpop.permute.xlu0 %2058
      %vm2076 = vcmask 97344
      %2077 = vst.msk [vmem:[#allocation4] sm:$0xff] %vm2076, %v2029
      %2078 = vst.msk [vmem:[#allocation4 + $0x8] sm:$0xff] %vm2076, %v2031
      %2079 = vst.msk [vmem:[#allocation4 + $0x10] sm:$0xff] %vm2076, %v2033
      %2080 = vst.msk [vmem:[#allocation4 + $0x18] sm:$0xff] %vm2076, %v2035
      %2081 = vst.msk [vmem:[#allocation4 + $0x20] sm:$0xff] %vm2076, %v2037
      %2082 = vst.msk [vmem:[#allocation4 + $0x28] sm:$0xff] %vm2076, %v2039
      %2083 = vst.msk [vmem:[#allocation4 + $0x30] sm:$0xff] %vm2076, %v2041
      %2084 = vst.msk [vmem:[#allocation4 + $0x38] sm:$0xff] %vm2076, %v2043
      %2085 = vst.msk [vmem:[#allocation4 + $0x40] sm:$0xff] %vm2076, %v2045
      %2086 = vst.msk [vmem:[#allocation4 + $0x48] sm:$0xff] %vm2076, %v2047
      %2087 = vst.msk [vmem:[#allocation4 + $0x50] sm:$0xff] %vm2076, %v2049
      %2088 = vst.msk [vmem:[#allocation4 + $0x58] sm:$0xff] %vm2076, %v2051
      %2089 = vst.msk [vmem:[#allocation4 + $0x60] sm:$0xff] %vm2076, %v2053
      %2090 = vst.msk [vmem:[#allocation4 + $0x68] sm:$0xff] %vm2076, %v2055
      %2091 = vst.msk [vmem:[#allocation4 + $0x70] sm:$0xff] %vm2076, %v2057
      %2092 = vst.msk [vmem:[#allocation4 + $0x78] sm:$0xff] %vm2076, %v2059
      %v2093 = vld [vmem:[%s957] sm:$0xf]
      %v2094 = vld [vmem:[%s957 + $0x4] sm:$0xf]
      %v2095 = vld [vmem:[%s957 + $0xc] sm:$0xf]
      %v2096 = vld [vmem:[%s957 + $0x10] sm:$0xf]
      %v2097 = vld [vmem:[%s957 + $0x18] sm:$0xf]
      %v2098 = vld [vmem:[%s957 + $0x1c] sm:$0xf]
      %v2099 = vld [vmem:[%s957 + $0x24] sm:$0xf]
      %v2100 = vld [vmem:[%s957 + $0x28] sm:$0xf]
      %v2101 = vld [vmem:[%s957 + $0x30] sm:$0xf]
      %v2102 = vld [vmem:[%s957 + $0x34] sm:$0xf]
      %v2103 = vld [vmem:[%s957 + $0x3c] sm:$0xf]
      %v2104 = vld [vmem:[%s957 + $0x40] sm:$0xf]
      %v2105 = vld [vmem:[%s957 + $0x48] sm:$0xf]
      %v2106 = vld [vmem:[%s957 + $0x4c] sm:$0xf]
      %v2107 = vld [vmem:[%s957 + $0x54] sm:$0xf]
      %v2108 = vld [vmem:[%s957 + $0x58] sm:$0xf]
      %v2109 = vld [vmem:[%s957 + $0x60] sm:$0xf]
      %v2110 = vld [vmem:[%s957 + $0x64] sm:$0xf]
      %v2111 = vld [vmem:[%s957 + $0x6c] sm:$0xf]
      %v2112 = vld [vmem:[%s957 + $0x70] sm:$0xf]
      %v2113 = vld [vmem:[%s957 + $0x78] sm:$0xf]
      %v2114 = vld [vmem:[%s957 + $0x7c] sm:$0xf]
      %v2115 = vld [vmem:[%s957 + $0x84] sm:$0xf]
      %v2116 = vld [vmem:[%s957 + $0x88] sm:$0xf]
      %v2117 = vld [vmem:[%s957 + $0x90] sm:$0xf]
      %v2118 = vld [vmem:[%s957 + $0x94] sm:$0xf]
      %v2119 = vld [vmem:[%s957 + $0x9c] sm:$0xf]
      %v2120 = vld [vmem:[%s957 + $0xa0] sm:$0xf]
      %v2121 = vld [vmem:[%s957 + $0xa8] sm:$0xf]
      %v2122 = vld [vmem:[%s957 + $0xac] sm:$0xf]
      %v2123 = vld [vmem:[%s957 + $0xb4] sm:$0xf]
      %v2124 = vld [vmem:[%s957 + $0xb8] sm:$0xf]
      %v2157 = vunpack.c.l.b16 %v2093
      %v2158 = vunpack.c.l.b16 %v2094
      %v2159 = vunpack.c.l.b16 %v2095
      %v2160 = vunpack.c.l.b16 %v2096
      %v2161 = vunpack.c.l.b16 %v2097
      %v2162 = vunpack.c.l.b16 %v2098
      %v2163 = vunpack.c.l.b16 %v2099
      %v2164 = vunpack.c.l.b16 %v2100
      %v2165 = vunpack.c.l.b16 %v2101
      %v2166 = vunpack.c.l.b16 %v2102
      %v2167 = vunpack.c.l.b16 %v2103
      %v2168 = vunpack.c.l.b16 %v2104
      %v2169 = vunpack.c.l.b16 %v2105
      %v2170 = vunpack.c.l.b16 %v2106
      %v2171 = vunpack.c.l.b16 %v2107
      %v2172 = vunpack.c.l.b16 %v2108
      %v2173 = vunpack.c.l.b16 %v2109
      %v2174 = vunpack.c.l.b16 %v2110
      %v2175 = vunpack.c.l.b16 %v2111
      %v2176 = vunpack.c.l.b16 %v2112
      %v2177 = vunpack.c.l.b16 %v2113
      %v2178 = vunpack.c.l.b16 %v2114
      %v2179 = vunpack.c.l.b16 %v2115
      %v2180 = vunpack.c.l.b16 %v2116
      %v2181 = vunpack.c.l.b16 %v2117
      %v2182 = vunpack.c.l.b16 %v2118
      %v2183 = vunpack.c.l.b16 %v2119
      %v2184 = vunpack.c.l.b16 %v2120
      %v2185 = vunpack.c.l.b16 %v2121
      %v2186 = vunpack.c.l.b16 %v2122
      %v2187 = vunpack.c.l.b16 %v2123
      %v2188 = vunpack.c.l.b16 %v2124
      %v2189 = vpack.c.b16 %v2158, %v2157
      %v2190 = vpack.c.b16 %v2160, %v2159
      %v2191 = vpack.c.b16 %v2162, %v2161
      %v2192 = vpack.c.b16 %v2164, %v2163
      %v2193 = vpack.c.b16 %v2166, %v2165
      %v2194 = vpack.c.b16 %v2168, %v2167
      %v2195 = vpack.c.b16 %v2170, %v2169
      %v2196 = vpack.c.b16 %v2172, %v2171
      %v2197 = vpack.c.b16 %v2174, %v2173
      %v2198 = vpack.c.b16 %v2176, %v2175
      %v2199 = vpack.c.b16 %v2178, %v2177
      %v2200 = vpack.c.b16 %v2180, %v2179
      %v2201 = vpack.c.b16 %v2182, %v2181
      %v2202 = vpack.c.b16 %v2184, %v2183
      %v2203 = vpack.c.b16 %v2186, %v2185
      %v2204 = vpack.c.b16 %v2188, %v2187
      %2205 = vrot.lane.b32.xlu0 %v2189, 12
      %v2206 = vpop.permute.xlu0 %2205
      %2207 = vrot.lane.b32.xlu0 %v2190, 12
      %v2208 = vpop.permute.xlu0 %2207
      %2209 = vrot.lane.b32.xlu0 %v2191, 12
      %v2210 = vpop.permute.xlu0 %2209
      %2211 = vrot.lane.b32.xlu0 %v2192, 12
      %v2212 = vpop.permute.xlu0 %2211
      %2213 = vrot.lane.b32.xlu0 %v2193, 12
      %v2214 = vpop.permute.xlu0 %2213
      %2215 = vrot.lane.b32.xlu0 %v2194, 12
      %v2216 = vpop.permute.xlu0 %2215
      %2217 = vrot.lane.b32.xlu0 %v2195, 12
      %v2218 = vpop.permute.xlu0 %2217
      %2219 = vrot.lane.b32.xlu0 %v2196, 12
      %v2220 = vpop.permute.xlu0 %2219
      %2221 = vrot.lane.b32.xlu0 %v2197, 12
      %v2222 = vpop.permute.xlu0 %2221
      %2223 = vrot.lane.b32.xlu0 %v2198, 12
      %v2224 = vpop.permute.xlu0 %2223
      %2225 = vrot.lane.b32.xlu0 %v2199, 12
      %v2226 = vpop.permute.xlu0 %2225
      %2227 = vrot.lane.b32.xlu0 %v2200, 12
      %v2228 = vpop.permute.xlu0 %2227
      %2229 = vrot.lane.b32.xlu0 %v2201, 12
      %v2230 = vpop.permute.xlu0 %2229
      %2231 = vrot.lane.b32.xlu0 %v2202, 12
      %v2232 = vpop.permute.xlu0 %2231
      %2233 = vrot.lane.b32.xlu0 %v2203, 12
      %v2234 = vpop.permute.xlu0 %2233
      %2235 = vrot.lane.b32.xlu0 %v2204, 12
      %v2236 = vpop.permute.xlu0 %2235
      %vm2253 = vcmask 130144
      %2254 = vst.msk [vmem:[#allocation4] sm:$0xff] %vm2253, %v2206
      %2255 = vst.msk [vmem:[#allocation4 + $0x8] sm:$0xff] %vm2253, %v2208
      %2256 = vst.msk [vmem:[#allocation4 + $0x10] sm:$0xff] %vm2253, %v2210
      %2257 = vst.msk [vmem:[#allocation4 + $0x18] sm:$0xff] %vm2253, %v2212
      %2258 = vst.msk [vmem:[#allocation4 + $0x20] sm:$0xff] %vm2253, %v2214
      %2259 = vst.msk [vmem:[#allocation4 + $0x28] sm:$0xff] %vm2253, %v2216
      %2260 = vst.msk [vmem:[#allocation4 + $0x30] sm:$0xff] %vm2253, %v2218
      %2261 = vst.msk [vmem:[#allocation4 + $0x38] sm:$0xff] %vm2253, %v2220
      %2262 = vst.msk [vmem:[#allocation4 + $0x40] sm:$0xff] %vm2253, %v2222
      %2263 = vst.msk [vmem:[#allocation4 + $0x48] sm:$0xff] %vm2253, %v2224
      %2264 = vst.msk [vmem:[#allocation4 + $0x50] sm:$0xff] %vm2253, %v2226
      %2265 = vst.msk [vmem:[#allocation4 + $0x58] sm:$0xff] %vm2253, %v2228
      %2266 = vst.msk [vmem:[#allocation4 + $0x60] sm:$0xff] %vm2253, %v2230
      %2267 = vst.msk [vmem:[#allocation4 + $0x68] sm:$0xff] %vm2253, %v2232
      %2268 = vst.msk [vmem:[#allocation4 + $0x70] sm:$0xff] %vm2253, %v2234
      %2269 = vst.msk [vmem:[#allocation4 + $0x78] sm:$0xff] %vm2253, %v2236
      %v2270 = vld [vmem:[%s957] sm:$0xf]
      %v2271 = vld [vmem:[%s957 + $0x4] sm:$0xf]
      %v2272 = vld [vmem:[%s957 + $0x8] sm:$0x1]
      %v2273 = vld [vmem:[%s957 + $0xc] sm:$0xf]
      %v2274 = vld [vmem:[%s957 + $0x10] sm:$0xf]
      %v2275 = vld [vmem:[%s957 + $0x14] sm:$0x1]
      %v2276 = vld [vmem:[%s957 + $0x18] sm:$0xf]
      %v2277 = vld [vmem:[%s957 + $0x1c] sm:$0xf]
      %v2278 = vld [vmem:[%s957 + $0x20] sm:$0x1]
      %v2279 = vld [vmem:[%s957 + $0x24] sm:$0xf]
      %v2280 = vld [vmem:[%s957 + $0x28] sm:$0xf]
      %v2281 = vld [vmem:[%s957 + $0x2c] sm:$0x1]
      %v2282 = vld [vmem:[%s957 + $0x30] sm:$0xf]
      %v2283 = vld [vmem:[%s957 + $0x34] sm:$0xf]
      %v2284 = vld [vmem:[%s957 + $0x38] sm:$0x1]
      %v2285 = vld [vmem:[%s957 + $0x3c] sm:$0xf]
      %v2286 = vld [vmem:[%s957 + $0x40] sm:$0xf]
      %v2287 = vld [vmem:[%s957 + $0x44] sm:$0x1]
      %v2288 = vld [vmem:[%s957 + $0x48] sm:$0xf]
      %v2289 = vld [vmem:[%s957 + $0x4c] sm:$0xf]
      %v2290 = vld [vmem:[%s957 + $0x50] sm:$0x1]
      %v2291 = vld [vmem:[%s957 + $0x54] sm:$0xf]
      %v2292 = vld [vmem:[%s957 + $0x58] sm:$0xf]
      %v2293 = vld [vmem:[%s957 + $0x5c] sm:$0x1]
      %v2294 = vld [vmem:[%s957 + $0x60] sm:$0xf]
      %v2295 = vld [vmem:[%s957 + $0x64] sm:$0xf]
      %v2296 = vld [vmem:[%s957 + $0x68] sm:$0x1]
      %v2297 = vld [vmem:[%s957 + $0x6c] sm:$0xf]
      %v2298 = vld [vmem:[%s957 + $0x70] sm:$0xf]
      %v2299 = vld [vmem:[%s957 + $0x74] sm:$0x1]
      %v2300 = vld [vmem:[%s957 + $0x78] sm:$0xf]
      %v2301 = vld [vmem:[%s957 + $0x7c] sm:$0xf]
      %v2302 = vld [vmem:[%s957 + $0x80] sm:$0x1]
      %v2303 = vld [vmem:[%s957 + $0x84] sm:$0xf]
      %v2304 = vld [vmem:[%s957 + $0x88] sm:$0xf]
      %v2305 = vld [vmem:[%s957 + $0x8c] sm:$0x1]
      %v2306 = vld [vmem:[%s957 + $0x90] sm:$0xf]
      %v2307 = vld [vmem:[%s957 + $0x94] sm:$0xf]
      %v2308 = vld [vmem:[%s957 + $0x98] sm:$0x1]
      %v2309 = vld [vmem:[%s957 + $0x9c] sm:$0xf]
      %v2310 = vld [vmem:[%s957 + $0xa0] sm:$0xf]
      %v2311 = vld [vmem:[%s957 + $0xa4] sm:$0x1]
      %v2312 = vld [vmem:[%s957 + $0xa8] sm:$0xf]
      %v2313 = vld [vmem:[%s957 + $0xac] sm:$0xf]
      %v2314 = vld [vmem:[%s957 + $0xb0] sm:$0x1]
      %v2315 = vld [vmem:[%s957 + $0xb4] sm:$0xf]
      %v2316 = vld [vmem:[%s957 + $0xb8] sm:$0xf]
      %v2317 = vld [vmem:[%s957 + $0xbc] sm:$0x1]
      %v2319 = vshrl.u32 %v2270, 16
      %v2321 = vrot.slane %v2319, 4
      %v2322 = vshll.u32 %v2270, 16
      %v2324 = vrot.slane %v2322, 5
      %v2325 = vor.u32 %v2321, %v2324
      %v2326 = vrot.slane %v2325, 4
      %v2328 = vshll.u32 %v2271, 16
      %v2330 = vrot.slane %v2328, 5
      %v2331 = vsel %vm1271, %v2326, %v2330
      %v2332 = vshrl.u32 %v2271, 16
      %v2334 = vrot.slane %v2332, 4
      %v2335 = vor.u32 %v2334, %v2330
      %v2336 = vrot.slane %v2335, 4
      %v2338 = vshll.u32 %v2272, 16
      %v2340 = vrot.slane %v2338, 5
      %v2341 = vsel %vm1271, %v2336, %v2340
      %v2343 = vshrl.u32 %v2273, 16
      %v2345 = vrot.slane %v2343, 4
      %v2346 = vshll.u32 %v2273, 16
      %v2348 = vrot.slane %v2346, 5
      %v2349 = vor.u32 %v2345, %v2348
      %v2350 = vrot.slane %v2349, 4
      %v2352 = vshll.u32 %v2274, 16
      %v2354 = vrot.slane %v2352, 5
      %v2355 = vsel %vm1271, %v2350, %v2354
      %v2356 = vshrl.u32 %v2274, 16
      %v2358 = vrot.slane %v2356, 4
      %v2359 = vor.u32 %v2358, %v2354
      %v2360 = vrot.slane %v2359, 4
      %v2362 = vshll.u32 %v2275, 16
      %v2364 = vrot.slane %v2362, 5
      %v2365 = vsel %vm1271, %v2360, %v2364
      %v2367 = vshrl.u32 %v2276, 16
      %v2369 = vrot.slane %v2367, 4
      %v2370 = vshll.u32 %v2276, 16
      %v2372 = vrot.slane %v2370, 5
      %v2373 = vor.u32 %v2369, %v2372
      %v2374 = vrot.slane %v2373, 4
      %v2376 = vshll.u32 %v2277, 16
      %v2378 = vrot.slane %v2376, 5
      %v2379 = vsel %vm1271, %v2374, %v2378
      %v2380 = vshrl.u32 %v2277, 16
      %v2382 = vrot.slane %v2380, 4
      %v2383 = vor.u32 %v2382, %v2378
      %v2384 = vrot.slane %v2383, 4
      %v2386 = vshll.u32 %v2278, 16
      %v2388 = vrot.slane %v2386, 5
      %v2389 = vsel %vm1271, %v2384, %v2388
      %v2391 = vshrl.u32 %v2279, 16
      %v2393 = vrot.slane %v2391, 4
      %v2394 = vshll.u32 %v2279, 16
      %v2396 = vrot.slane %v2394, 5
      %v2397 = vor.u32 %v2393, %v2396
      %v2398 = vrot.slane %v2397, 4
      %v2400 = vshll.u32 %v2280, 16
      %v2402 = vrot.slane %v2400, 5
      %v2403 = vsel %vm1271, %v2398, %v2402
      %v2404 = vshrl.u32 %v2280, 16
      %v2406 = vrot.slane %v2404, 4
      %v2407 = vor.u32 %v2406, %v2402
      %v2408 = vrot.slane %v2407, 4
      %v2410 = vshll.u32 %v2281, 16
      %v2412 = vrot.slane %v2410, 5
      %v2413 = vsel %vm1271, %v2408, %v2412
      %v2415 = vshrl.u32 %v2282, 16
      %v2417 = vrot.slane %v2415, 4
      %v2418 = vshll.u32 %v2282, 16
      %v2420 = vrot.slane %v2418, 5
      %v2421 = vor.u32 %v2417, %v2420
      %v2422 = vrot.slane %v2421, 4
      %v2424 = vshll.u32 %v2283, 16
      %v2426 = vrot.slane %v2424, 5
      %v2427 = vsel %vm1271, %v2422, %v2426
      %v2428 = vshrl.u32 %v2283, 16
      %v2430 = vrot.slane %v2428, 4
      %v2431 = vor.u32 %v2430, %v2426
      %v2432 = vrot.slane %v2431, 4
      %v2434 = vshll.u32 %v2284, 16
      %v2436 = vrot.slane %v2434, 5
      %v2437 = vsel %vm1271, %v2432, %v2436
      %v2439 = vshrl.u32 %v2285, 16
      %v2441 = vrot.slane %v2439, 4
      %v2442 = vshll.u32 %v2285, 16
      %v2444 = vrot.slane %v2442, 5
      %v2445 = vor.u32 %v2441, %v2444
      %v2446 = vrot.slane %v2445, 4
      %v2448 = vshll.u32 %v2286, 16
      %v2450 = vrot.slane %v2448, 5
      %v2451 = vsel %vm1271, %v2446, %v2450
      %v2452 = vshrl.u32 %v2286, 16
      %v2454 = vrot.slane %v2452, 4
      %v2455 = vor.u32 %v2454, %v2450
      %v2456 = vrot.slane %v2455, 4
      %v2458 = vshll.u32 %v2287, 16
      %v2460 = vrot.slane %v2458, 5
      %v2461 = vsel %vm1271, %v2456, %v2460
      %v2463 = vshrl.u32 %v2288, 16
      %v2465 = vrot.slane %v2463, 4
      %v2466 = vshll.u32 %v2288, 16
      %v2468 = vrot.slane %v2466, 5
      %v2469 = vor.u32 %v2465, %v2468
      %v2470 = vrot.slane %v2469, 4
      %v2472 = vshll.u32 %v2289, 16
      %v2474 = vrot.slane %v2472, 5
      %v2475 = vsel %vm1271, %v2470, %v2474
      %v2476 = vshrl.u32 %v2289, 16
      %v2478 = vrot.slane %v2476, 4
      %v2479 = vor.u32 %v2478, %v2474
      %v2480 = vrot.slane %v2479, 4
      %v2482 = vshll.u32 %v2290, 16
      %v2484 = vrot.slane %v2482, 5
      %v2485 = vsel %vm1271, %v2480, %v2484
      %v2487 = vshrl.u32 %v2291, 16
      %v2489 = vrot.slane %v2487, 4
      %v2490 = vshll.u32 %v2291, 16
      %v2492 = vrot.slane %v2490, 5
      %v2493 = vor.u32 %v2489, %v2492
      %v2494 = vrot.slane %v2493, 4
      %v2496 = vshll.u32 %v2292, 16
      %v2498 = vrot.slane %v2496, 5
      %v2499 = vsel %vm1271, %v2494, %v2498
      %v2500 = vshrl.u32 %v2292, 16
      %v2502 = vrot.slane %v2500, 4
      %v2503 = vor.u32 %v2502, %v2498
      %v2504 = vrot.slane %v2503, 4
      %v2506 = vshll.u32 %v2293, 16
      %v2508 = vrot.slane %v2506, 5
      %v2509 = vsel %vm1271, %v2504, %v2508
      %v2511 = vshrl.u32 %v2294, 16
      %v2513 = vrot.slane %v2511, 4
      %v2514 = vshll.u32 %v2294, 16
      %v2516 = vrot.slane %v2514, 5
      %v2517 = vor.u32 %v2513, %v2516
      %v2518 = vrot.slane %v2517, 4
      %v2520 = vshll.u32 %v2295, 16
      %v2522 = vrot.slane %v2520, 5
      %v2523 = vsel %vm1271, %v2518, %v2522
      %v2524 = vshrl.u32 %v2295, 16
      %v2526 = vrot.slane %v2524, 4
      %v2527 = vor.u32 %v2526, %v2522
      %v2528 = vrot.slane %v2527, 4
      %v2530 = vshll.u32 %v2296, 16
      %v2532 = vrot.slane %v2530, 5
      %v2533 = vsel %vm1271, %v2528, %v2532
      %v2535 = vshrl.u32 %v2297, 16
      %v2537 = vrot.slane %v2535, 4
      %v2538 = vshll.u32 %v2297, 16
      %v2540 = vrot.slane %v2538, 5
      %v2541 = vor.u32 %v2537, %v2540
      %v2542 = vrot.slane %v2541, 4
      %v2544 = vshll.u32 %v2298, 16
      %v2546 = vrot.slane %v2544, 5
      %v2547 = vsel %vm1271, %v2542, %v2546
      %v2548 = vshrl.u32 %v2298, 16
      %v2550 = vrot.slane %v2548, 4
      %v2551 = vor.u32 %v2550, %v2546
      %v2552 = vrot.slane %v2551, 4
      %v2554 = vshll.u32 %v2299, 16
      %v2556 = vrot.slane %v2554, 5
      %v2557 = vsel %vm1271, %v2552, %v2556
      %v2559 = vshrl.u32 %v2300, 16
      %v2561 = vrot.slane %v2559, 4
      %v2562 = vshll.u32 %v2300, 16
      %v2564 = vrot.slane %v2562, 5
      %v2565 = vor.u32 %v2561, %v2564
      %v2566 = vrot.slane %v2565, 4
      %v2568 = vshll.u32 %v2301, 16
      %v2570 = vrot.slane %v2568, 5
      %v2571 = vsel %vm1271, %v2566, %v2570
      %v2572 = vshrl.u32 %v2301, 16
      %v2574 = vrot.slane %v2572, 4
      %v2575 = vor.u32 %v2574, %v2570
      %v2576 = vrot.slane %v2575, 4
      %v2578 = vshll.u32 %v2302, 16
      %v2580 = vrot.slane %v2578, 5
      %v2581 = vsel %vm1271, %v2576, %v2580
      %v2583 = vshrl.u32 %v2303, 16
      %v2585 = vrot.slane %v2583, 4
      %v2586 = vshll.u32 %v2303, 16
      %v2588 = vrot.slane %v2586, 5
      %v2589 = vor.u32 %v2585, %v2588
      %v2590 = vrot.slane %v2589, 4
      %v2592 = vshll.u32 %v2304, 16
      %v2594 = vrot.slane %v2592, 5
      %v2595 = vsel %vm1271, %v2590, %v2594
      %v2596 = vshrl.u32 %v2304, 16
      %v2598 = vrot.slane %v2596, 4
      %v2599 = vor.u32 %v2598, %v2594
      %v2600 = vrot.slane %v2599, 4
      %v2602 = vshll.u32 %v2305, 16
      %v2604 = vrot.slane %v2602, 5
      %v2605 = vsel %vm1271, %v2600, %v2604
      %v2607 = vshrl.u32 %v2306, 16
      %v2609 = vrot.slane %v2607, 4
      %v2610 = vshll.u32 %v2306, 16
      %v2612 = vrot.slane %v2610, 5
      %v2613 = vor.u32 %v2609, %v2612
      %v2614 = vrot.slane %v2613, 4
      %v2616 = vshll.u32 %v2307, 16
      %v2618 = vrot.slane %v2616, 5
      %v2619 = vsel %vm1271, %v2614, %v2618
      %v2620 = vshrl.u32 %v2307, 16
      %v2622 = vrot.slane %v2620, 4
      %v2623 = vor.u32 %v2622, %v2618
      %v2624 = vrot.slane %v2623, 4
      %v2626 = vshll.u32 %v2308, 16
      %v2628 = vrot.slane %v2626, 5
      %v2629 = vsel %vm1271, %v2624, %v2628
      %v2631 = vshrl.u32 %v2309, 16
      %v2633 = vrot.slane %v2631, 4
      %v2634 = vshll.u32 %v2309, 16
      %v2636 = vrot.slane %v2634, 5
      %v2637 = vor.u32 %v2633, %v2636
      %v2638 = vrot.slane %v2637, 4
      %v2640 = vshll.u32 %v2310, 16
      %v2642 = vrot.slane %v2640, 5
      %v2643 = vsel %vm1271, %v2638, %v2642
      %v2644 = vshrl.u32 %v2310, 16
      %v2646 = vrot.slane %v2644, 4
      %v2647 = vor.u32 %v2646, %v2642
      %v2648 = vrot.slane %v2647, 4
      %v2650 = vshll.u32 %v2311, 16
      %v2652 = vrot.slane %v2650, 5
      %v2653 = vsel %vm1271, %v2648, %v2652
      %v2655 = vshrl.u32 %v2312, 16
      %v2657 = vrot.slane %v2655, 4
      %v2658 = vshll.u32 %v2312, 16
      %v2660 = vrot.slane %v2658, 5
      %v2661 = vor.u32 %v2657, %v2660
      %v2662 = vrot.slane %v2661, 4
      %v2664 = vshll.u32 %v2313, 16
      %v2666 = vrot.slane %v2664, 5
      %v2667 = vsel %vm1271, %v2662, %v2666
      %v2668 = vshrl.u32 %v2313, 16
      %v2670 = vrot.slane %v2668, 4
      %v2671 = vor.u32 %v2670, %v2666
      %v2672 = vrot.slane %v2671, 4
      %v2674 = vshll.u32 %v2314, 16
      %v2676 = vrot.slane %v2674, 5
      %v2677 = vsel %vm1271, %v2672, %v2676
      %v2679 = vshrl.u32 %v2315, 16
      %v2681 = vrot.slane %v2679, 4
      %v2682 = vshll.u32 %v2315, 16
      %v2684 = vrot.slane %v2682, 5
      %v2685 = vor.u32 %v2681, %v2684
      %v2686 = vrot.slane %v2685, 4
      %v2688 = vshll.u32 %v2316, 16
      %v2690 = vrot.slane %v2688, 5
      %v2691 = vsel %vm1271, %v2686, %v2690
      %v2692 = vshrl.u32 %v2316, 16
      %v2694 = vrot.slane %v2692, 4
      %v2695 = vor.u32 %v2694, %v2690
      %v2696 = vrot.slane %v2695, 4
      %v2698 = vshll.u32 %v2317, 16
      %v2700 = vrot.slane %v2698, 5
      %v2701 = vsel %vm1271, %v2696, %v2700
      %v2702 = vunpack.c.l.b16 %v2331
      %v2703 = vunpack.c.l.b16 %v2341
      %v2704 = vunpack.c.l.b16 %v2355
      %v2705 = vunpack.c.l.b16 %v2365
      %v2706 = vunpack.c.l.b16 %v2379
      %v2707 = vunpack.c.l.b16 %v2389
      %v2708 = vunpack.c.l.b16 %v2403
      %v2709 = vunpack.c.l.b16 %v2413
      %v2710 = vunpack.c.l.b16 %v2427
      %v2711 = vunpack.c.l.b16 %v2437
      %v2712 = vunpack.c.l.b16 %v2451
      %v2713 = vunpack.c.l.b16 %v2461
      %v2714 = vunpack.c.l.b16 %v2475
      %v2715 = vunpack.c.l.b16 %v2485
      %v2716 = vunpack.c.l.b16 %v2499
      %v2717 = vunpack.c.l.b16 %v2509
      %v2718 = vunpack.c.l.b16 %v2523
      %v2719 = vunpack.c.l.b16 %v2533
      %v2720 = vunpack.c.l.b16 %v2547
      %v2721 = vunpack.c.l.b16 %v2557
      %v2722 = vunpack.c.l.b16 %v2571
      %v2723 = vunpack.c.l.b16 %v2581
      %v2724 = vunpack.c.l.b16 %v2595
      %v2725 = vunpack.c.l.b16 %v2605
      %v2726 = vunpack.c.l.b16 %v2619
      %v2727 = vunpack.c.l.b16 %v2629
      %v2728 = vunpack.c.l.b16 %v2643
      %v2729 = vunpack.c.l.b16 %v2653
      %v2730 = vunpack.c.l.b16 %v2667
      %v2731 = vunpack.c.l.b16 %v2677
      %v2732 = vunpack.c.l.b16 %v2691
      %v2733 = vunpack.c.l.b16 %v2701
      %v2734 = vpack.c.b16 %v2703, %v2702
      %v2735 = vpack.c.b16 %v2705, %v2704
      %v2736 = vpack.c.b16 %v2707, %v2706
      %v2737 = vpack.c.b16 %v2709, %v2708
      %v2738 = vpack.c.b16 %v2711, %v2710
      %v2739 = vpack.c.b16 %v2713, %v2712
      %v2740 = vpack.c.b16 %v2715, %v2714
      %v2741 = vpack.c.b16 %v2717, %v2716
      %v2742 = vpack.c.b16 %v2719, %v2718
      %v2743 = vpack.c.b16 %v2721, %v2720
      %v2744 = vpack.c.b16 %v2723, %v2722
      %v2745 = vpack.c.b16 %v2725, %v2724
      %v2746 = vpack.c.b16 %v2727, %v2726
      %v2747 = vpack.c.b16 %v2729, %v2728
      %v2748 = vpack.c.b16 %v2731, %v2730
      %v2749 = vpack.c.b16 %v2733, %v2732
      %2750 = vrot.lane.b32.xlu0 %v2734, 16
      %v2751 = vpop.permute.xlu0 %2750
      %2752 = vrot.lane.b32.xlu0 %v2735, 16
      %v2753 = vpop.permute.xlu0 %2752
      %2754 = vrot.lane.b32.xlu0 %v2736, 16
      %v2755 = vpop.permute.xlu0 %2754
      %2756 = vrot.lane.b32.xlu0 %v2737, 16
      %v2757 = vpop.permute.xlu0 %2756
      %2758 = vrot.lane.b32.xlu0 %v2738, 16
      %v2759 = vpop.permute.xlu0 %2758
      %2760 = vrot.lane.b32.xlu0 %v2739, 16
      %v2761 = vpop.permute.xlu0 %2760
      %2762 = vrot.lane.b32.xlu0 %v2740, 16
      %v2763 = vpop.permute.xlu0 %2762
      %2764 = vrot.lane.b32.xlu0 %v2741, 16
      %v2765 = vpop.permute.xlu0 %2764
      %2766 = vrot.lane.b32.xlu0 %v2742, 16
      %v2767 = vpop.permute.xlu0 %2766
      %2768 = vrot.lane.b32.xlu0 %v2743, 16
      %v2769 = vpop.permute.xlu0 %2768
      %2770 = vrot.lane.b32.xlu0 %v2744, 16
      %v2771 = vpop.permute.xlu0 %2770
      %2772 = vrot.lane.b32.xlu0 %v2745, 16
      %v2773 = vpop.permute.xlu0 %2772
      %2774 = vrot.lane.b32.xlu0 %v2746, 16
      %v2775 = vpop.permute.xlu0 %2774
      %2776 = vrot.lane.b32.xlu0 %v2747, 16
      %v2777 = vpop.permute.xlu0 %2776
      %2778 = vrot.lane.b32.xlu0 %v2748, 16
      %v2779 = vpop.permute.xlu0 %2778
      %2780 = vrot.lane.b32.xlu0 %v2749, 16
      %v2781 = vpop.permute.xlu0 %2780
      %vm2798 = vcmask 162944
      %2799 = vst.msk [vmem:[#allocation4] sm:$0xff] %vm2798, %v2751
      %2800 = vst.msk [vmem:[#allocation4 + $0x8] sm:$0xff] %vm2798, %v2753
      %2801 = vst.msk [vmem:[#allocation4 + $0x10] sm:$0xff] %vm2798, %v2755
      %2802 = vst.msk [vmem:[#allocation4 + $0x18] sm:$0xff] %vm2798, %v2757
      %2803 = vst.msk [vmem:[#allocation4 + $0x20] sm:$0xff] %vm2798, %v2759
      %2804 = vst.msk [vmem:[#allocation4 + $0x28] sm:$0xff] %vm2798, %v2761
      %2805 = vst.msk [vmem:[#allocation4 + $0x30] sm:$0xff] %vm2798, %v2763
      %2806 = vst.msk [vmem:[#allocation4 + $0x38] sm:$0xff] %vm2798, %v2765
      %2807 = vst.msk [vmem:[#allocation4 + $0x40] sm:$0xff] %vm2798, %v2767
      %2808 = vst.msk [vmem:[#allocation4 + $0x48] sm:$0xff] %vm2798, %v2769
      %2809 = vst.msk [vmem:[#allocation4 + $0x50] sm:$0xff] %vm2798, %v2771
      %2810 = vst.msk [vmem:[#allocation4 + $0x58] sm:$0xff] %vm2798, %v2773
      %2811 = vst.msk [vmem:[#allocation4 + $0x60] sm:$0xff] %vm2798, %v2775
      %2812 = vst.msk [vmem:[#allocation4 + $0x68] sm:$0xff] %vm2798, %v2777
      %2813 = vst.msk [vmem:[#allocation4 + $0x70] sm:$0xff] %vm2798, %v2779
      %2814 = vst.msk [vmem:[#allocation4 + $0x78] sm:$0xff] %vm2798, %v2781
      %v2815 = vld [vmem:[%s957] sm:$0xe]
      %v2816 = vld [vmem:[%s957 + $0x4] sm:$0xf]
      %v2817 = vld [vmem:[%s957 + $0x8] sm:$0x1]
      %v2818 = vld [vmem:[%s957 + $0xc] sm:$0xe]
      %v2819 = vld [vmem:[%s957 + $0x10] sm:$0xf]
      %v2820 = vld [vmem:[%s957 + $0x14] sm:$0x1]
      %v2821 = vld [vmem:[%s957 + $0x18] sm:$0xe]
      %v2822 = vld [vmem:[%s957 + $0x1c] sm:$0xf]
      %v2823 = vld [vmem:[%s957 + $0x20] sm:$0x1]
      %v2824 = vld [vmem:[%s957 + $0x24] sm:$0xe]
      %v2825 = vld [vmem:[%s957 + $0x28] sm:$0xf]
      %v2826 = vld [vmem:[%s957 + $0x2c] sm:$0x1]
      %v2827 = vld [vmem:[%s957 + $0x30] sm:$0xe]
      %v2828 = vld [vmem:[%s957 + $0x34] sm:$0xf]
      %v2829 = vld [vmem:[%s957 + $0x38] sm:$0x1]
      %v2830 = vld [vmem:[%s957 + $0x3c] sm:$0xe]
      %v2831 = vld [vmem:[%s957 + $0x40] sm:$0xf]
      %v2832 = vld [vmem:[%s957 + $0x44] sm:$0x1]
      %v2833 = vld [vmem:[%s957 + $0x48] sm:$0xe]
      %v2834 = vld [vmem:[%s957 + $0x4c] sm:$0xf]
      %v2835 = vld [vmem:[%s957 + $0x50] sm:$0x1]
      %v2836 = vld [vmem:[%s957 + $0x54] sm:$0xe]
      %v2837 = vld [vmem:[%s957 + $0x58] sm:$0xf]
      %v2838 = vld [vmem:[%s957 + $0x5c] sm:$0x1]
      %v2839 = vld [vmem:[%s957 + $0x60] sm:$0xe]
      %v2840 = vld [vmem:[%s957 + $0x64] sm:$0xf]
      %v2841 = vld [vmem:[%s957 + $0x68] sm:$0x1]
      %v2842 = vld [vmem:[%s957 + $0x6c] sm:$0xe]
      %v2843 = vld [vmem:[%s957 + $0x70] sm:$0xf]
      %v2844 = vld [vmem:[%s957 + $0x74] sm:$0x1]
      %v2845 = vld [vmem:[%s957 + $0x78] sm:$0xe]
      %v2846 = vld [vmem:[%s957 + $0x7c] sm:$0xf]
      %v2847 = vld [vmem:[%s957 + $0x80] sm:$0x1]
      %v2848 = vld [vmem:[%s957 + $0x84] sm:$0xe]
      %v2849 = vld [vmem:[%s957 + $0x88] sm:$0xf]
      %v2850 = vld [vmem:[%s957 + $0x8c] sm:$0x1]
      %v2851 = vld [vmem:[%s957 + $0x90] sm:$0xe]
      %v2852 = vld [vmem:[%s957 + $0x94] sm:$0xf]
      %v2853 = vld [vmem:[%s957 + $0x98] sm:$0x1]
      %v2854 = vld [vmem:[%s957 + $0x9c] sm:$0xe]
      %v2855 = vld [vmem:[%s957 + $0xa0] sm:$0xf]
      %v2856 = vld [vmem:[%s957 + $0xa4] sm:$0x1]
      %v2857 = vld [vmem:[%s957 + $0xa8] sm:$0xe]
      %v2858 = vld [vmem:[%s957 + $0xac] sm:$0xf]
      %v2859 = vld [vmem:[%s957 + $0xb0] sm:$0x1]
      %v2860 = vld [vmem:[%s957 + $0xb4] sm:$0xe]
      %v2861 = vld [vmem:[%s957 + $0xb8] sm:$0xf]
      %v2862 = vld [vmem:[%s957 + $0xbc] sm:$0x1]
      %v2911 = vrot.slane %v2815, 5
      %v2912 = vrot.slane %v2911, 4
      %v2913 = vrot.slane %v2816, 5
      %v2914 = vsel %vm1867, %v2912, %v2913
      %v2915 = vrot.slane %v2913, 4
      %v2916 = vrot.slane %v2817, 5
      %v2917 = vsel %vm1867, %v2915, %v2916
      %v2918 = vrot.slane %v2818, 5
      %v2919 = vrot.slane %v2918, 4
      %v2920 = vrot.slane %v2819, 5
      %v2921 = vsel %vm1867, %v2919, %v2920
      %v2922 = vrot.slane %v2920, 4
      %v2923 = vrot.slane %v2820, 5
      %v2924 = vsel %vm1867, %v2922, %v2923
      %v2925 = vrot.slane %v2821, 5
      %v2926 = vrot.slane %v2925, 4
      %v2927 = vrot.slane %v2822, 5
      %v2928 = vsel %vm1867, %v2926, %v2927
      %v2929 = vrot.slane %v2927, 4
      %v2930 = vrot.slane %v2823, 5
      %v2931 = vsel %vm1867, %v2929, %v2930
      %v2932 = vrot.slane %v2824, 5
      %v2933 = vrot.slane %v2932, 4
      %v2934 = vrot.slane %v2825, 5
      %v2935 = vsel %vm1867, %v2933, %v2934
      %v2936 = vrot.slane %v2934, 4
      %v2937 = vrot.slane %v2826, 5
      %v2938 = vsel %vm1867, %v2936, %v2937
      %v2939 = vrot.slane %v2827, 5
      %v2940 = vrot.slane %v2939, 4
      %v2941 = vrot.slane %v2828, 5
      %v2942 = vsel %vm1867, %v2940, %v2941
      %v2943 = vrot.slane %v2941, 4
      %v2944 = vrot.slane %v2829, 5
      %v2945 = vsel %vm1867, %v2943, %v2944
      %v2946 = vrot.slane %v2830, 5
      %v2947 = vrot.slane %v2946, 4
      %v2948 = vrot.slane %v2831, 5
      %v2949 = vsel %vm1867, %v2947, %v2948
      %v2950 = vrot.slane %v2948, 4
      %v2951 = vrot.slane %v2832, 5
      %v2952 = vsel %vm1867, %v2950, %v2951
      %v2953 = vrot.slane %v2833, 5
      %v2954 = vrot.slane %v2953, 4
      %v2955 = vrot.slane %v2834, 5
      %v2956 = vsel %vm1867, %v2954, %v2955
      %v2957 = vrot.slane %v2955, 4
      %v2958 = vrot.slane %v2835, 5
      %v2959 = vsel %vm1867, %v2957, %v2958
      %v2960 = vrot.slane %v2836, 5
      %v2961 = vrot.slane %v2960, 4
      %v2962 = vrot.slane %v2837, 5
      %v2963 = vsel %vm1867, %v2961, %v2962
      %v2964 = vrot.slane %v2962, 4
      %v2965 = vrot.slane %v2838, 5
      %v2966 = vsel %vm1867, %v2964, %v2965
      %v2967 = vrot.slane %v2839, 5
      %v2968 = vrot.slane %v2967, 4
      %v2969 = vrot.slane %v2840, 5
      %v2970 = vsel %vm1867, %v2968, %v2969
      %v2971 = vrot.slane %v2969, 4
      %v2972 = vrot.slane %v2841, 5
      %v2973 = vsel %vm1867, %v2971, %v2972
      %v2974 = vrot.slane %v2842, 5
      %v2975 = vrot.slane %v2974, 4
      %v2976 = vrot.slane %v2843, 5
      %v2977 = vsel %vm1867, %v2975, %v2976
      %v2978 = vrot.slane %v2976, 4
      %v2979 = vrot.slane %v2844, 5
      %v2980 = vsel %vm1867, %v2978, %v2979
      %v2981 = vrot.slane %v2845, 5
      %v2982 = vrot.slane %v2981, 4
      %v2983 = vrot.slane %v2846, 5
      %v2984 = vsel %vm1867, %v2982, %v2983
      %v2985 = vrot.slane %v2983, 4
      %v2986 = vrot.slane %v2847, 5
      %v2987 = vsel %vm1867, %v2985, %v2986
      %v2988 = vrot.slane %v2848, 5
      %v2989 = vrot.slane %v2988, 4
      %v2990 = vrot.slane %v2849, 5
      %v2991 = vsel %vm1867, %v2989, %v2990
      %v2992 = vrot.slane %v2990, 4
      %v2993 = vrot.slane %v2850, 5
      %v2994 = vsel %vm1867, %v2992, %v2993
      %v2995 = vrot.slane %v2851, 5
      %v2996 = vrot.slane %v2995, 4
      %v2997 = vrot.slane %v2852, 5
      %v2998 = vsel %vm1867, %v2996, %v2997
      %v2999 = vrot.slane %v2997, 4
      %v3000 = vrot.slane %v2853, 5
      %v3001 = vsel %vm1867, %v2999, %v3000
      %v3002 = vrot.slane %v2854, 5
      %v3003 = vrot.slane %v3002, 4
      %v3004 = vrot.slane %v2855, 5
      %v3005 = vsel %vm1867, %v3003, %v3004
      %v3006 = vrot.slane %v3004, 4
      %v3007 = vrot.slane %v2856, 5
      %v3008 = vsel %vm1867, %v3006, %v3007
      %v3009 = vrot.slane %v2857, 5
      %v3010 = vrot.slane %v3009, 4
      %v3011 = vrot.slane %v2858, 5
      %v3012 = vsel %vm1867, %v3010, %v3011
      %v3013 = vrot.slane %v3011, 4
      %v3014 = vrot.slane %v2859, 5
      %v3015 = vsel %vm1867, %v3013, %v3014
      %v3016 = vrot.slane %v2860, 5
      %v3017 = vrot.slane %v3016, 4
      %v3018 = vrot.slane %v2861, 5
      %v3019 = vsel %vm1867, %v3017, %v3018
      %v3020 = vrot.slane %v3018, 4
      %v3021 = vrot.slane %v2862, 5
      %v3022 = vsel %vm1867, %v3020, %v3021
      %v3023 = vunpack.c.l.b16 %v2914
      %v3024 = vunpack.c.l.b16 %v2917
      %v3025 = vunpack.c.l.b16 %v2921
      %v3026 = vunpack.c.l.b16 %v2924
      %v3027 = vunpack.c.l.b16 %v2928
      %v3028 = vunpack.c.l.b16 %v2931
      %v3029 = vunpack.c.l.b16 %v2935
      %v3030 = vunpack.c.l.b16 %v2938
      %v3031 = vunpack.c.l.b16 %v2942
      %v3032 = vunpack.c.l.b16 %v2945
      %v3033 = vunpack.c.l.b16 %v2949
      %v3034 = vunpack.c.l.b16 %v2952
      %v3035 = vunpack.c.l.b16 %v2956
      %v3036 = vunpack.c.l.b16 %v2959
      %v3037 = vunpack.c.l.b16 %v2963
      %v3038 = vunpack.c.l.b16 %v2966
      %v3039 = vunpack.c.l.b16 %v2970
      %v3040 = vunpack.c.l.b16 %v2973
      %v3041 = vunpack.c.l.b16 %v2977
      %v3042 = vunpack.c.l.b16 %v2980
      %v3043 = vunpack.c.l.b16 %v2984
      %v3044 = vunpack.c.l.b16 %v2987
      %v3045 = vunpack.c.l.b16 %v2991
      %v3046 = vunpack.c.l.b16 %v2994
      %v3047 = vunpack.c.l.b16 %v2998
      %v3048 = vunpack.c.l.b16 %v3001
      %v3049 = vunpack.c.l.b16 %v3005
      %v3050 = vunpack.c.l.b16 %v3008
      %v3051 = vunpack.c.l.b16 %v3012
      %v3052 = vunpack.c.l.b16 %v3015
      %v3053 = vunpack.c.l.b16 %v3019
      %v3054 = vunpack.c.l.b16 %v3022
      %v3055 = vpack.c.b16 %v3024, %v3023
      %v3056 = vpack.c.b16 %v3026, %v3025
      %v3057 = vpack.c.b16 %v3028, %v3027
      %v3058 = vpack.c.b16 %v3030, %v3029
      %v3059 = vpack.c.b16 %v3032, %v3031
      %v3060 = vpack.c.b16 %v3034, %v3033
      %v3061 = vpack.c.b16 %v3036, %v3035
      %v3062 = vpack.c.b16 %v3038, %v3037
      %v3063 = vpack.c.b16 %v3040, %v3039
      %v3064 = vpack.c.b16 %v3042, %v3041
      %v3065 = vpack.c.b16 %v3044, %v3043
      %v3066 = vpack.c.b16 %v3046, %v3045
      %v3067 = vpack.c.b16 %v3048, %v3047
      %v3068 = vpack.c.b16 %v3050, %v3049
      %v3069 = vpack.c.b16 %v3052, %v3051
      %v3070 = vpack.c.b16 %v3054, %v3053
      %3071 = vrot.lane.b32.xlu0 %v3055, 20
      %v3072 = vpop.permute.xlu0 %3071
      %3073 = vrot.lane.b32.xlu0 %v3056, 20
      %v3074 = vpop.permute.xlu0 %3073
      %3075 = vrot.lane.b32.xlu0 %v3057, 20
      %v3076 = vpop.permute.xlu0 %3075
      %3077 = vrot.lane.b32.xlu0 %v3058, 20
      %v3078 = vpop.permute.xlu0 %3077
      %3079 = vrot.lane.b32.xlu0 %v3059, 20
      %v3080 = vpop.permute.xlu0 %3079
      %3081 = vrot.lane.b32.xlu0 %v3060, 20
      %v3082 = vpop.permute.xlu0 %3081
      %3083 = vrot.lane.b32.xlu0 %v3061, 20
      %v3084 = vpop.permute.xlu0 %3083
      %3085 = vrot.lane.b32.xlu0 %v3062, 20
      %v3086 = vpop.permute.xlu0 %3085
      %3087 = vrot.lane.b32.xlu0 %v3063, 20
      %v3088 = vpop.permute.xlu0 %3087
      %3089 = vrot.lane.b32.xlu0 %v3064, 20
      %v3090 = vpop.permute.xlu0 %3089
      %3091 = vrot.lane.b32.xlu0 %v3065, 20
      %v3092 = vpop.permute.xlu0 %3091
      %3093 = vrot.lane.b32.xlu0 %v3066, 20
      %v3094 = vpop.permute.xlu0 %3093
      %3095 = vrot.lane.b32.xlu0 %v3067, 20
      %v3096 = vpop.permute.xlu0 %3095
      %3097 = vrot.lane.b32.xlu0 %v3068, 20
      %v3098 = vpop.permute.xlu0 %3097
      %3099 = vrot.lane.b32.xlu0 %v3069, 20
      %v3100 = vpop.permute.xlu0 %3099
      %3101 = vrot.lane.b32.xlu0 %v3070, 20
      %v3102 = vpop.permute.xlu0 %3101
      %vm3119 = vcmask 195744
      %3120 = vst.msk [vmem:[#allocation4] sm:$0xff] %vm3119, %v3072
      %3121 = vst.msk [vmem:[#allocation4 + $0x8] sm:$0xff] %vm3119, %v3074
      %3122 = vst.msk [vmem:[#allocation4 + $0x10] sm:$0xff] %vm3119, %v3076
      %3123 = vst.msk [vmem:[#allocation4 + $0x18] sm:$0xff] %vm3119, %v3078
      %3124 = vst.msk [vmem:[#allocation4 + $0x20] sm:$0xff] %vm3119, %v3080
      %3125 = vst.msk [vmem:[#allocation4 + $0x28] sm:$0xff] %vm3119, %v3082
      %3126 = vst.msk [vmem:[#allocation4 + $0x30] sm:$0xff] %vm3119, %v3084
      %3127 = vst.msk [vmem:[#allocation4 + $0x38] sm:$0xff] %vm3119, %v3086
      %3128 = vst.msk [vmem:[#allocation4 + $0x40] sm:$0xff] %vm3119, %v3088
      %3129 = vst.msk [vmem:[#allocation4 + $0x48] sm:$0xff] %vm3119, %v3090
      %3130 = vst.msk [vmem:[#allocation4 + $0x50] sm:$0xff] %vm3119, %v3092
      %3131 = vst.msk [vmem:[#allocation4 + $0x58] sm:$0xff] %vm3119, %v3094
      %3132 = vst.msk [vmem:[#allocation4 + $0x60] sm:$0xff] %vm3119, %v3096
      %3133 = vst.msk [vmem:[#allocation4 + $0x68] sm:$0xff] %vm3119, %v3098
      %3134 = vst.msk [vmem:[#allocation4 + $0x70] sm:$0xff] %vm3119, %v3100
      %3135 = vst.msk [vmem:[#allocation4 + $0x78] sm:$0xff] %vm3119, %v3102
      %s3136 = scalar_lea.vmem [#allocation2], 24
      %v3137 = vld [vmem:[%s3136] sm:$0xf]
      %v3138 = vld [vmem:[%s3136 + $0x4] sm:$0xf]
      %v3139 = vld [vmem:[%s3136 + $0xc] sm:$0xf]
      %v3140 = vld [vmem:[%s3136 + $0x10] sm:$0xf]
      %v3141 = vld [vmem:[%s3136 + $0x18] sm:$0xf]
      %v3142 = vld [vmem:[%s3136 + $0x1c] sm:$0xf]
      %v3143 = vld [vmem:[%s3136 + $0x24] sm:$0xf]
      %v3144 = vld [vmem:[%s3136 + $0x28] sm:$0xf]
      %v3145 = vld [vmem:[%s3136 + $0x30] sm:$0xf]
      %v3146 = vld [vmem:[%s3136 + $0x34] sm:$0xf]
      %v3147 = vld [vmem:[%s3136 + $0x3c] sm:$0xf]
      %v3148 = vld [vmem:[%s3136 + $0x40] sm:$0xf]
      %v3149 = vld [vmem:[%s3136 + $0x48] sm:$0xf]
      %v3150 = vld [vmem:[%s3136 + $0x4c] sm:$0xf]
      %v3151 = vld [vmem:[%s3136 + $0x54] sm:$0xf]
      %v3152 = vld [vmem:[%s3136 + $0x58] sm:$0xf]
      %v3153 = vld [vmem:[%s3136 + $0x60] sm:$0xf]
      %v3154 = vld [vmem:[%s3136 + $0x64] sm:$0xf]
      %v3155 = vld [vmem:[%s3136 + $0x6c] sm:$0xf]
      %v3156 = vld [vmem:[%s3136 + $0x70] sm:$0xf]
      %v3157 = vld [vmem:[%s3136 + $0x78] sm:$0xf]
      %v3158 = vld [vmem:[%s3136 + $0x7c] sm:$0xf]
      %v3159 = vld [vmem:[%s3136 + $0x84] sm:$0xf]
      %v3160 = vld [vmem:[%s3136 + $0x88] sm:$0xf]
      %v3161 = vld [vmem:[%s3136 + $0x90] sm:$0xf]
      %v3162 = vld [vmem:[%s3136 + $0x94] sm:$0xf]
      %v3163 = vld [vmem:[%s3136 + $0x9c] sm:$0xf]
      %v3164 = vld [vmem:[%s3136 + $0xa0] sm:$0xf]
      %v3165 = vld [vmem:[%s3136 + $0xa8] sm:$0xf]
      %v3166 = vld [vmem:[%s3136 + $0xac] sm:$0xf]
      %v3167 = vld [vmem:[%s3136 + $0xb4] sm:$0xf]
      %v3168 = vld [vmem:[%s3136 + $0xb8] sm:$0xf]
      %v3201 = vunpack.c.l.b16 %v3137
      %v3202 = vunpack.c.l.b16 %v3138
      %v3203 = vunpack.c.l.b16 %v3139
      %v3204 = vunpack.c.l.b16 %v3140
      %v3205 = vunpack.c.l.b16 %v3141
      %v3206 = vunpack.c.l.b16 %v3142
      %v3207 = vunpack.c.l.b16 %v3143
      %v3208 = vunpack.c.l.b16 %v3144
      %v3209 = vunpack.c.l.b16 %v3145
      %v3210 = vunpack.c.l.b16 %v3146
      %v3211 = vunpack.c.l.b16 %v3147
      %v3212 = vunpack.c.l.b16 %v3148
      %v3213 = vunpack.c.l.b16 %v3149
      %v3214 = vunpack.c.l.b16 %v3150
      %v3215 = vunpack.c.l.b16 %v3151
      %v3216 = vunpack.c.l.b16 %v3152
      %v3217 = vunpack.c.l.b16 %v3153
      %v3218 = vunpack.c.l.b16 %v3154
      %v3219 = vunpack.c.l.b16 %v3155
      %v3220 = vunpack.c.l.b16 %v3156
      %v3221 = vunpack.c.l.b16 %v3157
      %v3222 = vunpack.c.l.b16 %v3158
      %v3223 = vunpack.c.l.b16 %v3159
      %v3224 = vunpack.c.l.b16 %v3160
      %v3225 = vunpack.c.l.b16 %v3161
      %v3226 = vunpack.c.l.b16 %v3162
      %v3227 = vunpack.c.l.b16 %v3163
      %v3228 = vunpack.c.l.b16 %v3164
      %v3229 = vunpack.c.l.b16 %v3165
      %v3230 = vunpack.c.l.b16 %v3166
      %v3231 = vunpack.c.l.b16 %v3167
      %v3232 = vunpack.c.l.b16 %v3168
      %v3233 = vpack.c.b16 %v3202, %v3201
      %v3234 = vpack.c.b16 %v3204, %v3203
      %v3235 = vpack.c.b16 %v3206, %v3205
      %v3236 = vpack.c.b16 %v3208, %v3207
      %v3237 = vpack.c.b16 %v3210, %v3209
      %v3238 = vpack.c.b16 %v3212, %v3211
      %v3239 = vpack.c.b16 %v3214, %v3213
      %v3240 = vpack.c.b16 %v3216, %v3215
      %v3241 = vpack.c.b16 %v3218, %v3217
      %v3242 = vpack.c.b16 %v3220, %v3219
      %v3243 = vpack.c.b16 %v3222, %v3221
      %v3244 = vpack.c.b16 %v3224, %v3223
      %v3245 = vpack.c.b16 %v3226, %v3225
      %v3246 = vpack.c.b16 %v3228, %v3227
      %v3247 = vpack.c.b16 %v3230, %v3229
      %v3248 = vpack.c.b16 %v3232, %v3231
      %3249 = vrot.lane.b32.xlu0 %v3233, 24
      %v3250 = vpop.permute.xlu0 %3249
      %3251 = vrot.lane.b32.xlu0 %v3234, 24
      %v3252 = vpop.permute.xlu0 %3251
      %3253 = vrot.lane.b32.xlu0 %v3235, 24
      %v3254 = vpop.permute.xlu0 %3253
      %3255 = vrot.lane.b32.xlu0 %v3236, 24
      %v3256 = vpop.permute.xlu0 %3255
      %3257 = vrot.lane.b32.xlu0 %v3237, 24
      %v3258 = vpop.permute.xlu0 %3257
      %3259 = vrot.lane.b32.xlu0 %v3238, 24
      %v3260 = vpop.permute.xlu0 %3259
      %3261 = vrot.lane.b32.xlu0 %v3239, 24
      %v3262 = vpop.permute.xlu0 %3261
      %3263 = vrot.lane.b32.xlu0 %v3240, 24
      %v3264 = vpop.permute.xlu0 %3263
      %3265 = vrot.lane.b32.xlu0 %v3241, 24
      %v3266 = vpop.permute.xlu0 %3265
      %3267 = vrot.lane.b32.xlu0 %v3242, 24
      %v3268 = vpop.permute.xlu0 %3267
      %3269 = vrot.lane.b32.xlu0 %v3243, 24
      %v3270 = vpop.permute.xlu0 %3269
      %3271 = vrot.lane.b32.xlu0 %v3244, 24
      %v3272 = vpop.permute.xlu0 %3271
      %3273 = vrot.lane.b32.xlu0 %v3245, 24
      %v3274 = vpop.permute.xlu0 %3273
      %3275 = vrot.lane.b32.xlu0 %v3246, 24
      %v3276 = vpop.permute.xlu0 %3275
      %3277 = vrot.lane.b32.xlu0 %v3247, 24
      %v3278 = vpop.permute.xlu0 %3277
      %3279 = vrot.lane.b32.xlu0 %v3248, 24
      %v3280 = vpop.permute.xlu0 %3279
      %vm3297 = vcmask 228544
      %3298 = vst.msk [vmem:[#allocation4] sm:$0xff] %vm3297, %v3250
      %3299 = vst.msk [vmem:[#allocation4 + $0x8] sm:$0xff] %vm3297, %v3252
      %3300 = vst.msk [vmem:[#allocation4 + $0x10] sm:$0xff] %vm3297, %v3254
      %3301 = vst.msk [vmem:[#allocation4 + $0x18] sm:$0xff] %vm3297, %v3256
      %3302 = vst.msk [vmem:[#allocation4 + $0x20] sm:$0xff] %vm3297, %v3258
      %3303 = vst.msk [vmem:[#allocation4 + $0x28] sm:$0xff] %vm3297, %v3260
      %3304 = vst.msk [vmem:[#allocation4 + $0x30] sm:$0xff] %vm3297, %v3262
      %3305 = vst.msk [vmem:[#allocation4 + $0x38] sm:$0xff] %vm3297, %v3264
      %3306 = vst.msk [vmem:[#allocation4 + $0x40] sm:$0xff] %vm3297, %v3266
      %3307 = vst.msk [vmem:[#allocation4 + $0x48] sm:$0xff] %vm3297, %v3268
      %3308 = vst.msk [vmem:[#allocation4 + $0x50] sm:$0xff] %vm3297, %v3270
      %3309 = vst.msk [vmem:[#allocation4 + $0x58] sm:$0xff] %vm3297, %v3272
      %3310 = vst.msk [vmem:[#allocation4 + $0x60] sm:$0xff] %vm3297, %v3274
      %3311 = vst.msk [vmem:[#allocation4 + $0x68] sm:$0xff] %vm3297, %v3276
      %3312 = vst.msk [vmem:[#allocation4 + $0x70] sm:$0xff] %vm3297, %v3278
      %3313 = vst.msk [vmem:[#allocation4 + $0x78] sm:$0xff] %vm3297, %v3280
      %v3314 = vld [vmem:[%s3136] sm:$0xf]
      %v3315 = vld [vmem:[%s3136 + $0x4] sm:$0xf]
      %v3316 = vld [vmem:[%s3136 + $0x8] sm:$0x1]
      %v3317 = vld [vmem:[%s3136 + $0xc] sm:$0xf]
      %v3318 = vld [vmem:[%s3136 + $0x10] sm:$0xf]
      %v3319 = vld [vmem:[%s3136 + $0x14] sm:$0x1]
      %v3320 = vld [vmem:[%s3136 + $0x18] sm:$0xf]
      %v3321 = vld [vmem:[%s3136 + $0x1c] sm:$0xf]
      %v3322 = vld [vmem:[%s3136 + $0x20] sm:$0x1]
      %v3323 = vld [vmem:[%s3136 + $0x24] sm:$0xf]
      %v3324 = vld [vmem:[%s3136 + $0x28] sm:$0xf]
      %v3325 = vld [vmem:[%s3136 + $0x2c] sm:$0x1]
      %v3326 = vld [vmem:[%s3136 + $0x30] sm:$0xf]
      %v3327 = vld [vmem:[%s3136 + $0x34] sm:$0xf]
      %v3328 = vld [vmem:[%s3136 + $0x38] sm:$0x1]
      %v3329 = vld [vmem:[%s3136 + $0x3c] sm:$0xf]
      %v3330 = vld [vmem:[%s3136 + $0x40] sm:$0xf]
      %v3331 = vld [vmem:[%s3136 + $0x44] sm:$0x1]
      %v3332 = vld [vmem:[%s3136 + $0x48] sm:$0xf]
      %v3333 = vld [vmem:[%s3136 + $0x4c] sm:$0xf]
      %v3334 = vld [vmem:[%s3136 + $0x50] sm:$0x1]
      %v3335 = vld [vmem:[%s3136 + $0x54] sm:$0xf]
      %v3336 = vld [vmem:[%s3136 + $0x58] sm:$0xf]
      %v3337 = vld [vmem:[%s3136 + $0x5c] sm:$0x1]
      %v3338 = vld [vmem:[%s3136 + $0x60] sm:$0xf]
      %v3339 = vld [vmem:[%s3136 + $0x64] sm:$0xf]
      %v3340 = vld [vmem:[%s3136 + $0x68] sm:$0x1]
      %v3341 = vld [vmem:[%s3136 + $0x6c] sm:$0xf]
      %v3342 = vld [vmem:[%s3136 + $0x70] sm:$0xf]
      %v3343 = vld [vmem:[%s3136 + $0x74] sm:$0x1]
      %v3344 = vld [vmem:[%s3136 + $0x78] sm:$0xf]
      %v3345 = vld [vmem:[%s3136 + $0x7c] sm:$0xf]
      %v3346 = vld [vmem:[%s3136 + $0x80] sm:$0x1]
      %v3347 = vld [vmem:[%s3136 + $0x84] sm:$0xf]
      %v3348 = vld [vmem:[%s3136 + $0x88] sm:$0xf]
      %v3349 = vld [vmem:[%s3136 + $0x8c] sm:$0x1]
      %v3350 = vld [vmem:[%s3136 + $0x90] sm:$0xf]
      %v3351 = vld [vmem:[%s3136 + $0x94] sm:$0xf]
      %v3352 = vld [vmem:[%s3136 + $0x98] sm:$0x1]
      %v3353 = vld [vmem:[%s3136 + $0x9c] sm:$0xf]
      %v3354 = vld [vmem:[%s3136 + $0xa0] sm:$0xf]
      %v3355 = vld [vmem:[%s3136 + $0xa4] sm:$0x1]
      %v3356 = vld [vmem:[%s3136 + $0xa8] sm:$0xf]
      %v3357 = vld [vmem:[%s3136 + $0xac] sm:$0xf]
      %v3358 = vld [vmem:[%s3136 + $0xb0] sm:$0x1]
      %v3359 = vld [vmem:[%s3136 + $0xb4] sm:$0xf]
      %v3360 = vld [vmem:[%s3136 + $0xb8] sm:$0xf]
      %v3361 = vld [vmem:[%s3136 + $0xbc] sm:$0x1]
      %v3363 = vshrl.u32 %v3314, 16
      %v3365 = vrot.slane %v3363, 4
      %v3366 = vshll.u32 %v3314, 16
      %v3368 = vrot.slane %v3366, 5
      %v3369 = vor.u32 %v3365, %v3368
      %v3370 = vrot.slane %v3369, 4
      %v3372 = vshll.u32 %v3315, 16
      %v3374 = vrot.slane %v3372, 5
      %v3375 = vsel %vm1271, %v3370, %v3374
      %v3376 = vshrl.u32 %v3315, 16
      %v3378 = vrot.slane %v3376, 4
      %v3379 = vor.u32 %v3378, %v3374
      %v3380 = vrot.slane %v3379, 4
      %v3382 = vshll.u32 %v3316, 16
      %v3384 = vrot.slane %v3382, 5
      %v3385 = vsel %vm1271, %v3380, %v3384
      %v3387 = vshrl.u32 %v3317, 16
      %v3389 = vrot.slane %v3387, 4
      %v3390 = vshll.u32 %v3317, 16
      %v3392 = vrot.slane %v3390, 5
      %v3393 = vor.u32 %v3389, %v3392
      %v3394 = vrot.slane %v3393, 4
      %v3396 = vshll.u32 %v3318, 16
      %v3398 = vrot.slane %v3396, 5
      %v3399 = vsel %vm1271, %v3394, %v3398
      %v3400 = vshrl.u32 %v3318, 16
      %v3402 = vrot.slane %v3400, 4
      %v3403 = vor.u32 %v3402, %v3398
      %v3404 = vrot.slane %v3403, 4
      %v3406 = vshll.u32 %v3319, 16
      %v3408 = vrot.slane %v3406, 5
      %v3409 = vsel %vm1271, %v3404, %v3408
      %v3411 = vshrl.u32 %v3320, 16
      %v3413 = vrot.slane %v3411, 4
      %v3414 = vshll.u32 %v3320, 16
      %v3416 = vrot.slane %v3414, 5
      %v3417 = vor.u32 %v3413, %v3416
      %v3418 = vrot.slane %v3417, 4
      %v3420 = vshll.u32 %v3321, 16
      %v3422 = vrot.slane %v3420, 5
      %v3423 = vsel %vm1271, %v3418, %v3422
      %v3424 = vshrl.u32 %v3321, 16
      %v3426 = vrot.slane %v3424, 4
      %v3427 = vor.u32 %v3426, %v3422
      %v3428 = vrot.slane %v3427, 4
      %v3430 = vshll.u32 %v3322, 16
      %v3432 = vrot.slane %v3430, 5
      %v3433 = vsel %vm1271, %v3428, %v3432
      %v3435 = vshrl.u32 %v3323, 16
      %v3437 = vrot.slane %v3435, 4
      %v3438 = vshll.u32 %v3323, 16
      %v3440 = vrot.slane %v3438, 5
      %v3441 = vor.u32 %v3437, %v3440
      %v3442 = vrot.slane %v3441, 4
      %v3444 = vshll.u32 %v3324, 16
      %v3446 = vrot.slane %v3444, 5
      %v3447 = vsel %vm1271, %v3442, %v3446
      %v3448 = vshrl.u32 %v3324, 16
      %v3450 = vrot.slane %v3448, 4
      %v3451 = vor.u32 %v3450, %v3446
      %v3452 = vrot.slane %v3451, 4
      %v3454 = vshll.u32 %v3325, 16
      %v3456 = vrot.slane %v3454, 5
      %v3457 = vsel %vm1271, %v3452, %v3456
      %v3459 = vshrl.u32 %v3326, 16
      %v3461 = vrot.slane %v3459, 4
      %v3462 = vshll.u32 %v3326, 16
      %v3464 = vrot.slane %v3462, 5
      %v3465 = vor.u32 %v3461, %v3464
      %v3466 = vrot.slane %v3465, 4
      %v3468 = vshll.u32 %v3327, 16
      %v3470 = vrot.slane %v3468, 5
      %v3471 = vsel %vm1271, %v3466, %v3470
      %v3472 = vshrl.u32 %v3327, 16
      %v3474 = vrot.slane %v3472, 4
      %v3475 = vor.u32 %v3474, %v3470
      %v3476 = vrot.slane %v3475, 4
      %v3478 = vshll.u32 %v3328, 16
      %v3480 = vrot.slane %v3478, 5
      %v3481 = vsel %vm1271, %v3476, %v3480
      %v3483 = vshrl.u32 %v3329, 16
      %v3485 = vrot.slane %v3483, 4
      %v3486 = vshll.u32 %v3329, 16
      %v3488 = vrot.slane %v3486, 5
      %v3489 = vor.u32 %v3485, %v3488
      %v3490 = vrot.slane %v3489, 4
      %v3492 = vshll.u32 %v3330, 16
      %v3494 = vrot.slane %v3492, 5
      %v3495 = vsel %vm1271, %v3490, %v3494
      %v3496 = vshrl.u32 %v3330, 16
      %v3498 = vrot.slane %v3496, 4
      %v3499 = vor.u32 %v3498, %v3494
      %v3500 = vrot.slane %v3499, 4
      %v3502 = vshll.u32 %v3331, 16
      %v3504 = vrot.slane %v3502, 5
      %v3505 = vsel %vm1271, %v3500, %v3504
      %v3507 = vshrl.u32 %v3332, 16
      %v3509 = vrot.slane %v3507, 4
      %v3510 = vshll.u32 %v3332, 16
      %v3512 = vrot.slane %v3510, 5
      %v3513 = vor.u32 %v3509, %v3512
      %v3514 = vrot.slane %v3513, 4
      %v3516 = vshll.u32 %v3333, 16
      %v3518 = vrot.slane %v3516, 5
      %v3519 = vsel %vm1271, %v3514, %v3518
      %v3520 = vshrl.u32 %v3333, 16
      %v3522 = vrot.slane %v3520, 4
      %v3523 = vor.u32 %v3522, %v3518
      %v3524 = vrot.slane %v3523, 4
      %v3526 = vshll.u32 %v3334, 16
      %v3528 = vrot.slane %v3526, 5
      %v3529 = vsel %vm1271, %v3524, %v3528
      %v3531 = vshrl.u32 %v3335, 16
      %v3533 = vrot.slane %v3531, 4
      %v3534 = vshll.u32 %v3335, 16
      %v3536 = vrot.slane %v3534, 5
      %v3537 = vor.u32 %v3533, %v3536
      %v3538 = vrot.slane %v3537, 4
      %v3540 = vshll.u32 %v3336, 16
      %v3542 = vrot.slane %v3540, 5
      %v3543 = vsel %vm1271, %v3538, %v3542
      %v3544 = vshrl.u32 %v3336, 16
      %v3546 = vrot.slane %v3544, 4
      %v3547 = vor.u32 %v3546, %v3542
      %v3548 = vrot.slane %v3547, 4
      %v3550 = vshll.u32 %v3337, 16
      %v3552 = vrot.slane %v3550, 5
      %v3553 = vsel %vm1271, %v3548, %v3552
      %v3555 = vshrl.u32 %v3338, 16
      %v3557 = vrot.slane %v3555, 4
      %v3558 = vshll.u32 %v3338, 16
      %v3560 = vrot.slane %v3558, 5
      %v3561 = vor.u32 %v3557, %v3560
      %v3562 = vrot.slane %v3561, 4
      %v3564 = vshll.u32 %v3339, 16
      %v3566 = vrot.slane %v3564, 5
      %v3567 = vsel %vm1271, %v3562, %v3566
      %v3568 = vshrl.u32 %v3339, 16
      %v3570 = vrot.slane %v3568, 4
      %v3571 = vor.u32 %v3570, %v3566
      %v3572 = vrot.slane %v3571, 4
      %v3574 = vshll.u32 %v3340, 16
      %v3576 = vrot.slane %v3574, 5
      %v3577 = vsel %vm1271, %v3572, %v3576
      %v3579 = vshrl.u32 %v3341, 16
      %v3581 = vrot.slane %v3579, 4
      %v3582 = vshll.u32 %v3341, 16
      %v3584 = vrot.slane %v3582, 5
      %v3585 = vor.u32 %v3581, %v3584
      %v3586 = vrot.slane %v3585, 4
      %v3588 = vshll.u32 %v3342, 16
      %v3590 = vrot.slane %v3588, 5
      %v3591 = vsel %vm1271, %v3586, %v3590
      %v3592 = vshrl.u32 %v3342, 16
      %v3594 = vrot.slane %v3592, 4
      %v3595 = vor.u32 %v3594, %v3590
      %v3596 = vrot.slane %v3595, 4
      %v3598 = vshll.u32 %v3343, 16
      %v3600 = vrot.slane %v3598, 5
      %v3601 = vsel %vm1271, %v3596, %v3600
      %v3603 = vshrl.u32 %v3344, 16
      %v3605 = vrot.slane %v3603, 4
      %v3606 = vshll.u32 %v3344, 16
      %v3608 = vrot.slane %v3606, 5
      %v3609 = vor.u32 %v3605, %v3608
      %v3610 = vrot.slane %v3609, 4
      %v3612 = vshll.u32 %v3345, 16
      %v3614 = vrot.slane %v3612, 5
      %v3615 = vsel %vm1271, %v3610, %v3614
      %v3616 = vshrl.u32 %v3345, 16
      %v3618 = vrot.slane %v3616, 4
      %v3619 = vor.u32 %v3618, %v3614
      %v3620 = vrot.slane %v3619, 4
      %v3622 = vshll.u32 %v3346, 16
      %v3624 = vrot.slane %v3622, 5
      %v3625 = vsel %vm1271, %v3620, %v3624
      %v3627 = vshrl.u32 %v3347, 16
      %v3629 = vrot.slane %v3627, 4
      %v3630 = vshll.u32 %v3347, 16
      %v3632 = vrot.slane %v3630, 5
      %v3633 = vor.u32 %v3629, %v3632
      %v3634 = vrot.slane %v3633, 4
      %v3636 = vshll.u32 %v3348, 16
      %v3638 = vrot.slane %v3636, 5
      %v3639 = vsel %vm1271, %v3634, %v3638
      %v3640 = vshrl.u32 %v3348, 16
      %v3642 = vrot.slane %v3640, 4
      %v3643 = vor.u32 %v3642, %v3638
      %v3644 = vrot.slane %v3643, 4
      %v3646 = vshll.u32 %v3349, 16
      %v3648 = vrot.slane %v3646, 5
      %v3649 = vsel %vm1271, %v3644, %v3648
      %v3651 = vshrl.u32 %v3350, 16
      %v3653 = vrot.slane %v3651, 4
      %v3654 = vshll.u32 %v3350, 16
      %v3656 = vrot.slane %v3654, 5
      %v3657 = vor.u32 %v3653, %v3656
      %v3658 = vrot.slane %v3657, 4
      %v3660 = vshll.u32 %v3351, 16
      %v3662 = vrot.slane %v3660, 5
      %v3663 = vsel %vm1271, %v3658, %v3662
      %v3664 = vshrl.u32 %v3351, 16
      %v3666 = vrot.slane %v3664, 4
      %v3667 = vor.u32 %v3666, %v3662
      %v3668 = vrot.slane %v3667, 4
      %v3670 = vshll.u32 %v3352, 16
      %v3672 = vrot.slane %v3670, 5
      %v3673 = vsel %vm1271, %v3668, %v3672
      %v3675 = vshrl.u32 %v3353, 16
      %v3677 = vrot.slane %v3675, 4
      %v3678 = vshll.u32 %v3353, 16
      %v3680 = vrot.slane %v3678, 5
      %v3681 = vor.u32 %v3677, %v3680
      %v3682 = vrot.slane %v3681, 4
      %v3684 = vshll.u32 %v3354, 16
      %v3686 = vrot.slane %v3684, 5
      %v3687 = vsel %vm1271, %v3682, %v3686
      %v3688 = vshrl.u32 %v3354, 16
      %v3690 = vrot.slane %v3688, 4
      %v3691 = vor.u32 %v3690, %v3686
      %v3692 = vrot.slane %v3691, 4
      %v3694 = vshll.u32 %v3355, 16
      %v3696 = vrot.slane %v3694, 5
      %v3697 = vsel %vm1271, %v3692, %v3696
      %v3699 = vshrl.u32 %v3356, 16
      %v3701 = vrot.slane %v3699, 4
      %v3702 = vshll.u32 %v3356, 16
      %v3704 = vrot.slane %v3702, 5
      %v3705 = vor.u32 %v3701, %v3704
      %v3706 = vrot.slane %v3705, 4
      %v3708 = vshll.u32 %v3357, 16
      %v3710 = vrot.slane %v3708, 5
      %v3711 = vsel %vm1271, %v3706, %v3710
      %v3712 = vshrl.u32 %v3357, 16
      %v3714 = vrot.slane %v3712, 4
      %v3715 = vor.u32 %v3714, %v3710
      %v3716 = vrot.slane %v3715, 4
      %v3718 = vshll.u32 %v3358, 16
      %v3720 = vrot.slane %v3718, 5
      %v3721 = vsel %vm1271, %v3716, %v3720
      %v3723 = vshrl.u32 %v3359, 16
      %v3725 = vrot.slane %v3723, 4
      %v3726 = vshll.u32 %v3359, 16
      %v3728 = vrot.slane %v3726, 5
      %v3729 = vor.u32 %v3725, %v3728
      %v3730 = vrot.slane %v3729, 4
      %v3732 = vshll.u32 %v3360, 16
      %v3734 = vrot.slane %v3732, 5
      %v3735 = vsel %vm1271, %v3730, %v3734
      %v3736 = vshrl.u32 %v3360, 16
      %v3738 = vrot.slane %v3736, 4
      %v3739 = vor.u32 %v3738, %v3734
      %v3740 = vrot.slane %v3739, 4
      %v3742 = vshll.u32 %v3361, 16
      %v3744 = vrot.slane %v3742, 5
      %v3745 = vsel %vm1271, %v3740, %v3744
      %v3746 = vunpack.c.l.b16 %v3375
      %v3747 = vunpack.c.l.b16 %v3385
      %v3748 = vunpack.c.l.b16 %v3399
      %v3749 = vunpack.c.l.b16 %v3409
      %v3750 = vunpack.c.l.b16 %v3423
      %v3751 = vunpack.c.l.b16 %v3433
      %v3752 = vunpack.c.l.b16 %v3447
      %v3753 = vunpack.c.l.b16 %v3457
      %v3754 = vunpack.c.l.b16 %v3471
      %v3755 = vunpack.c.l.b16 %v3481
      %v3756 = vunpack.c.l.b16 %v3495
      %v3757 = vunpack.c.l.b16 %v3505
      %v3758 = vunpack.c.l.b16 %v3519
      %v3759 = vunpack.c.l.b16 %v3529
      %v3760 = vunpack.c.l.b16 %v3543
      %v3761 = vunpack.c.l.b16 %v3553
      %v3762 = vunpack.c.l.b16 %v3567
      %v3763 = vunpack.c.l.b16 %v3577
      %v3764 = vunpack.c.l.b16 %v3591
      %v3765 = vunpack.c.l.b16 %v3601
      %v3766 = vunpack.c.l.b16 %v3615
      %v3767 = vunpack.c.l.b16 %v3625
      %v3768 = vunpack.c.l.b16 %v3639
      %v3769 = vunpack.c.l.b16 %v3649
      %v3770 = vunpack.c.l.b16 %v3663
      %v3771 = vunpack.c.l.b16 %v3673
      %v3772 = vunpack.c.l.b16 %v3687
      %v3773 = vunpack.c.l.b16 %v3697
      %v3774 = vunpack.c.l.b16 %v3711
      %v3775 = vunpack.c.l.b16 %v3721
      %v3776 = vunpack.c.l.b16 %v3735
      %v3777 = vunpack.c.l.b16 %v3745
      %v3778 = vpack.c.b16 %v3747, %v3746
      %v3779 = vpack.c.b16 %v3749, %v3748
      %v3780 = vpack.c.b16 %v3751, %v3750
      %v3781 = vpack.c.b16 %v3753, %v3752
      %v3782 = vpack.c.b16 %v3755, %v3754
      %v3783 = vpack.c.b16 %v3757, %v3756
      %v3784 = vpack.c.b16 %v3759, %v3758
      %v3785 = vpack.c.b16 %v3761, %v3760
      %v3786 = vpack.c.b16 %v3763, %v3762
      %v3787 = vpack.c.b16 %v3765, %v3764
      %v3788 = vpack.c.b16 %v3767, %v3766
      %v3789 = vpack.c.b16 %v3769, %v3768
      %v3790 = vpack.c.b16 %v3771, %v3770
      %v3791 = vpack.c.b16 %v3773, %v3772
      %v3792 = vpack.c.b16 %v3775, %v3774
      %v3793 = vpack.c.b16 %v3777, %v3776
      %3794 = vrot.lane.b32.xlu0 %v3778, 28
      %v3795 = vpop.permute.xlu0 %3794
      %3796 = vrot.lane.b32.xlu0 %v3779, 28
      %v3797 = vpop.permute.xlu0 %3796
      %3798 = vrot.lane.b32.xlu0 %v3780, 28
      %v3799 = vpop.permute.xlu0 %3798
      %3800 = vrot.lane.b32.xlu0 %v3781, 28
      %v3801 = vpop.permute.xlu0 %3800
      %3802 = vrot.lane.b32.xlu0 %v3782, 28
      %v3803 = vpop.permute.xlu0 %3802
      %3804 = vrot.lane.b32.xlu0 %v3783, 28
      %v3805 = vpop.permute.xlu0 %3804
      %3806 = vrot.lane.b32.xlu0 %v3784, 28
      %v3807 = vpop.permute.xlu0 %3806
      %3808 = vrot.lane.b32.xlu0 %v3785, 28
      %v3809 = vpop.permute.xlu0 %3808
      %3810 = vrot.lane.b32.xlu0 %v3786, 28
      %v3811 = vpop.permute.xlu0 %3810
      %3812 = vrot.lane.b32.xlu0 %v3787, 28
      %v3813 = vpop.permute.xlu0 %3812
      %3814 = vrot.lane.b32.xlu0 %v3788, 28
      %v3815 = vpop.permute.xlu0 %3814
      %3816 = vrot.lane.b32.xlu0 %v3789, 28
      %v3817 = vpop.permute.xlu0 %3816
      %3818 = vrot.lane.b32.xlu0 %v3790, 28
      %v3819 = vpop.permute.xlu0 %3818
      %3820 = vrot.lane.b32.xlu0 %v3791, 28
      %v3821 = vpop.permute.xlu0 %3820
      %3822 = vrot.lane.b32.xlu0 %v3792, 28
      %v3823 = vpop.permute.xlu0 %3822
      %3824 = vrot.lane.b32.xlu0 %v3793, 28
      %v3825 = vpop.permute.xlu0 %3824
      %vm3842 = vcmask 261344
      %3843 = vst.msk [vmem:[#allocation4] sm:$0xff] %vm3842, %v3795
      %3844 = vst.msk [vmem:[#allocation4 + $0x8] sm:$0xff] %vm3842, %v3797
      %3845 = vst.msk [vmem:[#allocation4 + $0x10] sm:$0xff] %vm3842, %v3799
      %3846 = vst.msk [vmem:[#allocation4 + $0x18] sm:$0xff] %vm3842, %v3801
      %3847 = vst.msk [vmem:[#allocation4 + $0x20] sm:$0xff] %vm3842, %v3803
      %3848 = vst.msk [vmem:[#allocation4 + $0x28] sm:$0xff] %vm3842, %v3805
      %3849 = vst.msk [vmem:[#allocation4 + $0x30] sm:$0xff] %vm3842, %v3807
      %3850 = vst.msk [vmem:[#allocation4 + $0x38] sm:$0xff] %vm3842, %v3809
      %3851 = vst.msk [vmem:[#allocation4 + $0x40] sm:$0xff] %vm3842, %v3811
      %3852 = vst.msk [vmem:[#allocation4 + $0x48] sm:$0xff] %vm3842, %v3813
      %3853 = vst.msk [vmem:[#allocation4 + $0x50] sm:$0xff] %vm3842, %v3815
      %3854 = vst.msk [vmem:[#allocation4 + $0x58] sm:$0xff] %vm3842, %v3817
      %3855 = vst.msk [vmem:[#allocation4 + $0x60] sm:$0xff] %vm3842, %v3819
      %3856 = vst.msk [vmem:[#allocation4 + $0x68] sm:$0xff] %vm3842, %v3821
      %3857 = vst.msk [vmem:[#allocation4 + $0x70] sm:$0xff] %vm3842, %v3823
      %3858 = vst.msk [vmem:[#allocation4 + $0x78] sm:$0xff] %vm3842, %v3825
      %v3859 = vld [vmem:[%s3136] sm:$0xe]
      %v3860 = vld [vmem:[%s3136 + $0x4] sm:$0xf]
      %v3861 = vld [vmem:[%s3136 + $0x8] sm:$0x1]
      %v3862 = vld [vmem:[%s3136 + $0xc] sm:$0xe]
      %v3863 = vld [vmem:[%s3136 + $0x10] sm:$0xf]
      %v3864 = vld [vmem:[%s3136 + $0x14] sm:$0x1]
      %v3865 = vld [vmem:[%s3136 + $0x18] sm:$0xe]
      %v3866 = vld [vmem:[%s3136 + $0x1c] sm:$0xf]
      %v3867 = vld [vmem:[%s3136 + $0x20] sm:$0x1]
      %v3868 = vld [vmem:[%s3136 + $0x24] sm:$0xe]
      %v3869 = vld [vmem:[%s3136 + $0x28] sm:$0xf]
      %v3870 = vld [vmem:[%s3136 + $0x2c] sm:$0x1]
      %v3871 = vld [vmem:[%s3136 + $0x30] sm:$0xe]
      %v3872 = vld [vmem:[%s3136 + $0x34] sm:$0xf]
      %v3873 = vld [vmem:[%s3136 + $0x38] sm:$0x1]
      %v3874 = vld [vmem:[%s3136 + $0x3c] sm:$0xe]
      %v3875 = vld [vmem:[%s3136 + $0x40] sm:$0xf]
      %v3876 = vld [vmem:[%s3136 + $0x44] sm:$0x1]
      %v3877 = vld [vmem:[%s3136 + $0x48] sm:$0xe]
      %v3878 = vld [vmem:[%s3136 + $0x4c] sm:$0xf]
      %v3879 = vld [vmem:[%s3136 + $0x50] sm:$0x1]
      %v3880 = vld [vmem:[%s3136 + $0x54] sm:$0xe]
      %v3881 = vld [vmem:[%s3136 + $0x58] sm:$0xf]
      %v3882 = vld [vmem:[%s3136 + $0x5c] sm:$0x1]
      %v3883 = vld [vmem:[%s3136 + $0x60] sm:$0xe]
      %v3884 = vld [vmem:[%s3136 + $0x64] sm:$0xf]
      %v3885 = vld [vmem:[%s3136 + $0x68] sm:$0x1]
      %v3886 = vld [vmem:[%s3136 + $0x6c] sm:$0xe]
      %v3887 = vld [vmem:[%s3136 + $0x70] sm:$0xf]
      %v3888 = vld [vmem:[%s3136 + $0x74] sm:$0x1]
      %v3889 = vld [vmem:[%s3136 + $0x78] sm:$0xe]
      %v3890 = vld [vmem:[%s3136 + $0x7c] sm:$0xf]
      %v3891 = vld [vmem:[%s3136 + $0x80] sm:$0x1]
      %v3892 = vld [vmem:[%s3136 + $0x84] sm:$0xe]
      %v3893 = vld [vmem:[%s3136 + $0x88] sm:$0xf]
      %v3894 = vld [vmem:[%s3136 + $0x8c] sm:$0x1]
      %v3895 = vld [vmem:[%s3136 + $0x90] sm:$0xe]
      %v3896 = vld [vmem:[%s3136 + $0x94] sm:$0xf]
      %v3897 = vld [vmem:[%s3136 + $0x98] sm:$0x1]
      %v3898 = vld [vmem:[%s3136 + $0x9c] sm:$0xe]
      %v3899 = vld [vmem:[%s3136 + $0xa0] sm:$0xf]
      %v3900 = vld [vmem:[%s3136 + $0xa4] sm:$0x1]
      %v3901 = vld [vmem:[%s3136 + $0xa8] sm:$0xe]
      %v3902 = vld [vmem:[%s3136 + $0xac] sm:$0xf]
      %v3903 = vld [vmem:[%s3136 + $0xb0] sm:$0x1]
      %v3904 = vld [vmem:[%s3136 + $0xb4] sm:$0xe]
      %v3905 = vld [vmem:[%s3136 + $0xb8] sm:$0xf]
      %v3906 = vld [vmem:[%s3136 + $0xbc] sm:$0x1]
      %v3955 = vrot.slane %v3859, 5
      %v3956 = vrot.slane %v3955, 4
      %v3957 = vrot.slane %v3860, 5
      %v3958 = vsel %vm1867, %v3956, %v3957
      %v3959 = vrot.slane %v3957, 4
      %v3960 = vrot.slane %v3861, 5
      %v3961 = vsel %vm1867, %v3959, %v3960
      %v3962 = vrot.slane %v3862, 5
      %v3963 = vrot.slane %v3962, 4
      %v3964 = vrot.slane %v3863, 5
      %v3965 = vsel %vm1867, %v3963, %v3964
      %v3966 = vrot.slane %v3964, 4
      %v3967 = vrot.slane %v3864, 5
      %v3968 = vsel %vm1867, %v3966, %v3967
      %v3969 = vrot.slane %v3865, 5
      %v3970 = vrot.slane %v3969, 4
      %v3971 = vrot.slane %v3866, 5
      %v3972 = vsel %vm1867, %v3970, %v3971
      %v3973 = vrot.slane %v3971, 4
      %v3974 = vrot.slane %v3867, 5
      %v3975 = vsel %vm1867, %v3973, %v3974
      %v3976 = vrot.slane %v3868, 5
      %v3977 = vrot.slane %v3976, 4
      %v3978 = vrot.slane %v3869, 5
      %v3979 = vsel %vm1867, %v3977, %v3978
      %v3980 = vrot.slane %v3978, 4
      %v3981 = vrot.slane %v3870, 5
      %v3982 = vsel %vm1867, %v3980, %v3981
      %v3983 = vrot.slane %v3871, 5
      %v3984 = vrot.slane %v3983, 4
      %v3985 = vrot.slane %v3872, 5
      %v3986 = vsel %vm1867, %v3984, %v3985
      %v3987 = vrot.slane %v3985, 4
      %v3988 = vrot.slane %v3873, 5
      %v3989 = vsel %vm1867, %v3987, %v3988
      %v3990 = vrot.slane %v3874, 5
      %v3991 = vrot.slane %v3990, 4
      %v3992 = vrot.slane %v3875, 5
      %v3993 = vsel %vm1867, %v3991, %v3992
      %v3994 = vrot.slane %v3992, 4
      %v3995 = vrot.slane %v3876, 5
      %v3996 = vsel %vm1867, %v3994, %v3995
      %v3997 = vrot.slane %v3877, 5
      %v3998 = vrot.slane %v3997, 4
      %v3999 = vrot.slane %v3878, 5
      %v4000 = vsel %vm1867, %v3998, %v3999
      %v4001 = vrot.slane %v3999, 4
      %v4002 = vrot.slane %v3879, 5
      %v4003 = vsel %vm1867, %v4001, %v4002
      %v4004 = vrot.slane %v3880, 5
      %v4005 = vrot.slane %v4004, 4
      %v4006 = vrot.slane %v3881, 5
      %v4007 = vsel %vm1867, %v4005, %v4006
      %v4008 = vrot.slane %v4006, 4
      %v4009 = vrot.slane %v3882, 5
      %v4010 = vsel %vm1867, %v4008, %v4009
      %v4011 = vrot.slane %v3883, 5
      %v4012 = vrot.slane %v4011, 4
      %v4013 = vrot.slane %v3884, 5
      %v4014 = vsel %vm1867, %v4012, %v4013
      %v4015 = vrot.slane %v4013, 4
      %v4016 = vrot.slane %v3885, 5
      %v4017 = vsel %vm1867, %v4015, %v4016
      %v4018 = vrot.slane %v3886, 5
      %v4019 = vrot.slane %v4018, 4
      %v4020 = vrot.slane %v3887, 5
      %v4021 = vsel %vm1867, %v4019, %v4020
      %v4022 = vrot.slane %v4020, 4
      %v4023 = vrot.slane %v3888, 5
      %v4024 = vsel %vm1867, %v4022, %v4023
      %v4025 = vrot.slane %v3889, 5
      %v4026 = vrot.slane %v4025, 4
      %v4027 = vrot.slane %v3890, 5
      %v4028 = vsel %vm1867, %v4026, %v4027
      %v4029 = vrot.slane %v4027, 4
      %v4030 = vrot.slane %v3891, 5
      %v4031 = vsel %vm1867, %v4029, %v4030
      %v4032 = vrot.slane %v3892, 5
      %v4033 = vrot.slane %v4032, 4
      %v4034 = vrot.slane %v3893, 5
      %v4035 = vsel %vm1867, %v4033, %v4034
      %v4036 = vrot.slane %v4034, 4
      %v4037 = vrot.slane %v3894, 5
      %v4038 = vsel %vm1867, %v4036, %v4037
      %v4039 = vrot.slane %v3895, 5
      %v4040 = vrot.slane %v4039, 4
      %v4041 = vrot.slane %v3896, 5
      %v4042 = vsel %vm1867, %v4040, %v4041
      %v4043 = vrot.slane %v4041, 4
      %v4044 = vrot.slane %v3897, 5
      %v4045 = vsel %vm1867, %v4043, %v4044
      %v4046 = vrot.slane %v3898, 5
      %v4047 = vrot.slane %v4046, 4
      %v4048 = vrot.slane %v3899, 5
      %v4049 = vsel %vm1867, %v4047, %v4048
      %v4050 = vrot.slane %v4048, 4
      %v4051 = vrot.slane %v3900, 5
      %v4052 = vsel %vm1867, %v4050, %v4051
      %v4053 = vrot.slane %v3901, 5
      %v4054 = vrot.slane %v4053, 4
      %v4055 = vrot.slane %v3902, 5
      %v4056 = vsel %vm1867, %v4054, %v4055
      %v4057 = vrot.slane %v4055, 4
      %v4058 = vrot.slane %v3903, 5
      %v4059 = vsel %vm1867, %v4057, %v4058
      %v4060 = vrot.slane %v3904, 5
      %v4061 = vrot.slane %v4060, 4
      %v4062 = vrot.slane %v3905, 5
      %v4063 = vsel %vm1867, %v4061, %v4062
      %v4064 = vrot.slane %v4062, 4
      %v4065 = vrot.slane %v3906, 5
      %v4066 = vsel %vm1867, %v4064, %v4065
      %v4067 = vunpack.c.l.b16 %v3958
      %v4068 = vunpack.c.l.b16 %v3961
      %v4069 = vunpack.c.l.b16 %v3965
      %v4070 = vunpack.c.l.b16 %v3968
      %v4071 = vunpack.c.l.b16 %v3972
      %v4072 = vunpack.c.l.b16 %v3975
      %v4073 = vunpack.c.l.b16 %v3979
      %v4074 = vunpack.c.l.b16 %v3982
      %v4075 = vunpack.c.l.b16 %v3986
      %v4076 = vunpack.c.l.b16 %v3989
      %v4077 = vunpack.c.l.b16 %v3993
      %v4078 = vunpack.c.l.b16 %v3996
      %v4079 = vunpack.c.l.b16 %v4000
      %v4080 = vunpack.c.l.b16 %v4003
      %v4081 = vunpack.c.l.b16 %v4007
      %v4082 = vunpack.c.l.b16 %v4010
      %v4083 = vunpack.c.l.b16 %v4014
      %v4084 = vunpack.c.l.b16 %v4017
      %v4085 = vunpack.c.l.b16 %v4021
      %v4086 = vunpack.c.l.b16 %v4024
      %v4087 = vunpack.c.l.b16 %v4028
      %v4088 = vunpack.c.l.b16 %v4031
      %v4089 = vunpack.c.l.b16 %v4035
      %v4090 = vunpack.c.l.b16 %v4038
      %v4091 = vunpack.c.l.b16 %v4042
      %v4092 = vunpack.c.l.b16 %v4045
      %v4093 = vunpack.c.l.b16 %v4049
      %v4094 = vunpack.c.l.b16 %v4052
      %v4095 = vunpack.c.l.b16 %v4056
      %v4096 = vunpack.c.l.b16 %v4059
      %v4097 = vunpack.c.l.b16 %v4063
      %v4098 = vunpack.c.l.b16 %v4066
      %v4099 = vpack.c.b16 %v4068, %v4067
      %v4100 = vpack.c.b16 %v4070, %v4069
      %v4101 = vpack.c.b16 %v4072, %v4071
      %v4102 = vpack.c.b16 %v4074, %v4073
      %v4103 = vpack.c.b16 %v4076, %v4075
      %v4104 = vpack.c.b16 %v4078, %v4077
      %v4105 = vpack.c.b16 %v4080, %v4079
      %v4106 = vpack.c.b16 %v4082, %v4081
      %v4107 = vpack.c.b16 %v4084, %v4083
      %v4108 = vpack.c.b16 %v4086, %v4085
      %v4109 = vpack.c.b16 %v4088, %v4087
      %v4110 = vpack.c.b16 %v4090, %v4089
      %v4111 = vpack.c.b16 %v4092, %v4091
      %v4112 = vpack.c.b16 %v4094, %v4093
      %v4113 = vpack.c.b16 %v4096, %v4095
      %v4114 = vpack.c.b16 %v4098, %v4097
      %4115 = vrot.lane.b32.xlu0 %v4099, 32
      %v4116 = vpop.permute.xlu0 %4115
      %4117 = vrot.lane.b32.xlu0 %v4100, 32
      %v4118 = vpop.permute.xlu0 %4117
      %4119 = vrot.lane.b32.xlu0 %v4101, 32
      %v4120 = vpop.permute.xlu0 %4119
      %4121 = vrot.lane.b32.xlu0 %v4102, 32
      %v4122 = vpop.permute.xlu0 %4121
      %4123 = vrot.lane.b32.xlu0 %v4103, 32
      %v4124 = vpop.permute.xlu0 %4123
      %4125 = vrot.lane.b32.xlu0 %v4104, 32
      %v4126 = vpop.permute.xlu0 %4125
      %4127 = vrot.lane.b32.xlu0 %v4105, 32
      %v4128 = vpop.permute.xlu0 %4127
      %4129 = vrot.lane.b32.xlu0 %v4106, 32
      %v4130 = vpop.permute.xlu0 %4129
      %4131 = vrot.lane.b32.xlu0 %v4107, 32
      %v4132 = vpop.permute.xlu0 %4131
      %4133 = vrot.lane.b32.xlu0 %v4108, 32
      %v4134 = vpop.permute.xlu0 %4133
      %4135 = vrot.lane.b32.xlu0 %v4109, 32
      %v4136 = vpop.permute.xlu0 %4135
      %4137 = vrot.lane.b32.xlu0 %v4110, 32
      %v4138 = vpop.permute.xlu0 %4137
      %4139 = vrot.lane.b32.xlu0 %v4111, 32
      %v4140 = vpop.permute.xlu0 %4139
      %4141 = vrot.lane.b32.xlu0 %v4112, 32
      %v4142 = vpop.permute.xlu0 %4141
      %4143 = vrot.lane.b32.xlu0 %v4113, 32
      %v4144 = vpop.permute.xlu0 %4143
      %4145 = vrot.lane.b32.xlu0 %v4114, 32
      %v4146 = vpop.permute.xlu0 %4145
      %vm4163 = vcmask 294144
      %4164 = vst.msk [vmem:[#allocation4] sm:$0xff] %vm4163, %v4116
      %4165 = vst.msk [vmem:[#allocation4 + $0x8] sm:$0xff] %vm4163, %v4118
      %4166 = vst.msk [vmem:[#allocation4 + $0x10] sm:$0xff] %vm4163, %v4120
      %4167 = vst.msk [vmem:[#allocation4 + $0x18] sm:$0xff] %vm4163, %v4122
      %4168 = vst.msk [vmem:[#allocation4 + $0x20] sm:$0xff] %vm4163, %v4124
      %4169 = vst.msk [vmem:[#allocation4 + $0x28] sm:$0xff] %vm4163, %v4126
      %4170 = vst.msk [vmem:[#allocation4 + $0x30] sm:$0xff] %vm4163, %v4128
      %4171 = vst.msk [vmem:[#allocation4 + $0x38] sm:$0xff] %vm4163, %v4130
      %4172 = vst.msk [vmem:[#allocation4 + $0x40] sm:$0xff] %vm4163, %v4132
      %4173 = vst.msk [vmem:[#allocation4 + $0x48] sm:$0xff] %vm4163, %v4134
      %4174 = vst.msk [vmem:[#allocation4 + $0x50] sm:$0xff] %vm4163, %v4136
      %4175 = vst.msk [vmem:[#allocation4 + $0x58] sm:$0xff] %vm4163, %v4138
      %4176 = vst.msk [vmem:[#allocation4 + $0x60] sm:$0xff] %vm4163, %v4140
      %4177 = vst.msk [vmem:[#allocation4 + $0x68] sm:$0xff] %vm4163, %v4142
      %4178 = vst.msk [vmem:[#allocation4 + $0x70] sm:$0xff] %vm4163, %v4144
      %4179 = vst.msk [vmem:[#allocation4 + $0x78] sm:$0xff] %vm4163, %v4146
      %v4180 = vld [vmem:[#allocation4] sm:$0xff]
      %v4181 = vld [vmem:[#allocation4 + $0x8] sm:$0xff]
      %v4182 = vld [vmem:[#allocation4 + $0x10] sm:$0xff]
      %v4183 = vld [vmem:[#allocation4 + $0x18] sm:$0xff]
      %v4184 = vld [vmem:[#allocation4 + $0x20] sm:$0xff]
      %v4185 = vld [vmem:[#allocation4 + $0x28] sm:$0xff]
      %v4186 = vld [vmem:[#allocation4 + $0x30] sm:$0xff]
      %v4187 = vld [vmem:[#allocation4 + $0x38] sm:$0xff]
      %v4188 = vld [vmem:[#allocation4 + $0x40] sm:$0xff]
      %v4189 = vld [vmem:[#allocation4 + $0x48] sm:$0xff]
      %v4190 = vld [vmem:[#allocation4 + $0x50] sm:$0xff]
      %v4191 = vld [vmem:[#allocation4 + $0x58] sm:$0xff]
      %v4192 = vld [vmem:[#allocation4 + $0x60] sm:$0xff]
      %v4193 = vld [vmem:[#allocation4 + $0x68] sm:$0xff]
      %v4194 = vld [vmem:[#allocation4 + $0x70] sm:$0xff]
      %v4195 = vld [vmem:[#allocation4 + $0x78] sm:$0xff]
      %v4196 = vld [vmem:[%s3] sm:$0xf]
      %v4197 = vld [vmem:[%s3 + $0x4] sm:$0xf]
      %v4198 = vld [vmem:[%s3 + $0x8] sm:$0xf]
      %v4199 = vld [vmem:[%s3 + $0xc] sm:$0xf]
      %v4200 = vld [vmem:[%s3 + $0x10] sm:$0x3]
      %v4201 = vld [vmem:[%s4] sm:$0x1]
      %v4203 = vlaneseq
      %v4204 = vshrl.u32 %v4203, 7
      %v4205 = vsub.s32 0, %v4204
      %v4206 = vrot.slane %v4201, %v4205
      %v4213 = vunpack.c.l.b16 %v4196
      %v4214 = vunpack.c.l.b16 %v4197
      %v4215 = vunpack.c.l.b16 %v4198
      %v4216 = vunpack.c.l.b16 %v4199
      %v4217 = vunpack.c.l.b16 %v4200
      %v4218 = vpack.c.b16 %v4214, %v4213
      %v4219 = vpack.c.b16 %v4216, %v4215
      %v4220 = vpack.c.b16 %v4217, %v4217
      %vm4223 = vcmask 293888
      %v4225 = vsel %vm4223, %v4180, 0
      %v4228 = vsel %vm4223, %v4181, 0
      %v4231 = vsel %vm4223, %v4182, 0
      %v4234 = vsel %vm4223, %v4183, 0
      %v4237 = vsel %vm4223, %v4184, 0
      %v4240 = vsel %vm4223, %v4185, 0
      %v4243 = vsel %vm4223, %v4186, 0
      %v4246 = vsel %vm4223, %v4187, 0
      %v4249 = vsel %vm4223, %v4188, 0
      %v4252 = vsel %vm4223, %v4189, 0
      %v4255 = vsel %vm4223, %v4190, 0
      %v4258 = vsel %vm4223, %v4191, 0
      %v4261 = vsel %vm4223, %v4192, 0
      %v4264 = vsel %vm4223, %v4193, 0
      %v4267 = vsel %vm4223, %v4194, 0
      %v4270 = vsel %vm4223, %v4195, 0
      %vm4272 = vcmask 1041408
      %v4274 = vsel %vm4272, %v4220, 0
      %4276 = vmatprep.subr.bf16.mxu0 0
      %4277 = vmatpush1.bf16.msra.mxu0 %v4218
      %4278 = vmatprep.subr.bf16.mxu0 0
      %4279 = vmatpush1.bf16.msra.mxu0 %v4219
      %4280 = vmatprep.subr.bf16.mxu0 0
      %4281 = vmatpush1.bf16.msra.mxu0 %v4274
      %4282 = vmatprep.subr.bf16.mxu0 0
      %4283 = vmatpush1.bf16.msra.mxu0 0
      %4284 = vmatprep.subr.bf16.mxu0 0
      %4285 = vmatpush1.bf16.msra.mxu0 0
      %4286 = vmatprep.subr.bf16.mxu0 0
      %4287 = vmatpush1.bf16.msra.mxu0 0
      %4288 = vmatprep.subr.bf16.mxu0 0
      %4289 = vmatpush1.bf16.msra.mxu0 0
      %4290 = vmatprep.subr.bf16.mxu0 0
      %4291 = vmatpush1.bf16.msra.mxu0 0
      %4292 = vmatprep.subr.bf16.mxu0 0
      %4293 = vmatpush1.bf16.msra.mxu0 0
      %4294 = vmatprep.subr.bf16.mxu0 0
      %4295 = vmatpush1.bf16.msra.mxu0 0
      %4296 = vmatprep.subr.bf16.mxu0 0
      %4297 = vmatpush1.bf16.msra.mxu0 0
      %4298 = vmatprep.subr.bf16.mxu0 0
      %4299 = vmatpush1.bf16.msra.mxu0 0
      %4300 = vmatprep.subr.bf16.mxu0 0
      %4301 = vmatpush1.bf16.msra.mxu0 0
      %4302 = vmatprep.subr.bf16.mxu0 0
      %4303 = vmatpush1.bf16.msra.mxu0 0
      %4304 = vmatprep.subr.bf16.mxu0 0
      %4305 = vmatpush1.bf16.msra.mxu0 0
      %4306 = vmatprep.subr.bf16.mxu0 0
      %4307 = vmatpush1.bf16.msra.mxu0 0
      %4308 = vmatprep.mubr.bf16.mxu0 0
      %4309 = vmatmul.mubr.bf16.gmra.mrb[0].mxu0 %v4225
      %v4310 = vpop.f32.mrb[0].mxu0
      %v4311 = vadd.f32 %v4206, %v4310
      %v4312 = vpop.f32.mrb[0].mxu0
      %v4313 = vpop.f32.mrb[0].mxu0
      %v4314 = vadd.f32 %v4206, %v4313
      %v4315 = vpop.f32.mrb[0].mxu0
      %4316 = vmatprep.mubr.bf16.mxu0 0
      %4317 = vmatmul.mubr.bf16.gmra.mrb[0].mxu0 %v4228
      %v4318 = vpop.f32.mrb[0].mxu0
      %v4319 = vadd.f32 %v4206, %v4318
      %v4320 = vpop.f32.mrb[0].mxu0
      %v4321 = vpop.f32.mrb[0].mxu0
      %v4322 = vadd.f32 %v4206, %v4321
      %v4323 = vpop.f32.mrb[0].mxu0
      %4324 = vmatprep.mubr.bf16.mxu0 0
      %4325 = vmatmul.mubr.bf16.gmra.mrb[0].mxu0 %v4231
      %v4326 = vpop.f32.mrb[0].mxu0
      %v4327 = vadd.f32 %v4206, %v4326
      %v4328 = vpop.f32.mrb[0].mxu0
      %v4329 = vpop.f32.mrb[0].mxu0
      %v4330 = vadd.f32 %v4206, %v4329
      %v4331 = vpop.f32.mrb[0].mxu0
      %4332 = vmatprep.mubr.bf16.mxu0 0
      %4333 = vmatmul.mubr.bf16.gmra.mrb[0].mxu0 %v4234
      %v4334 = vpop.f32.mrb[0].mxu0
      %v4335 = vadd.f32 %v4206, %v4334
      %v4336 = vpop.f32.mrb[0].mxu0
      %v4337 = vpop.f32.mrb[0].mxu0
      %v4338 = vadd.f32 %v4206, %v4337
      %v4339 = vpop.f32.mrb[0].mxu0
      %4340 = vmatprep.mubr.bf16.mxu0 0
      %4341 = vmatmul.mubr.bf16.gmra.mrb[0].mxu0 %v4237
      %v4342 = vpop.f32.mrb[0].mxu0
      %v4343 = vadd.f32 %v4206, %v4342
      %v4344 = vpop.f32.mrb[0].mxu0
      %v4345 = vpop.f32.mrb[0].mxu0
      %v4346 = vadd.f32 %v4206, %v4345
      %v4347 = vpop.f32.mrb[0].mxu0
      %4348 = vmatprep.mubr.bf16.mxu0 0
      %4349 = vmatmul.mubr.bf16.gmra.mrb[0].mxu0 %v4240
      %v4350 = vpop.f32.mrb[0].mxu0
      %v4351 = vadd.f32 %v4206, %v4350
      %v4352 = vpop.f32.mrb[0].mxu0
      %v4353 = vpop.f32.mrb[0].mxu0
      %v4354 = vadd.f32 %v4206, %v4353
      %v4355 = vpop.f32.mrb[0].mxu0
      %4356 = vmatprep.mubr.bf16.mxu0 0
      %4357 = vmatmul.mubr.bf16.gmra.mrb[0].mxu0 %v4243
      %v4358 = vpop.f32.mrb[0].mxu0
      %v4359 = vadd.f32 %v4206, %v4358
      %v4360 = vpop.f32.mrb[0].mxu0
      %v4361 = vpop.f32.mrb[0].mxu0
      %v4362 = vadd.f32 %v4206, %v4361
      %v4363 = vpop.f32.mrb[0].mxu0
      %4364 = vmatprep.mubr.bf16.mxu0 0
      %4365 = vmatmul.mubr.bf16.gmra.mrb[0].mxu0 %v4246
      %v4366 = vpop.f32.mrb[0].mxu0
      %v4367 = vadd.f32 %v4206, %v4366
      %v4368 = vpop.f32.mrb[0].mxu0
      %v4369 = vpop.f32.mrb[0].mxu0
      %v4370 = vadd.f32 %v4206, %v4369
      %v4371 = vpop.f32.mrb[0].mxu0
      %4372 = vmatprep.mubr.bf16.mxu0 0
      %4373 = vmatmul.mubr.bf16.gmra.mrb[0].mxu0 %v4249
      %v4374 = vpop.f32.mrb[0].mxu0
      %v4375 = vadd.f32 %v4206, %v4374
      %v4376 = vpop.f32.mrb[0].mxu0
      %v4377 = vpop.f32.mrb[0].mxu0
      %v4378 = vadd.f32 %v4206, %v4377
      %v4379 = vpop.f32.mrb[0].mxu0
      %4380 = vmatprep.mubr.bf16.mxu0 0
      %4381 = vmatmul.mubr.bf16.gmra.mrb[0].mxu0 %v4252
      %v4382 = vpop.f32.mrb[0].mxu0
      %v4383 = vadd.f32 %v4206, %v4382
      %v4384 = vpop.f32.mrb[0].mxu0
      %v4385 = vpop.f32.mrb[0].mxu0
      %v4386 = vadd.f32 %v4206, %v4385
      %v4387 = vpop.f32.mrb[0].mxu0
      %4388 = vmatprep.mubr.bf16.mxu0 0
      %4389 = vmatmul.mubr.bf16.gmra.mrb[0].mxu0 %v4255
      %v4390 = vpop.f32.mrb[0].mxu0
      %v4391 = vadd.f32 %v4206, %v4390
      %v4392 = vpop.f32.mrb[0].mxu0
      %v4393 = vpop.f32.mrb[0].mxu0
      %v4394 = vadd.f32 %v4206, %v4393
      %v4395 = vpop.f32.mrb[0].mxu0
      %4396 = vmatprep.mubr.bf16.mxu0 0
      %4397 = vmatmul.mubr.bf16.gmra.mrb[0].mxu0 %v4258
      %v4398 = vpop.f32.mrb[0].mxu0
      %v4399 = vadd.f32 %v4206, %v4398
      %v4400 = vpop.f32.mrb[0].mxu0
      %v4401 = vpop.f32.mrb[0].mxu0
      %v4402 = vadd.f32 %v4206, %v4401
      %v4403 = vpop.f32.mrb[0].mxu0
      %4404 = vmatprep.mubr.bf16.mxu0 0
      %4405 = vmatmul.mubr.bf16.gmra.mrb[0].mxu0 %v4261
      %v4406 = vpop.f32.mrb[0].mxu0
      %v4407 = vadd.f32 %v4206, %v4406
      %v4408 = vpop.f32.mrb[0].mxu0
      %v4409 = vpop.f32.mrb[0].mxu0
      %v4410 = vadd.f32 %v4206, %v4409
      %v4411 = vpop.f32.mrb[0].mxu0
      %4412 = vmatprep.mubr.bf16.mxu0 0
      %4413 = vmatmul.mubr.bf16.gmra.mrb[0].mxu0 %v4264
      %v4414 = vpop.f32.mrb[0].mxu0
      %v4415 = vadd.f32 %v4206, %v4414
      %v4416 = vpop.f32.mrb[0].mxu0
      %v4417 = vpop.f32.mrb[0].mxu0
      %v4418 = vadd.f32 %v4206, %v4417
      %v4419 = vpop.f32.mrb[0].mxu0
      %4420 = vmatprep.mubr.bf16.mxu0 0
      %4421 = vmatmul.mubr.bf16.gmra.mrb[0].mxu0 %v4267
      %v4422 = vpop.f32.mrb[0].mxu0
      %v4423 = vadd.f32 %v4206, %v4422
      %v4424 = vpop.f32.mrb[0].mxu0
      %v4425 = vpop.f32.mrb[0].mxu0
      %v4426 = vadd.f32 %v4206, %v4425
      %v4427 = vpop.f32.mrb[0].mxu0
      %4428 = vmatprep.mubr.bf16.mxu0 0
      %4429 = vmatmul.mubr.bf16.gmra.mrb[0].mxu0 %v4270
      %v4430 = vpop.f32.mrb[0].mxu0
      %v4431 = vadd.f32 %v4206, %v4430
      %v4432 = vpop.f32.mrb[0].mxu0
      %v4433 = vpop.f32.mrb[0].mxu0
      %v4434 = vadd.f32 %v4206, %v4433
      %v4435 = vpop.f32.mrb[0].mxu0
      %4436 = vdwg.mxu0
      %v4437 = vmax.f32 %v4311, 0.0
      %v4438 = vmax.f32 %v4314, 0.0
      %v4439 = vmax.f32 %v4319, 0.0
      %v4440 = vmax.f32 %v4322, 0.0
      %v4441 = vmax.f32 %v4327, 0.0
      %v4442 = vmax.f32 %v4330, 0.0
      %v4443 = vmax.f32 %v4335, 0.0
      %v4444 = vmax.f32 %v4338, 0.0
      %v4445 = vmax.f32 %v4343, 0.0
      %v4446 = vmax.f32 %v4346, 0.0
      %v4447 = vmax.f32 %v4351, 0.0
      %v4448 = vmax.f32 %v4354, 0.0
      %v4449 = vmax.f32 %v4359, 0.0
      %v4450 = vmax.f32 %v4362, 0.0
      %v4451 = vmax.f32 %v4367, 0.0
      %v4452 = vmax.f32 %v4370, 0.0
      %v4453 = vmax.f32 %v4375, 0.0
      %v4454 = vmax.f32 %v4378, 0.0
      %v4455 = vmax.f32 %v4383, 0.0
      %v4456 = vmax.f32 %v4386, 0.0
      %v4457 = vmax.f32 %v4391, 0.0
      %v4458 = vmax.f32 %v4394, 0.0
      %v4459 = vmax.f32 %v4399, 0.0
      %v4460 = vmax.f32 %v4402, 0.0
      %v4461 = vmax.f32 %v4407, 0.0
      %v4462 = vmax.f32 %v4410, 0.0
      %v4463 = vmax.f32 %v4415, 0.0
      %v4464 = vmax.f32 %v4418, 0.0
      %v4465 = vmax.f32 %v4423, 0.0
      %v4466 = vmax.f32 %v4426, 0.0
      %v4467 = vmax.f32 %v4431, 0.0
      %v4468 = vmax.f32 %v4434, 0.0
      %v4469 = vpack.c.bf16 %v4438, %v4437
      %v4470 = vpack.c.bf16 %v4440, %v4439
      %v4471 = vpack.c.bf16 %v4442, %v4441
      %v4472 = vpack.c.bf16 %v4444, %v4443
      %v4473 = vpack.c.bf16 %v4446, %v4445
      %v4474 = vpack.c.bf16 %v4448, %v4447
      %v4475 = vpack.c.bf16 %v4450, %v4449
      %v4476 = vpack.c.bf16 %v4452, %v4451
      %v4477 = vpack.c.bf16 %v4454, %v4453
      %v4478 = vpack.c.bf16 %v4456, %v4455
      %v4479 = vpack.c.bf16 %v4458, %v4457
      %v4480 = vpack.c.bf16 %v4460, %v4459
      %v4481 = vpack.c.bf16 %v4462, %v4461
      %v4482 = vpack.c.bf16 %v4464, %v4463
      %v4483 = vpack.c.bf16 %v4466, %v4465
      %v4484 = vpack.c.bf16 %v4468, %v4467
      %v4501 = vunpack.c.l.b16 %v4469
      %v4502 = vunpack.c.h.b16 %v4469
      %v4503 = vunpack.c.l.b16 %v4470
      %v4504 = vunpack.c.h.b16 %v4470
      %v4505 = vunpack.c.l.b16 %v4471
      %v4506 = vunpack.c.h.b16 %v4471
      %v4507 = vunpack.c.l.b16 %v4472
      %v4508 = vunpack.c.h.b16 %v4472
      %v4509 = vunpack.c.l.b16 %v4473
      %v4510 = vunpack.c.h.b16 %v4473
      %v4511 = vunpack.c.l.b16 %v4474
      %v4512 = vunpack.c.h.b16 %v4474
      %v4513 = vunpack.c.l.b16 %v4475
      %v4514 = vunpack.c.h.b16 %v4475
      %v4515 = vunpack.c.l.b16 %v4476
      %v4516 = vunpack.c.h.b16 %v4476
      %v4517 = vunpack.c.l.b16 %v4477
      %v4518 = vunpack.c.h.b16 %v4477
      %v4519 = vunpack.c.l.b16 %v4478
      %v4520 = vunpack.c.h.b16 %v4478
      %v4521 = vunpack.c.l.b16 %v4479
      %v4522 = vunpack.c.h.b16 %v4479
      %v4523 = vunpack.c.l.b16 %v4480
      %v4524 = vunpack.c.h.b16 %v4480
      %v4525 = vunpack.c.l.b16 %v4481
      %v4526 = vunpack.c.h.b16 %v4481
      %v4527 = vunpack.c.l.b16 %v4482
      %v4528 = vunpack.c.h.b16 %v4482
      %v4529 = vunpack.c.l.b16 %v4483
      %v4530 = vunpack.c.h.b16 %v4483
      %v4531 = vunpack.c.l.b16 %v4484
      %v4532 = vunpack.c.h.b16 %v4484
      %v4533 = vpack.c.b16 %v4501, %v4501
      %v4534 = vpack.c.b16 %v4502, %v4502
      %v4535 = vpack.c.b16 %v4503, %v4503
      %v4536 = vpack.c.b16 %v4504, %v4504
      %v4537 = vpack.c.b16 %v4505, %v4505
      %v4538 = vpack.c.b16 %v4506, %v4506
      %v4539 = vpack.c.b16 %v4507, %v4507
      %v4540 = vpack.c.b16 %v4508, %v4508
      %v4541 = vpack.c.b16 %v4509, %v4509
      %v4542 = vpack.c.b16 %v4510, %v4510
      %v4543 = vpack.c.b16 %v4511, %v4511
      %v4544 = vpack.c.b16 %v4512, %v4512
      %v4545 = vpack.c.b16 %v4513, %v4513
      %v4546 = vpack.c.b16 %v4514, %v4514
      %v4547 = vpack.c.b16 %v4515, %v4515
      %v4548 = vpack.c.b16 %v4516, %v4516
      %v4549 = vpack.c.b16 %v4517, %v4517
      %v4550 = vpack.c.b16 %v4518, %v4518
      %v4551 = vpack.c.b16 %v4519, %v4519
      %v4552 = vpack.c.b16 %v4520, %v4520
      %v4553 = vpack.c.b16 %v4521, %v4521
      %v4554 = vpack.c.b16 %v4522, %v4522
      %v4555 = vpack.c.b16 %v4523, %v4523
      %v4556 = vpack.c.b16 %v4524, %v4524
      %v4557 = vpack.c.b16 %v4525, %v4525
      %v4558 = vpack.c.b16 %v4526, %v4526
      %v4559 = vpack.c.b16 %v4527, %v4527
      %v4560 = vpack.c.b16 %v4528, %v4528
      %v4561 = vpack.c.b16 %v4529, %v4529
      %v4562 = vpack.c.b16 %v4530, %v4530
      %v4563 = vpack.c.b16 %v4531, %v4531
      %v4564 = vpack.c.b16 %v4532, %v4532
      %v4566 = vshrl.u32 %v4533, 16
      %v4568 = vrot.slane %v4566, 7
      %v4569 = vshll.u32 %v4533, 16
      %v4571 = vor.u32 %v4568, %v4569
      %v4572 = vrot.slane %v4568, 4
      %v4574 = vshrl.u32 %v4534, 16
      %v4576 = vrot.slane %v4574, 7
      %v4577 = vshll.u32 %v4534, 16
      %v4579 = vor.u32 %v4576, %v4577
      %v4580 = vsel %vm636, %v4572, %v4579
      %v4581 = vrot.slane %v4576, 4
      %v4583 = vshrl.u32 %v4535, 16
      %v4585 = vrot.slane %v4583, 7
      %v4586 = vshll.u32 %v4535, 16
      %v4588 = vor.u32 %v4585, %v4586
      %v4589 = vrot.slane %v4585, 4
      %v4591 = vshrl.u32 %v4536, 16
      %v4593 = vrot.slane %v4591, 7
      %v4594 = vshll.u32 %v4536, 16
      %v4596 = vor.u32 %v4593, %v4594
      %v4597 = vsel %vm636, %v4589, %v4596
      %v4598 = vrot.slane %v4593, 4
      %v4600 = vshrl.u32 %v4537, 16
      %v4602 = vrot.slane %v4600, 7
      %v4603 = vshll.u32 %v4537, 16
      %v4605 = vor.u32 %v4602, %v4603
      %v4606 = vrot.slane %v4602, 4
      %v4608 = vshrl.u32 %v4538, 16
      %v4610 = vrot.slane %v4608, 7
      %v4611 = vshll.u32 %v4538, 16
      %v4613 = vor.u32 %v4610, %v4611
      %v4614 = vsel %vm636, %v4606, %v4613
      %v4615 = vrot.slane %v4610, 4
      %v4617 = vshrl.u32 %v4539, 16
      %v4619 = vrot.slane %v4617, 7
      %v4620 = vshll.u32 %v4539, 16
      %v4622 = vor.u32 %v4619, %v4620
      %v4623 = vrot.slane %v4619, 4
      %v4625 = vshrl.u32 %v4540, 16
      %v4627 = vrot.slane %v4625, 7
      %v4628 = vshll.u32 %v4540, 16
      %v4630 = vor.u32 %v4627, %v4628
      %v4631 = vsel %vm636, %v4623, %v4630
      %v4632 = vrot.slane %v4627, 4
      %v4634 = vshrl.u32 %v4541, 16
      %v4636 = vrot.slane %v4634, 7
      %v4637 = vshll.u32 %v4541, 16
      %v4639 = vor.u32 %v4636, %v4637
      %v4640 = vrot.slane %v4636, 4
      %v4642 = vshrl.u32 %v4542, 16
      %v4644 = vrot.slane %v4642, 7
      %v4645 = vshll.u32 %v4542, 16
      %v4647 = vor.u32 %v4644, %v4645
      %v4648 = vsel %vm636, %v4640, %v4647
      %v4649 = vrot.slane %v4644, 4
      %v4651 = vshrl.u32 %v4543, 16
      %v4653 = vrot.slane %v4651, 7
      %v4654 = vshll.u32 %v4543, 16
      %v4656 = vor.u32 %v4653, %v4654
      %v4657 = vrot.slane %v4653, 4
      %v4659 = vshrl.u32 %v4544, 16
      %v4661 = vrot.slane %v4659, 7
      %v4662 = vshll.u32 %v4544, 16
      %v4664 = vor.u32 %v4661, %v4662
      %v4665 = vsel %vm636, %v4657, %v4664
      %v4666 = vrot.slane %v4661, 4
      %v4668 = vshrl.u32 %v4545, 16
      %v4670 = vrot.slane %v4668, 7
      %v4671 = vshll.u32 %v4545, 16
      %v4673 = vor.u32 %v4670, %v4671
      %v4674 = vrot.slane %v4670, 4
      %v4676 = vshrl.u32 %v4546, 16
      %v4678 = vrot.slane %v4676, 7
      %v4679 = vshll.u32 %v4546, 16
      %v4681 = vor.u32 %v4678, %v4679
      %v4682 = vsel %vm636, %v4674, %v4681
      %v4683 = vrot.slane %v4678, 4
      %v4685 = vshrl.u32 %v4547, 16
      %v4687 = vrot.slane %v4685, 7
      %v4688 = vshll.u32 %v4547, 16
      %v4690 = vor.u32 %v4687, %v4688
      %v4691 = vrot.slane %v4687, 4
      %v4693 = vshrl.u32 %v4548, 16
      %v4695 = vrot.slane %v4693, 7
      %v4696 = vshll.u32 %v4548, 16
      %v4698 = vor.u32 %v4695, %v4696
      %v4699 = vsel %vm636, %v4691, %v4698
      %v4700 = vrot.slane %v4695, 4
      %v4702 = vshrl.u32 %v4549, 16
      %v4704 = vrot.slane %v4702, 7
      %v4705 = vshll.u32 %v4549, 16
      %v4707 = vor.u32 %v4704, %v4705
      %v4708 = vrot.slane %v4704, 4
      %v4710 = vshrl.u32 %v4550, 16
      %v4712 = vrot.slane %v4710, 7
      %v4713 = vshll.u32 %v4550, 16
      %v4715 = vor.u32 %v4712, %v4713
      %v4716 = vsel %vm636, %v4708, %v4715
      %v4717 = vrot.slane %v4712, 4
      %v4719 = vshrl.u32 %v4551, 16
      %v4721 = vrot.slane %v4719, 7
      %v4722 = vshll.u32 %v4551, 16
      %v4724 = vor.u32 %v4721, %v4722
      %v4725 = vrot.slane %v4721, 4
      %v4727 = vshrl.u32 %v4552, 16
      %v4729 = vrot.slane %v4727, 7
      %v4730 = vshll.u32 %v4552, 16
      %v4732 = vor.u32 %v4729, %v4730
      %v4733 = vsel %vm636, %v4725, %v4732
      %v4734 = vrot.slane %v4729, 4
      %v4736 = vshrl.u32 %v4553, 16
      %v4738 = vrot.slane %v4736, 7
      %v4739 = vshll.u32 %v4553, 16
      %v4741 = vor.u32 %v4738, %v4739
      %v4742 = vrot.slane %v4738, 4
      %v4744 = vshrl.u32 %v4554, 16
      %v4746 = vrot.slane %v4744, 7
      %v4747 = vshll.u32 %v4554, 16
      %v4749 = vor.u32 %v4746, %v4747
      %v4750 = vsel %vm636, %v4742, %v4749
      %v4751 = vrot.slane %v4746, 4
      %v4753 = vshrl.u32 %v4555, 16
      %v4755 = vrot.slane %v4753, 7
      %v4756 = vshll.u32 %v4555, 16
      %v4758 = vor.u32 %v4755, %v4756
      %v4759 = vrot.slane %v4755, 4
      %v4761 = vshrl.u32 %v4556, 16
      %v4763 = vrot.slane %v4761, 7
      %v4764 = vshll.u32 %v4556, 16
      %v4766 = vor.u32 %v4763, %v4764
      %v4767 = vsel %vm636, %v4759, %v4766
      %v4768 = vrot.slane %v4763, 4
      %v4770 = vshrl.u32 %v4557, 16
      %v4772 = vrot.slane %v4770, 7
      %v4773 = vshll.u32 %v4557, 16
      %v4775 = vor.u32 %v4772, %v4773
      %v4776 = vrot.slane %v4772, 4
      %v4778 = vshrl.u32 %v4558, 16
      %v4780 = vrot.slane %v4778, 7
      %v4781 = vshll.u32 %v4558, 16
      %v4783 = vor.u32 %v4780, %v4781
      %v4784 = vsel %vm636, %v4776, %v4783
      %v4785 = vrot.slane %v4780, 4
      %v4787 = vshrl.u32 %v4559, 16
      %v4789 = vrot.slane %v4787, 7
      %v4790 = vshll.u32 %v4559, 16
      %v4792 = vor.u32 %v4789, %v4790
      %v4793 = vrot.slane %v4789, 4
      %v4795 = vshrl.u32 %v4560, 16
      %v4797 = vrot.slane %v4795, 7
      %v4798 = vshll.u32 %v4560, 16
      %v4800 = vor.u32 %v4797, %v4798
      %v4801 = vsel %vm636, %v4793, %v4800
      %v4802 = vrot.slane %v4797, 4
      %v4804 = vshrl.u32 %v4561, 16
      %v4806 = vrot.slane %v4804, 7
      %v4807 = vshll.u32 %v4561, 16
      %v4809 = vor.u32 %v4806, %v4807
      %v4810 = vrot.slane %v4806, 4
      %v4812 = vshrl.u32 %v4562, 16
      %v4814 = vrot.slane %v4812, 7
      %v4815 = vshll.u32 %v4562, 16
      %v4817 = vor.u32 %v4814, %v4815
      %v4818 = vsel %vm636, %v4810, %v4817
      %v4819 = vrot.slane %v4814, 4
      %v4821 = vshrl.u32 %v4563, 16
      %v4823 = vrot.slane %v4821, 7
      %v4824 = vshll.u32 %v4563, 16
      %v4826 = vor.u32 %v4823, %v4824
      %v4827 = vrot.slane %v4823, 4
      %v4829 = vshrl.u32 %v4564, 16
      %v4831 = vrot.slane %v4829, 7
      %v4832 = vshll.u32 %v4564, 16
      %v4834 = vor.u32 %v4831, %v4832
      %v4835 = vsel %vm636, %v4827, %v4834
      %v4836 = vrot.slane %v4831, 4
      %s4885 = scalar_lea.vmem [#allocation3], 12
      %vm4886 = vcmask 60416
      %vm4887 = vmand %vm4886, %vm959
      %v4888 = vld [vmem:[%s4885] sm:$0xf]
      %v4889 = vsel %vm4887, %v4571, %v4888
      %4890 = vst [vmem:[%s4885] sm:$0xf] %v4889
      %vm4891 = vcmask 60416
      %4892 = vst.msk [vmem:[%s4885 + $0x4] sm:$0xf] %vm4891, %v4580
      %vm4893 = vcmask 57344
      %vm4894 = vmand %vm4893, %vm634
      %v4895 = vld [vmem:[%s4885 + $0x8] sm:$0x1]
      %v4896 = vsel %vm4894, %v4581, %v4895
      %4897 = vst [vmem:[%s4885 + $0x8] sm:$0x1] %v4896
      %v4898 = vld [vmem:[%s4885 + $0xc] sm:$0xf]
      %v4899 = vsel %vm4887, %v4588, %v4898
      %4900 = vst [vmem:[%s4885 + $0xc] sm:$0xf] %v4899
      %4901 = vst.msk [vmem:[%s4885 + $0x10] sm:$0xf] %vm4891, %v4597
      %v4902 = vld [vmem:[%s4885 + $0x14] sm:$0x1]
      %v4903 = vsel %vm4894, %v4598, %v4902
      %4904 = vst [vmem:[%s4885 + $0x14] sm:$0x1] %v4903
      %v4905 = vld [vmem:[%s4885 + $0x18] sm:$0xf]
      %v4906 = vsel %vm4887, %v4605, %v4905
      %4907 = vst [vmem:[%s4885 + $0x18] sm:$0xf] %v4906
      %4908 = vst.msk [vmem:[%s4885 + $0x1c] sm:$0xf] %vm4891, %v4614
      %v4909 = vld [vmem:[%s4885 + $0x20] sm:$0x1]
      %v4910 = vsel %vm4894, %v4615, %v4909
      %4911 = vst [vmem:[%s4885 + $0x20] sm:$0x1] %v4910
      %v4912 = vld [vmem:[%s4885 + $0x24] sm:$0xf]
      %v4913 = vsel %vm4887, %v4622, %v4912
      %4914 = vst [vmem:[%s4885 + $0x24] sm:$0xf] %v4913
      %4915 = vst.msk [vmem:[%s4885 + $0x28] sm:$0xf] %vm4891, %v4631
      %v4916 = vld [vmem:[%s4885 + $0x2c] sm:$0x1]
      %v4917 = vsel %vm4894, %v4632, %v4916
      %4918 = vst [vmem:[%s4885 + $0x2c] sm:$0x1] %v4917
      %v4919 = vld [vmem:[%s4885 + $0x30] sm:$0xf]
      %v4920 = vsel %vm4887, %v4639, %v4919
      %4921 = vst [vmem:[%s4885 + $0x30] sm:$0xf] %v4920
      %4922 = vst.msk [vmem:[%s4885 + $0x34] sm:$0xf] %vm4891, %v4648
      %v4923 = vld [vmem:[%s4885 + $0x38] sm:$0x1]
      %v4924 = vsel %vm4894, %v4649, %v4923
      %4925 = vst [vmem:[%s4885 + $0x38] sm:$0x1] %v4924
      %v4926 = vld [vmem:[%s4885 + $0x3c] sm:$0xf]
      %v4927 = vsel %vm4887, %v4656, %v4926
      %4928 = vst [vmem:[%s4885 + $0x3c] sm:$0xf] %v4927
      %4929 = vst.msk [vmem:[%s4885 + $0x40] sm:$0xf] %vm4891, %v4665
      %v4930 = vld [vmem:[%s4885 + $0x44] sm:$0x1]
      %v4931 = vsel %vm4894, %v4666, %v4930
      %4932 = vst [vmem:[%s4885 + $0x44] sm:$0x1] %v4931
      %v4933 = vld [vmem:[%s4885 + $0x48] sm:$0xf]
      %v4934 = vsel %vm4887, %v4673, %v4933
      %4935 = vst [vmem:[%s4885 + $0x48] sm:$0xf] %v4934
      %4936 = vst.msk [vmem:[%s4885 + $0x4c] sm:$0xf] %vm4891, %v4682
      %v4937 = vld [vmem:[%s4885 + $0x50] sm:$0x1]
      %v4938 = vsel %vm4894, %v4683, %v4937
      %4939 = vst [vmem:[%s4885 + $0x50] sm:$0x1] %v4938
      %v4940 = vld [vmem:[%s4885 + $0x54] sm:$0xf]
      %v4941 = vsel %vm4887, %v4690, %v4940
      %4942 = vst [vmem:[%s4885 + $0x54] sm:$0xf] %v4941
      %4943 = vst.msk [vmem:[%s4885 + $0x58] sm:$0xf] %vm4891, %v4699
      %v4944 = vld [vmem:[%s4885 + $0x5c] sm:$0x1]
      %v4945 = vsel %vm4894, %v4700, %v4944
      %4946 = vst [vmem:[%s4885 + $0x5c] sm:$0x1] %v4945
      %v4947 = vld [vmem:[%s4885 + $0x60] sm:$0xf]
      %v4948 = vsel %vm4887, %v4707, %v4947
      %4949 = vst [vmem:[%s4885 + $0x60] sm:$0xf] %v4948
      %4950 = vst.msk [vmem:[%s4885 + $0x64] sm:$0xf] %vm4891, %v4716
      %v4951 = vld [vmem:[%s4885 + $0x68] sm:$0x1]
      %v4952 = vsel %vm4894, %v4717, %v4951
      %4953 = vst [vmem:[%s4885 + $0x68] sm:$0x1] %v4952
      %v4954 = vld [vmem:[%s4885 + $0x6c] sm:$0xf]
      %v4955 = vsel %vm4887, %v4724, %v4954
      %4956 = vst [vmem:[%s4885 + $0x6c] sm:$0xf] %v4955
      %4957 = vst.msk [vmem:[%s4885 + $0x70] sm:$0xf] %vm4891, %v4733
      %v4958 = vld [vmem:[%s4885 + $0x74] sm:$0x1]
      %v4959 = vsel %vm4894, %v4734, %v4958
      %4960 = vst [vmem:[%s4885 + $0x74] sm:$0x1] %v4959
      %v4961 = vld [vmem:[%s4885 + $0x78] sm:$0xf]
      %v4962 = vsel %vm4887, %v4741, %v4961
      %4963 = vst [vmem:[%s4885 + $0x78] sm:$0xf] %v4962
      %4964 = vst.msk [vmem:[%s4885 + $0x7c] sm:$0xf] %vm4891, %v4750
      %v4965 = vld [vmem:[%s4885 + $0x80] sm:$0x1]
      %v4966 = vsel %vm4894, %v4751, %v4965
      %4967 = vst [vmem:[%s4885 + $0x80] sm:$0x1] %v4966
      %v4968 = vld [vmem:[%s4885 + $0x84] sm:$0xf]
      %v4969 = vsel %vm4887, %v4758, %v4968
      %4970 = vst [vmem:[%s4885 + $0x84] sm:$0xf] %v4969
      %4971 = vst.msk [vmem:[%s4885 + $0x88] sm:$0xf] %vm4891, %v4767
      %v4972 = vld [vmem:[%s4885 + $0x8c] sm:$0x1]
      %v4973 = vsel %vm4894, %v4768, %v4972
      %4974 = vst [vmem:[%s4885 + $0x8c] sm:$0x1] %v4973
      %v4975 = vld [vmem:[%s4885 + $0x90] sm:$0xf]
      %v4976 = vsel %vm4887, %v4775, %v4975
      %4977 = vst [vmem:[%s4885 + $0x90] sm:$0xf] %v4976
      %4978 = vst.msk [vmem:[%s4885 + $0x94] sm:$0xf] %vm4891, %v4784
      %v4979 = vld [vmem:[%s4885 + $0x98] sm:$0x1]
      %v4980 = vsel %vm4894, %v4785, %v4979
      %4981 = vst [vmem:[%s4885 + $0x98] sm:$0x1] %v4980
      %v4982 = vld [vmem:[%s4885 + $0x9c] sm:$0xf]
      %v4983 = vsel %vm4887, %v4792, %v4982
      %4984 = vst [vmem:[%s4885 + $0x9c] sm:$0xf] %v4983
      %4985 = vst.msk [vmem:[%s4885 + $0xa0] sm:$0xf] %vm4891, %v4801
      %v4986 = vld [vmem:[%s4885 + $0xa4] sm:$0x1]
      %v4987 = vsel %vm4894, %v4802, %v4986
      %4988 = vst [vmem:[%s4885 + $0xa4] sm:$0x1] %v4987
      %v4989 = vld [vmem:[%s4885 + $0xa8] sm:$0xf]
      %v4990 = vsel %vm4887, %v4809, %v4989
      %4991 = vst [vmem:[%s4885 + $0xa8] sm:$0xf] %v4990
      %4992 = vst.msk [vmem:[%s4885 + $0xac] sm:$0xf] %vm4891, %v4818
      %v4993 = vld [vmem:[%s4885 + $0xb0] sm:$0x1]
      %v4994 = vsel %vm4894, %v4819, %v4993
      %4995 = vst [vmem:[%s4885 + $0xb0] sm:$0x1] %v4994
      %v4996 = vld [vmem:[%s4885 + $0xb4] sm:$0xf]
      %v4997 = vsel %vm4887, %v4826, %v4996
      %4998 = vst [vmem:[%s4885 + $0xb4] sm:$0xf] %v4997
      %4999 = vst.msk [vmem:[%s4885 + $0xb8] sm:$0xf] %vm4891, %v4835
      %v5000 = vld [vmem:[%s4885 + $0xbc] sm:$0x1]
      %v5001 = vsel %vm4894, %v4836, %v5000
      %5002 = vst [vmem:[%s4885 + $0xbc] sm:$0x1] %v5001
      %v5003 = vld [vmem:[#allocation3] sm:$0xf]
      %v5004 = vld [vmem:[#allocation3 + $0x4] sm:$0xf]
      %v5005 = vld [vmem:[#allocation3 + $0xc] sm:$0xf]
      %v5006 = vld [vmem:[#allocation3 + $0x10] sm:$0xf]
      %v5007 = vld [vmem:[#allocation3 + $0x18] sm:$0xf]
      %v5008 = vld [vmem:[#allocation3 + $0x1c] sm:$0xf]
      %v5009 = vld [vmem:[#allocation3 + $0x24] sm:$0xf]
      %v5010 = vld [vmem:[#allocation3 + $0x28] sm:$0xf]
      %v5011 = vld [vmem:[#allocation3 + $0x30] sm:$0xf]
      %v5012 = vld [vmem:[#allocation3 + $0x34] sm:$0xf]
      %v5013 = vld [vmem:[#allocation3 + $0x3c] sm:$0xf]
      %v5014 = vld [vmem:[#allocation3 + $0x40] sm:$0xf]
      %v5015 = vld [vmem:[#allocation3 + $0x48] sm:$0xf]
      %v5016 = vld [vmem:[#allocation3 + $0x4c] sm:$0xf]
      %v5017 = vld [vmem:[#allocation3 + $0x54] sm:$0xf]
      %v5018 = vld [vmem:[#allocation3 + $0x58] sm:$0xf]
      %v5019 = vld [vmem:[#allocation3 + $0x60] sm:$0xf]
      %v5020 = vld [vmem:[#allocation3 + $0x64] sm:$0xf]
      %v5021 = vld [vmem:[#allocation3 + $0x6c] sm:$0xf]
      %v5022 = vld [vmem:[#allocation3 + $0x70] sm:$0xf]
      %v5023 = vld [vmem:[#allocation3 + $0x78] sm:$0xf]
      %v5024 = vld [vmem:[#allocation3 + $0x7c] sm:$0xf]
      %v5025 = vld [vmem:[#allocation3 + $0x84] sm:$0xf]
      %v5026 = vld [vmem:[#allocation3 + $0x88] sm:$0xf]
      %v5027 = vld [vmem:[#allocation3 + $0x90] sm:$0xf]
      %v5028 = vld [vmem:[#allocation3 + $0x94] sm:$0xf]
      %v5029 = vld [vmem:[#allocation3 + $0x9c] sm:$0xf]
      %v5030 = vld [vmem:[#allocation3 + $0xa0] sm:$0xf]
      %v5031 = vld [vmem:[#allocation3 + $0xa8] sm:$0xf]
      %v5032 = vld [vmem:[#allocation3 + $0xac] sm:$0xf]
      %v5033 = vld [vmem:[#allocation3 + $0xb4] sm:$0xf]
      %v5034 = vld [vmem:[#allocation3 + $0xb8] sm:$0xf]
      %v5067 = vunpack.c.l.b16 %v5003
      %v5068 = vunpack.c.l.b16 %v5004
      %v5069 = vunpack.c.l.b16 %v5005
      %v5070 = vunpack.c.l.b16 %v5006
      %v5071 = vunpack.c.l.b16 %v5007
      %v5072 = vunpack.c.l.b16 %v5008
      %v5073 = vunpack.c.l.b16 %v5009
      %v5074 = vunpack.c.l.b16 %v5010
      %v5075 = vunpack.c.l.b16 %v5011
      %v5076 = vunpack.c.l.b16 %v5012
      %v5077 = vunpack.c.l.b16 %v5013
      %v5078 = vunpack.c.l.b16 %v5014
      %v5079 = vunpack.c.l.b16 %v5015
      %v5080 = vunpack.c.l.b16 %v5016
      %v5081 = vunpack.c.l.b16 %v5017
      %v5082 = vunpack.c.l.b16 %v5018
      %v5083 = vunpack.c.l.b16 %v5019
      %v5084 = vunpack.c.l.b16 %v5020
      %v5085 = vunpack.c.l.b16 %v5021
      %v5086 = vunpack.c.l.b16 %v5022
      %v5087 = vunpack.c.l.b16 %v5023
      %v5088 = vunpack.c.l.b16 %v5024
      %v5089 = vunpack.c.l.b16 %v5025
      %v5090 = vunpack.c.l.b16 %v5026
      %v5091 = vunpack.c.l.b16 %v5027
      %v5092 = vunpack.c.l.b16 %v5028
      %v5093 = vunpack.c.l.b16 %v5029
      %v5094 = vunpack.c.l.b16 %v5030
      %v5095 = vunpack.c.l.b16 %v5031
      %v5096 = vunpack.c.l.b16 %v5032
      %v5097 = vunpack.c.l.b16 %v5033
      %v5098 = vunpack.c.l.b16 %v5034
      %v5099 = vpack.c.b16 %v5068, %v5067
      %v5100 = vpack.c.b16 %v5070, %v5069
      %v5101 = vpack.c.b16 %v5072, %v5071
      %v5102 = vpack.c.b16 %v5074, %v5073
      %v5103 = vpack.c.b16 %v5076, %v5075
      %v5104 = vpack.c.b16 %v5078, %v5077
      %v5105 = vpack.c.b16 %v5080, %v5079
      %v5106 = vpack.c.b16 %v5082, %v5081
      %v5107 = vpack.c.b16 %v5084, %v5083
      %v5108 = vpack.c.b16 %v5086, %v5085
      %v5109 = vpack.c.b16 %v5088, %v5087
      %v5110 = vpack.c.b16 %v5090, %v5089
      %v5111 = vpack.c.b16 %v5092, %v5091
      %v5112 = vpack.c.b16 %v5094, %v5093
      %v5113 = vpack.c.b16 %v5096, %v5095
      %v5114 = vpack.c.b16 %v5098, %v5097
      %vm5131 = vcmask 64512
      %5132 = vst.msk [vmem:[#allocation5] sm:$0xff] %vm5131, %v5099
      %5133 = vst.msk [vmem:[#allocation5 + $0x8] sm:$0xff] %vm5131, %v5100
      %5134 = vst.msk [vmem:[#allocation5 + $0x10] sm:$0xff] %vm5131, %v5101
      %5135 = vst.msk [vmem:[#allocation5 + $0x18] sm:$0xff] %vm5131, %v5102
      %5136 = vst.msk [vmem:[#allocation5 + $0x20] sm:$0xff] %vm5131, %v5103
      %5137 = vst.msk [vmem:[#allocation5 + $0x28] sm:$0xff] %vm5131, %v5104
      %5138 = vst.msk [vmem:[#allocation5 + $0x30] sm:$0xff] %vm5131, %v5105
      %5139 = vst.msk [vmem:[#allocation5 + $0x38] sm:$0xff] %vm5131, %v5106
      %5140 = vst.msk [vmem:[#allocation5 + $0x40] sm:$0xff] %vm5131, %v5107
      %5141 = vst.msk [vmem:[#allocation5 + $0x48] sm:$0xff] %vm5131, %v5108
      %5142 = vst.msk [vmem:[#allocation5 + $0x50] sm:$0xff] %vm5131, %v5109
      %5143 = vst.msk [vmem:[#allocation5 + $0x58] sm:$0xff] %vm5131, %v5110
      %5144 = vst.msk [vmem:[#allocation5 + $0x60] sm:$0xff] %vm5131, %v5111
      %5145 = vst.msk [vmem:[#allocation5 + $0x68] sm:$0xff] %vm5131, %v5112
      %5146 = vst.msk [vmem:[#allocation5 + $0x70] sm:$0xff] %vm5131, %v5113
      %5147 = vst.msk [vmem:[#allocation5 + $0x78] sm:$0xff] %vm5131, %v5114
      %v5148 = vld [vmem:[#allocation3] sm:$0xf]
      %v5149 = vld [vmem:[#allocation3 + $0x4] sm:$0xf]
      %v5150 = vld [vmem:[#allocation3 + $0x8] sm:$0x1]
      %v5151 = vld [vmem:[#allocation3 + $0xc] sm:$0xf]
      %v5152 = vld [vmem:[#allocation3 + $0x10] sm:$0xf]
      %v5153 = vld [vmem:[#allocation3 + $0x14] sm:$0x1]
      %v5154 = vld [vmem:[#allocation3 + $0x18] sm:$0xf]
      %v5155 = vld [vmem:[#allocation3 + $0x1c] sm:$0xf]
      %v5156 = vld [vmem:[#allocation3 + $0x20] sm:$0x1]
      %v5157 = vld [vmem:[#allocation3 + $0x24] sm:$0xf]
      %v5158 = vld [vmem:[#allocation3 + $0x28] sm:$0xf]
      %v5159 = vld [vmem:[#allocation3 + $0x2c] sm:$0x1]
      %v5160 = vld [vmem:[#allocation3 + $0x30] sm:$0xf]
      %v5161 = vld [vmem:[#allocation3 + $0x34] sm:$0xf]
      %v5162 = vld [vmem:[#allocation3 + $0x38] sm:$0x1]
      %v5163 = vld [vmem:[#allocation3 + $0x3c] sm:$0xf]
      %v5164 = vld [vmem:[#allocation3 + $0x40] sm:$0xf]
      %v5165 = vld [vmem:[#allocation3 + $0x44] sm:$0x1]
      %v5166 = vld [vmem:[#allocation3 + $0x48] sm:$0xf]
      %v5167 = vld [vmem:[#allocation3 + $0x4c] sm:$0xf]
      %v5168 = vld [vmem:[#allocation3 + $0x50] sm:$0x1]
      %v5169 = vld [vmem:[#allocation3 + $0x54] sm:$0xf]
      %v5170 = vld [vmem:[#allocation3 + $0x58] sm:$0xf]
      %v5171 = vld [vmem:[#allocation3 + $0x5c] sm:$0x1]
      %v5172 = vld [vmem:[#allocation3 + $0x60] sm:$0xf]
      %v5173 = vld [vmem:[#allocation3 + $0x64] sm:$0xf]
      %v5174 = vld [vmem:[#allocation3 + $0x68] sm:$0x1]
      %v5175 = vld [vmem:[#allocation3 + $0x6c] sm:$0xf]
      %v5176 = vld [vmem:[#allocation3 + $0x70] sm:$0xf]
      %v5177 = vld [vmem:[#allocation3 + $0x74] sm:$0x1]
      %v5178 = vld [vmem:[#allocation3 + $0x78] sm:$0xf]
      %v5179 = vld [vmem:[#allocation3 + $0x7c] sm:$0xf]
      %v5180 = vld [vmem:[#allocation3 + $0x80] sm:$0x1]
      %v5181 = vld [vmem:[#allocation3 + $0x84] sm:$0xf]
      %v5182 = vld [vmem:[#allocation3 + $0x88] sm:$0xf]
      %v5183 = vld [vmem:[#allocation3 + $0x8c] sm:$0x1]
      %v5184 = vld [vmem:[#allocation3 + $0x90] sm:$0xf]
      %v5185 = vld [vmem:[#allocation3 + $0x94] sm:$0xf]
      %v5186 = vld [vmem:[#allocation3 + $0x98] sm:$0x1]
      %v5187 = vld [vmem:[#allocation3 + $0x9c] sm:$0xf]
      %v5188 = vld [vmem:[#allocation3 + $0xa0] sm:$0xf]
      %v5189 = vld [vmem:[#allocation3 + $0xa4] sm:$0x1]
      %v5190 = vld [vmem:[#allocation3 + $0xa8] sm:$0xf]
      %v5191 = vld [vmem:[#allocation3 + $0xac] sm:$0xf]
      %v5192 = vld [vmem:[#allocation3 + $0xb0] sm:$0x1]
      %v5193 = vld [vmem:[#allocation3 + $0xb4] sm:$0xf]
      %v5194 = vld [vmem:[#allocation3 + $0xb8] sm:$0xf]
      %v5195 = vld [vmem:[#allocation3 + $0xbc] sm:$0x1]
      %v5197 = vshrl.u32 %v5148, 16
      %v5199 = vrot.slane %v5197, 4
      %v5200 = vshll.u32 %v5148, 16
      %v5202 = vrot.slane %v5200, 5
      %v5203 = vor.u32 %v5199, %v5202
      %v5204 = vrot.slane %v5203, 4
      %v5206 = vshll.u32 %v5149, 16
      %v5208 = vrot.slane %v5206, 5
      %v5209 = vsel %vm1271, %v5204, %v5208
      %v5210 = vshrl.u32 %v5149, 16
      %v5212 = vrot.slane %v5210, 4
      %v5213 = vor.u32 %v5212, %v5208
      %v5214 = vrot.slane %v5213, 4
      %v5216 = vshll.u32 %v5150, 16
      %v5218 = vrot.slane %v5216, 5
      %v5219 = vsel %vm1271, %v5214, %v5218
      %v5221 = vshrl.u32 %v5151, 16
      %v5223 = vrot.slane %v5221, 4
      %v5224 = vshll.u32 %v5151, 16
      %v5226 = vrot.slane %v5224, 5
      %v5227 = vor.u32 %v5223, %v5226
      %v5228 = vrot.slane %v5227, 4
      %v5230 = vshll.u32 %v5152, 16
      %v5232 = vrot.slane %v5230, 5
      %v5233 = vsel %vm1271, %v5228, %v5232
      %v5234 = vshrl.u32 %v5152, 16
      %v5236 = vrot.slane %v5234, 4
      %v5237 = vor.u32 %v5236, %v5232
      %v5238 = vrot.slane %v5237, 4
      %v5240 = vshll.u32 %v5153, 16
      %v5242 = vrot.slane %v5240, 5
      %v5243 = vsel %vm1271, %v5238, %v5242
      %v5245 = vshrl.u32 %v5154, 16
      %v5247 = vrot.slane %v5245, 4
      %v5248 = vshll.u32 %v5154, 16
      %v5250 = vrot.slane %v5248, 5
      %v5251 = vor.u32 %v5247, %v5250
      %v5252 = vrot.slane %v5251, 4
      %v5254 = vshll.u32 %v5155, 16
      %v5256 = vrot.slane %v5254, 5
      %v5257 = vsel %vm1271, %v5252, %v5256
      %v5258 = vshrl.u32 %v5155, 16
      %v5260 = vrot.slane %v5258, 4
      %v5261 = vor.u32 %v5260, %v5256
      %v5262 = vrot.slane %v5261, 4
      %v5264 = vshll.u32 %v5156, 16
      %v5266 = vrot.slane %v5264, 5
      %v5267 = vsel %vm1271, %v5262, %v5266
      %v5269 = vshrl.u32 %v5157, 16
      %v5271 = vrot.slane %v5269, 4
      %v5272 = vshll.u32 %v5157, 16
      %v5274 = vrot.slane %v5272, 5
      %v5275 = vor.u32 %v5271, %v5274
      %v5276 = vrot.slane %v5275, 4
      %v5278 = vshll.u32 %v5158, 16
      %v5280 = vrot.slane %v5278, 5
      %v5281 = vsel %vm1271, %v5276, %v5280
      %v5282 = vshrl.u32 %v5158, 16
      %v5284 = vrot.slane %v5282, 4
      %v5285 = vor.u32 %v5284, %v5280
      %v5286 = vrot.slane %v5285, 4
      %v5288 = vshll.u32 %v5159, 16
      %v5290 = vrot.slane %v5288, 5
      %v5291 = vsel %vm1271, %v5286, %v5290
      %v5293 = vshrl.u32 %v5160, 16
      %v5295 = vrot.slane %v5293, 4
      %v5296 = vshll.u32 %v5160, 16
      %v5298 = vrot.slane %v5296, 5
      %v5299 = vor.u32 %v5295, %v5298
      %v5300 = vrot.slane %v5299, 4
      %v5302 = vshll.u32 %v5161, 16
      %v5304 = vrot.slane %v5302, 5
      %v5305 = vsel %vm1271, %v5300, %v5304
      %v5306 = vshrl.u32 %v5161, 16
      %v5308 = vrot.slane %v5306, 4
      %v5309 = vor.u32 %v5308, %v5304
      %v5310 = vrot.slane %v5309, 4
      %v5312 = vshll.u32 %v5162, 16
      %v5314 = vrot.slane %v5312, 5
      %v5315 = vsel %vm1271, %v5310, %v5314
      %v5317 = vshrl.u32 %v5163, 16
      %v5319 = vrot.slane %v5317, 4
      %v5320 = vshll.u32 %v5163, 16
      %v5322 = vrot.slane %v5320, 5
      %v5323 = vor.u32 %v5319, %v5322
      %v5324 = vrot.slane %v5323, 4
      %v5326 = vshll.u32 %v5164, 16
      %v5328 = vrot.slane %v5326, 5
      %v5329 = vsel %vm1271, %v5324, %v5328
      %v5330 = vshrl.u32 %v5164, 16
      %v5332 = vrot.slane %v5330, 4
      %v5333 = vor.u32 %v5332, %v5328
      %v5334 = vrot.slane %v5333, 4
      %v5336 = vshll.u32 %v5165, 16
      %v5338 = vrot.slane %v5336, 5
      %v5339 = vsel %vm1271, %v5334, %v5338
      %v5341 = vshrl.u32 %v5166, 16
      %v5343 = vrot.slane %v5341, 4
      %v5344 = vshll.u32 %v5166, 16
      %v5346 = vrot.slane %v5344, 5
      %v5347 = vor.u32 %v5343, %v5346
      %v5348 = vrot.slane %v5347, 4
      %v5350 = vshll.u32 %v5167, 16
      %v5352 = vrot.slane %v5350, 5
      %v5353 = vsel %vm1271, %v5348, %v5352
      %v5354 = vshrl.u32 %v5167, 16
      %v5356 = vrot.slane %v5354, 4
      %v5357 = vor.u32 %v5356, %v5352
      %v5358 = vrot.slane %v5357, 4
      %v5360 = vshll.u32 %v5168, 16
      %v5362 = vrot.slane %v5360, 5
      %v5363 = vsel %vm1271, %v5358, %v5362
      %v5365 = vshrl.u32 %v5169, 16
      %v5367 = vrot.slane %v5365, 4
      %v5368 = vshll.u32 %v5169, 16
      %v5370 = vrot.slane %v5368, 5
      %v5371 = vor.u32 %v5367, %v5370
      %v5372 = vrot.slane %v5371, 4
      %v5374 = vshll.u32 %v5170, 16
      %v5376 = vrot.slane %v5374, 5
      %v5377 = vsel %vm1271, %v5372, %v5376
      %v5378 = vshrl.u32 %v5170, 16
      %v5380 = vrot.slane %v5378, 4
      %v5381 = vor.u32 %v5380, %v5376
      %v5382 = vrot.slane %v5381, 4
      %v5384 = vshll.u32 %v5171, 16
      %v5386 = vrot.slane %v5384, 5
      %v5387 = vsel %vm1271, %v5382, %v5386
      %v5389 = vshrl.u32 %v5172, 16
      %v5391 = vrot.slane %v5389, 4
      %v5392 = vshll.u32 %v5172, 16
      %v5394 = vrot.slane %v5392, 5
      %v5395 = vor.u32 %v5391, %v5394
      %v5396 = vrot.slane %v5395, 4
      %v5398 = vshll.u32 %v5173, 16
      %v5400 = vrot.slane %v5398, 5
      %v5401 = vsel %vm1271, %v5396, %v5400
      %v5402 = vshrl.u32 %v5173, 16
      %v5404 = vrot.slane %v5402, 4
      %v5405 = vor.u32 %v5404, %v5400
      %v5406 = vrot.slane %v5405, 4
      %v5408 = vshll.u32 %v5174, 16
      %v5410 = vrot.slane %v5408, 5
      %v5411 = vsel %vm1271, %v5406, %v5410
      %v5413 = vshrl.u32 %v5175, 16
      %v5415 = vrot.slane %v5413, 4
      %v5416 = vshll.u32 %v5175, 16
      %v5418 = vrot.slane %v5416, 5
      %v5419 = vor.u32 %v5415, %v5418
      %v5420 = vrot.slane %v5419, 4
      %v5422 = vshll.u32 %v5176, 16
      %v5424 = vrot.slane %v5422, 5
      %v5425 = vsel %vm1271, %v5420, %v5424
      %v5426 = vshrl.u32 %v5176, 16
      %v5428 = vrot.slane %v5426, 4
      %v5429 = vor.u32 %v5428, %v5424
      %v5430 = vrot.slane %v5429, 4
      %v5432 = vshll.u32 %v5177, 16
      %v5434 = vrot.slane %v5432, 5
      %v5435 = vsel %vm1271, %v5430, %v5434
      %v5437 = vshrl.u32 %v5178, 16
      %v5439 = vrot.slane %v5437, 4
      %v5440 = vshll.u32 %v5178, 16
      %v5442 = vrot.slane %v5440, 5
      %v5443 = vor.u32 %v5439, %v5442
      %v5444 = vrot.slane %v5443, 4
      %v5446 = vshll.u32 %v5179, 16
      %v5448 = vrot.slane %v5446, 5
      %v5449 = vsel %vm1271, %v5444, %v5448
      %v5450 = vshrl.u32 %v5179, 16
      %v5452 = vrot.slane %v5450, 4
      %v5453 = vor.u32 %v5452, %v5448
      %v5454 = vrot.slane %v5453, 4
      %v5456 = vshll.u32 %v5180, 16
      %v5458 = vrot.slane %v5456, 5
      %v5459 = vsel %vm1271, %v5454, %v5458
      %v5461 = vshrl.u32 %v5181, 16
      %v5463 = vrot.slane %v5461, 4
      %v5464 = vshll.u32 %v5181, 16
      %v5466 = vrot.slane %v5464, 5
      %v5467 = vor.u32 %v5463, %v5466
      %v5468 = vrot.slane %v5467, 4
      %v5470 = vshll.u32 %v5182, 16
      %v5472 = vrot.slane %v5470, 5
      %v5473 = vsel %vm1271, %v5468, %v5472
      %v5474 = vshrl.u32 %v5182, 16
      %v5476 = vrot.slane %v5474, 4
      %v5477 = vor.u32 %v5476, %v5472
      %v5478 = vrot.slane %v5477, 4
      %v5480 = vshll.u32 %v5183, 16
      %v5482 = vrot.slane %v5480, 5
      %v5483 = vsel %vm1271, %v5478, %v5482
      %v5485 = vshrl.u32 %v5184, 16
      %v5487 = vrot.slane %v5485, 4
      %v5488 = vshll.u32 %v5184, 16
      %v5490 = vrot.slane %v5488, 5
      %v5491 = vor.u32 %v5487, %v5490
      %v5492 = vrot.slane %v5491, 4
      %v5494 = vshll.u32 %v5185, 16
      %v5496 = vrot.slane %v5494, 5
      %v5497 = vsel %vm1271, %v5492, %v5496
      %v5498 = vshrl.u32 %v5185, 16
      %v5500 = vrot.slane %v5498, 4
      %v5501 = vor.u32 %v5500, %v5496
      %v5502 = vrot.slane %v5501, 4
      %v5504 = vshll.u32 %v5186, 16
      %v5506 = vrot.slane %v5504, 5
      %v5507 = vsel %vm1271, %v5502, %v5506
      %v5509 = vshrl.u32 %v5187, 16
      %v5511 = vrot.slane %v5509, 4
      %v5512 = vshll.u32 %v5187, 16
      %v5514 = vrot.slane %v5512, 5
      %v5515 = vor.u32 %v5511, %v5514
      %v5516 = vrot.slane %v5515, 4
      %v5518 = vshll.u32 %v5188, 16
      %v5520 = vrot.slane %v5518, 5
      %v5521 = vsel %vm1271, %v5516, %v5520
      %v5522 = vshrl.u32 %v5188, 16
      %v5524 = vrot.slane %v5522, 4
      %v5525 = vor.u32 %v5524, %v5520
      %v5526 = vrot.slane %v5525, 4
      %v5528 = vshll.u32 %v5189, 16
      %v5530 = vrot.slane %v5528, 5
      %v5531 = vsel %vm1271, %v5526, %v5530
      %v5533 = vshrl.u32 %v5190, 16
      %v5535 = vrot.slane %v5533, 4
      %v5536 = vshll.u32 %v5190, 16
      %v5538 = vrot.slane %v5536, 5
      %v5539 = vor.u32 %v5535, %v5538
      %v5540 = vrot.slane %v5539, 4
      %v5542 = vshll.u32 %v5191, 16
      %v5544 = vrot.slane %v5542, 5
      %v5545 = vsel %vm1271, %v5540, %v5544
      %v5546 = vshrl.u32 %v5191, 16
      %v5548 = vrot.slane %v5546, 4
      %v5549 = vor.u32 %v5548, %v5544
      %v5550 = vrot.slane %v5549, 4
      %v5552 = vshll.u32 %v5192, 16
      %v5554 = vrot.slane %v5552, 5
      %v5555 = vsel %vm1271, %v5550, %v5554
      %v5557 = vshrl.u32 %v5193, 16
      %v5559 = vrot.slane %v5557, 4
      %v5560 = vshll.u32 %v5193, 16
      %v5562 = vrot.slane %v5560, 5
      %v5563 = vor.u32 %v5559, %v5562
      %v5564 = vrot.slane %v5563, 4
      %v5566 = vshll.u32 %v5194, 16
      %v5568 = vrot.slane %v5566, 5
      %v5569 = vsel %vm1271, %v5564, %v5568
      %v5570 = vshrl.u32 %v5194, 16
      %v5572 = vrot.slane %v5570, 4
      %v5573 = vor.u32 %v5572, %v5568
      %v5574 = vrot.slane %v5573, 4
      %v5576 = vshll.u32 %v5195, 16
      %v5578 = vrot.slane %v5576, 5
      %v5579 = vsel %vm1271, %v5574, %v5578
      %v5580 = vunpack.c.l.b16 %v5209
      %v5581 = vunpack.c.l.b16 %v5219
      %v5582 = vunpack.c.l.b16 %v5233
      %v5583 = vunpack.c.l.b16 %v5243
      %v5584 = vunpack.c.l.b16 %v5257
      %v5585 = vunpack.c.l.b16 %v5267
      %v5586 = vunpack.c.l.b16 %v5281
      %v5587 = vunpack.c.l.b16 %v5291
      %v5588 = vunpack.c.l.b16 %v5305
      %v5589 = vunpack.c.l.b16 %v5315
      %v5590 = vunpack.c.l.b16 %v5329
      %v5591 = vunpack.c.l.b16 %v5339
      %v5592 = vunpack.c.l.b16 %v5353
      %v5593 = vunpack.c.l.b16 %v5363
      %v5594 = vunpack.c.l.b16 %v5377
      %v5595 = vunpack.c.l.b16 %v5387
      %v5596 = vunpack.c.l.b16 %v5401
      %v5597 = vunpack.c.l.b16 %v5411
      %v5598 = vunpack.c.l.b16 %v5425
      %v5599 = vunpack.c.l.b16 %v5435
      %v5600 = vunpack.c.l.b16 %v5449
      %v5601 = vunpack.c.l.b16 %v5459
      %v5602 = vunpack.c.l.b16 %v5473
      %v5603 = vunpack.c.l.b16 %v5483
      %v5604 = vunpack.c.l.b16 %v5497
      %v5605 = vunpack.c.l.b16 %v5507
      %v5606 = vunpack.c.l.b16 %v5521
      %v5607 = vunpack.c.l.b16 %v5531
      %v5608 = vunpack.c.l.b16 %v5545
      %v5609 = vunpack.c.l.b16 %v5555
      %v5610 = vunpack.c.l.b16 %v5569
      %v5611 = vunpack.c.l.b16 %v5579
      %v5612 = vpack.c.b16 %v5581, %v5580
      %v5613 = vpack.c.b16 %v5583, %v5582
      %v5614 = vpack.c.b16 %v5585, %v5584
      %v5615 = vpack.c.b16 %v5587, %v5586
      %v5616 = vpack.c.b16 %v5589, %v5588
      %v5617 = vpack.c.b16 %v5591, %v5590
      %v5618 = vpack.c.b16 %v5593, %v5592
      %v5619 = vpack.c.b16 %v5595, %v5594
      %v5620 = vpack.c.b16 %v5597, %v5596
      %v5621 = vpack.c.b16 %v5599, %v5598
      %v5622 = vpack.c.b16 %v5601, %v5600
      %v5623 = vpack.c.b16 %v5603, %v5602
      %v5624 = vpack.c.b16 %v5605, %v5604
      %v5625 = vpack.c.b16 %v5607, %v5606
      %v5626 = vpack.c.b16 %v5609, %v5608
      %v5627 = vpack.c.b16 %v5611, %v5610
      %5628 = vrot.lane.b32.xlu0 %v5612, 8
      %v5629 = vpop.permute.xlu0 %5628
      %5630 = vrot.lane.b32.xlu0 %v5613, 8
      %v5631 = vpop.permute.xlu0 %5630
      %5632 = vrot.lane.b32.xlu0 %v5614, 8
      %v5633 = vpop.permute.xlu0 %5632
      %5634 = vrot.lane.b32.xlu0 %v5615, 8
      %v5635 = vpop.permute.xlu0 %5634
      %5636 = vrot.lane.b32.xlu0 %v5616, 8
      %v5637 = vpop.permute.xlu0 %5636
      %5638 = vrot.lane.b32.xlu0 %v5617, 8
      %v5639 = vpop.permute.xlu0 %5638
      %5640 = vrot.lane.b32.xlu0 %v5618, 8
      %v5641 = vpop.permute.xlu0 %5640
      %5642 = vrot.lane.b32.xlu0 %v5619, 8
      %v5643 = vpop.permute.xlu0 %5642
      %5644 = vrot.lane.b32.xlu0 %v5620, 8
      %v5645 = vpop.permute.xlu0 %5644
      %5646 = vrot.lane.b32.xlu0 %v5621, 8
      %v5647 = vpop.permute.xlu0 %5646
      %5648 = vrot.lane.b32.xlu0 %v5622, 8
      %v5649 = vpop.permute.xlu0 %5648
      %5650 = vrot.lane.b32.xlu0 %v5623, 8
      %v5651 = vpop.permute.xlu0 %5650
      %5652 = vrot.lane.b32.xlu0 %v5624, 8
      %v5653 = vpop.permute.xlu0 %5652
      %5654 = vrot.lane.b32.xlu0 %v5625, 8
      %v5655 = vpop.permute.xlu0 %5654
      %5656 = vrot.lane.b32.xlu0 %v5626, 8
      %v5657 = vpop.permute.xlu0 %5656
      %5658 = vrot.lane.b32.xlu0 %v5627, 8
      %v5659 = vpop.permute.xlu0 %5658
      %vm5676 = vcmask 130112
      %5677 = vst.msk [vmem:[#allocation5] sm:$0xff] %vm5676, %v5629
      %5678 = vst.msk [vmem:[#allocation5 + $0x8] sm:$0xff] %vm5676, %v5631
      %5679 = vst.msk [vmem:[#allocation5 + $0x10] sm:$0xff] %vm5676, %v5633
      %5680 = vst.msk [vmem:[#allocation5 + $0x18] sm:$0xff] %vm5676, %v5635
      %5681 = vst.msk [vmem:[#allocation5 + $0x20] sm:$0xff] %vm5676, %v5637
      %5682 = vst.msk [vmem:[#allocation5 + $0x28] sm:$0xff] %vm5676, %v5639
      %5683 = vst.msk [vmem:[#allocation5 + $0x30] sm:$0xff] %vm5676, %v5641
      %5684 = vst.msk [vmem:[#allocation5 + $0x38] sm:$0xff] %vm5676, %v5643
      %5685 = vst.msk [vmem:[#allocation5 + $0x40] sm:$0xff] %vm5676, %v5645
      %5686 = vst.msk [vmem:[#allocation5 + $0x48] sm:$0xff] %vm5676, %v5647
      %5687 = vst.msk [vmem:[#allocation5 + $0x50] sm:$0xff] %vm5676, %v5649
      %5688 = vst.msk [vmem:[#allocation5 + $0x58] sm:$0xff] %vm5676, %v5651
      %5689 = vst.msk [vmem:[#allocation5 + $0x60] sm:$0xff] %vm5676, %v5653
      %5690 = vst.msk [vmem:[#allocation5 + $0x68] sm:$0xff] %vm5676, %v5655
      %5691 = vst.msk [vmem:[#allocation5 + $0x70] sm:$0xff] %vm5676, %v5657
      %5692 = vst.msk [vmem:[#allocation5 + $0x78] sm:$0xff] %vm5676, %v5659
      %v5693 = vld [vmem:[%s4885] sm:$0xf]
      %v5694 = vld [vmem:[%s4885 + $0x4] sm:$0xf]
      %v5695 = vld [vmem:[%s4885 + $0xc] sm:$0xf]
      %v5696 = vld [vmem:[%s4885 + $0x10] sm:$0xf]
      %v5697 = vld [vmem:[%s4885 + $0x18] sm:$0xf]
      %v5698 = vld [vmem:[%s4885 + $0x1c] sm:$0xf]
      %v5699 = vld [vmem:[%s4885 + $0x24] sm:$0xf]
      %v5700 = vld [vmem:[%s4885 + $0x28] sm:$0xf]
      %v5701 = vld [vmem:[%s4885 + $0x30] sm:$0xf]
      %v5702 = vld [vmem:[%s4885 + $0x34] sm:$0xf]
      %v5703 = vld [vmem:[%s4885 + $0x3c] sm:$0xf]
      %v5704 = vld [vmem:[%s4885 + $0x40] sm:$0xf]
      %v5705 = vld [vmem:[%s4885 + $0x48] sm:$0xf]
      %v5706 = vld [vmem:[%s4885 + $0x4c] sm:$0xf]
      %v5707 = vld [vmem:[%s4885 + $0x54] sm:$0xf]
      %v5708 = vld [vmem:[%s4885 + $0x58] sm:$0xf]
      %v5709 = vld [vmem:[%s4885 + $0x60] sm:$0xf]
      %v5710 = vld [vmem:[%s4885 + $0x64] sm:$0xf]
      %v5711 = vld [vmem:[%s4885 + $0x6c] sm:$0xf]
      %v5712 = vld [vmem:[%s4885 + $0x70] sm:$0xf]
      %v5713 = vld [vmem:[%s4885 + $0x78] sm:$0xf]
      %v5714 = vld [vmem:[%s4885 + $0x7c] sm:$0xf]
      %v5715 = vld [vmem:[%s4885 + $0x84] sm:$0xf]
      %v5716 = vld [vmem:[%s4885 + $0x88] sm:$0xf]
      %v5717 = vld [vmem:[%s4885 + $0x90] sm:$0xf]
      %v5718 = vld [vmem:[%s4885 + $0x94] sm:$0xf]
      %v5719 = vld [vmem:[%s4885 + $0x9c] sm:$0xf]
      %v5720 = vld [vmem:[%s4885 + $0xa0] sm:$0xf]
      %v5721 = vld [vmem:[%s4885 + $0xa8] sm:$0xf]
      %v5722 = vld [vmem:[%s4885 + $0xac] sm:$0xf]
      %v5723 = vld [vmem:[%s4885 + $0xb4] sm:$0xf]
      %v5724 = vld [vmem:[%s4885 + $0xb8] sm:$0xf]
      %v5757 = vunpack.c.l.b16 %v5693
      %v5758 = vunpack.c.l.b16 %v5694
      %v5759 = vunpack.c.l.b16 %v5695
      %v5760 = vunpack.c.l.b16 %v5696
      %v5761 = vunpack.c.l.b16 %v5697
      %v5762 = vunpack.c.l.b16 %v5698
      %v5763 = vunpack.c.l.b16 %v5699
      %v5764 = vunpack.c.l.b16 %v5700
      %v5765 = vunpack.c.l.b16 %v5701
      %v5766 = vunpack.c.l.b16 %v5702
      %v5767 = vunpack.c.l.b16 %v5703
      %v5768 = vunpack.c.l.b16 %v5704
      %v5769 = vunpack.c.l.b16 %v5705
      %v5770 = vunpack.c.l.b16 %v5706
      %v5771 = vunpack.c.l.b16 %v5707
      %v5772 = vunpack.c.l.b16 %v5708
      %v5773 = vunpack.c.l.b16 %v5709
      %v5774 = vunpack.c.l.b16 %v5710
      %v5775 = vunpack.c.l.b16 %v5711
      %v5776 = vunpack.c.l.b16 %v5712
      %v5777 = vunpack.c.l.b16 %v5713
      %v5778 = vunpack.c.l.b16 %v5714
      %v5779 = vunpack.c.l.b16 %v5715
      %v5780 = vunpack.c.l.b16 %v5716
      %v5781 = vunpack.c.l.b16 %v5717
      %v5782 = vunpack.c.l.b16 %v5718
      %v5783 = vunpack.c.l.b16 %v5719
      %v5784 = vunpack.c.l.b16 %v5720
      %v5785 = vunpack.c.l.b16 %v5721
      %v5786 = vunpack.c.l.b16 %v5722
      %v5787 = vunpack.c.l.b16 %v5723
      %v5788 = vunpack.c.l.b16 %v5724
      %v5789 = vpack.c.b16 %v5758, %v5757
      %v5790 = vpack.c.b16 %v5760, %v5759
      %v5791 = vpack.c.b16 %v5762, %v5761
      %v5792 = vpack.c.b16 %v5764, %v5763
      %v5793 = vpack.c.b16 %v5766, %v5765
      %v5794 = vpack.c.b16 %v5768, %v5767
      %v5795 = vpack.c.b16 %v5770, %v5769
      %v5796 = vpack.c.b16 %v5772, %v5771
      %v5797 = vpack.c.b16 %v5774, %v5773
      %v5798 = vpack.c.b16 %v5776, %v5775
      %v5799 = vpack.c.b16 %v5778, %v5777
      %v5800 = vpack.c.b16 %v5780, %v5779
      %v5801 = vpack.c.b16 %v5782, %v5781
      %v5802 = vpack.c.b16 %v5784, %v5783
      %v5803 = vpack.c.b16 %v5786, %v5785
      %v5804 = vpack.c.b16 %v5788, %v5787
      %5805 = vrot.lane.b32.xlu0 %v5789, 16
      %v5806 = vpop.permute.xlu0 %5805
      %5807 = vrot.lane.b32.xlu0 %v5790, 16
      %v5808 = vpop.permute.xlu0 %5807
      %5809 = vrot.lane.b32.xlu0 %v5791, 16
      %v5810 = vpop.permute.xlu0 %5809
      %5811 = vrot.lane.b32.xlu0 %v5792, 16
      %v5812 = vpop.permute.xlu0 %5811
      %5813 = vrot.lane.b32.xlu0 %v5793, 16
      %v5814 = vpop.permute.xlu0 %5813
      %5815 = vrot.lane.b32.xlu0 %v5794, 16
      %v5816 = vpop.permute.xlu0 %5815
      %5817 = vrot.lane.b32.xlu0 %v5795, 16
      %v5818 = vpop.permute.xlu0 %5817
      %5819 = vrot.lane.b32.xlu0 %v5796, 16
      %v5820 = vpop.permute.xlu0 %5819
      %5821 = vrot.lane.b32.xlu0 %v5797, 16
      %v5822 = vpop.permute.xlu0 %5821
      %5823 = vrot.lane.b32.xlu0 %v5798, 16
      %v5824 = vpop.permute.xlu0 %5823
      %5825 = vrot.lane.b32.xlu0 %v5799, 16
      %v5826 = vpop.permute.xlu0 %5825
      %5827 = vrot.lane.b32.xlu0 %v5800, 16
      %v5828 = vpop.permute.xlu0 %5827
      %5829 = vrot.lane.b32.xlu0 %v5801, 16
      %v5830 = vpop.permute.xlu0 %5829
      %5831 = vrot.lane.b32.xlu0 %v5802, 16
      %v5832 = vpop.permute.xlu0 %5831
      %5833 = vrot.lane.b32.xlu0 %v5803, 16
      %v5834 = vpop.permute.xlu0 %5833
      %5835 = vrot.lane.b32.xlu0 %v5804, 16
      %v5836 = vpop.permute.xlu0 %5835
      %vm5853 = vcmask 195712
      %5854 = vst.msk [vmem:[#allocation5] sm:$0xff] %vm5853, %v5806
      %5855 = vst.msk [vmem:[#allocation5 + $0x8] sm:$0xff] %vm5853, %v5808
      %5856 = vst.msk [vmem:[#allocation5 + $0x10] sm:$0xff] %vm5853, %v5810
      %5857 = vst.msk [vmem:[#allocation5 + $0x18] sm:$0xff] %vm5853, %v5812
      %5858 = vst.msk [vmem:[#allocation5 + $0x20] sm:$0xff] %vm5853, %v5814
      %5859 = vst.msk [vmem:[#allocation5 + $0x28] sm:$0xff] %vm5853, %v5816
      %5860 = vst.msk [vmem:[#allocation5 + $0x30] sm:$0xff] %vm5853, %v5818
      %5861 = vst.msk [vmem:[#allocation5 + $0x38] sm:$0xff] %vm5853, %v5820
      %5862 = vst.msk [vmem:[#allocation5 + $0x40] sm:$0xff] %vm5853, %v5822
      %5863 = vst.msk [vmem:[#allocation5 + $0x48] sm:$0xff] %vm5853, %v5824
      %5864 = vst.msk [vmem:[#allocation5 + $0x50] sm:$0xff] %vm5853, %v5826
      %5865 = vst.msk [vmem:[#allocation5 + $0x58] sm:$0xff] %vm5853, %v5828
      %5866 = vst.msk [vmem:[#allocation5 + $0x60] sm:$0xff] %vm5853, %v5830
      %5867 = vst.msk [vmem:[#allocation5 + $0x68] sm:$0xff] %vm5853, %v5832
      %5868 = vst.msk [vmem:[#allocation5 + $0x70] sm:$0xff] %vm5853, %v5834
      %5869 = vst.msk [vmem:[#allocation5 + $0x78] sm:$0xff] %vm5853, %v5836
      %v5870 = vld [vmem:[%s4885] sm:$0xf]
      %v5871 = vld [vmem:[%s4885 + $0x4] sm:$0xf]
      %v5872 = vld [vmem:[%s4885 + $0x8] sm:$0x1]
      %v5873 = vld [vmem:[%s4885 + $0xc] sm:$0xf]
      %v5874 = vld [vmem:[%s4885 + $0x10] sm:$0xf]
      %v5875 = vld [vmem:[%s4885 + $0x14] sm:$0x1]
      %v5876 = vld [vmem:[%s4885 + $0x18] sm:$0xf]
      %v5877 = vld [vmem:[%s4885 + $0x1c] sm:$0xf]
      %v5878 = vld [vmem:[%s4885 + $0x20] sm:$0x1]
      %v5879 = vld [vmem:[%s4885 + $0x24] sm:$0xf]
      %v5880 = vld [vmem:[%s4885 + $0x28] sm:$0xf]
      %v5881 = vld [vmem:[%s4885 + $0x2c] sm:$0x1]
      %v5882 = vld [vmem:[%s4885 + $0x30] sm:$0xf]
      %v5883 = vld [vmem:[%s4885 + $0x34] sm:$0xf]
      %v5884 = vld [vmem:[%s4885 + $0x38] sm:$0x1]
      %v5885 = vld [vmem:[%s4885 + $0x3c] sm:$0xf]
      %v5886 = vld [vmem:[%s4885 + $0x40] sm:$0xf]
      %v5887 = vld [vmem:[%s4885 + $0x44] sm:$0x1]
      %v5888 = vld [vmem:[%s4885 + $0x48] sm:$0xf]
      %v5889 = vld [vmem:[%s4885 + $0x4c] sm:$0xf]
      %v5890 = vld [vmem:[%s4885 + $0x50] sm:$0x1]
      %v5891 = vld [vmem:[%s4885 + $0x54] sm:$0xf]
      %v5892 = vld [vmem:[%s4885 + $0x58] sm:$0xf]
      %v5893 = vld [vmem:[%s4885 + $0x5c] sm:$0x1]
      %v5894 = vld [vmem:[%s4885 + $0x60] sm:$0xf]
      %v5895 = vld [vmem:[%s4885 + $0x64] sm:$0xf]
      %v5896 = vld [vmem:[%s4885 + $0x68] sm:$0x1]
      %v5897 = vld [vmem:[%s4885 + $0x6c] sm:$0xf]
      %v5898 = vld [vmem:[%s4885 + $0x70] sm:$0xf]
      %v5899 = vld [vmem:[%s4885 + $0x74] sm:$0x1]
      %v5900 = vld [vmem:[%s4885 + $0x78] sm:$0xf]
      %v5901 = vld [vmem:[%s4885 + $0x7c] sm:$0xf]
      %v5902 = vld [vmem:[%s4885 + $0x80] sm:$0x1]
      %v5903 = vld [vmem:[%s4885 + $0x84] sm:$0xf]
      %v5904 = vld [vmem:[%s4885 + $0x88] sm:$0xf]
      %v5905 = vld [vmem:[%s4885 + $0x8c] sm:$0x1]
      %v5906 = vld [vmem:[%s4885 + $0x90] sm:$0xf]
      %v5907 = vld [vmem:[%s4885 + $0x94] sm:$0xf]
      %v5908 = vld [vmem:[%s4885 + $0x98] sm:$0x1]
      %v5909 = vld [vmem:[%s4885 + $0x9c] sm:$0xf]
      %v5910 = vld [vmem:[%s4885 + $0xa0] sm:$0xf]
      %v5911 = vld [vmem:[%s4885 + $0xa4] sm:$0x1]
      %v5912 = vld [vmem:[%s4885 + $0xa8] sm:$0xf]
      %v5913 = vld [vmem:[%s4885 + $0xac] sm:$0xf]
      %v5914 = vld [vmem:[%s4885 + $0xb0] sm:$0x1]
      %v5915 = vld [vmem:[%s4885 + $0xb4] sm:$0xf]
      %v5916 = vld [vmem:[%s4885 + $0xb8] sm:$0xf]
      %v5917 = vld [vmem:[%s4885 + $0xbc] sm:$0x1]
      %v5919 = vshrl.u32 %v5870, 16
      %v5921 = vrot.slane %v5919, 4
      %v5922 = vshll.u32 %v5870, 16
      %v5924 = vrot.slane %v5922, 5
      %v5925 = vor.u32 %v5921, %v5924
      %v5926 = vrot.slane %v5925, 4
      %v5928 = vshll.u32 %v5871, 16
      %v5930 = vrot.slane %v5928, 5
      %v5931 = vsel %vm1271, %v5926, %v5930
      %v5932 = vshrl.u32 %v5871, 16
      %v5934 = vrot.slane %v5932, 4
      %v5935 = vor.u32 %v5934, %v5930
      %v5936 = vrot.slane %v5935, 4
      %v5938 = vshll.u32 %v5872, 16
      %v5940 = vrot.slane %v5938, 5
      %v5941 = vsel %vm1271, %v5936, %v5940
      %v5943 = vshrl.u32 %v5873, 16
      %v5945 = vrot.slane %v5943, 4
      %v5946 = vshll.u32 %v5873, 16
      %v5948 = vrot.slane %v5946, 5
      %v5949 = vor.u32 %v5945, %v5948
      %v5950 = vrot.slane %v5949, 4
      %v5952 = vshll.u32 %v5874, 16
      %v5954 = vrot.slane %v5952, 5
      %v5955 = vsel %vm1271, %v5950, %v5954
      %v5956 = vshrl.u32 %v5874, 16
      %v5958 = vrot.slane %v5956, 4
      %v5959 = vor.u32 %v5958, %v5954
      %v5960 = vrot.slane %v5959, 4
      %v5962 = vshll.u32 %v5875, 16
      %v5964 = vrot.slane %v5962, 5
      %v5965 = vsel %vm1271, %v5960, %v5964
      %v5967 = vshrl.u32 %v5876, 16
      %v5969 = vrot.slane %v5967, 4
      %v5970 = vshll.u32 %v5876, 16
      %v5972 = vrot.slane %v5970, 5
      %v5973 = vor.u32 %v5969, %v5972
      %v5974 = vrot.slane %v5973, 4
      %v5976 = vshll.u32 %v5877, 16
      %v5978 = vrot.slane %v5976, 5
      %v5979 = vsel %vm1271, %v5974, %v5978
      %v5980 = vshrl.u32 %v5877, 16
      %v5982 = vrot.slane %v5980, 4
      %v5983 = vor.u32 %v5982, %v5978
      %v5984 = vrot.slane %v5983, 4
      %v5986 = vshll.u32 %v5878, 16
      %v5988 = vrot.slane %v5986, 5
      %v5989 = vsel %vm1271, %v5984, %v5988
      %v5991 = vshrl.u32 %v5879, 16
      %v5993 = vrot.slane %v5991, 4
      %v5994 = vshll.u32 %v5879, 16
      %v5996 = vrot.slane %v5994, 5
      %v5997 = vor.u32 %v5993, %v5996
      %v5998 = vrot.slane %v5997, 4
      %v6000 = vshll.u32 %v5880, 16
      %v6002 = vrot.slane %v6000, 5
      %v6003 = vsel %vm1271, %v5998, %v6002
      %v6004 = vshrl.u32 %v5880, 16
      %v6006 = vrot.slane %v6004, 4
      %v6007 = vor.u32 %v6006, %v6002
      %v6008 = vrot.slane %v6007, 4
      %v6010 = vshll.u32 %v5881, 16
      %v6012 = vrot.slane %v6010, 5
      %v6013 = vsel %vm1271, %v6008, %v6012
      %v6015 = vshrl.u32 %v5882, 16
      %v6017 = vrot.slane %v6015, 4
      %v6018 = vshll.u32 %v5882, 16
      %v6020 = vrot.slane %v6018, 5
      %v6021 = vor.u32 %v6017, %v6020
      %v6022 = vrot.slane %v6021, 4
      %v6024 = vshll.u32 %v5883, 16
      %v6026 = vrot.slane %v6024, 5
      %v6027 = vsel %vm1271, %v6022, %v6026
      %v6028 = vshrl.u32 %v5883, 16
      %v6030 = vrot.slane %v6028, 4
      %v6031 = vor.u32 %v6030, %v6026
      %v6032 = vrot.slane %v6031, 4
      %v6034 = vshll.u32 %v5884, 16
      %v6036 = vrot.slane %v6034, 5
      %v6037 = vsel %vm1271, %v6032, %v6036
      %v6039 = vshrl.u32 %v5885, 16
      %v6041 = vrot.slane %v6039, 4
      %v6042 = vshll.u32 %v5885, 16
      %v6044 = vrot.slane %v6042, 5
      %v6045 = vor.u32 %v6041, %v6044
      %v6046 = vrot.slane %v6045, 4
      %v6048 = vshll.u32 %v5886, 16
      %v6050 = vrot.slane %v6048, 5
      %v6051 = vsel %vm1271, %v6046, %v6050
      %v6052 = vshrl.u32 %v5886, 16
      %v6054 = vrot.slane %v6052, 4
      %v6055 = vor.u32 %v6054, %v6050
      %v6056 = vrot.slane %v6055, 4
      %v6058 = vshll.u32 %v5887, 16
      %v6060 = vrot.slane %v6058, 5
      %v6061 = vsel %vm1271, %v6056, %v6060
      %v6063 = vshrl.u32 %v5888, 16
      %v6065 = vrot.slane %v6063, 4
      %v6066 = vshll.u32 %v5888, 16
      %v6068 = vrot.slane %v6066, 5
      %v6069 = vor.u32 %v6065, %v6068
      %v6070 = vrot.slane %v6069, 4
      %v6072 = vshll.u32 %v5889, 16
      %v6074 = vrot.slane %v6072, 5
      %v6075 = vsel %vm1271, %v6070, %v6074
      %v6076 = vshrl.u32 %v5889, 16
      %v6078 = vrot.slane %v6076, 4
      %v6079 = vor.u32 %v6078, %v6074
      %v6080 = vrot.slane %v6079, 4
      %v6082 = vshll.u32 %v5890, 16
      %v6084 = vrot.slane %v6082, 5
      %v6085 = vsel %vm1271, %v6080, %v6084
      %v6087 = vshrl.u32 %v5891, 16
      %v6089 = vrot.slane %v6087, 4
      %v6090 = vshll.u32 %v5891, 16
      %v6092 = vrot.slane %v6090, 5
      %v6093 = vor.u32 %v6089, %v6092
      %v6094 = vrot.slane %v6093, 4
      %v6096 = vshll.u32 %v5892, 16
      %v6098 = vrot.slane %v6096, 5
      %v6099 = vsel %vm1271, %v6094, %v6098
      %v6100 = vshrl.u32 %v5892, 16
      %v6102 = vrot.slane %v6100, 4
      %v6103 = vor.u32 %v6102, %v6098
      %v6104 = vrot.slane %v6103, 4
      %v6106 = vshll.u32 %v5893, 16
      %v6108 = vrot.slane %v6106, 5
      %v6109 = vsel %vm1271, %v6104, %v6108
      %v6111 = vshrl.u32 %v5894, 16
      %v6113 = vrot.slane %v6111, 4
      %v6114 = vshll.u32 %v5894, 16
      %v6116 = vrot.slane %v6114, 5
      %v6117 = vor.u32 %v6113, %v6116
      %v6118 = vrot.slane %v6117, 4
      %v6120 = vshll.u32 %v5895, 16
      %v6122 = vrot.slane %v6120, 5
      %v6123 = vsel %vm1271, %v6118, %v6122
      %v6124 = vshrl.u32 %v5895, 16
      %v6126 = vrot.slane %v6124, 4
      %v6127 = vor.u32 %v6126, %v6122
      %v6128 = vrot.slane %v6127, 4
      %v6130 = vshll.u32 %v5896, 16
      %v6132 = vrot.slane %v6130, 5
      %v6133 = vsel %vm1271, %v6128, %v6132
      %v6135 = vshrl.u32 %v5897, 16
      %v6137 = vrot.slane %v6135, 4
      %v6138 = vshll.u32 %v5897, 16
      %v6140 = vrot.slane %v6138, 5
      %v6141 = vor.u32 %v6137, %v6140
      %v6142 = vrot.slane %v6141, 4
      %v6144 = vshll.u32 %v5898, 16
      %v6146 = vrot.slane %v6144, 5
      %v6147 = vsel %vm1271, %v6142, %v6146
      %v6148 = vshrl.u32 %v5898, 16
      %v6150 = vrot.slane %v6148, 4
      %v6151 = vor.u32 %v6150, %v6146
      %v6152 = vrot.slane %v6151, 4
      %v6154 = vshll.u32 %v5899, 16
      %v6156 = vrot.slane %v6154, 5
      %v6157 = vsel %vm1271, %v6152, %v6156
      %v6159 = vshrl.u32 %v5900, 16
      %v6161 = vrot.slane %v6159, 4
      %v6162 = vshll.u32 %v5900, 16
      %v6164 = vrot.slane %v6162, 5
      %v6165 = vor.u32 %v6161, %v6164
      %v6166 = vrot.slane %v6165, 4
      %v6168 = vshll.u32 %v5901, 16
      %v6170 = vrot.slane %v6168, 5
      %v6171 = vsel %vm1271, %v6166, %v6170
      %v6172 = vshrl.u32 %v5901, 16
      %v6174 = vrot.slane %v6172, 4
      %v6175 = vor.u32 %v6174, %v6170
      %v6176 = vrot.slane %v6175, 4
      %v6178 = vshll.u32 %v5902, 16
      %v6180 = vrot.slane %v6178, 5
      %v6181 = vsel %vm1271, %v6176, %v6180
      %v6183 = vshrl.u32 %v5903, 16
      %v6185 = vrot.slane %v6183, 4
      %v6186 = vshll.u32 %v5903, 16
      %v6188 = vrot.slane %v6186, 5
      %v6189 = vor.u32 %v6185, %v6188
      %v6190 = vrot.slane %v6189, 4
      %v6192 = vshll.u32 %v5904, 16
      %v6194 = vrot.slane %v6192, 5
      %v6195 = vsel %vm1271, %v6190, %v6194
      %v6196 = vshrl.u32 %v5904, 16
      %v6198 = vrot.slane %v6196, 4
      %v6199 = vor.u32 %v6198, %v6194
      %v6200 = vrot.slane %v6199, 4
      %v6202 = vshll.u32 %v5905, 16
      %v6204 = vrot.slane %v6202, 5
      %v6205 = vsel %vm1271, %v6200, %v6204
      %v6207 = vshrl.u32 %v5906, 16
      %v6209 = vrot.slane %v6207, 4
      %v6210 = vshll.u32 %v5906, 16
      %v6212 = vrot.slane %v6210, 5
      %v6213 = vor.u32 %v6209, %v6212
      %v6214 = vrot.slane %v6213, 4
      %v6216 = vshll.u32 %v5907, 16
      %v6218 = vrot.slane %v6216, 5
      %v6219 = vsel %vm1271, %v6214, %v6218
      %v6220 = vshrl.u32 %v5907, 16
      %v6222 = vrot.slane %v6220, 4
      %v6223 = vor.u32 %v6222, %v6218
      %v6224 = vrot.slane %v6223, 4
      %v6226 = vshll.u32 %v5908, 16
      %v6228 = vrot.slane %v6226, 5
      %v6229 = vsel %vm1271, %v6224, %v6228
      %v6231 = vshrl.u32 %v5909, 16
      %v6233 = vrot.slane %v6231, 4
      %v6234 = vshll.u32 %v5909, 16
      %v6236 = vrot.slane %v6234, 5
      %v6237 = vor.u32 %v6233, %v6236
      %v6238 = vrot.slane %v6237, 4
      %v6240 = vshll.u32 %v5910, 16
      %v6242 = vrot.slane %v6240, 5
      %v6243 = vsel %vm1271, %v6238, %v6242
      %v6244 = vshrl.u32 %v5910, 16
      %v6246 = vrot.slane %v6244, 4
      %v6247 = vor.u32 %v6246, %v6242
      %v6248 = vrot.slane %v6247, 4
      %v6250 = vshll.u32 %v5911, 16
      %v6252 = vrot.slane %v6250, 5
      %v6253 = vsel %vm1271, %v6248, %v6252
      %v6255 = vshrl.u32 %v5912, 16
      %v6257 = vrot.slane %v6255, 4
      %v6258 = vshll.u32 %v5912, 16
      %v6260 = vrot.slane %v6258, 5
      %v6261 = vor.u32 %v6257, %v6260
      %v6262 = vrot.slane %v6261, 4
      %v6264 = vshll.u32 %v5913, 16
      %v6266 = vrot.slane %v6264, 5
      %v6267 = vsel %vm1271, %v6262, %v6266
      %v6268 = vshrl.u32 %v5913, 16
      %v6270 = vrot.slane %v6268, 4
      %v6271 = vor.u32 %v6270, %v6266
      %v6272 = vrot.slane %v6271, 4
      %v6274 = vshll.u32 %v5914, 16
      %v6276 = vrot.slane %v6274, 5
      %v6277 = vsel %vm1271, %v6272, %v6276
      %v6279 = vshrl.u32 %v5915, 16
      %v6281 = vrot.slane %v6279, 4
      %v6282 = vshll.u32 %v5915, 16
      %v6284 = vrot.slane %v6282, 5
      %v6285 = vor.u32 %v6281, %v6284
      %v6286 = vrot.slane %v6285, 4
      %v6288 = vshll.u32 %v5916, 16
      %v6290 = vrot.slane %v6288, 5
      %v6291 = vsel %vm1271, %v6286, %v6290
      %v6292 = vshrl.u32 %v5916, 16
      %v6294 = vrot.slane %v6292, 4
      %v6295 = vor.u32 %v6294, %v6290
      %v6296 = vrot.slane %v6295, 4
      %v6298 = vshll.u32 %v5917, 16
      %v6300 = vrot.slane %v6298, 5
      %v6301 = vsel %vm1271, %v6296, %v6300
      %v6302 = vunpack.c.l.b16 %v5931
      %v6303 = vunpack.c.l.b16 %v5941
      %v6304 = vunpack.c.l.b16 %v5955
      %v6305 = vunpack.c.l.b16 %v5965
      %v6306 = vunpack.c.l.b16 %v5979
      %v6307 = vunpack.c.l.b16 %v5989
      %v6308 = vunpack.c.l.b16 %v6003
      %v6309 = vunpack.c.l.b16 %v6013
      %v6310 = vunpack.c.l.b16 %v6027
      %v6311 = vunpack.c.l.b16 %v6037
      %v6312 = vunpack.c.l.b16 %v6051
      %v6313 = vunpack.c.l.b16 %v6061
      %v6314 = vunpack.c.l.b16 %v6075
      %v6315 = vunpack.c.l.b16 %v6085
      %v6316 = vunpack.c.l.b16 %v6099
      %v6317 = vunpack.c.l.b16 %v6109
      %v6318 = vunpack.c.l.b16 %v6123
      %v6319 = vunpack.c.l.b16 %v6133
      %v6320 = vunpack.c.l.b16 %v6147
      %v6321 = vunpack.c.l.b16 %v6157
      %v6322 = vunpack.c.l.b16 %v6171
      %v6323 = vunpack.c.l.b16 %v6181
      %v6324 = vunpack.c.l.b16 %v6195
      %v6325 = vunpack.c.l.b16 %v6205
      %v6326 = vunpack.c.l.b16 %v6219
      %v6327 = vunpack.c.l.b16 %v6229
      %v6328 = vunpack.c.l.b16 %v6243
      %v6329 = vunpack.c.l.b16 %v6253
      %v6330 = vunpack.c.l.b16 %v6267
      %v6331 = vunpack.c.l.b16 %v6277
      %v6332 = vunpack.c.l.b16 %v6291
      %v6333 = vunpack.c.l.b16 %v6301
      %v6334 = vpack.c.b16 %v6303, %v6302
      %v6335 = vpack.c.b16 %v6305, %v6304
      %v6336 = vpack.c.b16 %v6307, %v6306
      %v6337 = vpack.c.b16 %v6309, %v6308
      %v6338 = vpack.c.b16 %v6311, %v6310
      %v6339 = vpack.c.b16 %v6313, %v6312
      %v6340 = vpack.c.b16 %v6315, %v6314
      %v6341 = vpack.c.b16 %v6317, %v6316
      %v6342 = vpack.c.b16 %v6319, %v6318
      %v6343 = vpack.c.b16 %v6321, %v6320
      %v6344 = vpack.c.b16 %v6323, %v6322
      %v6345 = vpack.c.b16 %v6325, %v6324
      %v6346 = vpack.c.b16 %v6327, %v6326
      %v6347 = vpack.c.b16 %v6329, %v6328
      %v6348 = vpack.c.b16 %v6331, %v6330
      %v6349 = vpack.c.b16 %v6333, %v6332
      %6350 = vrot.lane.b32.xlu0 %v6334, 24
      %v6351 = vpop.permute.xlu0 %6350
      %6352 = vrot.lane.b32.xlu0 %v6335, 24
      %v6353 = vpop.permute.xlu0 %6352
      %6354 = vrot.lane.b32.xlu0 %v6336, 24
      %v6355 = vpop.permute.xlu0 %6354
      %6356 = vrot.lane.b32.xlu0 %v6337, 24
      %v6357 = vpop.permute.xlu0 %6356
      %6358 = vrot.lane.b32.xlu0 %v6338, 24
      %v6359 = vpop.permute.xlu0 %6358
      %6360 = vrot.lane.b32.xlu0 %v6339, 24
      %v6361 = vpop.permute.xlu0 %6360
      %6362 = vrot.lane.b32.xlu0 %v6340, 24
      %v6363 = vpop.permute.xlu0 %6362
      %6364 = vrot.lane.b32.xlu0 %v6341, 24
      %v6365 = vpop.permute.xlu0 %6364
      %6366 = vrot.lane.b32.xlu0 %v6342, 24
      %v6367 = vpop.permute.xlu0 %6366
      %6368 = vrot.lane.b32.xlu0 %v6343, 24
      %v6369 = vpop.permute.xlu0 %6368
      %6370 = vrot.lane.b32.xlu0 %v6344, 24
      %v6371 = vpop.permute.xlu0 %6370
      %6372 = vrot.lane.b32.xlu0 %v6345, 24
      %v6373 = vpop.permute.xlu0 %6372
      %6374 = vrot.lane.b32.xlu0 %v6346, 24
      %v6375 = vpop.permute.xlu0 %6374
      %6376 = vrot.lane.b32.xlu0 %v6347, 24
      %v6377 = vpop.permute.xlu0 %6376
      %6378 = vrot.lane.b32.xlu0 %v6348, 24
      %v6379 = vpop.permute.xlu0 %6378
      %6380 = vrot.lane.b32.xlu0 %v6349, 24
      %v6381 = vpop.permute.xlu0 %6380
      %vm6398 = vcmask 261312
      %6399 = vst.msk [vmem:[#allocation5] sm:$0xff] %vm6398, %v6351
      %6400 = vst.msk [vmem:[#allocation5 + $0x8] sm:$0xff] %vm6398, %v6353
      %6401 = vst.msk [vmem:[#allocation5 + $0x10] sm:$0xff] %vm6398, %v6355
      %6402 = vst.msk [vmem:[#allocation5 + $0x18] sm:$0xff] %vm6398, %v6357
      %6403 = vst.msk [vmem:[#allocation5 + $0x20] sm:$0xff] %vm6398, %v6359
      %6404 = vst.msk [vmem:[#allocation5 + $0x28] sm:$0xff] %vm6398, %v6361
      %6405 = vst.msk [vmem:[#allocation5 + $0x30] sm:$0xff] %vm6398, %v6363
      %6406 = vst.msk [vmem:[#allocation5 + $0x38] sm:$0xff] %vm6398, %v6365
      %6407 = vst.msk [vmem:[#allocation5 + $0x40] sm:$0xff] %vm6398, %v6367
      %6408 = vst.msk [vmem:[#allocation5 + $0x48] sm:$0xff] %vm6398, %v6369
      %6409 = vst.msk [vmem:[#allocation5 + $0x50] sm:$0xff] %vm6398, %v6371
      %6410 = vst.msk [vmem:[#allocation5 + $0x58] sm:$0xff] %vm6398, %v6373
      %6411 = vst.msk [vmem:[#allocation5 + $0x60] sm:$0xff] %vm6398, %v6375
      %6412 = vst.msk [vmem:[#allocation5 + $0x68] sm:$0xff] %vm6398, %v6377
      %6413 = vst.msk [vmem:[#allocation5 + $0x70] sm:$0xff] %vm6398, %v6379
      %6414 = vst.msk [vmem:[#allocation5 + $0x78] sm:$0xff] %vm6398, %v6381
      %v6415 = vld [vmem:[#allocation5] sm:$0xff]
      %v6416 = vld [vmem:[#allocation5 + $0x8] sm:$0xff]
      %v6417 = vld [vmem:[#allocation5 + $0x10] sm:$0xff]
      %v6418 = vld [vmem:[#allocation5 + $0x18] sm:$0xff]
      %v6419 = vld [vmem:[#allocation5 + $0x20] sm:$0xff]
      %v6420 = vld [vmem:[#allocation5 + $0x28] sm:$0xff]
      %v6421 = vld [vmem:[#allocation5 + $0x30] sm:$0xff]
      %v6422 = vld [vmem:[#allocation5 + $0x38] sm:$0xff]
      %v6423 = vld [vmem:[#allocation5 + $0x40] sm:$0xff]
      %v6424 = vld [vmem:[#allocation5 + $0x48] sm:$0xff]
      %v6425 = vld [vmem:[#allocation5 + $0x50] sm:$0xff]
      %v6426 = vld [vmem:[#allocation5 + $0x58] sm:$0xff]
      %v6427 = vld [vmem:[#allocation5 + $0x60] sm:$0xff]
      %v6428 = vld [vmem:[#allocation5 + $0x68] sm:$0xff]
      %v6429 = vld [vmem:[#allocation5 + $0x70] sm:$0xff]
      %v6430 = vld [vmem:[#allocation5 + $0x78] sm:$0xff]
      %v6431 = vld [vmem:[%s5] sm:$0xf]
      %v6432 = vld [vmem:[%s5 + $0x4] sm:$0xf]
      %v6433 = vld [vmem:[%s5 + $0x8] sm:$0xf]
      %v6434 = vld [vmem:[%s5 + $0xc] sm:$0xf]
      %v6435 = vld [vmem:[%s6] sm:$0x1]
      %v6437 = vlaneseq
      %v6438 = vshrl.u32 %v6437, 7
      %v6439 = vsub.s32 0, %v6438
      %v6440 = vrot.slane %v6435, %v6439
      %v6446 = vunpack.c.l.b16 %v6431
      %v6447 = vunpack.c.l.b16 %v6432
      %v6448 = vunpack.c.l.b16 %v6433
      %v6449 = vunpack.c.l.b16 %v6434
      %v6450 = vpack.c.b16 %v6447, %v6446
      %v6451 = vpack.c.b16 %v6449, %v6448
      %vm6454 = vcmask 261120
      %v6456 = vsel %vm6454, %v6415, 0
      %v6459 = vsel %vm6454, %v6416, 0
      %v6462 = vsel %vm6454, %v6417, 0
      %v6465 = vsel %vm6454, %v6418, 0
      %v6468 = vsel %vm6454, %v6419, 0
      %v6471 = vsel %vm6454, %v6420, 0
      %v6474 = vsel %vm6454, %v6421, 0
      %v6477 = vsel %vm6454, %v6422, 0
      %v6480 = vsel %vm6454, %v6423, 0
      %v6483 = vsel %vm6454, %v6424, 0
      %v6486 = vsel %vm6454, %v6425, 0
      %v6489 = vsel %vm6454, %v6426, 0
      %v6492 = vsel %vm6454, %v6427, 0
      %v6495 = vsel %vm6454, %v6428, 0
      %v6498 = vsel %vm6454, %v6429, 0
      %v6501 = vsel %vm6454, %v6430, 0
      %6503 = vmatprep.subr.bf16.mxu0 0
      %6504 = vmatpush1.bf16.msra.mxu0 %v6450
      %6505 = vmatprep.subr.bf16.mxu0 0
      %6506 = vmatpush1.bf16.msra.mxu0 %v6451
      %6507 = vmatprep.subr.bf16.mxu0 0
      %6508 = vmatpush1.bf16.msra.mxu0 0
      %6509 = vmatprep.subr.bf16.mxu0 0
      %6510 = vmatpush1.bf16.msra.mxu0 0
      %6511 = vmatprep.subr.bf16.mxu0 0
      %6512 = vmatpush1.bf16.msra.mxu0 0
      %6513 = vmatprep.subr.bf16.mxu0 0
      %6514 = vmatpush1.bf16.msra.mxu0 0
      %6515 = vmatprep.subr.bf16.mxu0 0
      %6516 = vmatpush1.bf16.msra.mxu0 0
      %6517 = vmatprep.subr.bf16.mxu0 0
      %6518 = vmatpush1.bf16.msra.mxu0 0
      %6519 = vmatprep.subr.bf16.mxu0 0
      %6520 = vmatpush1.bf16.msra.mxu0 0
      %6521 = vmatprep.subr.bf16.mxu0 0
      %6522 = vmatpush1.bf16.msra.mxu0 0
      %6523 = vmatprep.subr.bf16.mxu0 0
      %6524 = vmatpush1.bf16.msra.mxu0 0
      %6525 = vmatprep.subr.bf16.mxu0 0
      %6526 = vmatpush1.bf16.msra.mxu0 0
      %6527 = vmatprep.subr.bf16.mxu0 0
      %6528 = vmatpush1.bf16.msra.mxu0 0
      %6529 = vmatprep.subr.bf16.mxu0 0
      %6530 = vmatpush1.bf16.msra.mxu0 0
      %6531 = vmatprep.subr.bf16.mxu0 0
      %6532 = vmatpush1.bf16.msra.mxu0 0
      %6533 = vmatprep.subr.bf16.mxu0 0
      %6534 = vmatpush1.bf16.msra.mxu0 0
      %6535 = vmatprep.mubr.bf16.mxu0 0
      %6536 = vmatmul.mubr.bf16.gmra.mrb[0].mxu0 %v6456
      %v6537 = vpop.f32.mrb[0].mxu0
      %v6538 = vadd.f32 %v6440, %v6537
      %v6539 = vpop.f32.mrb[0].mxu0
      %v6540 = vpop.f32.mrb[0].mxu0
      %v6541 = vadd.f32 %v6440, %v6540
      %v6542 = vpop.f32.mrb[0].mxu0
      %6543 = vmatprep.mubr.bf16.mxu0 0
      %6544 = vmatmul.mubr.bf16.gmra.mrb[0].mxu0 %v6459
      %v6545 = vpop.f32.mrb[0].mxu0
      %v6546 = vadd.f32 %v6440, %v6545
      %v6547 = vpop.f32.mrb[0].mxu0
      %v6548 = vpop.f32.mrb[0].mxu0
      %v6549 = vadd.f32 %v6440, %v6548
      %v6550 = vpop.f32.mrb[0].mxu0
      %6551 = vmatprep.mubr.bf16.mxu0 0
      %6552 = vmatmul.mubr.bf16.gmra.mrb[0].mxu0 %v6462
      %v6553 = vpop.f32.mrb[0].mxu0
      %v6554 = vadd.f32 %v6440, %v6553
      %v6555 = vpop.f32.mrb[0].mxu0
      %v6556 = vpop.f32.mrb[0].mxu0
      %v6557 = vadd.f32 %v6440, %v6556
      %v6558 = vpop.f32.mrb[0].mxu0
      %6559 = vmatprep.mubr.bf16.mxu0 0
      %6560 = vmatmul.mubr.bf16.gmra.mrb[0].mxu0 %v6465
      %v6561 = vpop.f32.mrb[0].mxu0
      %v6562 = vadd.f32 %v6440, %v6561
      %v6563 = vpop.f32.mrb[0].mxu0
      %v6564 = vpop.f32.mrb[0].mxu0
      %v6565 = vadd.f32 %v6440, %v6564
      %v6566 = vpop.f32.mrb[0].mxu0
      %6567 = vmatprep.mubr.bf16.mxu0 0
      %6568 = vmatmul.mubr.bf16.gmra.mrb[0].mxu0 %v6468
      %v6569 = vpop.f32.mrb[0].mxu0
      %v6570 = vadd.f32 %v6440, %v6569
      %v6571 = vpop.f32.mrb[0].mxu0
      %v6572 = vpop.f32.mrb[0].mxu0
      %v6573 = vadd.f32 %v6440, %v6572
      %v6574 = vpop.f32.mrb[0].mxu0
      %6575 = vmatprep.mubr.bf16.mxu0 0
      %6576 = vmatmul.mubr.bf16.gmra.mrb[0].mxu0 %v6471
      %v6577 = vpop.f32.mrb[0].mxu0
      %v6578 = vadd.f32 %v6440, %v6577
      %v6579 = vpop.f32.mrb[0].mxu0
      %v6580 = vpop.f32.mrb[0].mxu0
      %v6581 = vadd.f32 %v6440, %v6580
      %v6582 = vpop.f32.mrb[0].mxu0
      %6583 = vmatprep.mubr.bf16.mxu0 0
      %6584 = vmatmul.mubr.bf16.gmra.mrb[0].mxu0 %v6474
      %v6585 = vpop.f32.mrb[0].mxu0
      %v6586 = vadd.f32 %v6440, %v6585
      %v6587 = vpop.f32.mrb[0].mxu0
      %v6588 = vpop.f32.mrb[0].mxu0
      %v6589 = vadd.f32 %v6440, %v6588
      %v6590 = vpop.f32.mrb[0].mxu0
      %6591 = vmatprep.mubr.bf16.mxu0 0
      %6592 = vmatmul.mubr.bf16.gmra.mrb[0].mxu0 %v6477
      %v6593 = vpop.f32.mrb[0].mxu0
      %v6594 = vadd.f32 %v6440, %v6593
      %v6595 = vpop.f32.mrb[0].mxu0
      %v6596 = vpop.f32.mrb[0].mxu0
      %v6597 = vadd.f32 %v6440, %v6596
      %v6598 = vpop.f32.mrb[0].mxu0
      %6599 = vmatprep.mubr.bf16.mxu0 0
      %6600 = vmatmul.mubr.bf16.gmra.mrb[0].mxu0 %v6480
      %v6601 = vpop.f32.mrb[0].mxu0
      %v6602 = vadd.f32 %v6440, %v6601
      %v6603 = vpop.f32.mrb[0].mxu0
      %v6604 = vpop.f32.mrb[0].mxu0
      %v6605 = vadd.f32 %v6440, %v6604
      %v6606 = vpop.f32.mrb[0].mxu0
      %6607 = vmatprep.mubr.bf16.mxu0 0
      %6608 = vmatmul.mubr.bf16.gmra.mrb[0].mxu0 %v6483
      %v6609 = vpop.f32.mrb[0].mxu0
      %v6610 = vadd.f32 %v6440, %v6609
      %v6611 = vpop.f32.mrb[0].mxu0
      %v6612 = vpop.f32.mrb[0].mxu0
      %v6613 = vadd.f32 %v6440, %v6612
      %v6614 = vpop.f32.mrb[0].mxu0
      %6615 = vmatprep.mubr.bf16.mxu0 0
      %6616 = vmatmul.mubr.bf16.gmra.mrb[0].mxu0 %v6486
      %v6617 = vpop.f32.mrb[0].mxu0
      %v6618 = vadd.f32 %v6440, %v6617
      %v6619 = vpop.f32.mrb[0].mxu0
      %v6620 = vpop.f32.mrb[0].mxu0
      %v6621 = vadd.f32 %v6440, %v6620
      %v6622 = vpop.f32.mrb[0].mxu0
      %6623 = vmatprep.mubr.bf16.mxu0 0
      %6624 = vmatmul.mubr.bf16.gmra.mrb[0].mxu0 %v6489
      %v6625 = vpop.f32.mrb[0].mxu0
      %v6626 = vadd.f32 %v6440, %v6625
      %v6627 = vpop.f32.mrb[0].mxu0
      %v6628 = vpop.f32.mrb[0].mxu0
      %v6629 = vadd.f32 %v6440, %v6628
      %v6630 = vpop.f32.mrb[0].mxu0
      %6631 = vmatprep.mubr.bf16.mxu0 0
      %6632 = vmatmul.mubr.bf16.gmra.mrb[0].mxu0 %v6492
      %v6633 = vpop.f32.mrb[0].mxu0
      %v6634 = vadd.f32 %v6440, %v6633
      %v6635 = vpop.f32.mrb[0].mxu0
      %v6636 = vpop.f32.mrb[0].mxu0
      %v6637 = vadd.f32 %v6440, %v6636
      %v6638 = vpop.f32.mrb[0].mxu0
      %6639 = vmatprep.mubr.bf16.mxu0 0
      %6640 = vmatmul.mubr.bf16.gmra.mrb[0].mxu0 %v6495
      %v6641 = vpop.f32.mrb[0].mxu0
      %v6642 = vadd.f32 %v6440, %v6641
      %v6643 = vpop.f32.mrb[0].mxu0
      %v6644 = vpop.f32.mrb[0].mxu0
      %v6645 = vadd.f32 %v6440, %v6644
      %v6646 = vpop.f32.mrb[0].mxu0
      %6647 = vmatprep.mubr.bf16.mxu0 0
      %6648 = vmatmul.mubr.bf16.gmra.mrb[0].mxu0 %v6498
      %v6649 = vpop.f32.mrb[0].mxu0
      %v6650 = vadd.f32 %v6440, %v6649
      %v6651 = vpop.f32.mrb[0].mxu0
      %v6652 = vpop.f32.mrb[0].mxu0
      %v6653 = vadd.f32 %v6440, %v6652
      %v6654 = vpop.f32.mrb[0].mxu0
      %6655 = vmatprep.mubr.bf16.mxu0 0
      %6656 = vmatmul.mubr.bf16.gmra.mrb[0].mxu0 %v6501
      %v6657 = vpop.f32.mrb[0].mxu0
      %v6658 = vadd.f32 %v6440, %v6657
      %v6659 = vpop.f32.mrb[0].mxu0
      %v6660 = vpop.f32.mrb[0].mxu0
      %v6661 = vadd.f32 %v6440, %v6660
      %v6662 = vpop.f32.mrb[0].mxu0
      %6663 = vdwg.mxu0
      %v6664 = vmax.f32 %v6538, 0.0
      %v6665 = vmax.f32 %v6541, 0.0
      %v6666 = vmax.f32 %v6546, 0.0
      %v6667 = vmax.f32 %v6549, 0.0
      %v6668 = vmax.f32 %v6554, 0.0
      %v6669 = vmax.f32 %v6557, 0.0
      %v6670 = vmax.f32 %v6562, 0.0
      %v6671 = vmax.f32 %v6565, 0.0
      %v6672 = vmax.f32 %v6570, 0.0
      %v6673 = vmax.f32 %v6573, 0.0
      %v6674 = vmax.f32 %v6578, 0.0
      %v6675 = vmax.f32 %v6581, 0.0
      %v6676 = vmax.f32 %v6586, 0.0
      %v6677 = vmax.f32 %v6589, 0.0
      %v6678 = vmax.f32 %v6594, 0.0
      %v6679 = vmax.f32 %v6597, 0.0
      %v6680 = vmax.f32 %v6602, 0.0
      %v6681 = vmax.f32 %v6605, 0.0
      %v6682 = vmax.f32 %v6610, 0.0
      %v6683 = vmax.f32 %v6613, 0.0
      %v6684 = vmax.f32 %v6618, 0.0
      %v6685 = vmax.f32 %v6621, 0.0
      %v6686 = vmax.f32 %v6626, 0.0
      %v6687 = vmax.f32 %v6629, 0.0
      %v6688 = vmax.f32 %v6634, 0.0
      %v6689 = vmax.f32 %v6637, 0.0
      %v6690 = vmax.f32 %v6642, 0.0
      %v6691 = vmax.f32 %v6645, 0.0
      %v6692 = vmax.f32 %v6650, 0.0
      %v6693 = vmax.f32 %v6653, 0.0
      %v6694 = vmax.f32 %v6658, 0.0
      %v6695 = vmax.f32 %v6661, 0.0
      %6696 = vst.msk [vmem:[%s278] sm:$0xff] %vm1204, %v6664
      %6697 = vst.msk [vmem:[%s278 + $0x8] sm:$0xff] %vm1204, %v6665
      %6698 = vst.msk [vmem:[%s278 + $0x10] sm:$0xff] %vm1204, %v6666
      %6699 = vst.msk [vmem:[%s278 + $0x18] sm:$0xff] %vm1204, %v6667
      %6700 = vst.msk [vmem:[%s278 + $0x20] sm:$0xff] %vm1204, %v6668
      %6701 = vst.msk [vmem:[%s278 + $0x28] sm:$0xff] %vm1204, %v6669
      %6702 = vst.msk [vmem:[%s278 + $0x30] sm:$0xff] %vm1204, %v6670
      %6703 = vst.msk [vmem:[%s278 + $0x38] sm:$0xff] %vm1204, %v6671
      %6704 = vst.msk [vmem:[%s278 + $0x40] sm:$0xff] %vm1204, %v6672
      %6705 = vst.msk [vmem:[%s278 + $0x48] sm:$0xff] %vm1204, %v6673
      %6706 = vst.msk [vmem:[%s278 + $0x50] sm:$0xff] %vm1204, %v6674
      %6707 = vst.msk [vmem:[%s278 + $0x58] sm:$0xff] %vm1204, %v6675
      %6708 = vst.msk [vmem:[%s278 + $0x60] sm:$0xff] %vm1204, %v6676
      %6709 = vst.msk [vmem:[%s278 + $0x68] sm:$0xff] %vm1204, %v6677
      %6710 = vst.msk [vmem:[%s278 + $0x70] sm:$0xff] %vm1204, %v6678
      %6711 = vst.msk [vmem:[%s278 + $0x78] sm:$0xff] %vm1204, %v6679
      %6712 = vst.msk [vmem:[%s278 + $0x80] sm:$0xff] %vm1204, %v6680
      %6713 = vst.msk [vmem:[%s278 + $0x88] sm:$0xff] %vm1204, %v6681
      %6714 = vst.msk [vmem:[%s278 + $0x90] sm:$0xff] %vm1204, %v6682
      %6715 = vst.msk [vmem:[%s278 + $0x98] sm:$0xff] %vm1204, %v6683
      %6716 = vst.msk [vmem:[%s278 + $0xa0] sm:$0xff] %vm1204, %v6684
      %6717 = vst.msk [vmem:[%s278 + $0xa8] sm:$0xff] %vm1204, %v6685
      %6718 = vst.msk [vmem:[%s278 + $0xb0] sm:$0xff] %vm1204, %v6686
      %6719 = vst.msk [vmem:[%s278 + $0xb8] sm:$0xff] %vm1204, %v6687
      %6720 = vst.msk [vmem:[%s278 + $0xc0] sm:$0xff] %vm1204, %v6688
      %6721 = vst.msk [vmem:[%s278 + $0xc8] sm:$0xff] %vm1204, %v6689
      %6722 = vst.msk [vmem:[%s278 + $0xd0] sm:$0xff] %vm1204, %v6690
      %6723 = vst.msk [vmem:[%s278 + $0xd8] sm:$0xff] %vm1204, %v6691
      %6724 = vst.msk [vmem:[%s278 + $0xe0] sm:$0xff] %vm1204, %v6692
      %6725 = vst.msk [vmem:[%s278 + $0xe8] sm:$0xff] %vm1204, %v6693
      %6726 = vst.msk [vmem:[%s278 + $0xf0] sm:$0xff] %vm1204, %v6694
      %6727 = vst.msk [vmem:[%s278 + $0xf8] sm:$0xff] %vm1204, %v6695
      %v6728 = vld [vmem:[#allocation3] sm:$0xf]
      %v6729 = vld [vmem:[#allocation3 + $0x4] sm:$0xf]
      %v6730 = vld [vmem:[#allocation3 + $0x8] sm:$0x1]
      %v6731 = vld [vmem:[#allocation3 + $0xc] sm:$0xf]
      %v6732 = vld [vmem:[#allocation3 + $0x10] sm:$0xf]
      %v6733 = vld [vmem:[#allocation3 + $0x14] sm:$0x1]
      %v6734 = vld [vmem:[#allocation3 + $0x18] sm:$0xf]
      %v6735 = vld [vmem:[#allocation3 + $0x1c] sm:$0xf]
      %v6736 = vld [vmem:[#allocation3 + $0x20] sm:$0x1]
      %v6737 = vld [vmem:[#allocation3 + $0x24] sm:$0xf]
      %v6738 = vld [vmem:[#allocation3 + $0x28] sm:$0xf]
      %v6739 = vld [vmem:[#allocation3 + $0x2c] sm:$0x1]
      %v6740 = vld [vmem:[#allocation3 + $0x30] sm:$0xf]
      %v6741 = vld [vmem:[#allocation3 + $0x34] sm:$0xf]
      %v6742 = vld [vmem:[#allocation3 + $0x38] sm:$0x1]
      %v6743 = vld [vmem:[#allocation3 + $0x3c] sm:$0xf]
      %v6744 = vld [vmem:[#allocation3 + $0x40] sm:$0xf]
      %v6745 = vld [vmem:[#allocation3 + $0x44] sm:$0x1]
      %v6746 = vld [vmem:[#allocation3 + $0x48] sm:$0xf]
      %v6747 = vld [vmem:[#allocation3 + $0x4c] sm:$0xf]
      %v6748 = vld [vmem:[#allocation3 + $0x50] sm:$0x1]
      %v6749 = vld [vmem:[#allocation3 + $0x54] sm:$0xf]
      %v6750 = vld [vmem:[#allocation3 + $0x58] sm:$0xf]
      %v6751 = vld [vmem:[#allocation3 + $0x5c] sm:$0x1]
      %v6752 = vld [vmem:[#allocation3 + $0x60] sm:$0xf]
      %v6753 = vld [vmem:[#allocation3 + $0x64] sm:$0xf]
      %v6754 = vld [vmem:[#allocation3 + $0x68] sm:$0x1]
      %v6755 = vld [vmem:[#allocation3 + $0x6c] sm:$0xf]
      %v6756 = vld [vmem:[#allocation3 + $0x70] sm:$0xf]
      %v6757 = vld [vmem:[#allocation3 + $0x74] sm:$0x1]
      %v6758 = vld [vmem:[#allocation3 + $0x78] sm:$0xf]
      %v6759 = vld [vmem:[#allocation3 + $0x7c] sm:$0xf]
      %v6760 = vld [vmem:[#allocation3 + $0x80] sm:$0x1]
      %v6761 = vld [vmem:[#allocation3 + $0x84] sm:$0xf]
      %v6762 = vld [vmem:[#allocation3 + $0x88] sm:$0xf]
      %v6763 = vld [vmem:[#allocation3 + $0x8c] sm:$0x1]
      %v6764 = vld [vmem:[#allocation3 + $0x90] sm:$0xf]
      %v6765 = vld [vmem:[#allocation3 + $0x94] sm:$0xf]
      %v6766 = vld [vmem:[#allocation3 + $0x98] sm:$0x1]
      %v6767 = vld [vmem:[#allocation3 + $0x9c] sm:$0xf]
      %v6768 = vld [vmem:[#allocation3 + $0xa0] sm:$0xf]
      %v6769 = vld [vmem:[#allocation3 + $0xa4] sm:$0x1]
      %v6770 = vld [vmem:[#allocation3 + $0xa8] sm:$0xf]
      %v6771 = vld [vmem:[#allocation3 + $0xac] sm:$0xf]
      %v6772 = vld [vmem:[#allocation3 + $0xb0] sm:$0x1]
      %v6773 = vld [vmem:[#allocation3 + $0xb4] sm:$0xf]
      %v6774 = vld [vmem:[#allocation3 + $0xb8] sm:$0xf]
      %v6775 = vld [vmem:[#allocation3 + $0xbc] sm:$0x1]
      %v6777 = vshrl.u32 %v6728, 16
      %v6779 = vrot.slane %v6777, 4
      %v6780 = vshll.u32 %v6728, 16
      %v6782 = vrot.slane %v6780, 5
      %v6783 = vor.u32 %v6779, %v6782
      %v6784 = vrot.slane %v6783, 4
      %v6786 = vshll.u32 %v6729, 16
      %v6788 = vrot.slane %v6786, 5
      %v6789 = vsel %vm1271, %v6784, %v6788
      %v6790 = vshrl.u32 %v6729, 16
      %v6792 = vrot.slane %v6790, 4
      %v6793 = vor.u32 %v6792, %v6788
      %v6794 = vrot.slane %v6793, 4
      %v6796 = vshll.u32 %v6730, 16
      %v6798 = vrot.slane %v6796, 5
      %v6799 = vsel %vm1271, %v6794, %v6798
      %v6801 = vshrl.u32 %v6731, 16
      %v6803 = vrot.slane %v6801, 4
      %v6804 = vshll.u32 %v6731, 16
      %v6806 = vrot.slane %v6804, 5
      %v6807 = vor.u32 %v6803, %v6806
      %v6808 = vrot.slane %v6807, 4
      %v6810 = vshll.u32 %v6732, 16
      %v6812 = vrot.slane %v6810, 5
      %v6813 = vsel %vm1271, %v6808, %v6812
      %v6814 = vshrl.u32 %v6732, 16
      %v6816 = vrot.slane %v6814, 4
      %v6817 = vor.u32 %v6816, %v6812
      %v6818 = vrot.slane %v6817, 4
      %v6820 = vshll.u32 %v6733, 16
      %v6822 = vrot.slane %v6820, 5
      %v6823 = vsel %vm1271, %v6818, %v6822
      %v6825 = vshrl.u32 %v6734, 16
      %v6827 = vrot.slane %v6825, 4
      %v6828 = vshll.u32 %v6734, 16
      %v6830 = vrot.slane %v6828, 5
      %v6831 = vor.u32 %v6827, %v6830
      %v6832 = vrot.slane %v6831, 4
      %v6834 = vshll.u32 %v6735, 16
      %v6836 = vrot.slane %v6834, 5
      %v6837 = vsel %vm1271, %v6832, %v6836
      %v6838 = vshrl.u32 %v6735, 16
      %v6840 = vrot.slane %v6838, 4
      %v6841 = vor.u32 %v6840, %v6836
      %v6842 = vrot.slane %v6841, 4
      %v6844 = vshll.u32 %v6736, 16
      %v6846 = vrot.slane %v6844, 5
      %v6847 = vsel %vm1271, %v6842, %v6846
      %v6849 = vshrl.u32 %v6737, 16
      %v6851 = vrot.slane %v6849, 4
      %v6852 = vshll.u32 %v6737, 16
      %v6854 = vrot.slane %v6852, 5
      %v6855 = vor.u32 %v6851, %v6854
      %v6856 = vrot.slane %v6855, 4
      %v6858 = vshll.u32 %v6738, 16
      %v6860 = vrot.slane %v6858, 5
      %v6861 = vsel %vm1271, %v6856, %v6860
      %v6862 = vshrl.u32 %v6738, 16
      %v6864 = vrot.slane %v6862, 4
      %v6865 = vor.u32 %v6864, %v6860
      %v6866 = vrot.slane %v6865, 4
      %v6868 = vshll.u32 %v6739, 16
      %v6870 = vrot.slane %v6868, 5
      %v6871 = vsel %vm1271, %v6866, %v6870
      %v6873 = vshrl.u32 %v6740, 16
      %v6875 = vrot.slane %v6873, 4
      %v6876 = vshll.u32 %v6740, 16
      %v6878 = vrot.slane %v6876, 5
      %v6879 = vor.u32 %v6875, %v6878
      %v6880 = vrot.slane %v6879, 4
      %v6882 = vshll.u32 %v6741, 16
      %v6884 = vrot.slane %v6882, 5
      %v6885 = vsel %vm1271, %v6880, %v6884
      %v6886 = vshrl.u32 %v6741, 16
      %v6888 = vrot.slane %v6886, 4
      %v6889 = vor.u32 %v6888, %v6884
      %v6890 = vrot.slane %v6889, 4
      %v6892 = vshll.u32 %v6742, 16
      %v6894 = vrot.slane %v6892, 5
      %v6895 = vsel %vm1271, %v6890, %v6894
      %v6897 = vshrl.u32 %v6743, 16
      %v6899 = vrot.slane %v6897, 4
      %v6900 = vshll.u32 %v6743, 16
      %v6902 = vrot.slane %v6900, 5
      %v6903 = vor.u32 %v6899, %v6902
      %v6904 = vrot.slane %v6903, 4
      %v6906 = vshll.u32 %v6744, 16
      %v6908 = vrot.slane %v6906, 5
      %v6909 = vsel %vm1271, %v6904, %v6908
      %v6910 = vshrl.u32 %v6744, 16
      %v6912 = vrot.slane %v6910, 4
      %v6913 = vor.u32 %v6912, %v6908
      %v6914 = vrot.slane %v6913, 4
      %v6916 = vshll.u32 %v6745, 16
      %v6918 = vrot.slane %v6916, 5
      %v6919 = vsel %vm1271, %v6914, %v6918
      %v6921 = vshrl.u32 %v6746, 16
      %v6923 = vrot.slane %v6921, 4
      %v6924 = vshll.u32 %v6746, 16
      %v6926 = vrot.slane %v6924, 5
      %v6927 = vor.u32 %v6923, %v6926
      %v6928 = vrot.slane %v6927, 4
      %v6930 = vshll.u32 %v6747, 16
      %v6932 = vrot.slane %v6930, 5
      %v6933 = vsel %vm1271, %v6928, %v6932
      %v6934 = vshrl.u32 %v6747, 16
      %v6936 = vrot.slane %v6934, 4
      %v6937 = vor.u32 %v6936, %v6932
      %v6938 = vrot.slane %v6937, 4
      %v6940 = vshll.u32 %v6748, 16
      %v6942 = vrot.slane %v6940, 5
      %v6943 = vsel %vm1271, %v6938, %v6942
      %v6945 = vshrl.u32 %v6749, 16
      %v6947 = vrot.slane %v6945, 4
      %v6948 = vshll.u32 %v6749, 16
      %v6950 = vrot.slane %v6948, 5
      %v6951 = vor.u32 %v6947, %v6950
      %v6952 = vrot.slane %v6951, 4
      %v6954 = vshll.u32 %v6750, 16
      %v6956 = vrot.slane %v6954, 5
      %v6957 = vsel %vm1271, %v6952, %v6956
      %v6958 = vshrl.u32 %v6750, 16
      %v6960 = vrot.slane %v6958, 4
      %v6961 = vor.u32 %v6960, %v6956
      %v6962 = vrot.slane %v6961, 4
      %v6964 = vshll.u32 %v6751, 16
      %v6966 = vrot.slane %v6964, 5
      %v6967 = vsel %vm1271, %v6962, %v6966
      %v6969 = vshrl.u32 %v6752, 16
      %v6971 = vrot.slane %v6969, 4
      %v6972 = vshll.u32 %v6752, 16
      %v6974 = vrot.slane %v6972, 5
      %v6975 = vor.u32 %v6971, %v6974
      %v6976 = vrot.slane %v6975, 4
      %v6978 = vshll.u32 %v6753, 16
      %v6980 = vrot.slane %v6978, 5
      %v6981 = vsel %vm1271, %v6976, %v6980
      %v6982 = vshrl.u32 %v6753, 16
      %v6984 = vrot.slane %v6982, 4
      %v6985 = vor.u32 %v6984, %v6980
      %v6986 = vrot.slane %v6985, 4
      %v6988 = vshll.u32 %v6754, 16
      %v6990 = vrot.slane %v6988, 5
      %v6991 = vsel %vm1271, %v6986, %v6990
      %v6993 = vshrl.u32 %v6755, 16
      %v6995 = vrot.slane %v6993, 4
      %v6996 = vshll.u32 %v6755, 16
      %v6998 = vrot.slane %v6996, 5
      %v6999 = vor.u32 %v6995, %v6998
      %v7000 = vrot.slane %v6999, 4
      %v7002 = vshll.u32 %v6756, 16
      %v7004 = vrot.slane %v7002, 5
      %v7005 = vsel %vm1271, %v7000, %v7004
      %v7006 = vshrl.u32 %v6756, 16
      %v7008 = vrot.slane %v7006, 4
      %v7009 = vor.u32 %v7008, %v7004
      %v7010 = vrot.slane %v7009, 4
      %v7012 = vshll.u32 %v6757, 16
      %v7014 = vrot.slane %v7012, 5
      %v7015 = vsel %vm1271, %v7010, %v7014
      %v7017 = vshrl.u32 %v6758, 16
      %v7019 = vrot.slane %v7017, 4
      %v7020 = vshll.u32 %v6758, 16
      %v7022 = vrot.slane %v7020, 5
      %v7023 = vor.u32 %v7019, %v7022
      %v7024 = vrot.slane %v7023, 4
      %v7026 = vshll.u32 %v6759, 16
      %v7028 = vrot.slane %v7026, 5
      %v7029 = vsel %vm1271, %v7024, %v7028
      %v7030 = vshrl.u32 %v6759, 16
      %v7032 = vrot.slane %v7030, 4
      %v7033 = vor.u32 %v7032, %v7028
      %v7034 = vrot.slane %v7033, 4
      %v7036 = vshll.u32 %v6760, 16
      %v7038 = vrot.slane %v7036, 5
      %v7039 = vsel %vm1271, %v7034, %v7038
      %v7041 = vshrl.u32 %v6761, 16
      %v7043 = vrot.slane %v7041, 4
      %v7044 = vshll.u32 %v6761, 16
      %v7046 = vrot.slane %v7044, 5
      %v7047 = vor.u32 %v7043, %v7046
      %v7048 = vrot.slane %v7047, 4
      %v7050 = vshll.u32 %v6762, 16
      %v7052 = vrot.slane %v7050, 5
      %v7053 = vsel %vm1271, %v7048, %v7052
      %v7054 = vshrl.u32 %v6762, 16
      %v7056 = vrot.slane %v7054, 4
      %v7057 = vor.u32 %v7056, %v7052
      %v7058 = vrot.slane %v7057, 4
      %v7060 = vshll.u32 %v6763, 16
      %v7062 = vrot.slane %v7060, 5
      %v7063 = vsel %vm1271, %v7058, %v7062
      %v7065 = vshrl.u32 %v6764, 16
      %v7067 = vrot.slane %v7065, 4
      %v7068 = vshll.u32 %v6764, 16
      %v7070 = vrot.slane %v7068, 5
      %v7071 = vor.u32 %v7067, %v7070
      %v7072 = vrot.slane %v7071, 4
      %v7074 = vshll.u32 %v6765, 16
      %v7076 = vrot.slane %v7074, 5
      %v7077 = vsel %vm1271, %v7072, %v7076
      %v7078 = vshrl.u32 %v6765, 16
      %v7080 = vrot.slane %v7078, 4
      %v7081 = vor.u32 %v7080, %v7076
      %v7082 = vrot.slane %v7081, 4
      %v7084 = vshll.u32 %v6766, 16
      %v7086 = vrot.slane %v7084, 5
      %v7087 = vsel %vm1271, %v7082, %v7086
      %v7089 = vshrl.u32 %v6767, 16
      %v7091 = vrot.slane %v7089, 4
      %v7092 = vshll.u32 %v6767, 16
      %v7094 = vrot.slane %v7092, 5
      %v7095 = vor.u32 %v7091, %v7094
      %v7096 = vrot.slane %v7095, 4
      %v7098 = vshll.u32 %v6768, 16
      %v7100 = vrot.slane %v7098, 5
      %v7101 = vsel %vm1271, %v7096, %v7100
      %v7102 = vshrl.u32 %v6768, 16
      %v7104 = vrot.slane %v7102, 4
      %v7105 = vor.u32 %v7104, %v7100
      %v7106 = vrot.slane %v7105, 4
      %v7108 = vshll.u32 %v6769, 16
      %v7110 = vrot.slane %v7108, 5
      %v7111 = vsel %vm1271, %v7106, %v7110
      %v7113 = vshrl.u32 %v6770, 16
      %v7115 = vrot.slane %v7113, 4
      %v7116 = vshll.u32 %v6770, 16
      %v7118 = vrot.slane %v7116, 5
      %v7119 = vor.u32 %v7115, %v7118
      %v7120 = vrot.slane %v7119, 4
      %v7122 = vshll.u32 %v6771, 16
      %v7124 = vrot.slane %v7122, 5
      %v7125 = vsel %vm1271, %v7120, %v7124
      %v7126 = vshrl.u32 %v6771, 16
      %v7128 = vrot.slane %v7126, 4
      %v7129 = vor.u32 %v7128, %v7124
      %v7130 = vrot.slane %v7129, 4
      %v7132 = vshll.u32 %v6772, 16
      %v7134 = vrot.slane %v7132, 5
      %v7135 = vsel %vm1271, %v7130, %v7134
      %v7137 = vshrl.u32 %v6773, 16
      %v7139 = vrot.slane %v7137, 4
      %v7140 = vshll.u32 %v6773, 16
      %v7142 = vrot.slane %v7140, 5
      %v7143 = vor.u32 %v7139, %v7142
      %v7144 = vrot.slane %v7143, 4
      %v7146 = vshll.u32 %v6774, 16
      %v7148 = vrot.slane %v7146, 5
      %v7149 = vsel %vm1271, %v7144, %v7148
      %v7150 = vshrl.u32 %v6774, 16
      %v7152 = vrot.slane %v7150, 4
      %v7153 = vor.u32 %v7152, %v7148
      %v7154 = vrot.slane %v7153, 4
      %v7156 = vshll.u32 %v6775, 16
      %v7158 = vrot.slane %v7156, 5
      %v7159 = vsel %vm1271, %v7154, %v7158
      %v7160 = vunpack.c.l.b16 %v6789
      %v7161 = vunpack.c.l.b16 %v6799
      %v7162 = vunpack.c.l.b16 %v6813
      %v7163 = vunpack.c.l.b16 %v6823
      %v7164 = vunpack.c.l.b16 %v6837
      %v7165 = vunpack.c.l.b16 %v6847
      %v7166 = vunpack.c.l.b16 %v6861
      %v7167 = vunpack.c.l.b16 %v6871
      %v7168 = vunpack.c.l.b16 %v6885
      %v7169 = vunpack.c.l.b16 %v6895
      %v7170 = vunpack.c.l.b16 %v6909
      %v7171 = vunpack.c.l.b16 %v6919
      %v7172 = vunpack.c.l.b16 %v6933
      %v7173 = vunpack.c.l.b16 %v6943
      %v7174 = vunpack.c.l.b16 %v6957
      %v7175 = vunpack.c.l.b16 %v6967
      %v7176 = vunpack.c.l.b16 %v6981
      %v7177 = vunpack.c.l.b16 %v6991
      %v7178 = vunpack.c.l.b16 %v7005
      %v7179 = vunpack.c.l.b16 %v7015
      %v7180 = vunpack.c.l.b16 %v7029
      %v7181 = vunpack.c.l.b16 %v7039
      %v7182 = vunpack.c.l.b16 %v7053
      %v7183 = vunpack.c.l.b16 %v7063
      %v7184 = vunpack.c.l.b16 %v7077
      %v7185 = vunpack.c.l.b16 %v7087
      %v7186 = vunpack.c.l.b16 %v7101
      %v7187 = vunpack.c.l.b16 %v7111
      %v7188 = vunpack.c.l.b16 %v7125
      %v7189 = vunpack.c.l.b16 %v7135
      %v7190 = vunpack.c.l.b16 %v7149
      %v7191 = vunpack.c.l.b16 %v7159
      %v7192 = vpack.c.b16 %v7161, %v7160
      %v7193 = vpack.c.b16 %v7163, %v7162
      %v7194 = vpack.c.b16 %v7165, %v7164
      %v7195 = vpack.c.b16 %v7167, %v7166
      %v7196 = vpack.c.b16 %v7169, %v7168
      %v7197 = vpack.c.b16 %v7171, %v7170
      %v7198 = vpack.c.b16 %v7173, %v7172
      %v7199 = vpack.c.b16 %v7175, %v7174
      %v7200 = vpack.c.b16 %v7177, %v7176
      %v7201 = vpack.c.b16 %v7179, %v7178
      %v7202 = vpack.c.b16 %v7181, %v7180
      %v7203 = vpack.c.b16 %v7183, %v7182
      %v7204 = vpack.c.b16 %v7185, %v7184
      %v7205 = vpack.c.b16 %v7187, %v7186
      %v7206 = vpack.c.b16 %v7189, %v7188
      %v7207 = vpack.c.b16 %v7191, %v7190
      %7224 = vst.msk [vmem:[#allocation5] sm:$0xff] %vm5131, %v7192
      %7225 = vst.msk [vmem:[#allocation5 + $0x8] sm:$0xff] %vm5131, %v7193
      %7226 = vst.msk [vmem:[#allocation5 + $0x10] sm:$0xff] %vm5131, %v7194
      %7227 = vst.msk [vmem:[#allocation5 + $0x18] sm:$0xff] %vm5131, %v7195
      %7228 = vst.msk [vmem:[#allocation5 + $0x20] sm:$0xff] %vm5131, %v7196
      %7229 = vst.msk [vmem:[#allocation5 + $0x28] sm:$0xff] %vm5131, %v7197
      %7230 = vst.msk [vmem:[#allocation5 + $0x30] sm:$0xff] %vm5131, %v7198
      %7231 = vst.msk [vmem:[#allocation5 + $0x38] sm:$0xff] %vm5131, %v7199
      %7232 = vst.msk [vmem:[#allocation5 + $0x40] sm:$0xff] %vm5131, %v7200
      %7233 = vst.msk [vmem:[#allocation5 + $0x48] sm:$0xff] %vm5131, %v7201
      %7234 = vst.msk [vmem:[#allocation5 + $0x50] sm:$0xff] %vm5131, %v7202
      %7235 = vst.msk [vmem:[#allocation5 + $0x58] sm:$0xff] %vm5131, %v7203
      %7236 = vst.msk [vmem:[#allocation5 + $0x60] sm:$0xff] %vm5131, %v7204
      %7237 = vst.msk [vmem:[#allocation5 + $0x68] sm:$0xff] %vm5131, %v7205
      %7238 = vst.msk [vmem:[#allocation5 + $0x70] sm:$0xff] %vm5131, %v7206
      %7239 = vst.msk [vmem:[#allocation5 + $0x78] sm:$0xff] %vm5131, %v7207
      %v7240 = vld [vmem:[#allocation3] sm:$0xe]
      %v7241 = vld [vmem:[#allocation3 + $0x4] sm:$0xf]
      %v7242 = vld [vmem:[#allocation3 + $0x8] sm:$0x1]
      %v7243 = vld [vmem:[#allocation3 + $0xc] sm:$0xe]
      %v7244 = vld [vmem:[#allocation3 + $0x10] sm:$0xf]
      %v7245 = vld [vmem:[#allocation3 + $0x14] sm:$0x1]
      %v7246 = vld [vmem:[#allocation3 + $0x18] sm:$0xe]
      %v7247 = vld [vmem:[#allocation3 + $0x1c] sm:$0xf]
      %v7248 = vld [vmem:[#allocation3 + $0x20] sm:$0x1]
      %v7249 = vld [vmem:[#allocation3 + $0x24] sm:$0xe]
      %v7250 = vld [vmem:[#allocation3 + $0x28] sm:$0xf]
      %v7251 = vld [vmem:[#allocation3 + $0x2c] sm:$0x1]
      %v7252 = vld [vmem:[#allocation3 + $0x30] sm:$0xe]
      %v7253 = vld [vmem:[#allocation3 + $0x34] sm:$0xf]
      %v7254 = vld [vmem:[#allocation3 + $0x38] sm:$0x1]
      %v7255 = vld [vmem:[#allocation3 + $0x3c] sm:$0xe]
      %v7256 = vld [vmem:[#allocation3 + $0x40] sm:$0xf]
      %v7257 = vld [vmem:[#allocation3 + $0x44] sm:$0x1]
      %v7258 = vld [vmem:[#allocation3 + $0x48] sm:$0xe]
      %v7259 = vld [vmem:[#allocation3 + $0x4c] sm:$0xf]
      %v7260 = vld [vmem:[#allocation3 + $0x50] sm:$0x1]
      %v7261 = vld [vmem:[#allocation3 + $0x54] sm:$0xe]
      %v7262 = vld [vmem:[#allocation3 + $0x58] sm:$0xf]
      %v7263 = vld [vmem:[#allocation3 + $0x5c] sm:$0x1]
      %v7264 = vld [vmem:[#allocation3 + $0x60] sm:$0xe]
      %v7265 = vld [vmem:[#allocation3 + $0x64] sm:$0xf]
      %v7266 = vld [vmem:[#allocation3 + $0x68] sm:$0x1]
      %v7267 = vld [vmem:[#allocation3 + $0x6c] sm:$0xe]
      %v7268 = vld [vmem:[#allocation3 + $0x70] sm:$0xf]
      %v7269 = vld [vmem:[#allocation3 + $0x74] sm:$0x1]
      %v7270 = vld [vmem:[#allocation3 + $0x78] sm:$0xe]
      %v7271 = vld [vmem:[#allocation3 + $0x7c] sm:$0xf]
      %v7272 = vld [vmem:[#allocation3 + $0x80] sm:$0x1]
      %v7273 = vld [vmem:[#allocation3 + $0x84] sm:$0xe]
      %v7274 = vld [vmem:[#allocation3 + $0x88] sm:$0xf]
      %v7275 = vld [vmem:[#allocation3 + $0x8c] sm:$0x1]
      %v7276 = vld [vmem:[#allocation3 + $0x90] sm:$0xe]
      %v7277 = vld [vmem:[#allocation3 + $0x94] sm:$0xf]
      %v7278 = vld [vmem:[#allocation3 + $0x98] sm:$0x1]
      %v7279 = vld [vmem:[#allocation3 + $0x9c] sm:$0xe]
      %v7280 = vld [vmem:[#allocation3 + $0xa0] sm:$0xf]
      %v7281 = vld [vmem:[#allocation3 + $0xa4] sm:$0x1]
      %v7282 = vld [vmem:[#allocation3 + $0xa8] sm:$0xe]
      %v7283 = vld [vmem:[#allocation3 + $0xac] sm:$0xf]
      %v7284 = vld [vmem:[#allocation3 + $0xb0] sm:$0x1]
      %v7285 = vld [vmem:[#allocation3 + $0xb4] sm:$0xe]
      %v7286 = vld [vmem:[#allocation3 + $0xb8] sm:$0xf]
      %v7287 = vld [vmem:[#allocation3 + $0xbc] sm:$0x1]
      %v7336 = vrot.slane %v7240, 5
      %v7337 = vrot.slane %v7336, 4
      %v7338 = vrot.slane %v7241, 5
      %v7339 = vsel %vm1867, %v7337, %v7338
      %v7340 = vrot.slane %v7338, 4
      %v7341 = vrot.slane %v7242, 5
      %v7342 = vsel %vm1867, %v7340, %v7341
      %v7343 = vrot.slane %v7243, 5
      %v7344 = vrot.slane %v7343, 4
      %v7345 = vrot.slane %v7244, 5
      %v7346 = vsel %vm1867, %v7344, %v7345
      %v7347 = vrot.slane %v7345, 4
      %v7348 = vrot.slane %v7245, 5
      %v7349 = vsel %vm1867, %v7347, %v7348
      %v7350 = vrot.slane %v7246, 5
      %v7351 = vrot.slane %v7350, 4
      %v7352 = vrot.slane %v7247, 5
      %v7353 = vsel %vm1867, %v7351, %v7352
      %v7354 = vrot.slane %v7352, 4
      %v7355 = vrot.slane %v7248, 5
      %v7356 = vsel %vm1867, %v7354, %v7355
      %v7357 = vrot.slane %v7249, 5
      %v7358 = vrot.slane %v7357, 4
      %v7359 = vrot.slane %v7250, 5
      %v7360 = vsel %vm1867, %v7358, %v7359
      %v7361 = vrot.slane %v7359, 4
      %v7362 = vrot.slane %v7251, 5
      %v7363 = vsel %vm1867, %v7361, %v7362
      %v7364 = vrot.slane %v7252, 5
      %v7365 = vrot.slane %v7364, 4
      %v7366 = vrot.slane %v7253, 5
      %v7367 = vsel %vm1867, %v7365, %v7366
      %v7368 = vrot.slane %v7366, 4
      %v7369 = vrot.slane %v7254, 5
      %v7370 = vsel %vm1867, %v7368, %v7369
      %v7371 = vrot.slane %v7255, 5
      %v7372 = vrot.slane %v7371, 4
      %v7373 = vrot.slane %v7256, 5
      %v7374 = vsel %vm1867, %v7372, %v7373
      %v7375 = vrot.slane %v7373, 4
      %v7376 = vrot.slane %v7257, 5
      %v7377 = vsel %vm1867, %v7375, %v7376
      %v7378 = vrot.slane %v7258, 5
      %v7379 = vrot.slane %v7378, 4
      %v7380 = vrot.slane %v7259, 5
      %v7381 = vsel %vm1867, %v7379, %v7380
      %v7382 = vrot.slane %v7380, 4
      %v7383 = vrot.slane %v7260, 5
      %v7384 = vsel %vm1867, %v7382, %v7383
      %v7385 = vrot.slane %v7261, 5
      %v7386 = vrot.slane %v7385, 4
      %v7387 = vrot.slane %v7262, 5
      %v7388 = vsel %vm1867, %v7386, %v7387
      %v7389 = vrot.slane %v7387, 4
      %v7390 = vrot.slane %v7263, 5
      %v7391 = vsel %vm1867, %v7389, %v7390
      %v7392 = vrot.slane %v7264, 5
      %v7393 = vrot.slane %v7392, 4
      %v7394 = vrot.slane %v7265, 5
      %v7395 = vsel %vm1867, %v7393, %v7394
      %v7396 = vrot.slane %v7394, 4
      %v7397 = vrot.slane %v7266, 5
      %v7398 = vsel %vm1867, %v7396, %v7397
      %v7399 = vrot.slane %v7267, 5
      %v7400 = vrot.slane %v7399, 4
      %v7401 = vrot.slane %v7268, 5
      %v7402 = vsel %vm1867, %v7400, %v7401
      %v7403 = vrot.slane %v7401, 4
      %v7404 = vrot.slane %v7269, 5
      %v7405 = vsel %vm1867, %v7403, %v7404
      %v7406 = vrot.slane %v7270, 5
      %v7407 = vrot.slane %v7406, 4
      %v7408 = vrot.slane %v7271, 5
      %v7409 = vsel %vm1867, %v7407, %v7408
      %v7410 = vrot.slane %v7408, 4
      %v7411 = vrot.slane %v7272, 5
      %v7412 = vsel %vm1867, %v7410, %v7411
      %v7413 = vrot.slane %v7273, 5
      %v7414 = vrot.slane %v7413, 4
      %v7415 = vrot.slane %v7274, 5
      %v7416 = vsel %vm1867, %v7414, %v7415
      %v7417 = vrot.slane %v7415, 4
      %v7418 = vrot.slane %v7275, 5
      %v7419 = vsel %vm1867, %v7417, %v7418
      %v7420 = vrot.slane %v7276, 5
      %v7421 = vrot.slane %v7420, 4
      %v7422 = vrot.slane %v7277, 5
      %v7423 = vsel %vm1867, %v7421, %v7422
      %v7424 = vrot.slane %v7422, 4
      %v7425 = vrot.slane %v7278, 5
      %v7426 = vsel %vm1867, %v7424, %v7425
      %v7427 = vrot.slane %v7279, 5
      %v7428 = vrot.slane %v7427, 4
      %v7429 = vrot.slane %v7280, 5
      %v7430 = vsel %vm1867, %v7428, %v7429
      %v7431 = vrot.slane %v7429, 4
      %v7432 = vrot.slane %v7281, 5
      %v7433 = vsel %vm1867, %v7431, %v7432
      %v7434 = vrot.slane %v7282, 5
      %v7435 = vrot.slane %v7434, 4
      %v7436 = vrot.slane %v7283, 5
      %v7437 = vsel %vm1867, %v7435, %v7436
      %v7438 = vrot.slane %v7436, 4
      %v7439 = vrot.slane %v7284, 5
      %v7440 = vsel %vm1867, %v7438, %v7439
      %v7441 = vrot.slane %v7285, 5
      %v7442 = vrot.slane %v7441, 4
      %v7443 = vrot.slane %v7286, 5
      %v7444 = vsel %vm1867, %v7442, %v7443
      %v7445 = vrot.slane %v7443, 4
      %v7446 = vrot.slane %v7287, 5
      %v7447 = vsel %vm1867, %v7445, %v7446
      %v7448 = vunpack.c.l.b16 %v7339
      %v7449 = vunpack.c.l.b16 %v7342
      %v7450 = vunpack.c.l.b16 %v7346
      %v7451 = vunpack.c.l.b16 %v7349
      %v7452 = vunpack.c.l.b16 %v7353
      %v7453 = vunpack.c.l.b16 %v7356
      %v7454 = vunpack.c.l.b16 %v7360
      %v7455 = vunpack.c.l.b16 %v7363
      %v7456 = vunpack.c.l.b16 %v7367
      %v7457 = vunpack.c.l.b16 %v7370
      %v7458 = vunpack.c.l.b16 %v7374
      %v7459 = vunpack.c.l.b16 %v7377
      %v7460 = vunpack.c.l.b16 %v7381
      %v7461 = vunpack.c.l.b16 %v7384
      %v7462 = vunpack.c.l.b16 %v7388
      %v7463 = vunpack.c.l.b16 %v7391
      %v7464 = vunpack.c.l.b16 %v7395
      %v7465 = vunpack.c.l.b16 %v7398
      %v7466 = vunpack.c.l.b16 %v7402
      %v7467 = vunpack.c.l.b16 %v7405
      %v7468 = vunpack.c.l.b16 %v7409
      %v7469 = vunpack.c.l.b16 %v7412
      %v7470 = vunpack.c.l.b16 %v7416
      %v7471 = vunpack.c.l.b16 %v7419
      %v7472 = vunpack.c.l.b16 %v7423
      %v7473 = vunpack.c.l.b16 %v7426
      %v7474 = vunpack.c.l.b16 %v7430
      %v7475 = vunpack.c.l.b16 %v7433
      %v7476 = vunpack.c.l.b16 %v7437
      %v7477 = vunpack.c.l.b16 %v7440
      %v7478 = vunpack.c.l.b16 %v7444
      %v7479 = vunpack.c.l.b16 %v7447
      %v7480 = vpack.c.b16 %v7449, %v7448
      %v7481 = vpack.c.b16 %v7451, %v7450
      %v7482 = vpack.c.b16 %v7453, %v7452
      %v7483 = vpack.c.b16 %v7455, %v7454
      %v7484 = vpack.c.b16 %v7457, %v7456
      %v7485 = vpack.c.b16 %v7459, %v7458
      %v7486 = vpack.c.b16 %v7461, %v7460
      %v7487 = vpack.c.b16 %v7463, %v7462
      %v7488 = vpack.c.b16 %v7465, %v7464
      %v7489 = vpack.c.b16 %v7467, %v7466
      %v7490 = vpack.c.b16 %v7469, %v7468
      %v7491 = vpack.c.b16 %v7471, %v7470
      %v7492 = vpack.c.b16 %v7473, %v7472
      %v7493 = vpack.c.b16 %v7475, %v7474
      %v7494 = vpack.c.b16 %v7477, %v7476
      %v7495 = vpack.c.b16 %v7479, %v7478
      %7496 = vrot.lane.b32.xlu0 %v7480, 8
      %v7497 = vpop.permute.xlu0 %7496
      %7498 = vrot.lane.b32.xlu0 %v7481, 8
      %v7499 = vpop.permute.xlu0 %7498
      %7500 = vrot.lane.b32.xlu0 %v7482, 8
      %v7501 = vpop.permute.xlu0 %7500
      %7502 = vrot.lane.b32.xlu0 %v7483, 8
      %v7503 = vpop.permute.xlu0 %7502
      %7504 = vrot.lane.b32.xlu0 %v7484, 8
      %v7505 = vpop.permute.xlu0 %7504
      %7506 = vrot.lane.b32.xlu0 %v7485, 8
      %v7507 = vpop.permute.xlu0 %7506
      %7508 = vrot.lane.b32.xlu0 %v7486, 8
      %v7509 = vpop.permute.xlu0 %7508
      %7510 = vrot.lane.b32.xlu0 %v7487, 8
      %v7511 = vpop.permute.xlu0 %7510
      %7512 = vrot.lane.b32.xlu0 %v7488, 8
      %v7513 = vpop.permute.xlu0 %7512
      %7514 = vrot.lane.b32.xlu0 %v7489, 8
      %v7515 = vpop.permute.xlu0 %7514
      %7516 = vrot.lane.b32.xlu0 %v7490, 8
      %v7517 = vpop.permute.xlu0 %7516
      %7518 = vrot.lane.b32.xlu0 %v7491, 8
      %v7519 = vpop.permute.xlu0 %7518
      %7520 = vrot.lane.b32.xlu0 %v7492, 8
      %v7521 = vpop.permute.xlu0 %7520
      %7522 = vrot.lane.b32.xlu0 %v7493, 8
      %v7523 = vpop.permute.xlu0 %7522
      %7524 = vrot.lane.b32.xlu0 %v7494, 8
      %v7525 = vpop.permute.xlu0 %7524
      %7526 = vrot.lane.b32.xlu0 %v7495, 8
      %v7527 = vpop.permute.xlu0 %7526
      %7544 = vst.msk [vmem:[#allocation5] sm:$0xff] %vm5676, %v7497
      %7545 = vst.msk [vmem:[#allocation5 + $0x8] sm:$0xff] %vm5676, %v7499
      %7546 = vst.msk [vmem:[#allocation5 + $0x10] sm:$0xff] %vm5676, %v7501
      %7547 = vst.msk [vmem:[#allocation5 + $0x18] sm:$0xff] %vm5676, %v7503
      %7548 = vst.msk [vmem:[#allocation5 + $0x20] sm:$0xff] %vm5676, %v7505
      %7549 = vst.msk [vmem:[#allocation5 + $0x28] sm:$0xff] %vm5676, %v7507
      %7550 = vst.msk [vmem:[#allocation5 + $0x30] sm:$0xff] %vm5676, %v7509
      %7551 = vst.msk [vmem:[#allocation5 + $0x38] sm:$0xff] %vm5676, %v7511
      %7552 = vst.msk [vmem:[#allocation5 + $0x40] sm:$0xff] %vm5676, %v7513
      %7553 = vst.msk [vmem:[#allocation5 + $0x48] sm:$0xff] %vm5676, %v7515
      %7554 = vst.msk [vmem:[#allocation5 + $0x50] sm:$0xff] %vm5676, %v7517
      %7555 = vst.msk [vmem:[#allocation5 + $0x58] sm:$0xff] %vm5676, %v7519
      %7556 = vst.msk [vmem:[#allocation5 + $0x60] sm:$0xff] %vm5676, %v7521
      %7557 = vst.msk [vmem:[#allocation5 + $0x68] sm:$0xff] %vm5676, %v7523
      %7558 = vst.msk [vmem:[#allocation5 + $0x70] sm:$0xff] %vm5676, %v7525
      %7559 = vst.msk [vmem:[#allocation5 + $0x78] sm:$0xff] %vm5676, %v7527
      %v7560 = vld [vmem:[%s4885] sm:$0xf]
      %v7561 = vld [vmem:[%s4885 + $0x4] sm:$0xf]
      %v7562 = vld [vmem:[%s4885 + $0x8] sm:$0x1]
      %v7563 = vld [vmem:[%s4885 + $0xc] sm:$0xf]
      %v7564 = vld [vmem:[%s4885 + $0x10] sm:$0xf]
      %v7565 = vld [vmem:[%s4885 + $0x14] sm:$0x1]
      %v7566 = vld [vmem:[%s4885 + $0x18] sm:$0xf]
      %v7567 = vld [vmem:[%s4885 + $0x1c] sm:$0xf]
      %v7568 = vld [vmem:[%s4885 + $0x20] sm:$0x1]
      %v7569 = vld [vmem:[%s4885 + $0x24] sm:$0xf]
      %v7570 = vld [vmem:[%s4885 + $0x28] sm:$0xf]
      %v7571 = vld [vmem:[%s4885 + $0x2c] sm:$0x1]
      %v7572 = vld [vmem:[%s4885 + $0x30] sm:$0xf]
      %v7573 = vld [vmem:[%s4885 + $0x34] sm:$0xf]
      %v7574 = vld [vmem:[%s4885 + $0x38] sm:$0x1]
      %v7575 = vld [vmem:[%s4885 + $0x3c] sm:$0xf]
      %v7576 = vld [vmem:[%s4885 + $0x40] sm:$0xf]
      %v7577 = vld [vmem:[%s4885 + $0x44] sm:$0x1]
      %v7578 = vld [vmem:[%s4885 + $0x48] sm:$0xf]
      %v7579 = vld [vmem:[%s4885 + $0x4c] sm:$0xf]
      %v7580 = vld [vmem:[%s4885 + $0x50] sm:$0x1]
      %v7581 = vld [vmem:[%s4885 + $0x54] sm:$0xf]
      %v7582 = vld [vmem:[%s4885 + $0x58] sm:$0xf]
      %v7583 = vld [vmem:[%s4885 + $0x5c] sm:$0x1]
      %v7584 = vld [vmem:[%s4885 + $0x60] sm:$0xf]
      %v7585 = vld [vmem:[%s4885 + $0x64] sm:$0xf]
      %v7586 = vld [vmem:[%s4885 + $0x68] sm:$0x1]
      %v7587 = vld [vmem:[%s4885 + $0x6c] sm:$0xf]
      %v7588 = vld [vmem:[%s4885 + $0x70] sm:$0xf]
      %v7589 = vld [vmem:[%s4885 + $0x74] sm:$0x1]
      %v7590 = vld [vmem:[%s4885 + $0x78] sm:$0xf]
      %v7591 = vld [vmem:[%s4885 + $0x7c] sm:$0xf]
      %v7592 = vld [vmem:[%s4885 + $0x80] sm:$0x1]
      %v7593 = vld [vmem:[%s4885 + $0x84] sm:$0xf]
      %v7594 = vld [vmem:[%s4885 + $0x88] sm:$0xf]
      %v7595 = vld [vmem:[%s4885 + $0x8c] sm:$0x1]
      %v7596 = vld [vmem:[%s4885 + $0x90] sm:$0xf]
      %v7597 = vld [vmem:[%s4885 + $0x94] sm:$0xf]
      %v7598 = vld [vmem:[%s4885 + $0x98] sm:$0x1]
      %v7599 = vld [vmem:[%s4885 + $0x9c] sm:$0xf]
      %v7600 = vld [vmem:[%s4885 + $0xa0] sm:$0xf]
      %v7601 = vld [vmem:[%s4885 + $0xa4] sm:$0x1]
      %v7602 = vld [vmem:[%s4885 + $0xa8] sm:$0xf]
      %v7603 = vld [vmem:[%s4885 + $0xac] sm:$0xf]
      %v7604 = vld [vmem:[%s4885 + $0xb0] sm:$0x1]
      %v7605 = vld [vmem:[%s4885 + $0xb4] sm:$0xf]
      %v7606 = vld [vmem:[%s4885 + $0xb8] sm:$0xf]
      %v7607 = vld [vmem:[%s4885 + $0xbc] sm:$0x1]
      %v7609 = vshrl.u32 %v7560, 16
      %v7611 = vrot.slane %v7609, 4
      %v7612 = vshll.u32 %v7560, 16
      %v7614 = vrot.slane %v7612, 5
      %v7615 = vor.u32 %v7611, %v7614
      %v7616 = vrot.slane %v7615, 4
      %v7618 = vshll.u32 %v7561, 16
      %v7620 = vrot.slane %v7618, 5
      %v7621 = vsel %vm1271, %v7616, %v7620
      %v7622 = vshrl.u32 %v7561, 16
      %v7624 = vrot.slane %v7622, 4
      %v7625 = vor.u32 %v7624, %v7620
      %v7626 = vrot.slane %v7625, 4
      %v7628 = vshll.u32 %v7562, 16
      %v7630 = vrot.slane %v7628, 5
      %v7631 = vsel %vm1271, %v7626, %v7630
      %v7633 = vshrl.u32 %v7563, 16
      %v7635 = vrot.slane %v7633, 4
      %v7636 = vshll.u32 %v7563, 16
      %v7638 = vrot.slane %v7636, 5
      %v7639 = vor.u32 %v7635, %v7638
      %v7640 = vrot.slane %v7639, 4
      %v7642 = vshll.u32 %v7564, 16
      %v7644 = vrot.slane %v7642, 5
      %v7645 = vsel %vm1271, %v7640, %v7644
      %v7646 = vshrl.u32 %v7564, 16
      %v7648 = vrot.slane %v7646, 4
      %v7649 = vor.u32 %v7648, %v7644
      %v7650 = vrot.slane %v7649, 4
      %v7652 = vshll.u32 %v7565, 16
      %v7654 = vrot.slane %v7652, 5
      %v7655 = vsel %vm1271, %v7650, %v7654
      %v7657 = vshrl.u32 %v7566, 16
      %v7659 = vrot.slane %v7657, 4
      %v7660 = vshll.u32 %v7566, 16
      %v7662 = vrot.slane %v7660, 5
      %v7663 = vor.u32 %v7659, %v7662
      %v7664 = vrot.slane %v7663, 4
      %v7666 = vshll.u32 %v7567, 16
      %v7668 = vrot.slane %v7666, 5
      %v7669 = vsel %vm1271, %v7664, %v7668
      %v7670 = vshrl.u32 %v7567, 16
      %v7672 = vrot.slane %v7670, 4
      %v7673 = vor.u32 %v7672, %v7668
      %v7674 = vrot.slane %v7673, 4
      %v7676 = vshll.u32 %v7568, 16
      %v7678 = vrot.slane %v7676, 5
      %v7679 = vsel %vm1271, %v7674, %v7678
      %v7681 = vshrl.u32 %v7569, 16
      %v7683 = vrot.slane %v7681, 4
      %v7684 = vshll.u32 %v7569, 16
      %v7686 = vrot.slane %v7684, 5
      %v7687 = vor.u32 %v7683, %v7686
      %v7688 = vrot.slane %v7687, 4
      %v7690 = vshll.u32 %v7570, 16
      %v7692 = vrot.slane %v7690, 5
      %v7693 = vsel %vm1271, %v7688, %v7692
      %v7694 = vshrl.u32 %v7570, 16
      %v7696 = vrot.slane %v7694, 4
      %v7697 = vor.u32 %v7696, %v7692
      %v7698 = vrot.slane %v7697, 4
      %v7700 = vshll.u32 %v7571, 16
      %v7702 = vrot.slane %v7700, 5
      %v7703 = vsel %vm1271, %v7698, %v7702
      %v7705 = vshrl.u32 %v7572, 16
      %v7707 = vrot.slane %v7705, 4
      %v7708 = vshll.u32 %v7572, 16
      %v7710 = vrot.slane %v7708, 5
      %v7711 = vor.u32 %v7707, %v7710
      %v7712 = vrot.slane %v7711, 4
      %v7714 = vshll.u32 %v7573, 16
      %v7716 = vrot.slane %v7714, 5
      %v7717 = vsel %vm1271, %v7712, %v7716
      %v7718 = vshrl.u32 %v7573, 16
      %v7720 = vrot.slane %v7718, 4
      %v7721 = vor.u32 %v7720, %v7716
      %v7722 = vrot.slane %v7721, 4
      %v7724 = vshll.u32 %v7574, 16
      %v7726 = vrot.slane %v7724, 5
      %v7727 = vsel %vm1271, %v7722, %v7726
      %v7729 = vshrl.u32 %v7575, 16
      %v7731 = vrot.slane %v7729, 4
      %v7732 = vshll.u32 %v7575, 16
      %v7734 = vrot.slane %v7732, 5
      %v7735 = vor.u32 %v7731, %v7734
      %v7736 = vrot.slane %v7735, 4
      %v7738 = vshll.u32 %v7576, 16
      %v7740 = vrot.slane %v7738, 5
      %v7741 = vsel %vm1271, %v7736, %v7740
      %v7742 = vshrl.u32 %v7576, 16
      %v7744 = vrot.slane %v7742, 4
      %v7745 = vor.u32 %v7744, %v7740
      %v7746 = vrot.slane %v7745, 4
      %v7748 = vshll.u32 %v7577, 16
      %v7750 = vrot.slane %v7748, 5
      %v7751 = vsel %vm1271, %v7746, %v7750
      %v7753 = vshrl.u32 %v7578, 16
      %v7755 = vrot.slane %v7753, 4
      %v7756 = vshll.u32 %v7578, 16
      %v7758 = vrot.slane %v7756, 5
      %v7759 = vor.u32 %v7755, %v7758
      %v7760 = vrot.slane %v7759, 4
      %v7762 = vshll.u32 %v7579, 16
      %v7764 = vrot.slane %v7762, 5
      %v7765 = vsel %vm1271, %v7760, %v7764
      %v7766 = vshrl.u32 %v7579, 16
      %v7768 = vrot.slane %v7766, 4
      %v7769 = vor.u32 %v7768, %v7764
      %v7770 = vrot.slane %v7769, 4
      %v7772 = vshll.u32 %v7580, 16
      %v7774 = vrot.slane %v7772, 5
      %v7775 = vsel %vm1271, %v7770, %v7774
      %v7777 = vshrl.u32 %v7581, 16
      %v7779 = vrot.slane %v7777, 4
      %v7780 = vshll.u32 %v7581, 16
      %v7782 = vrot.slane %v7780, 5
      %v7783 = vor.u32 %v7779, %v7782
      %v7784 = vrot.slane %v7783, 4
      %v7786 = vshll.u32 %v7582, 16
      %v7788 = vrot.slane %v7786, 5
      %v7789 = vsel %vm1271, %v7784, %v7788
      %v7790 = vshrl.u32 %v7582, 16
      %v7792 = vrot.slane %v7790, 4
      %v7793 = vor.u32 %v7792, %v7788
      %v7794 = vrot.slane %v7793, 4
      %v7796 = vshll.u32 %v7583, 16
      %v7798 = vrot.slane %v7796, 5
      %v7799 = vsel %vm1271, %v7794, %v7798
      %v7801 = vshrl.u32 %v7584, 16
      %v7803 = vrot.slane %v7801, 4
      %v7804 = vshll.u32 %v7584, 16
      %v7806 = vrot.slane %v7804, 5
      %v7807 = vor.u32 %v7803, %v7806
      %v7808 = vrot.slane %v7807, 4
      %v7810 = vshll.u32 %v7585, 16
      %v7812 = vrot.slane %v7810, 5
      %v7813 = vsel %vm1271, %v7808, %v7812
      %v7814 = vshrl.u32 %v7585, 16
      %v7816 = vrot.slane %v7814, 4
      %v7817 = vor.u32 %v7816, %v7812
      %v7818 = vrot.slane %v7817, 4
      %v7820 = vshll.u32 %v7586, 16
      %v7822 = vrot.slane %v7820, 5
      %v7823 = vsel %vm1271, %v7818, %v7822
      %v7825 = vshrl.u32 %v7587, 16
      %v7827 = vrot.slane %v7825, 4
      %v7828 = vshll.u32 %v7587, 16
      %v7830 = vrot.slane %v7828, 5
      %v7831 = vor.u32 %v7827, %v7830
      %v7832 = vrot.slane %v7831, 4
      %v7834 = vshll.u32 %v7588, 16
      %v7836 = vrot.slane %v7834, 5
      %v7837 = vsel %vm1271, %v7832, %v7836
      %v7838 = vshrl.u32 %v7588, 16
      %v7840 = vrot.slane %v7838, 4
      %v7841 = vor.u32 %v7840, %v7836
      %v7842 = vrot.slane %v7841, 4
      %v7844 = vshll.u32 %v7589, 16
      %v7846 = vrot.slane %v7844, 5
      %v7847 = vsel %vm1271, %v7842, %v7846
      %v7849 = vshrl.u32 %v7590, 16
      %v7851 = vrot.slane %v7849, 4
      %v7852 = vshll.u32 %v7590, 16
      %v7854 = vrot.slane %v7852, 5
      %v7855 = vor.u32 %v7851, %v7854
      %v7856 = vrot.slane %v7855, 4
      %v7858 = vshll.u32 %v7591, 16
      %v7860 = vrot.slane %v7858, 5
      %v7861 = vsel %vm1271, %v7856, %v7860
      %v7862 = vshrl.u32 %v7591, 16
      %v7864 = vrot.slane %v7862, 4
      %v7865 = vor.u32 %v7864, %v7860
      %v7866 = vrot.slane %v7865, 4
      %v7868 = vshll.u32 %v7592, 16
      %v7870 = vrot.slane %v7868, 5
      %v7871 = vsel %vm1271, %v7866, %v7870
      %v7873 = vshrl.u32 %v7593, 16
      %v7875 = vrot.slane %v7873, 4
      %v7876 = vshll.u32 %v7593, 16
      %v7878 = vrot.slane %v7876, 5
      %v7879 = vor.u32 %v7875, %v7878
      %v7880 = vrot.slane %v7879, 4
      %v7882 = vshll.u32 %v7594, 16
      %v7884 = vrot.slane %v7882, 5
      %v7885 = vsel %vm1271, %v7880, %v7884
      %v7886 = vshrl.u32 %v7594, 16
      %v7888 = vrot.slane %v7886, 4
      %v7889 = vor.u32 %v7888, %v7884
      %v7890 = vrot.slane %v7889, 4
      %v7892 = vshll.u32 %v7595, 16
      %v7894 = vrot.slane %v7892, 5
      %v7895 = vsel %vm1271, %v7890, %v7894
      %v7897 = vshrl.u32 %v7596, 16
      %v7899 = vrot.slane %v7897, 4
      %v7900 = vshll.u32 %v7596, 16
      %v7902 = vrot.slane %v7900, 5
      %v7903 = vor.u32 %v7899, %v7902
      %v7904 = vrot.slane %v7903, 4
      %v7906 = vshll.u32 %v7597, 16
      %v7908 = vrot.slane %v7906, 5
      %v7909 = vsel %vm1271, %v7904, %v7908
      %v7910 = vshrl.u32 %v7597, 16
      %v7912 = vrot.slane %v7910, 4
      %v7913 = vor.u32 %v7912, %v7908
      %v7914 = vrot.slane %v7913, 4
      %v7916 = vshll.u32 %v7598, 16
      %v7918 = vrot.slane %v7916, 5
      %v7919 = vsel %vm1271, %v7914, %v7918
      %v7921 = vshrl.u32 %v7599, 16
      %v7923 = vrot.slane %v7921, 4
      %v7924 = vshll.u32 %v7599, 16
      %v7926 = vrot.slane %v7924, 5
      %v7927 = vor.u32 %v7923, %v7926
      %v7928 = vrot.slane %v7927, 4
      %v7930 = vshll.u32 %v7600, 16
      %v7932 = vrot.slane %v7930, 5
      %v7933 = vsel %vm1271, %v7928, %v7932
      %v7934 = vshrl.u32 %v7600, 16
      %v7936 = vrot.slane %v7934, 4
      %v7937 = vor.u32 %v7936, %v7932
      %v7938 = vrot.slane %v7937, 4
      %v7940 = vshll.u32 %v7601, 16
      %v7942 = vrot.slane %v7940, 5
      %v7943 = vsel %vm1271, %v7938, %v7942
      %v7945 = vshrl.u32 %v7602, 16
      %v7947 = vrot.slane %v7945, 4
      %v7948 = vshll.u32 %v7602, 16
      %v7950 = vrot.slane %v7948, 5
      %v7951 = vor.u32 %v7947, %v7950
      %v7952 = vrot.slane %v7951, 4
      %v7954 = vshll.u32 %v7603, 16
      %v7956 = vrot.slane %v7954, 5
      %v7957 = vsel %vm1271, %v7952, %v7956
      %v7958 = vshrl.u32 %v7603, 16
      %v7960 = vrot.slane %v7958, 4
      %v7961 = vor.u32 %v7960, %v7956
      %v7962 = vrot.slane %v7961, 4
      %v7964 = vshll.u32 %v7604, 16
      %v7966 = vrot.slane %v7964, 5
      %v7967 = vsel %vm1271, %v7962, %v7966
      %v7969 = vshrl.u32 %v7605, 16
      %v7971 = vrot.slane %v7969, 4
      %v7972 = vshll.u32 %v7605, 16
      %v7974 = vrot.slane %v7972, 5
      %v7975 = vor.u32 %v7971, %v7974
      %v7976 = vrot.slane %v7975, 4
      %v7978 = vshll.u32 %v7606, 16
      %v7980 = vrot.slane %v7978, 5
      %v7981 = vsel %vm1271, %v7976, %v7980
      %v7982 = vshrl.u32 %v7606, 16
      %v7984 = vrot.slane %v7982, 4
      %v7985 = vor.u32 %v7984, %v7980
      %v7986 = vrot.slane %v7985, 4
      %v7988 = vshll.u32 %v7607, 16
      %v7990 = vrot.slane %v7988, 5
      %v7991 = vsel %vm1271, %v7986, %v7990
      %v7992 = vunpack.c.l.b16 %v7621
      %v7993 = vunpack.c.l.b16 %v7631
      %v7994 = vunpack.c.l.b16 %v7645
      %v7995 = vunpack.c.l.b16 %v7655
      %v7996 = vunpack.c.l.b16 %v7669
      %v7997 = vunpack.c.l.b16 %v7679
      %v7998 = vunpack.c.l.b16 %v7693
      %v7999 = vunpack.c.l.b16 %v7703
      %v8000 = vunpack.c.l.b16 %v7717
      %v8001 = vunpack.c.l.b16 %v7727
      %v8002 = vunpack.c.l.b16 %v7741
      %v8003 = vunpack.c.l.b16 %v7751
      %v8004 = vunpack.c.l.b16 %v7765
      %v8005 = vunpack.c.l.b16 %v7775
      %v8006 = vunpack.c.l.b16 %v7789
      %v8007 = vunpack.c.l.b16 %v7799
      %v8008 = vunpack.c.l.b16 %v7813
      %v8009 = vunpack.c.l.b16 %v7823
      %v8010 = vunpack.c.l.b16 %v7837
      %v8011 = vunpack.c.l.b16 %v7847
      %v8012 = vunpack.c.l.b16 %v7861
      %v8013 = vunpack.c.l.b16 %v7871
      %v8014 = vunpack.c.l.b16 %v7885
      %v8015 = vunpack.c.l.b16 %v7895
      %v8016 = vunpack.c.l.b16 %v7909
      %v8017 = vunpack.c.l.b16 %v7919
      %v8018 = vunpack.c.l.b16 %v7933
      %v8019 = vunpack.c.l.b16 %v7943
      %v8020 = vunpack.c.l.b16 %v7957
      %v8021 = vunpack.c.l.b16 %v7967
      %v8022 = vunpack.c.l.b16 %v7981
      %v8023 = vunpack.c.l.b16 %v7991
      %v8024 = vpack.c.b16 %v7993, %v7992
      %v8025 = vpack.c.b16 %v7995, %v7994
      %v8026 = vpack.c.b16 %v7997, %v7996
      %v8027 = vpack.c.b16 %v7999, %v7998
      %v8028 = vpack.c.b16 %v8001, %v8000
      %v8029 = vpack.c.b16 %v8003, %v8002
      %v8030 = vpack.c.b16 %v8005, %v8004
      %v8031 = vpack.c.b16 %v8007, %v8006
      %v8032 = vpack.c.b16 %v8009, %v8008
      %v8033 = vpack.c.b16 %v8011, %v8010
      %v8034 = vpack.c.b16 %v8013, %v8012
      %v8035 = vpack.c.b16 %v8015, %v8014
      %v8036 = vpack.c.b16 %v8017, %v8016
      %v8037 = vpack.c.b16 %v8019, %v8018
      %v8038 = vpack.c.b16 %v8021, %v8020
      %v8039 = vpack.c.b16 %v8023, %v8022
      %8040 = vrot.lane.b32.xlu0 %v8024, 16
      %v8041 = vpop.permute.xlu0 %8040
      %8042 = vrot.lane.b32.xlu0 %v8025, 16
      %v8043 = vpop.permute.xlu0 %8042
      %8044 = vrot.lane.b32.xlu0 %v8026, 16
      %v8045 = vpop.permute.xlu0 %8044
      %8046 = vrot.lane.b32.xlu0 %v8027, 16
      %v8047 = vpop.permute.xlu0 %8046
      %8048 = vrot.lane.b32.xlu0 %v8028, 16
      %v8049 = vpop.permute.xlu0 %8048
      %8050 = vrot.lane.b32.xlu0 %v8029, 16
      %v8051 = vpop.permute.xlu0 %8050
      %8052 = vrot.lane.b32.xlu0 %v8030, 16
      %v8053 = vpop.permute.xlu0 %8052
      %8054 = vrot.lane.b32.xlu0 %v8031, 16
      %v8055 = vpop.permute.xlu0 %8054
      %8056 = vrot.lane.b32.xlu0 %v8032, 16
      %v8057 = vpop.permute.xlu0 %8056
      %8058 = vrot.lane.b32.xlu0 %v8033, 16
      %v8059 = vpop.permute.xlu0 %8058
      %8060 = vrot.lane.b32.xlu0 %v8034, 16
      %v8061 = vpop.permute.xlu0 %8060
      %8062 = vrot.lane.b32.xlu0 %v8035, 16
      %v8063 = vpop.permute.xlu0 %8062
      %8064 = vrot.lane.b32.xlu0 %v8036, 16
      %v8065 = vpop.permute.xlu0 %8064
      %8066 = vrot.lane.b32.xlu0 %v8037, 16
      %v8067 = vpop.permute.xlu0 %8066
      %8068 = vrot.lane.b32.xlu0 %v8038, 16
      %v8069 = vpop.permute.xlu0 %8068
      %8070 = vrot.lane.b32.xlu0 %v8039, 16
      %v8071 = vpop.permute.xlu0 %8070
      %8088 = vst.msk [vmem:[#allocation5] sm:$0xff] %vm5853, %v8041
      %8089 = vst.msk [vmem:[#allocation5 + $0x8] sm:$0xff] %vm5853, %v8043
      %8090 = vst.msk [vmem:[#allocation5 + $0x10] sm:$0xff] %vm5853, %v8045
      %8091 = vst.msk [vmem:[#allocation5 + $0x18] sm:$0xff] %vm5853, %v8047
      %8092 = vst.msk [vmem:[#allocation5 + $0x20] sm:$0xff] %vm5853, %v8049
      %8093 = vst.msk [vmem:[#allocation5 + $0x28] sm:$0xff] %vm5853, %v8051
      %8094 = vst.msk [vmem:[#allocation5 + $0x30] sm:$0xff] %vm5853, %v8053
      %8095 = vst.msk [vmem:[#allocation5 + $0x38] sm:$0xff] %vm5853, %v8055
      %8096 = vst.msk [vmem:[#allocation5 + $0x40] sm:$0xff] %vm5853, %v8057
      %8097 = vst.msk [vmem:[#allocation5 + $0x48] sm:$0xff] %vm5853, %v8059
      %8098 = vst.msk [vmem:[#allocation5 + $0x50] sm:$0xff] %vm5853, %v8061
      %8099 = vst.msk [vmem:[#allocation5 + $0x58] sm:$0xff] %vm5853, %v8063
      %8100 = vst.msk [vmem:[#allocation5 + $0x60] sm:$0xff] %vm5853, %v8065
      %8101 = vst.msk [vmem:[#allocation5 + $0x68] sm:$0xff] %vm5853, %v8067
      %8102 = vst.msk [vmem:[#allocation5 + $0x70] sm:$0xff] %vm5853, %v8069
      %8103 = vst.msk [vmem:[#allocation5 + $0x78] sm:$0xff] %vm5853, %v8071
      %v8104 = vld [vmem:[%s4885] sm:$0xe]
      %v8105 = vld [vmem:[%s4885 + $0x4] sm:$0xf]
      %v8106 = vld [vmem:[%s4885 + $0x8] sm:$0x1]
      %v8107 = vld [vmem:[%s4885 + $0xc] sm:$0xe]
      %v8108 = vld [vmem:[%s4885 + $0x10] sm:$0xf]
      %v8109 = vld [vmem:[%s4885 + $0x14] sm:$0x1]
      %v8110 = vld [vmem:[%s4885 + $0x18] sm:$0xe]
      %v8111 = vld [vmem:[%s4885 + $0x1c] sm:$0xf]
      %v8112 = vld [vmem:[%s4885 + $0x20] sm:$0x1]
      %v8113 = vld [vmem:[%s4885 + $0x24] sm:$0xe]
      %v8114 = vld [vmem:[%s4885 + $0x28] sm:$0xf]
      %v8115 = vld [vmem:[%s4885 + $0x2c] sm:$0x1]
      %v8116 = vld [vmem:[%s4885 + $0x30] sm:$0xe]
      %v8117 = vld [vmem:[%s4885 + $0x34] sm:$0xf]
      %v8118 = vld [vmem:[%s4885 + $0x38] sm:$0x1]
      %v8119 = vld [vmem:[%s4885 + $0x3c] sm:$0xe]
      %v8120 = vld [vmem:[%s4885 + $0x40] sm:$0xf]
      %v8121 = vld [vmem:[%s4885 + $0x44] sm:$0x1]
      %v8122 = vld [vmem:[%s4885 + $0x48] sm:$0xe]
      %v8123 = vld [vmem:[%s4885 + $0x4c] sm:$0xf]
      %v8124 = vld [vmem:[%s4885 + $0x50] sm:$0x1]
      %v8125 = vld [vmem:[%s4885 + $0x54] sm:$0xe]
      %v8126 = vld [vmem:[%s4885 + $0x58] sm:$0xf]
      %v8127 = vld [vmem:[%s4885 + $0x5c] sm:$0x1]
      %v8128 = vld [vmem:[%s4885 + $0x60] sm:$0xe]
      %v8129 = vld [vmem:[%s4885 + $0x64] sm:$0xf]
      %v8130 = vld [vmem:[%s4885 + $0x68] sm:$0x1]
      %v8131 = vld [vmem:[%s4885 + $0x6c] sm:$0xe]
      %v8132 = vld [vmem:[%s4885 + $0x70] sm:$0xf]
      %v8133 = vld [vmem:[%s4885 + $0x74] sm:$0x1]
      %v8134 = vld [vmem:[%s4885 + $0x78] sm:$0xe]
      %v8135 = vld [vmem:[%s4885 + $0x7c] sm:$0xf]
      %v8136 = vld [vmem:[%s4885 + $0x80] sm:$0x1]
      %v8137 = vld [vmem:[%s4885 + $0x84] sm:$0xe]
      %v8138 = vld [vmem:[%s4885 + $0x88] sm:$0xf]
      %v8139 = vld [vmem:[%s4885 + $0x8c] sm:$0x1]
      %v8140 = vld [vmem:[%s4885 + $0x90] sm:$0xe]
      %v8141 = vld [vmem:[%s4885 + $0x94] sm:$0xf]
      %v8142 = vld [vmem:[%s4885 + $0x98] sm:$0x1]
      %v8143 = vld [vmem:[%s4885 + $0x9c] sm:$0xe]
      %v8144 = vld [vmem:[%s4885 + $0xa0] sm:$0xf]
      %v8145 = vld [vmem:[%s4885 + $0xa4] sm:$0x1]
      %v8146 = vld [vmem:[%s4885 + $0xa8] sm:$0xe]
      %v8147 = vld [vmem:[%s4885 + $0xac] sm:$0xf]
      %v8148 = vld [vmem:[%s4885 + $0xb0] sm:$0x1]
      %v8149 = vld [vmem:[%s4885 + $0xb4] sm:$0xe]
      %v8150 = vld [vmem:[%s4885 + $0xb8] sm:$0xf]
      %v8151 = vld [vmem:[%s4885 + $0xbc] sm:$0x1]
      %v8200 = vrot.slane %v8104, 5
      %v8201 = vrot.slane %v8200, 4
      %v8202 = vrot.slane %v8105, 5
      %v8203 = vsel %vm1867, %v8201, %v8202
      %v8204 = vrot.slane %v8202, 4
      %v8205 = vrot.slane %v8106, 5
      %v8206 = vsel %vm1867, %v8204, %v8205
      %v8207 = vrot.slane %v8107, 5
      %v8208 = vrot.slane %v8207, 4
      %v8209 = vrot.slane %v8108, 5
      %v8210 = vsel %vm1867, %v8208, %v8209
      %v8211 = vrot.slane %v8209, 4
      %v8212 = vrot.slane %v8109, 5
      %v8213 = vsel %vm1867, %v8211, %v8212
      %v8214 = vrot.slane %v8110, 5
      %v8215 = vrot.slane %v8214, 4
      %v8216 = vrot.slane %v8111, 5
      %v8217 = vsel %vm1867, %v8215, %v8216
      %v8218 = vrot.slane %v8216, 4
      %v8219 = vrot.slane %v8112, 5
      %v8220 = vsel %vm1867, %v8218, %v8219
      %v8221 = vrot.slane %v8113, 5
      %v8222 = vrot.slane %v8221, 4
      %v8223 = vrot.slane %v8114, 5
      %v8224 = vsel %vm1867, %v8222, %v8223
      %v8225 = vrot.slane %v8223, 4
      %v8226 = vrot.slane %v8115, 5
      %v8227 = vsel %vm1867, %v8225, %v8226
      %v8228 = vrot.slane %v8116, 5
      %v8229 = vrot.slane %v8228, 4
      %v8230 = vrot.slane %v8117, 5
      %v8231 = vsel %vm1867, %v8229, %v8230
      %v8232 = vrot.slane %v8230, 4
      %v8233 = vrot.slane %v8118, 5
      %v8234 = vsel %vm1867, %v8232, %v8233
      %v8235 = vrot.slane %v8119, 5
      %v8236 = vrot.slane %v8235, 4
      %v8237 = vrot.slane %v8120, 5
      %v8238 = vsel %vm1867, %v8236, %v8237
      %v8239 = vrot.slane %v8237, 4
      %v8240 = vrot.slane %v8121, 5
      %v8241 = vsel %vm1867, %v8239, %v8240
      %v8242 = vrot.slane %v8122, 5
      %v8243 = vrot.slane %v8242, 4
      %v8244 = vrot.slane %v8123, 5
      %v8245 = vsel %vm1867, %v8243, %v8244
      %v8246 = vrot.slane %v8244, 4
      %v8247 = vrot.slane %v8124, 5
      %v8248 = vsel %vm1867, %v8246, %v8247
      %v8249 = vrot.slane %v8125, 5
      %v8250 = vrot.slane %v8249, 4
      %v8251 = vrot.slane %v8126, 5
      %v8252 = vsel %vm1867, %v8250, %v8251
      %v8253 = vrot.slane %v8251, 4
      %v8254 = vrot.slane %v8127, 5
      %v8255 = vsel %vm1867, %v8253, %v8254
      %v8256 = vrot.slane %v8128, 5
      %v8257 = vrot.slane %v8256, 4
      %v8258 = vrot.slane %v8129, 5
      %v8259 = vsel %vm1867, %v8257, %v8258
      %v8260 = vrot.slane %v8258, 4
      %v8261 = vrot.slane %v8130, 5
      %v8262 = vsel %vm1867, %v8260, %v8261
      %v8263 = vrot.slane %v8131, 5
      %v8264 = vrot.slane %v8263, 4
      %v8265 = vrot.slane %v8132, 5
      %v8266 = vsel %vm1867, %v8264, %v8265
      %v8267 = vrot.slane %v8265, 4
      %v8268 = vrot.slane %v8133, 5
      %v8269 = vsel %vm1867, %v8267, %v8268
      %v8270 = vrot.slane %v8134, 5
      %v8271 = vrot.slane %v8270, 4
      %v8272 = vrot.slane %v8135, 5
      %v8273 = vsel %vm1867, %v8271, %v8272
      %v8274 = vrot.slane %v8272, 4
      %v8275 = vrot.slane %v8136, 5
      %v8276 = vsel %vm1867, %v8274, %v8275
      %v8277 = vrot.slane %v8137, 5
      %v8278 = vrot.slane %v8277, 4
      %v8279 = vrot.slane %v8138, 5
      %v8280 = vsel %vm1867, %v8278, %v8279
      %v8281 = vrot.slane %v8279, 4
      %v8282 = vrot.slane %v8139, 5
      %v8283 = vsel %vm1867, %v8281, %v8282
      %v8284 = vrot.slane %v8140, 5
      %v8285 = vrot.slane %v8284, 4
      %v8286 = vrot.slane %v8141, 5
      %v8287 = vsel %vm1867, %v8285, %v8286
      %v8288 = vrot.slane %v8286, 4
      %v8289 = vrot.slane %v8142, 5
      %v8290 = vsel %vm1867, %v8288, %v8289
      %v8291 = vrot.slane %v8143, 5
      %v8292 = vrot.slane %v8291, 4
      %v8293 = vrot.slane %v8144, 5
      %v8294 = vsel %vm1867, %v8292, %v8293
      %v8295 = vrot.slane %v8293, 4
      %v8296 = vrot.slane %v8145, 5
      %v8297 = vsel %vm1867, %v8295, %v8296
      %v8298 = vrot.slane %v8146, 5
      %v8299 = vrot.slane %v8298, 4
      %v8300 = vrot.slane %v8147, 5
      %v8301 = vsel %vm1867, %v8299, %v8300
      %v8302 = vrot.slane %v8300, 4
      %v8303 = vrot.slane %v8148, 5
      %v8304 = vsel %vm1867, %v8302, %v8303
      %v8305 = vrot.slane %v8149, 5
      %v8306 = vrot.slane %v8305, 4
      %v8307 = vrot.slane %v8150, 5
      %v8308 = vsel %vm1867, %v8306, %v8307
      %v8309 = vrot.slane %v8307, 4
      %v8310 = vrot.slane %v8151, 5
      %v8311 = vsel %vm1867, %v8309, %v8310
      %v8312 = vunpack.c.l.b16 %v8203
      %v8313 = vunpack.c.l.b16 %v8206
      %v8314 = vunpack.c.l.b16 %v8210
      %v8315 = vunpack.c.l.b16 %v8213
      %v8316 = vunpack.c.l.b16 %v8217
      %v8317 = vunpack.c.l.b16 %v8220
      %v8318 = vunpack.c.l.b16 %v8224
      %v8319 = vunpack.c.l.b16 %v8227
      %v8320 = vunpack.c.l.b16 %v8231
      %v8321 = vunpack.c.l.b16 %v8234
      %v8322 = vunpack.c.l.b16 %v8238
      %v8323 = vunpack.c.l.b16 %v8241
      %v8324 = vunpack.c.l.b16 %v8245
      %v8325 = vunpack.c.l.b16 %v8248
      %v8326 = vunpack.c.l.b16 %v8252
      %v8327 = vunpack.c.l.b16 %v8255
      %v8328 = vunpack.c.l.b16 %v8259
      %v8329 = vunpack.c.l.b16 %v8262
      %v8330 = vunpack.c.l.b16 %v8266
      %v8331 = vunpack.c.l.b16 %v8269
      %v8332 = vunpack.c.l.b16 %v8273
      %v8333 = vunpack.c.l.b16 %v8276
      %v8334 = vunpack.c.l.b16 %v8280
      %v8335 = vunpack.c.l.b16 %v8283
      %v8336 = vunpack.c.l.b16 %v8287
      %v8337 = vunpack.c.l.b16 %v8290
      %v8338 = vunpack.c.l.b16 %v8294
      %v8339 = vunpack.c.l.b16 %v8297
      %v8340 = vunpack.c.l.b16 %v8301
      %v8341 = vunpack.c.l.b16 %v8304
      %v8342 = vunpack.c.l.b16 %v8308
      %v8343 = vunpack.c.l.b16 %v8311
      %v8344 = vpack.c.b16 %v8313, %v8312
      %v8345 = vpack.c.b16 %v8315, %v8314
      %v8346 = vpack.c.b16 %v8317, %v8316
      %v8347 = vpack.c.b16 %v8319, %v8318
      %v8348 = vpack.c.b16 %v8321, %v8320
      %v8349 = vpack.c.b16 %v8323, %v8322
      %v8350 = vpack.c.b16 %v8325, %v8324
      %v8351 = vpack.c.b16 %v8327, %v8326
      %v8352 = vpack.c.b16 %v8329, %v8328
      %v8353 = vpack.c.b16 %v8331, %v8330
      %v8354 = vpack.c.b16 %v8333, %v8332
      %v8355 = vpack.c.b16 %v8335, %v8334
      %v8356 = vpack.c.b16 %v8337, %v8336
      %v8357 = vpack.c.b16 %v8339, %v8338
      %v8358 = vpack.c.b16 %v8341, %v8340
      %v8359 = vpack.c.b16 %v8343, %v8342
      %8360 = vrot.lane.b32.xlu0 %v8344, 24
      %v8361 = vpop.permute.xlu0 %8360
      %8362 = vrot.lane.b32.xlu0 %v8345, 24
      %v8363 = vpop.permute.xlu0 %8362
      %8364 = vrot.lane.b32.xlu0 %v8346, 24
      %v8365 = vpop.permute.xlu0 %8364
      %8366 = vrot.lane.b32.xlu0 %v8347, 24
      %v8367 = vpop.permute.xlu0 %8366
      %8368 = vrot.lane.b32.xlu0 %v8348, 24
      %v8369 = vpop.permute.xlu0 %8368
      %8370 = vrot.lane.b32.xlu0 %v8349, 24
      %v8371 = vpop.permute.xlu0 %8370
      %8372 = vrot.lane.b32.xlu0 %v8350, 24
      %v8373 = vpop.permute.xlu0 %8372
      %8374 = vrot.lane.b32.xlu0 %v8351, 24
      %v8375 = vpop.permute.xlu0 %8374
      %8376 = vrot.lane.b32.xlu0 %v8352, 24
      %v8377 = vpop.permute.xlu0 %8376
      %8378 = vrot.lane.b32.xlu0 %v8353, 24
      %v8379 = vpop.permute.xlu0 %8378
      %8380 = vrot.lane.b32.xlu0 %v8354, 24
      %v8381 = vpop.permute.xlu0 %8380
      %8382 = vrot.lane.b32.xlu0 %v8355, 24
      %v8383 = vpop.permute.xlu0 %8382
      %8384 = vrot.lane.b32.xlu0 %v8356, 24
      %v8385 = vpop.permute.xlu0 %8384
      %8386 = vrot.lane.b32.xlu0 %v8357, 24
      %v8387 = vpop.permute.xlu0 %8386
      %8388 = vrot.lane.b32.xlu0 %v8358, 24
      %v8389 = vpop.permute.xlu0 %8388
      %8390 = vrot.lane.b32.xlu0 %v8359, 24
      %v8391 = vpop.permute.xlu0 %8390
      %8408 = vst.msk [vmem:[#allocation5] sm:$0xff] %vm6398, %v8361
      %8409 = vst.msk [vmem:[#allocation5 + $0x8] sm:$0xff] %vm6398, %v8363
      %8410 = vst.msk [vmem:[#allocation5 + $0x10] sm:$0xff] %vm6398, %v8365
      %8411 = vst.msk [vmem:[#allocation5 + $0x18] sm:$0xff] %vm6398, %v8367
      %8412 = vst.msk [vmem:[#allocation5 + $0x20] sm:$0xff] %vm6398, %v8369
      %8413 = vst.msk [vmem:[#allocation5 + $0x28] sm:$0xff] %vm6398, %v8371
      %8414 = vst.msk [vmem:[#allocation5 + $0x30] sm:$0xff] %vm6398, %v8373
      %8415 = vst.msk [vmem:[#allocation5 + $0x38] sm:$0xff] %vm6398, %v8375
      %8416 = vst.msk [vmem:[#allocation5 + $0x40] sm:$0xff] %vm6398, %v8377
      %8417 = vst.msk [vmem:[#allocation5 + $0x48] sm:$0xff] %vm6398, %v8379
      %8418 = vst.msk [vmem:[#allocation5 + $0x50] sm:$0xff] %vm6398, %v8381
      %8419 = vst.msk [vmem:[#allocation5 + $0x58] sm:$0xff] %vm6398, %v8383
      %8420 = vst.msk [vmem:[#allocation5 + $0x60] sm:$0xff] %vm6398, %v8385
      %8421 = vst.msk [vmem:[#allocation5 + $0x68] sm:$0xff] %vm6398, %v8387
      %8422 = vst.msk [vmem:[#allocation5 + $0x70] sm:$0xff] %vm6398, %v8389
      %8423 = vst.msk [vmem:[#allocation5 + $0x78] sm:$0xff] %vm6398, %v8391
      %v8424 = vld [vmem:[#allocation5] sm:$0xff]
      %v8425 = vld [vmem:[#allocation5 + $0x8] sm:$0xff]
      %v8426 = vld [vmem:[#allocation5 + $0x10] sm:$0xff]
      %v8427 = vld [vmem:[#allocation5 + $0x18] sm:$0xff]
      %v8428 = vld [vmem:[#allocation5 + $0x20] sm:$0xff]
      %v8429 = vld [vmem:[#allocation5 + $0x28] sm:$0xff]
      %v8430 = vld [vmem:[#allocation5 + $0x30] sm:$0xff]
      %v8431 = vld [vmem:[#allocation5 + $0x38] sm:$0xff]
      %v8432 = vld [vmem:[#allocation5 + $0x40] sm:$0xff]
      %v8433 = vld [vmem:[#allocation5 + $0x48] sm:$0xff]
      %v8434 = vld [vmem:[#allocation5 + $0x50] sm:$0xff]
      %v8435 = vld [vmem:[#allocation5 + $0x58] sm:$0xff]
      %v8436 = vld [vmem:[#allocation5 + $0x60] sm:$0xff]
      %v8437 = vld [vmem:[#allocation5 + $0x68] sm:$0xff]
      %v8438 = vld [vmem:[#allocation5 + $0x70] sm:$0xff]
      %v8439 = vld [vmem:[#allocation5 + $0x78] sm:$0xff]
      %s8440 = scalar_lea.vmem %s5, 16
      %v8441 = vld [vmem:[%s8440] sm:$0xf]
      %v8442 = vld [vmem:[%s8440 + $0x4] sm:$0xf]
      %v8443 = vld [vmem:[%s8440 + $0x8] sm:$0xf]
      %v8444 = vld [vmem:[%s8440 + $0xc] sm:$0xf]
      %v8445 = vld [vmem:[%s6] sm:$0x1]
      %v8447 = vlaneseq
      %v8448 = vshrl.u32 %v8447, 7
      %v8449 = vsub.s32 0, %v8448
      %v8450 = vrot.slane %v8445, %v8449
      %v8456 = vunpack.c.l.b16 %v8441
      %v8457 = vunpack.c.l.b16 %v8442
      %v8458 = vunpack.c.l.b16 %v8443
      %v8459 = vunpack.c.l.b16 %v8444
      %v8460 = vpack.c.b16 %v8457, %v8456
      %v8461 = vpack.c.b16 %v8459, %v8458
      %v8465 = vsel %vm6454, %v8424, 0
      %v8468 = vsel %vm6454, %v8425, 0
      %v8471 = vsel %vm6454, %v8426, 0
      %v8474 = vsel %vm6454, %v8427, 0
      %v8477 = vsel %vm6454, %v8428, 0
      %v8480 = vsel %vm6454, %v8429, 0
      %v8483 = vsel %vm6454, %v8430, 0
      %v8486 = vsel %vm6454, %v8431, 0
      %v8489 = vsel %vm6454, %v8432, 0
      %v8492 = vsel %vm6454, %v8433, 0
      %v8495 = vsel %vm6454, %v8434, 0
      %v8498 = vsel %vm6454, %v8435, 0
      %v8501 = vsel %vm6454, %v8436, 0
      %v8504 = vsel %vm6454, %v8437, 0
      %v8507 = vsel %vm6454, %v8438, 0
      %v8510 = vsel %vm6454, %v8439, 0
      %8512 = vmatprep.subr.bf16.mxu0 0
      %8513 = vmatpush1.bf16.msra.mxu0 %v8460
      %8514 = vmatprep.subr.bf16.mxu0 0
      %8515 = vmatpush1.bf16.msra.mxu0 %v8461
      %8516 = vmatprep.subr.bf16.mxu0 0
      %8517 = vmatpush1.bf16.msra.mxu0 0
      %8518 = vmatprep.subr.bf16.mxu0 0
      %8519 = vmatpush1.bf16.msra.mxu0 0
      %8520 = vmatprep.subr.bf16.mxu0 0
      %8521 = vmatpush1.bf16.msra.mxu0 0
      %8522 = vmatprep.subr.bf16.mxu0 0
      %8523 = vmatpush1.bf16.msra.mxu0 0
      %8524 = vmatprep.subr.bf16.mxu0 0
      %8525 = vmatpush1.bf16.msra.mxu0 0
      %8526 = vmatprep.subr.bf16.mxu0 0
      %8527 = vmatpush1.bf16.msra.mxu0 0
      %8528 = vmatprep.subr.bf16.mxu0 0
      %8529 = vmatpush1.bf16.msra.mxu0 0
      %8530 = vmatprep.subr.bf16.mxu0 0
      %8531 = vmatpush1.bf16.msra.mxu0 0
      %8532 = vmatprep.subr.bf16.mxu0 0
      %8533 = vmatpush1.bf16.msra.mxu0 0
      %8534 = vmatprep.subr.bf16.mxu0 0
      %8535 = vmatpush1.bf16.msra.mxu0 0
      %8536 = vmatprep.subr.bf16.mxu0 0
      %8537 = vmatpush1.bf16.msra.mxu0 0
      %8538 = vmatprep.subr.bf16.mxu0 0
      %8539 = vmatpush1.bf16.msra.mxu0 0
      %8540 = vmatprep.subr.bf16.mxu0 0
      %8541 = vmatpush1.bf16.msra.mxu0 0
      %8542 = vmatprep.subr.bf16.mxu0 0
      %8543 = vmatpush1.bf16.msra.mxu0 0
      %8544 = vmatprep.mubr.bf16.mxu0 0
      %8545 = vmatmul.mubr.bf16.gmra.mrb[0].mxu0 %v8465
      %v8546 = vpop.f32.mrb[0].mxu0
      %v8547 = vadd.f32 %v8450, %v8546
      %v8548 = vpop.f32.mrb[0].mxu0
      %v8549 = vpop.f32.mrb[0].mxu0
      %v8550 = vadd.f32 %v8450, %v8549
      %v8551 = vpop.f32.mrb[0].mxu0
      %8552 = vmatprep.mubr.bf16.mxu0 0
      %8553 = vmatmul.mubr.bf16.gmra.mrb[0].mxu0 %v8468
      %v8554 = vpop.f32.mrb[0].mxu0
      %v8555 = vadd.f32 %v8450, %v8554
      %v8556 = vpop.f32.mrb[0].mxu0
      %v8557 = vpop.f32.mrb[0].mxu0
      %v8558 = vadd.f32 %v8450, %v8557
      %v8559 = vpop.f32.mrb[0].mxu0
      %8560 = vmatprep.mubr.bf16.mxu0 0
      %8561 = vmatmul.mubr.bf16.gmra.mrb[0].mxu0 %v8471
      %v8562 = vpop.f32.mrb[0].mxu0
      %v8563 = vadd.f32 %v8450, %v8562
      %v8564 = vpop.f32.mrb[0].mxu0
      %v8565 = vpop.f32.mrb[0].mxu0
      %v8566 = vadd.f32 %v8450, %v8565
      %v8567 = vpop.f32.mrb[0].mxu0
      %8568 = vmatprep.mubr.bf16.mxu0 0
      %8569 = vmatmul.mubr.bf16.gmra.mrb[0].mxu0 %v8474
      %v8570 = vpop.f32.mrb[0].mxu0
      %v8571 = vadd.f32 %v8450, %v8570
      %v8572 = vpop.f32.mrb[0].mxu0
      %v8573 = vpop.f32.mrb[0].mxu0
      %v8574 = vadd.f32 %v8450, %v8573
      %v8575 = vpop.f32.mrb[0].mxu0
      %8576 = vmatprep.mubr.bf16.mxu0 0
      %8577 = vmatmul.mubr.bf16.gmra.mrb[0].mxu0 %v8477
      %v8578 = vpop.f32.mrb[0].mxu0
      %v8579 = vadd.f32 %v8450, %v8578
      %v8580 = vpop.f32.mrb[0].mxu0
      %v8581 = vpop.f32.mrb[0].mxu0
      %v8582 = vadd.f32 %v8450, %v8581
      %v8583 = vpop.f32.mrb[0].mxu0
      %8584 = vmatprep.mubr.bf16.mxu0 0
      %8585 = vmatmul.mubr.bf16.gmra.mrb[0].mxu0 %v8480
      %v8586 = vpop.f32.mrb[0].mxu0
      %v8587 = vadd.f32 %v8450, %v8586
      %v8588 = vpop.f32.mrb[0].mxu0
      %v8589 = vpop.f32.mrb[0].mxu0
      %v8590 = vadd.f32 %v8450, %v8589
      %v8591 = vpop.f32.mrb[0].mxu0
      %8592 = vmatprep.mubr.bf16.mxu0 0
      %8593 = vmatmul.mubr.bf16.gmra.mrb[0].mxu0 %v8483
      %v8594 = vpop.f32.mrb[0].mxu0
      %v8595 = vadd.f32 %v8450, %v8594
      %v8596 = vpop.f32.mrb[0].mxu0
      %v8597 = vpop.f32.mrb[0].mxu0
      %v8598 = vadd.f32 %v8450, %v8597
      %v8599 = vpop.f32.mrb[0].mxu0
      %8600 = vmatprep.mubr.bf16.mxu0 0
      %8601 = vmatmul.mubr.bf16.gmra.mrb[0].mxu0 %v8486
      %v8602 = vpop.f32.mrb[0].mxu0
      %v8603 = vadd.f32 %v8450, %v8602
      %v8604 = vpop.f32.mrb[0].mxu0
      %v8605 = vpop.f32.mrb[0].mxu0
      %v8606 = vadd.f32 %v8450, %v8605
      %v8607 = vpop.f32.mrb[0].mxu0
      %8608 = vmatprep.mubr.bf16.mxu0 0
      %8609 = vmatmul.mubr.bf16.gmra.mrb[0].mxu0 %v8489
      %v8610 = vpop.f32.mrb[0].mxu0
      %v8611 = vadd.f32 %v8450, %v8610
      %v8612 = vpop.f32.mrb[0].mxu0
      %v8613 = vpop.f32.mrb[0].mxu0
      %v8614 = vadd.f32 %v8450, %v8613
      %v8615 = vpop.f32.mrb[0].mxu0
      %8616 = vmatprep.mubr.bf16.mxu0 0
      %8617 = vmatmul.mubr.bf16.gmra.mrb[0].mxu0 %v8492
      %v8618 = vpop.f32.mrb[0].mxu0
      %v8619 = vadd.f32 %v8450, %v8618
      %v8620 = vpop.f32.mrb[0].mxu0
      %v8621 = vpop.f32.mrb[0].mxu0
      %v8622 = vadd.f32 %v8450, %v8621
      %v8623 = vpop.f32.mrb[0].mxu0
      %8624 = vmatprep.mubr.bf16.mxu0 0
      %8625 = vmatmul.mubr.bf16.gmra.mrb[0].mxu0 %v8495
      %v8626 = vpop.f32.mrb[0].mxu0
      %v8627 = vadd.f32 %v8450, %v8626
      %v8628 = vpop.f32.mrb[0].mxu0
      %v8629 = vpop.f32.mrb[0].mxu0
      %v8630 = vadd.f32 %v8450, %v8629
      %v8631 = vpop.f32.mrb[0].mxu0
      %8632 = vmatprep.mubr.bf16.mxu0 0
      %8633 = vmatmul.mubr.bf16.gmra.mrb[0].mxu0 %v8498
      %v8634 = vpop.f32.mrb[0].mxu0
      %v8635 = vadd.f32 %v8450, %v8634
      %v8636 = vpop.f32.mrb[0].mxu0
      %v8637 = vpop.f32.mrb[0].mxu0
      %v8638 = vadd.f32 %v8450, %v8637
      %v8639 = vpop.f32.mrb[0].mxu0
      %8640 = vmatprep.mubr.bf16.mxu0 0
      %8641 = vmatmul.mubr.bf16.gmra.mrb[0].mxu0 %v8501
      %v8642 = vpop.f32.mrb[0].mxu0
      %v8643 = vadd.f32 %v8450, %v8642
      %v8644 = vpop.f32.mrb[0].mxu0
      %v8645 = vpop.f32.mrb[0].mxu0
      %v8646 = vadd.f32 %v8450, %v8645
      %v8647 = vpop.f32.mrb[0].mxu0
      %8648 = vmatprep.mubr.bf16.mxu0 0
      %8649 = vmatmul.mubr.bf16.gmra.mrb[0].mxu0 %v8504
      %v8650 = vpop.f32.mrb[0].mxu0
      %v8651 = vadd.f32 %v8450, %v8650
      %v8652 = vpop.f32.mrb[0].mxu0
      %v8653 = vpop.f32.mrb[0].mxu0
      %v8654 = vadd.f32 %v8450, %v8653
      %v8655 = vpop.f32.mrb[0].mxu0
      %8656 = vmatprep.mubr.bf16.mxu0 0
      %8657 = vmatmul.mubr.bf16.gmra.mrb[0].mxu0 %v8507
      %v8658 = vpop.f32.mrb[0].mxu0
      %v8659 = vadd.f32 %v8450, %v8658
      %v8660 = vpop.f32.mrb[0].mxu0
      %v8661 = vpop.f32.mrb[0].mxu0
      %v8662 = vadd.f32 %v8450, %v8661
      %v8663 = vpop.f32.mrb[0].mxu0
      %8664 = vmatprep.mubr.bf16.mxu0 0
      %8665 = vmatmul.mubr.bf16.gmra.mrb[0].mxu0 %v8510
      %v8666 = vpop.f32.mrb[0].mxu0
      %v8667 = vadd.f32 %v8450, %v8666
      %v8668 = vpop.f32.mrb[0].mxu0
      %v8669 = vpop.f32.mrb[0].mxu0
      %v8670 = vadd.f32 %v8450, %v8669
      %v8671 = vpop.f32.mrb[0].mxu0
      %8672 = vdwg.mxu0
      %v8673 = vmax.f32 %v8547, 0.0
      %v8674 = vmax.f32 %v8550, 0.0
      %v8675 = vmax.f32 %v8555, 0.0
      %v8676 = vmax.f32 %v8558, 0.0
      %v8677 = vmax.f32 %v8563, 0.0
      %v8678 = vmax.f32 %v8566, 0.0
      %v8679 = vmax.f32 %v8571, 0.0
      %v8680 = vmax.f32 %v8574, 0.0
      %v8681 = vmax.f32 %v8579, 0.0
      %v8682 = vmax.f32 %v8582, 0.0
      %v8683 = vmax.f32 %v8587, 0.0
      %v8684 = vmax.f32 %v8590, 0.0
      %v8685 = vmax.f32 %v8595, 0.0
      %v8686 = vmax.f32 %v8598, 0.0
      %v8687 = vmax.f32 %v8603, 0.0
      %v8688 = vmax.f32 %v8606, 0.0
      %v8689 = vmax.f32 %v8611, 0.0
      %v8690 = vmax.f32 %v8614, 0.0
      %v8691 = vmax.f32 %v8619, 0.0
      %v8692 = vmax.f32 %v8622, 0.0
      %v8693 = vmax.f32 %v8627, 0.0
      %v8694 = vmax.f32 %v8630, 0.0
      %v8695 = vmax.f32 %v8635, 0.0
      %v8696 = vmax.f32 %v8638, 0.0
      %v8697 = vmax.f32 %v8643, 0.0
      %v8698 = vmax.f32 %v8646, 0.0
      %v8699 = vmax.f32 %v8651, 0.0
      %v8700 = vmax.f32 %v8654, 0.0
      %v8701 = vmax.f32 %v8659, 0.0
      %v8702 = vmax.f32 %v8662, 0.0
      %v8703 = vmax.f32 %v8667, 0.0
      %v8704 = vmax.f32 %v8670, 0.0
      %s8705 = scalar_lea.vmem %s278, 256
      %8706 = vst.msk [vmem:[%s8705] sm:$0xff] %vm1204, %v8673
      %8707 = vst.msk [vmem:[%s8705 + $0x8] sm:$0xff] %vm1204, %v8674
      %8708 = vst.msk [vmem:[%s8705 + $0x10] sm:$0xff] %vm1204, %v8675
      %8709 = vst.msk [vmem:[%s8705 + $0x18] sm:$0xff] %vm1204, %v8676
      %8710 = vst.msk [vmem:[%s8705 + $0x20] sm:$0xff] %vm1204, %v8677
      %8711 = vst.msk [vmem:[%s8705 + $0x28] sm:$0xff] %vm1204, %v8678
      %8712 = vst.msk [vmem:[%s8705 + $0x30] sm:$0xff] %vm1204, %v8679
      %8713 = vst.msk [vmem:[%s8705 + $0x38] sm:$0xff] %vm1204, %v8680
      %8714 = vst.msk [vmem:[%s8705 + $0x40] sm:$0xff] %vm1204, %v8681
      %8715 = vst.msk [vmem:[%s8705 + $0x48] sm:$0xff] %vm1204, %v8682
      %8716 = vst.msk [vmem:[%s8705 + $0x50] sm:$0xff] %vm1204, %v8683
      %8717 = vst.msk [vmem:[%s8705 + $0x58] sm:$0xff] %vm1204, %v8684
      %8718 = vst.msk [vmem:[%s8705 + $0x60] sm:$0xff] %vm1204, %v8685
      %8719 = vst.msk [vmem:[%s8705 + $0x68] sm:$0xff] %vm1204, %v8686
      %8720 = vst.msk [vmem:[%s8705 + $0x70] sm:$0xff] %vm1204, %v8687
      %8721 = vst.msk [vmem:[%s8705 + $0x78] sm:$0xff] %vm1204, %v8688
      %8722 = vst.msk [vmem:[%s8705 + $0x80] sm:$0xff] %vm1204, %v8689
      %8723 = vst.msk [vmem:[%s8705 + $0x88] sm:$0xff] %vm1204, %v8690
      %8724 = vst.msk [vmem:[%s8705 + $0x90] sm:$0xff] %vm1204, %v8691
      %8725 = vst.msk [vmem:[%s8705 + $0x98] sm:$0xff] %vm1204, %v8692
      %8726 = vst.msk [vmem:[%s8705 + $0xa0] sm:$0xff] %vm1204, %v8693
      %8727 = vst.msk [vmem:[%s8705 + $0xa8] sm:$0xff] %vm1204, %v8694
      %8728 = vst.msk [vmem:[%s8705 + $0xb0] sm:$0xff] %vm1204, %v8695
      %8729 = vst.msk [vmem:[%s8705 + $0xb8] sm:$0xff] %vm1204, %v8696
      %8730 = vst.msk [vmem:[%s8705 + $0xc0] sm:$0xff] %vm1204, %v8697
      %8731 = vst.msk [vmem:[%s8705 + $0xc8] sm:$0xff] %vm1204, %v8698
      %8732 = vst.msk [vmem:[%s8705 + $0xd0] sm:$0xff] %vm1204, %v8699
      %8733 = vst.msk [vmem:[%s8705 + $0xd8] sm:$0xff] %vm1204, %v8700
      %8734 = vst.msk [vmem:[%s8705 + $0xe0] sm:$0xff] %vm1204, %v8701
      %8735 = vst.msk [vmem:[%s8705 + $0xe8] sm:$0xff] %vm1204, %v8702
      %8736 = vst.msk [vmem:[%s8705 + $0xf0] sm:$0xff] %vm1204, %v8703
      %8737 = vst.msk [vmem:[%s8705 + $0xf8] sm:$0xff] %vm1204, %v8704
      %v8738 = vld [vmem:[%s4885] sm:$0xf]
      %v8739 = vld [vmem:[%s4885 + $0x4] sm:$0xf]
      %v8740 = vld [vmem:[%s4885 + $0xc] sm:$0xf]
      %v8741 = vld [vmem:[%s4885 + $0x10] sm:$0xf]
      %v8742 = vld [vmem:[%s4885 + $0x18] sm:$0xf]
      %v8743 = vld [vmem:[%s4885 + $0x1c] sm:$0xf]
      %v8744 = vld [vmem:[%s4885 + $0x24] sm:$0xf]
      %v8745 = vld [vmem:[%s4885 + $0x28] sm:$0xf]
      %v8746 = vld [vmem:[%s4885 + $0x30] sm:$0xf]
      %v8747 = vld [vmem:[%s4885 + $0x34] sm:$0xf]
      %v8748 = vld [vmem:[%s4885 + $0x3c] sm:$0xf]
      %v8749 = vld [vmem:[%s4885 + $0x40] sm:$0xf]
      %v8750 = vld [vmem:[%s4885 + $0x48] sm:$0xf]
      %v8751 = vld [vmem:[%s4885 + $0x4c] sm:$0xf]
      %v8752 = vld [vmem:[%s4885 + $0x54] sm:$0xf]
      %v8753 = vld [vmem:[%s4885 + $0x58] sm:$0xf]
      %v8754 = vld [vmem:[%s4885 + $0x60] sm:$0xf]
      %v8755 = vld [vmem:[%s4885 + $0x64] sm:$0xf]
      %v8756 = vld [vmem:[%s4885 + $0x6c] sm:$0xf]
      %v8757 = vld [vmem:[%s4885 + $0x70] sm:$0xf]
      %v8758 = vld [vmem:[%s4885 + $0x78] sm:$0xf]
      %v8759 = vld [vmem:[%s4885 + $0x7c] sm:$0xf]
      %v8760 = vld [vmem:[%s4885 + $0x84] sm:$0xf]
      %v8761 = vld [vmem:[%s4885 + $0x88] sm:$0xf]
      %v8762 = vld [vmem:[%s4885 + $0x90] sm:$0xf]
      %v8763 = vld [vmem:[%s4885 + $0x94] sm:$0xf]
      %v8764 = vld [vmem:[%s4885 + $0x9c] sm:$0xf]
      %v8765 = vld [vmem:[%s4885 + $0xa0] sm:$0xf]
      %v8766 = vld [vmem:[%s4885 + $0xa8] sm:$0xf]
      %v8767 = vld [vmem:[%s4885 + $0xac] sm:$0xf]
      %v8768 = vld [vmem:[%s4885 + $0xb4] sm:$0xf]
      %v8769 = vld [vmem:[%s4885 + $0xb8] sm:$0xf]
      %v8802 = vunpack.c.l.b16 %v8738
      %v8803 = vunpack.c.l.b16 %v8739
      %v8804 = vunpack.c.l.b16 %v8740
      %v8805 = vunpack.c.l.b16 %v8741
      %v8806 = vunpack.c.l.b16 %v8742
      %v8807 = vunpack.c.l.b16 %v8743
      %v8808 = vunpack.c.l.b16 %v8744
      %v8809 = vunpack.c.l.b16 %v8745
      %v8810 = vunpack.c.l.b16 %v8746
      %v8811 = vunpack.c.l.b16 %v8747
      %v8812 = vunpack.c.l.b16 %v8748
      %v8813 = vunpack.c.l.b16 %v8749
      %v8814 = vunpack.c.l.b16 %v8750
      %v8815 = vunpack.c.l.b16 %v8751
      %v8816 = vunpack.c.l.b16 %v8752
      %v8817 = vunpack.c.l.b16 %v8753
      %v8818 = vunpack.c.l.b16 %v8754
      %v8819 = vunpack.c.l.b16 %v8755
      %v8820 = vunpack.c.l.b16 %v8756
      %v8821 = vunpack.c.l.b16 %v8757
      %v8822 = vunpack.c.l.b16 %v8758
      %v8823 = vunpack.c.l.b16 %v8759
      %v8824 = vunpack.c.l.b16 %v8760
      %v8825 = vunpack.c.l.b16 %v8761
      %v8826 = vunpack.c.l.b16 %v8762
      %v8827 = vunpack.c.l.b16 %v8763
      %v8828 = vunpack.c.l.b16 %v8764
      %v8829 = vunpack.c.l.b16 %v8765
      %v8830 = vunpack.c.l.b16 %v8766
      %v8831 = vunpack.c.l.b16 %v8767
      %v8832 = vunpack.c.l.b16 %v8768
      %v8833 = vunpack.c.l.b16 %v8769
      %v8834 = vpack.c.b16 %v8803, %v8802
      %v8835 = vpack.c.b16 %v8805, %v8804
      %v8836 = vpack.c.b16 %v8807, %v8806
      %v8837 = vpack.c.b16 %v8809, %v8808
      %v8838 = vpack.c.b16 %v8811, %v8810
      %v8839 = vpack.c.b16 %v8813, %v8812
      %v8840 = vpack.c.b16 %v8815, %v8814
      %v8841 = vpack.c.b16 %v8817, %v8816
      %v8842 = vpack.c.b16 %v8819, %v8818
      %v8843 = vpack.c.b16 %v8821, %v8820
      %v8844 = vpack.c.b16 %v8823, %v8822
      %v8845 = vpack.c.b16 %v8825, %v8824
      %v8846 = vpack.c.b16 %v8827, %v8826
      %v8847 = vpack.c.b16 %v8829, %v8828
      %v8848 = vpack.c.b16 %v8831, %v8830
      %v8849 = vpack.c.b16 %v8833, %v8832
      %8866 = vst.msk [vmem:[#allocation5] sm:$0xff] %vm5131, %v8834
      %8867 = vst.msk [vmem:[#allocation5 + $0x8] sm:$0xff] %vm5131, %v8835
      %8868 = vst.msk [vmem:[#allocation5 + $0x10] sm:$0xff] %vm5131, %v8836
      %8869 = vst.msk [vmem:[#allocation5 + $0x18] sm:$0xff] %vm5131, %v8837
      %8870 = vst.msk [vmem:[#allocation5 + $0x20] sm:$0xff] %vm5131, %v8838
      %8871 = vst.msk [vmem:[#allocation5 + $0x28] sm:$0xff] %vm5131, %v8839
      %8872 = vst.msk [vmem:[#allocation5 + $0x30] sm:$0xff] %vm5131, %v8840
      %8873 = vst.msk [vmem:[#allocation5 + $0x38] sm:$0xff] %vm5131, %v8841
      %8874 = vst.msk [vmem:[#allocation5 + $0x40] sm:$0xff] %vm5131, %v8842
      %8875 = vst.msk [vmem:[#allocation5 + $0x48] sm:$0xff] %vm5131, %v8843
      %8876 = vst.msk [vmem:[#allocation5 + $0x50] sm:$0xff] %vm5131, %v8844
      %8877 = vst.msk [vmem:[#allocation5 + $0x58] sm:$0xff] %vm5131, %v8845
      %8878 = vst.msk [vmem:[#allocation5 + $0x60] sm:$0xff] %vm5131, %v8846
      %8879 = vst.msk [vmem:[#allocation5 + $0x68] sm:$0xff] %vm5131, %v8847
      %8880 = vst.msk [vmem:[#allocation5 + $0x70] sm:$0xff] %vm5131, %v8848
      %8881 = vst.msk [vmem:[#allocation5 + $0x78] sm:$0xff] %vm5131, %v8849
      %v8882 = vld [vmem:[%s4885] sm:$0xf]
      %v8883 = vld [vmem:[%s4885 + $0x4] sm:$0xf]
      %v8884 = vld [vmem:[%s4885 + $0x8] sm:$0x1]
      %v8885 = vld [vmem:[%s4885 + $0xc] sm:$0xf]
      %v8886 = vld [vmem:[%s4885 + $0x10] sm:$0xf]
      %v8887 = vld [vmem:[%s4885 + $0x14] sm:$0x1]
      %v8888 = vld [vmem:[%s4885 + $0x18] sm:$0xf]
      %v8889 = vld [vmem:[%s4885 + $0x1c] sm:$0xf]
      %v8890 = vld [vmem:[%s4885 + $0x20] sm:$0x1]
      %v8891 = vld [vmem:[%s4885 + $0x24] sm:$0xf]
      %v8892 = vld [vmem:[%s4885 + $0x28] sm:$0xf]
      %v8893 = vld [vmem:[%s4885 + $0x2c] sm:$0x1]
      %v8894 = vld [vmem:[%s4885 + $0x30] sm:$0xf]
      %v8895 = vld [vmem:[%s4885 + $0x34] sm:$0xf]
      %v8896 = vld [vmem:[%s4885 + $0x38] sm:$0x1]
      %v8897 = vld [vmem:[%s4885 + $0x3c] sm:$0xf]
      %v8898 = vld [vmem:[%s4885 + $0x40] sm:$0xf]
      %v8899 = vld [vmem:[%s4885 + $0x44] sm:$0x1]
      %v8900 = vld [vmem:[%s4885 + $0x48] sm:$0xf]
      %v8901 = vld [vmem:[%s4885 + $0x4c] sm:$0xf]
      %v8902 = vld [vmem:[%s4885 + $0x50] sm:$0x1]
      %v8903 = vld [vmem:[%s4885 + $0x54] sm:$0xf]
      %v8904 = vld [vmem:[%s4885 + $0x58] sm:$0xf]
      %v8905 = vld [vmem:[%s4885 + $0x5c] sm:$0x1]
      %v8906 = vld [vmem:[%s4885 + $0x60] sm:$0xf]
      %v8907 = vld [vmem:[%s4885 + $0x64] sm:$0xf]
      %v8908 = vld [vmem:[%s4885 + $0x68] sm:$0x1]
      %v8909 = vld [vmem:[%s4885 + $0x6c] sm:$0xf]
      %v8910 = vld [vmem:[%s4885 + $0x70] sm:$0xf]
      %v8911 = vld [vmem:[%s4885 + $0x74] sm:$0x1]
      %v8912 = vld [vmem:[%s4885 + $0x78] sm:$0xf]
      %v8913 = vld [vmem:[%s4885 + $0x7c] sm:$0xf]
      %v8914 = vld [vmem:[%s4885 + $0x80] sm:$0x1]
      %v8915 = vld [vmem:[%s4885 + $0x84] sm:$0xf]
      %v8916 = vld [vmem:[%s4885 + $0x88] sm:$0xf]
      %v8917 = vld [vmem:[%s4885 + $0x8c] sm:$0x1]
      %v8918 = vld [vmem:[%s4885 + $0x90] sm:$0xf]
      %v8919 = vld [vmem:[%s4885 + $0x94] sm:$0xf]
      %v8920 = vld [vmem:[%s4885 + $0x98] sm:$0x1]
      %v8921 = vld [vmem:[%s4885 + $0x9c] sm:$0xf]
      %v8922 = vld [vmem:[%s4885 + $0xa0] sm:$0xf]
      %v8923 = vld [vmem:[%s4885 + $0xa4] sm:$0x1]
      %v8924 = vld [vmem:[%s4885 + $0xa8] sm:$0xf]
      %v8925 = vld [vmem:[%s4885 + $0xac] sm:$0xf]
      %v8926 = vld [vmem:[%s4885 + $0xb0] sm:$0x1]
      %v8927 = vld [vmem:[%s4885 + $0xb4] sm:$0xf]
      %v8928 = vld [vmem:[%s4885 + $0xb8] sm:$0xf]
      %v8929 = vld [vmem:[%s4885 + $0xbc] sm:$0x1]
      %v8931 = vshrl.u32 %v8882, 16
      %v8933 = vrot.slane %v8931, 4
      %v8934 = vshll.u32 %v8882, 16
      %v8936 = vrot.slane %v8934, 5
      %v8937 = vor.u32 %v8933, %v8936
      %v8938 = vrot.slane %v8937, 4
      %v8940 = vshll.u32 %v8883, 16
      %v8942 = vrot.slane %v8940, 5
      %v8943 = vsel %vm1271, %v8938, %v8942
      %v8944 = vshrl.u32 %v8883, 16
      %v8946 = vrot.slane %v8944, 4
      %v8947 = vor.u32 %v8946, %v8942
      %v8948 = vrot.slane %v8947, 4
      %v8950 = vshll.u32 %v8884, 16
      %v8952 = vrot.slane %v8950, 5
      %v8953 = vsel %vm1271, %v8948, %v8952
      %v8955 = vshrl.u32 %v8885, 16
      %v8957 = vrot.slane %v8955, 4
      %v8958 = vshll.u32 %v8885, 16
      %v8960 = vrot.slane %v8958, 5
      %v8961 = vor.u32 %v8957, %v8960
      %v8962 = vrot.slane %v8961, 4
      %v8964 = vshll.u32 %v8886, 16
      %v8966 = vrot.slane %v8964, 5
      %v8967 = vsel %vm1271, %v8962, %v8966
      %v8968 = vshrl.u32 %v8886, 16
      %v8970 = vrot.slane %v8968, 4
      %v8971 = vor.u32 %v8970, %v8966
      %v8972 = vrot.slane %v8971, 4
      %v8974 = vshll.u32 %v8887, 16
      %v8976 = vrot.slane %v8974, 5
      %v8977 = vsel %vm1271, %v8972, %v8976
      %v8979 = vshrl.u32 %v8888, 16
      %v8981 = vrot.slane %v8979, 4
      %v8982 = vshll.u32 %v8888, 16
      %v8984 = vrot.slane %v8982, 5
      %v8985 = vor.u32 %v8981, %v8984
      %v8986 = vrot.slane %v8985, 4
      %v8988 = vshll.u32 %v8889, 16
      %v8990 = vrot.slane %v8988, 5
      %v8991 = vsel %vm1271, %v8986, %v8990
      %v8992 = vshrl.u32 %v8889, 16
      %v8994 = vrot.slane %v8992, 4
      %v8995 = vor.u32 %v8994, %v8990
      %v8996 = vrot.slane %v8995, 4
      %v8998 = vshll.u32 %v8890, 16
      %v9000 = vrot.slane %v8998, 5
      %v9001 = vsel %vm1271, %v8996, %v9000
      %v9003 = vshrl.u32 %v8891, 16
      %v9005 = vrot.slane %v9003, 4
      %v9006 = vshll.u32 %v8891, 16
      %v9008 = vrot.slane %v9006, 5
      %v9009 = vor.u32 %v9005, %v9008
      %v9010 = vrot.slane %v9009, 4
      %v9012 = vshll.u32 %v8892, 16
      %v9014 = vrot.slane %v9012, 5
      %v9015 = vsel %vm1271, %v9010, %v9014
      %v9016 = vshrl.u32 %v8892, 16
      %v9018 = vrot.slane %v9016, 4
      %v9019 = vor.u32 %v9018, %v9014
      %v9020 = vrot.slane %v9019, 4
      %v9022 = vshll.u32 %v8893, 16
      %v9024 = vrot.slane %v9022, 5
      %v9025 = vsel %vm1271, %v9020, %v9024
      %v9027 = vshrl.u32 %v8894, 16
      %v9029 = vrot.slane %v9027, 4
      %v9030 = vshll.u32 %v8894, 16
      %v9032 = vrot.slane %v9030, 5
      %v9033 = vor.u32 %v9029, %v9032
      %v9034 = vrot.slane %v9033, 4
      %v9036 = vshll.u32 %v8895, 16
      %v9038 = vrot.slane %v9036, 5
      %v9039 = vsel %vm1271, %v9034, %v9038
      %v9040 = vshrl.u32 %v8895, 16
      %v9042 = vrot.slane %v9040, 4
      %v9043 = vor.u32 %v9042, %v9038
      %v9044 = vrot.slane %v9043, 4
      %v9046 = vshll.u32 %v8896, 16
      %v9048 = vrot.slane %v9046, 5
      %v9049 = vsel %vm1271, %v9044, %v9048
      %v9051 = vshrl.u32 %v8897, 16
      %v9053 = vrot.slane %v9051, 4
      %v9054 = vshll.u32 %v8897, 16
      %v9056 = vrot.slane %v9054, 5
      %v9057 = vor.u32 %v9053, %v9056
      %v9058 = vrot.slane %v9057, 4
      %v9060 = vshll.u32 %v8898, 16
      %v9062 = vrot.slane %v9060, 5
      %v9063 = vsel %vm1271, %v9058, %v9062
      %v9064 = vshrl.u32 %v8898, 16
      %v9066 = vrot.slane %v9064, 4
      %v9067 = vor.u32 %v9066, %v9062
      %v9068 = vrot.slane %v9067, 4
      %v9070 = vshll.u32 %v8899, 16
      %v9072 = vrot.slane %v9070, 5
      %v9073 = vsel %vm1271, %v9068, %v9072
      %v9075 = vshrl.u32 %v8900, 16
      %v9077 = vrot.slane %v9075, 4
      %v9078 = vshll.u32 %v8900, 16
      %v9080 = vrot.slane %v9078, 5
      %v9081 = vor.u32 %v9077, %v9080
      %v9082 = vrot.slane %v9081, 4
      %v9084 = vshll.u32 %v8901, 16
      %v9086 = vrot.slane %v9084, 5
      %v9087 = vsel %vm1271, %v9082, %v9086
      %v9088 = vshrl.u32 %v8901, 16
      %v9090 = vrot.slane %v9088, 4
      %v9091 = vor.u32 %v9090, %v9086
      %v9092 = vrot.slane %v9091, 4
      %v9094 = vshll.u32 %v8902, 16
      %v9096 = vrot.slane %v9094, 5
      %v9097 = vsel %vm1271, %v9092, %v9096
      %v9099 = vshrl.u32 %v8903, 16
      %v9101 = vrot.slane %v9099, 4
      %v9102 = vshll.u32 %v8903, 16
      %v9104 = vrot.slane %v9102, 5
      %v9105 = vor.u32 %v9101, %v9104
      %v9106 = vrot.slane %v9105, 4
      %v9108 = vshll.u32 %v8904, 16
      %v9110 = vrot.slane %v9108, 5
      %v9111 = vsel %vm1271, %v9106, %v9110
      %v9112 = vshrl.u32 %v8904, 16
      %v9114 = vrot.slane %v9112, 4
      %v9115 = vor.u32 %v9114, %v9110
      %v9116 = vrot.slane %v9115, 4
      %v9118 = vshll.u32 %v8905, 16
      %v9120 = vrot.slane %v9118, 5
      %v9121 = vsel %vm1271, %v9116, %v9120
      %v9123 = vshrl.u32 %v8906, 16
      %v9125 = vrot.slane %v9123, 4
      %v9126 = vshll.u32 %v8906, 16
      %v9128 = vrot.slane %v9126, 5
      %v9129 = vor.u32 %v9125, %v9128
      %v9130 = vrot.slane %v9129, 4
      %v9132 = vshll.u32 %v8907, 16
      %v9134 = vrot.slane %v9132, 5
      %v9135 = vsel %vm1271, %v9130, %v9134
      %v9136 = vshrl.u32 %v8907, 16
      %v9138 = vrot.slane %v9136, 4
      %v9139 = vor.u32 %v9138, %v9134
      %v9140 = vrot.slane %v9139, 4
      %v9142 = vshll.u32 %v8908, 16
      %v9144 = vrot.slane %v9142, 5
      %v9145 = vsel %vm1271, %v9140, %v9144
      %v9147 = vshrl.u32 %v8909, 16
      %v9149 = vrot.slane %v9147, 4
      %v9150 = vshll.u32 %v8909, 16
      %v9152 = vrot.slane %v9150, 5
      %v9153 = vor.u32 %v9149, %v9152
      %v9154 = vrot.slane %v9153, 4
      %v9156 = vshll.u32 %v8910, 16
      %v9158 = vrot.slane %v9156, 5
      %v9159 = vsel %vm1271, %v9154, %v9158
      %v9160 = vshrl.u32 %v8910, 16
      %v9162 = vrot.slane %v9160, 4
      %v9163 = vor.u32 %v9162, %v9158
      %v9164 = vrot.slane %v9163, 4
      %v9166 = vshll.u32 %v8911, 16
      %v9168 = vrot.slane %v9166, 5
      %v9169 = vsel %vm1271, %v9164, %v9168
      %v9171 = vshrl.u32 %v8912, 16
      %v9173 = vrot.slane %v9171, 4
      %v9174 = vshll.u32 %v8912, 16
      %v9176 = vrot.slane %v9174, 5
      %v9177 = vor.u32 %v9173, %v9176
      %v9178 = vrot.slane %v9177, 4
      %v9180 = vshll.u32 %v8913, 16
      %v9182 = vrot.slane %v9180, 5
      %v9183 = vsel %vm1271, %v9178, %v9182
      %v9184 = vshrl.u32 %v8913, 16
      %v9186 = vrot.slane %v9184, 4
      %v9187 = vor.u32 %v9186, %v9182
      %v9188 = vrot.slane %v9187, 4
      %v9190 = vshll.u32 %v8914, 16
      %v9192 = vrot.slane %v9190, 5
      %v9193 = vsel %vm1271, %v9188, %v9192
      %v9195 = vshrl.u32 %v8915, 16
      %v9197 = vrot.slane %v9195, 4
      %v9198 = vshll.u32 %v8915, 16
      %v9200 = vrot.slane %v9198, 5
      %v9201 = vor.u32 %v9197, %v9200
      %v9202 = vrot.slane %v9201, 4
      %v9204 = vshll.u32 %v8916, 16
      %v9206 = vrot.slane %v9204, 5
      %v9207 = vsel %vm1271, %v9202, %v9206
      %v9208 = vshrl.u32 %v8916, 16
      %v9210 = vrot.slane %v9208, 4
      %v9211 = vor.u32 %v9210, %v9206
      %v9212 = vrot.slane %v9211, 4
      %v9214 = vshll.u32 %v8917, 16
      %v9216 = vrot.slane %v9214, 5
      %v9217 = vsel %vm1271, %v9212, %v9216
      %v9219 = vshrl.u32 %v8918, 16
      %v9221 = vrot.slane %v9219, 4
      %v9222 = vshll.u32 %v8918, 16
      %v9224 = vrot.slane %v9222, 5
      %v9225 = vor.u32 %v9221, %v9224
      %v9226 = vrot.slane %v9225, 4
      %v9228 = vshll.u32 %v8919, 16
      %v9230 = vrot.slane %v9228, 5
      %v9231 = vsel %vm1271, %v9226, %v9230
      %v9232 = vshrl.u32 %v8919, 16
      %v9234 = vrot.slane %v9232, 4
      %v9235 = vor.u32 %v9234, %v9230
      %v9236 = vrot.slane %v9235, 4
      %v9238 = vshll.u32 %v8920, 16
      %v9240 = vrot.slane %v9238, 5
      %v9241 = vsel %vm1271, %v9236, %v9240
      %v9243 = vshrl.u32 %v8921, 16
      %v9245 = vrot.slane %v9243, 4
      %v9246 = vshll.u32 %v8921, 16
      %v9248 = vrot.slane %v9246, 5
      %v9249 = vor.u32 %v9245, %v9248
      %v9250 = vrot.slane %v9249, 4
      %v9252 = vshll.u32 %v8922, 16
      %v9254 = vrot.slane %v9252, 5
      %v9255 = vsel %vm1271, %v9250, %v9254
      %v9256 = vshrl.u32 %v8922, 16
      %v9258 = vrot.slane %v9256, 4
      %v9259 = vor.u32 %v9258, %v9254
      %v9260 = vrot.slane %v9259, 4
      %v9262 = vshll.u32 %v8923, 16
      %v9264 = vrot.slane %v9262, 5
      %v9265 = vsel %vm1271, %v9260, %v9264
      %v9267 = vshrl.u32 %v8924, 16
      %v9269 = vrot.slane %v9267, 4
      %v9270 = vshll.u32 %v8924, 16
      %v9272 = vrot.slane %v9270, 5
      %v9273 = vor.u32 %v9269, %v9272
      %v9274 = vrot.slane %v9273, 4
      %v9276 = vshll.u32 %v8925, 16
      %v9278 = vrot.slane %v9276, 5
      %v9279 = vsel %vm1271, %v9274, %v9278
      %v9280 = vshrl.u32 %v8925, 16
      %v9282 = vrot.slane %v9280, 4
      %v9283 = vor.u32 %v9282, %v9278
      %v9284 = vrot.slane %v9283, 4
      %v9286 = vshll.u32 %v8926, 16
      %v9288 = vrot.slane %v9286, 5
      %v9289 = vsel %vm1271, %v9284, %v9288
      %v9291 = vshrl.u32 %v8927, 16
      %v9293 = vrot.slane %v9291, 4
      %v9294 = vshll.u32 %v8927, 16
      %v9296 = vrot.slane %v9294, 5
      %v9297 = vor.u32 %v9293, %v9296
      %v9298 = vrot.slane %v9297, 4
      %v9300 = vshll.u32 %v8928, 16
      %v9302 = vrot.slane %v9300, 5
      %v9303 = vsel %vm1271, %v9298, %v9302
      %v9304 = vshrl.u32 %v8928, 16
      %v9306 = vrot.slane %v9304, 4
      %v9307 = vor.u32 %v9306, %v9302
      %v9308 = vrot.slane %v9307, 4
      %v9310 = vshll.u32 %v8929, 16
      %v9312 = vrot.slane %v9310, 5
      %v9313 = vsel %vm1271, %v9308, %v9312
      %v9314 = vunpack.c.l.b16 %v8943
      %v9315 = vunpack.c.l.b16 %v8953
      %v9316 = vunpack.c.l.b16 %v8967
      %v9317 = vunpack.c.l.b16 %v8977
      %v9318 = vunpack.c.l.b16 %v8991
      %v9319 = vunpack.c.l.b16 %v9001
      %v9320 = vunpack.c.l.b16 %v9015
      %v9321 = vunpack.c.l.b16 %v9025
      %v9322 = vunpack.c.l.b16 %v9039
      %v9323 = vunpack.c.l.b16 %v9049
      %v9324 = vunpack.c.l.b16 %v9063
      %v9325 = vunpack.c.l.b16 %v9073
      %v9326 = vunpack.c.l.b16 %v9087
      %v9327 = vunpack.c.l.b16 %v9097
      %v9328 = vunpack.c.l.b16 %v9111
      %v9329 = vunpack.c.l.b16 %v9121
      %v9330 = vunpack.c.l.b16 %v9135
      %v9331 = vunpack.c.l.b16 %v9145
      %v9332 = vunpack.c.l.b16 %v9159
      %v9333 = vunpack.c.l.b16 %v9169
      %v9334 = vunpack.c.l.b16 %v9183
      %v9335 = vunpack.c.l.b16 %v9193
      %v9336 = vunpack.c.l.b16 %v9207
      %v9337 = vunpack.c.l.b16 %v9217
      %v9338 = vunpack.c.l.b16 %v9231
      %v9339 = vunpack.c.l.b16 %v9241
      %v9340 = vunpack.c.l.b16 %v9255
      %v9341 = vunpack.c.l.b16 %v9265
      %v9342 = vunpack.c.l.b16 %v9279
      %v9343 = vunpack.c.l.b16 %v9289
      %v9344 = vunpack.c.l.b16 %v9303
      %v9345 = vunpack.c.l.b16 %v9313
      %v9346 = vpack.c.b16 %v9315, %v9314
      %v9347 = vpack.c.b16 %v9317, %v9316
      %v9348 = vpack.c.b16 %v9319, %v9318
      %v9349 = vpack.c.b16 %v9321, %v9320
      %v9350 = vpack.c.b16 %v9323, %v9322
      %v9351 = vpack.c.b16 %v9325, %v9324
      %v9352 = vpack.c.b16 %v9327, %v9326
      %v9353 = vpack.c.b16 %v9329, %v9328
      %v9354 = vpack.c.b16 %v9331, %v9330
      %v9355 = vpack.c.b16 %v9333, %v9332
      %v9356 = vpack.c.b16 %v9335, %v9334
      %v9357 = vpack.c.b16 %v9337, %v9336
      %v9358 = vpack.c.b16 %v9339, %v9338
      %v9359 = vpack.c.b16 %v9341, %v9340
      %v9360 = vpack.c.b16 %v9343, %v9342
      %v9361 = vpack.c.b16 %v9345, %v9344
      %9362 = vrot.lane.b32.xlu0 %v9346, 8
      %v9363 = vpop.permute.xlu0 %9362
      %9364 = vrot.lane.b32.xlu0 %v9347, 8
      %v9365 = vpop.permute.xlu0 %9364
      %9366 = vrot.lane.b32.xlu0 %v9348, 8
      %v9367 = vpop.permute.xlu0 %9366
      %9368 = vrot.lane.b32.xlu0 %v9349, 8
      %v9369 = vpop.permute.xlu0 %9368
      %9370 = vrot.lane.b32.xlu0 %v9350, 8
      %v9371 = vpop.permute.xlu0 %9370
      %9372 = vrot.lane.b32.xlu0 %v9351, 8
      %v9373 = vpop.permute.xlu0 %9372
      %9374 = vrot.lane.b32.xlu0 %v9352, 8
      %v9375 = vpop.permute.xlu0 %9374
      %9376 = vrot.lane.b32.xlu0 %v9353, 8
      %v9377 = vpop.permute.xlu0 %9376
      %9378 = vrot.lane.b32.xlu0 %v9354, 8
      %v9379 = vpop.permute.xlu0 %9378
      %9380 = vrot.lane.b32.xlu0 %v9355, 8
      %v9381 = vpop.permute.xlu0 %9380
      %9382 = vrot.lane.b32.xlu0 %v9356, 8
      %v9383 = vpop.permute.xlu0 %9382
      %9384 = vrot.lane.b32.xlu0 %v9357, 8
      %v9385 = vpop.permute.xlu0 %9384
      %9386 = vrot.lane.b32.xlu0 %v9358, 8
      %v9387 = vpop.permute.xlu0 %9386
      %9388 = vrot.lane.b32.xlu0 %v9359, 8
      %v9389 = vpop.permute.xlu0 %9388
      %9390 = vrot.lane.b32.xlu0 %v9360, 8
      %v9391 = vpop.permute.xlu0 %9390
      %9392 = vrot.lane.b32.xlu0 %v9361, 8
      %v9393 = vpop.permute.xlu0 %9392
      %9410 = vst.msk [vmem:[#allocation5] sm:$0xff] %vm5676, %v9363
      %9411 = vst.msk [vmem:[#allocation5 + $0x8] sm:$0xff] %vm5676, %v9365
      %9412 = vst.msk [vmem:[#allocation5 + $0x10] sm:$0xff] %vm5676, %v9367
      %9413 = vst.msk [vmem:[#allocation5 + $0x18] sm:$0xff] %vm5676, %v9369
      %9414 = vst.msk [vmem:[#allocation5 + $0x20] sm:$0xff] %vm5676, %v9371
      %9415 = vst.msk [vmem:[#allocation5 + $0x28] sm:$0xff] %vm5676, %v9373
      %9416 = vst.msk [vmem:[#allocation5 + $0x30] sm:$0xff] %vm5676, %v9375
      %9417 = vst.msk [vmem:[#allocation5 + $0x38] sm:$0xff] %vm5676, %v9377
      %9418 = vst.msk [vmem:[#allocation5 + $0x40] sm:$0xff] %vm5676, %v9379
      %9419 = vst.msk [vmem:[#allocation5 + $0x48] sm:$0xff] %vm5676, %v9381
      %9420 = vst.msk [vmem:[#allocation5 + $0x50] sm:$0xff] %vm5676, %v9383
      %9421 = vst.msk [vmem:[#allocation5 + $0x58] sm:$0xff] %vm5676, %v9385
      %9422 = vst.msk [vmem:[#allocation5 + $0x60] sm:$0xff] %vm5676, %v9387
      %9423 = vst.msk [vmem:[#allocation5 + $0x68] sm:$0xff] %vm5676, %v9389
      %9424 = vst.msk [vmem:[#allocation5 + $0x70] sm:$0xff] %vm5676, %v9391
      %9425 = vst.msk [vmem:[#allocation5 + $0x78] sm:$0xff] %vm5676, %v9393
      %s9426 = scalar_lea.vmem [#allocation3], 24
      %v9427 = vld [vmem:[%s9426] sm:$0xf]
      %v9428 = vld [vmem:[%s9426 + $0x4] sm:$0xf]
      %v9429 = vld [vmem:[%s9426 + $0xc] sm:$0xf]
      %v9430 = vld [vmem:[%s9426 + $0x10] sm:$0xf]
      %v9431 = vld [vmem:[%s9426 + $0x18] sm:$0xf]
      %v9432 = vld [vmem:[%s9426 + $0x1c] sm:$0xf]
      %v9433 = vld [vmem:[%s9426 + $0x24] sm:$0xf]
      %v9434 = vld [vmem:[%s9426 + $0x28] sm:$0xf]
      %v9435 = vld [vmem:[%s9426 + $0x30] sm:$0xf]
      %v9436 = vld [vmem:[%s9426 + $0x34] sm:$0xf]
      %v9437 = vld [vmem:[%s9426 + $0x3c] sm:$0xf]
      %v9438 = vld [vmem:[%s9426 + $0x40] sm:$0xf]
      %v9439 = vld [vmem:[%s9426 + $0x48] sm:$0xf]
      %v9440 = vld [vmem:[%s9426 + $0x4c] sm:$0xf]
      %v9441 = vld [vmem:[%s9426 + $0x54] sm:$0xf]
      %v9442 = vld [vmem:[%s9426 + $0x58] sm:$0xf]
      %v9443 = vld [vmem:[%s9426 + $0x60] sm:$0xf]
      %v9444 = vld [vmem:[%s9426 + $0x64] sm:$0xf]
      %v9445 = vld [vmem:[%s9426 + $0x6c] sm:$0xf]
      %v9446 = vld [vmem:[%s9426 + $0x70] sm:$0xf]
      %v9447 = vld [vmem:[%s9426 + $0x78] sm:$0xf]
      %v9448 = vld [vmem:[%s9426 + $0x7c] sm:$0xf]
      %v9449 = vld [vmem:[%s9426 + $0x84] sm:$0xf]
      %v9450 = vld [vmem:[%s9426 + $0x88] sm:$0xf]
      %v9451 = vld [vmem:[%s9426 + $0x90] sm:$0xf]
      %v9452 = vld [vmem:[%s9426 + $0x94] sm:$0xf]
      %v9453 = vld [vmem:[%s9426 + $0x9c] sm:$0xf]
      %v9454 = vld [vmem:[%s9426 + $0xa0] sm:$0xf]
      %v9455 = vld [vmem:[%s9426 + $0xa8] sm:$0xf]
      %v9456 = vld [vmem:[%s9426 + $0xac] sm:$0xf]
      %v9457 = vld [vmem:[%s9426 + $0xb4] sm:$0xf]
      %v9458 = vld [vmem:[%s9426 + $0xb8] sm:$0xf]
      %v9491 = vunpack.c.l.b16 %v9427
      %v9492 = vunpack.c.l.b16 %v9428
      %v9493 = vunpack.c.l.b16 %v9429
      %v9494 = vunpack.c.l.b16 %v9430
      %v9495 = vunpack.c.l.b16 %v9431
      %v9496 = vunpack.c.l.b16 %v9432
      %v9497 = vunpack.c.l.b16 %v9433
      %v9498 = vunpack.c.l.b16 %v9434
      %v9499 = vunpack.c.l.b16 %v9435
      %v9500 = vunpack.c.l.b16 %v9436
      %v9501 = vunpack.c.l.b16 %v9437
      %v9502 = vunpack.c.l.b16 %v9438
      %v9503 = vunpack.c.l.b16 %v9439
      %v9504 = vunpack.c.l.b16 %v9440
      %v9505 = vunpack.c.l.b16 %v9441
      %v9506 = vunpack.c.l.b16 %v9442
      %v9507 = vunpack.c.l.b16 %v9443
      %v9508 = vunpack.c.l.b16 %v9444
      %v9509 = vunpack.c.l.b16 %v9445
      %v9510 = vunpack.c.l.b16 %v9446
      %v9511 = vunpack.c.l.b16 %v9447
      %v9512 = vunpack.c.l.b16 %v9448
      %v9513 = vunpack.c.l.b16 %v9449
      %v9514 = vunpack.c.l.b16 %v9450
      %v9515 = vunpack.c.l.b16 %v9451
      %v9516 = vunpack.c.l.b16 %v9452
      %v9517 = vunpack.c.l.b16 %v9453
      %v9518 = vunpack.c.l.b16 %v9454
      %v9519 = vunpack.c.l.b16 %v9455
      %v9520 = vunpack.c.l.b16 %v9456
      %v9521 = vunpack.c.l.b16 %v9457
      %v9522 = vunpack.c.l.b16 %v9458
      %v9523 = vpack.c.b16 %v9492, %v9491
      %v9524 = vpack.c.b16 %v9494, %v9493
      %v9525 = vpack.c.b16 %v9496, %v9495
      %v9526 = vpack.c.b16 %v9498, %v9497
      %v9527 = vpack.c.b16 %v9500, %v9499
      %v9528 = vpack.c.b16 %v9502, %v9501
      %v9529 = vpack.c.b16 %v9504, %v9503
      %v9530 = vpack.c.b16 %v9506, %v9505
      %v9531 = vpack.c.b16 %v9508, %v9507
      %v9532 = vpack.c.b16 %v9510, %v9509
      %v9533 = vpack.c.b16 %v9512, %v9511
      %v9534 = vpack.c.b16 %v9514, %v9513
      %v9535 = vpack.c.b16 %v9516, %v9515
      %v9536 = vpack.c.b16 %v9518, %v9517
      %v9537 = vpack.c.b16 %v9520, %v9519
      %v9538 = vpack.c.b16 %v9522, %v9521
      %9539 = vrot.lane.b32.xlu0 %v9523, 16
      %v9540 = vpop.permute.xlu0 %9539
      %9541 = vrot.lane.b32.xlu0 %v9524, 16
      %v9542 = vpop.permute.xlu0 %9541
      %9543 = vrot.lane.b32.xlu0 %v9525, 16
      %v9544 = vpop.permute.xlu0 %9543
      %9545 = vrot.lane.b32.xlu0 %v9526, 16
      %v9546 = vpop.permute.xlu0 %9545
      %9547 = vrot.lane.b32.xlu0 %v9527, 16
      %v9548 = vpop.permute.xlu0 %9547
      %9549 = vrot.lane.b32.xlu0 %v9528, 16
      %v9550 = vpop.permute.xlu0 %9549
      %9551 = vrot.lane.b32.xlu0 %v9529, 16
      %v9552 = vpop.permute.xlu0 %9551
      %9553 = vrot.lane.b32.xlu0 %v9530, 16
      %v9554 = vpop.permute.xlu0 %9553
      %9555 = vrot.lane.b32.xlu0 %v9531, 16
      %v9556 = vpop.permute.xlu0 %9555
      %9557 = vrot.lane.b32.xlu0 %v9532, 16
      %v9558 = vpop.permute.xlu0 %9557
      %9559 = vrot.lane.b32.xlu0 %v9533, 16
      %v9560 = vpop.permute.xlu0 %9559
      %9561 = vrot.lane.b32.xlu0 %v9534, 16
      %v9562 = vpop.permute.xlu0 %9561
      %9563 = vrot.lane.b32.xlu0 %v9535, 16
      %v9564 = vpop.permute.xlu0 %9563
      %9565 = vrot.lane.b32.xlu0 %v9536, 16
      %v9566 = vpop.permute.xlu0 %9565
      %9567 = vrot.lane.b32.xlu0 %v9537, 16
      %v9568 = vpop.permute.xlu0 %9567
      %9569 = vrot.lane.b32.xlu0 %v9538, 16
      %v9570 = vpop.permute.xlu0 %9569
      %9587 = vst.msk [vmem:[#allocation5] sm:$0xff] %vm5853, %v9540
      %9588 = vst.msk [vmem:[#allocation5 + $0x8] sm:$0xff] %vm5853, %v9542
      %9589 = vst.msk [vmem:[#allocation5 + $0x10] sm:$0xff] %vm5853, %v9544
      %9590 = vst.msk [vmem:[#allocation5 + $0x18] sm:$0xff] %vm5853, %v9546
      %9591 = vst.msk [vmem:[#allocation5 + $0x20] sm:$0xff] %vm5853, %v9548
      %9592 = vst.msk [vmem:[#allocation5 + $0x28] sm:$0xff] %vm5853, %v9550
      %9593 = vst.msk [vmem:[#allocation5 + $0x30] sm:$0xff] %vm5853, %v9552
      %9594 = vst.msk [vmem:[#allocation5 + $0x38] sm:$0xff] %vm5853, %v9554
      %9595 = vst.msk [vmem:[#allocation5 + $0x40] sm:$0xff] %vm5853, %v9556
      %9596 = vst.msk [vmem:[#allocation5 + $0x48] sm:$0xff] %vm5853, %v9558
      %9597 = vst.msk [vmem:[#allocation5 + $0x50] sm:$0xff] %vm5853, %v9560
      %9598 = vst.msk [vmem:[#allocation5 + $0x58] sm:$0xff] %vm5853, %v9562
      %9599 = vst.msk [vmem:[#allocation5 + $0x60] sm:$0xff] %vm5853, %v9564
      %9600 = vst.msk [vmem:[#allocation5 + $0x68] sm:$0xff] %vm5853, %v9566
      %9601 = vst.msk [vmem:[#allocation5 + $0x70] sm:$0xff] %vm5853, %v9568
      %9602 = vst.msk [vmem:[#allocation5 + $0x78] sm:$0xff] %vm5853, %v9570
      %v9603 = vld [vmem:[%s9426] sm:$0xf]
      %v9604 = vld [vmem:[%s9426 + $0x4] sm:$0xf]
      %v9605 = vld [vmem:[%s9426 + $0x8] sm:$0x1]
      %v9606 = vld [vmem:[%s9426 + $0xc] sm:$0xf]
      %v9607 = vld [vmem:[%s9426 + $0x10] sm:$0xf]
      %v9608 = vld [vmem:[%s9426 + $0x14] sm:$0x1]
      %v9609 = vld [vmem:[%s9426 + $0x18] sm:$0xf]
      %v9610 = vld [vmem:[%s9426 + $0x1c] sm:$0xf]
      %v9611 = vld [vmem:[%s9426 + $0x20] sm:$0x1]
      %v9612 = vld [vmem:[%s9426 + $0x24] sm:$0xf]
      %v9613 = vld [vmem:[%s9426 + $0x28] sm:$0xf]
      %v9614 = vld [vmem:[%s9426 + $0x2c] sm:$0x1]
      %v9615 = vld [vmem:[%s9426 + $0x30] sm:$0xf]
      %v9616 = vld [vmem:[%s9426 + $0x34] sm:$0xf]
      %v9617 = vld [vmem:[%s9426 + $0x38] sm:$0x1]
      %v9618 = vld [vmem:[%s9426 + $0x3c] sm:$0xf]
      %v9619 = vld [vmem:[%s9426 + $0x40] sm:$0xf]
      %v9620 = vld [vmem:[%s9426 + $0x44] sm:$0x1]
      %v9621 = vld [vmem:[%s9426 + $0x48] sm:$0xf]
      %v9622 = vld [vmem:[%s9426 + $0x4c] sm:$0xf]
      %v9623 = vld [vmem:[%s9426 + $0x50] sm:$0x1]
      %v9624 = vld [vmem:[%s9426 + $0x54] sm:$0xf]
      %v9625 = vld [vmem:[%s9426 + $0x58] sm:$0xf]
      %v9626 = vld [vmem:[%s9426 + $0x5c] sm:$0x1]
      %v9627 = vld [vmem:[%s9426 + $0x60] sm:$0xf]
      %v9628 = vld [vmem:[%s9426 + $0x64] sm:$0xf]
      %v9629 = vld [vmem:[%s9426 + $0x68] sm:$0x1]
      %v9630 = vld [vmem:[%s9426 + $0x6c] sm:$0xf]
      %v9631 = vld [vmem:[%s9426 + $0x70] sm:$0xf]
      %v9632 = vld [vmem:[%s9426 + $0x74] sm:$0x1]
      %v9633 = vld [vmem:[%s9426 + $0x78] sm:$0xf]
      %v9634 = vld [vmem:[%s9426 + $0x7c] sm:$0xf]
      %v9635 = vld [vmem:[%s9426 + $0x80] sm:$0x1]
      %v9636 = vld [vmem:[%s9426 + $0x84] sm:$0xf]
      %v9637 = vld [vmem:[%s9426 + $0x88] sm:$0xf]
      %v9638 = vld [vmem:[%s9426 + $0x8c] sm:$0x1]
      %v9639 = vld [vmem:[%s9426 + $0x90] sm:$0xf]
      %v9640 = vld [vmem:[%s9426 + $0x94] sm:$0xf]
      %v9641 = vld [vmem:[%s9426 + $0x98] sm:$0x1]
      %v9642 = vld [vmem:[%s9426 + $0x9c] sm:$0xf]
      %v9643 = vld [vmem:[%s9426 + $0xa0] sm:$0xf]
      %v9644 = vld [vmem:[%s9426 + $0xa4] sm:$0x1]
      %v9645 = vld [vmem:[%s9426 + $0xa8] sm:$0xf]
      %v9646 = vld [vmem:[%s9426 + $0xac] sm:$0xf]
      %v9647 = vld [vmem:[%s9426 + $0xb0] sm:$0x1]
      %v9648 = vld [vmem:[%s9426 + $0xb4] sm:$0xf]
      %v9649 = vld [vmem:[%s9426 + $0xb8] sm:$0xf]
      %v9650 = vld [vmem:[%s9426 + $0xbc] sm:$0x1]
      %v9652 = vshrl.u32 %v9603, 16
      %v9654 = vrot.slane %v9652, 4
      %v9655 = vshll.u32 %v9603, 16
      %v9657 = vrot.slane %v9655, 5
      %v9658 = vor.u32 %v9654, %v9657
      %v9659 = vrot.slane %v9658, 4
      %v9661 = vshll.u32 %v9604, 16
      %v9663 = vrot.slane %v9661, 5
      %v9664 = vsel %vm1271, %v9659, %v9663
      %v9665 = vshrl.u32 %v9604, 16
      %v9667 = vrot.slane %v9665, 4
      %v9668 = vor.u32 %v9667, %v9663
      %v9669 = vrot.slane %v9668, 4
      %v9671 = vshll.u32 %v9605, 16
      %v9673 = vrot.slane %v9671, 5
      %v9674 = vsel %vm1271, %v9669, %v9673
      %v9676 = vshrl.u32 %v9606, 16
      %v9678 = vrot.slane %v9676, 4
      %v9679 = vshll.u32 %v9606, 16
      %v9681 = vrot.slane %v9679, 5
      %v9682 = vor.u32 %v9678, %v9681
      %v9683 = vrot.slane %v9682, 4
      %v9685 = vshll.u32 %v9607, 16
      %v9687 = vrot.slane %v9685, 5
      %v9688 = vsel %vm1271, %v9683, %v9687
      %v9689 = vshrl.u32 %v9607, 16
      %v9691 = vrot.slane %v9689, 4
      %v9692 = vor.u32 %v9691, %v9687
      %v9693 = vrot.slane %v9692, 4
      %v9695 = vshll.u32 %v9608, 16
      %v9697 = vrot.slane %v9695, 5
      %v9698 = vsel %vm1271, %v9693, %v9697
      %v9700 = vshrl.u32 %v9609, 16
      %v9702 = vrot.slane %v9700, 4
      %v9703 = vshll.u32 %v9609, 16
      %v9705 = vrot.slane %v9703, 5
      %v9706 = vor.u32 %v9702, %v9705
      %v9707 = vrot.slane %v9706, 4
      %v9709 = vshll.u32 %v9610, 16
      %v9711 = vrot.slane %v9709, 5
      %v9712 = vsel %vm1271, %v9707, %v9711
      %v9713 = vshrl.u32 %v9610, 16
      %v9715 = vrot.slane %v9713, 4
      %v9716 = vor.u32 %v9715, %v9711
      %v9717 = vrot.slane %v9716, 4
      %v9719 = vshll.u32 %v9611, 16
      %v9721 = vrot.slane %v9719, 5
      %v9722 = vsel %vm1271, %v9717, %v9721
      %v9724 = vshrl.u32 %v9612, 16
      %v9726 = vrot.slane %v9724, 4
      %v9727 = vshll.u32 %v9612, 16
      %v9729 = vrot.slane %v9727, 5
      %v9730 = vor.u32 %v9726, %v9729
      %v9731 = vrot.slane %v9730, 4
      %v9733 = vshll.u32 %v9613, 16
      %v9735 = vrot.slane %v9733, 5
      %v9736 = vsel %vm1271, %v9731, %v9735
      %v9737 = vshrl.u32 %v9613, 16
      %v9739 = vrot.slane %v9737, 4
      %v9740 = vor.u32 %v9739, %v9735
      %v9741 = vrot.slane %v9740, 4
      %v9743 = vshll.u32 %v9614, 16
      %v9745 = vrot.slane %v9743, 5
      %v9746 = vsel %vm1271, %v9741, %v9745
      %v9748 = vshrl.u32 %v9615, 16
      %v9750 = vrot.slane %v9748, 4
      %v9751 = vshll.u32 %v9615, 16
      %v9753 = vrot.slane %v9751, 5
      %v9754 = vor.u32 %v9750, %v9753
      %v9755 = vrot.slane %v9754, 4
      %v9757 = vshll.u32 %v9616, 16
      %v9759 = vrot.slane %v9757, 5
      %v9760 = vsel %vm1271, %v9755, %v9759
      %v9761 = vshrl.u32 %v9616, 16
      %v9763 = vrot.slane %v9761, 4
      %v9764 = vor.u32 %v9763, %v9759
      %v9765 = vrot.slane %v9764, 4
      %v9767 = vshll.u32 %v9617, 16
      %v9769 = vrot.slane %v9767, 5
      %v9770 = vsel %vm1271, %v9765, %v9769
      %v9772 = vshrl.u32 %v9618, 16
      %v9774 = vrot.slane %v9772, 4
      %v9775 = vshll.u32 %v9618, 16
      %v9777 = vrot.slane %v9775, 5
      %v9778 = vor.u32 %v9774, %v9777
      %v9779 = vrot.slane %v9778, 4
      %v9781 = vshll.u32 %v9619, 16
      %v9783 = vrot.slane %v9781, 5
      %v9784 = vsel %vm1271, %v9779, %v9783
      %v9785 = vshrl.u32 %v9619, 16
      %v9787 = vrot.slane %v9785, 4
      %v9788 = vor.u32 %v9787, %v9783
      %v9789 = vrot.slane %v9788, 4
      %v9791 = vshll.u32 %v9620, 16
      %v9793 = vrot.slane %v9791, 5
      %v9794 = vsel %vm1271, %v9789, %v9793
      %v9796 = vshrl.u32 %v9621, 16
      %v9798 = vrot.slane %v9796, 4
      %v9799 = vshll.u32 %v9621, 16
      %v9801 = vrot.slane %v9799, 5
      %v9802 = vor.u32 %v9798, %v9801
      %v9803 = vrot.slane %v9802, 4
      %v9805 = vshll.u32 %v9622, 16
      %v9807 = vrot.slane %v9805, 5
      %v9808 = vsel %vm1271, %v9803, %v9807
      %v9809 = vshrl.u32 %v9622, 16
      %v9811 = vrot.slane %v9809, 4
      %v9812 = vor.u32 %v9811, %v9807
      %v9813 = vrot.slane %v9812, 4
      %v9815 = vshll.u32 %v9623, 16
      %v9817 = vrot.slane %v9815, 5
      %v9818 = vsel %vm1271, %v9813, %v9817
      %v9820 = vshrl.u32 %v9624, 16
      %v9822 = vrot.slane %v9820, 4
      %v9823 = vshll.u32 %v9624, 16
      %v9825 = vrot.slane %v9823, 5
      %v9826 = vor.u32 %v9822, %v9825
      %v9827 = vrot.slane %v9826, 4
      %v9829 = vshll.u32 %v9625, 16
      %v9831 = vrot.slane %v9829, 5
      %v9832 = vsel %vm1271, %v9827, %v9831
      %v9833 = vshrl.u32 %v9625, 16
      %v9835 = vrot.slane %v9833, 4
      %v9836 = vor.u32 %v9835, %v9831
      %v9837 = vrot.slane %v9836, 4
      %v9839 = vshll.u32 %v9626, 16
      %v9841 = vrot.slane %v9839, 5
      %v9842 = vsel %vm1271, %v9837, %v9841
      %v9844 = vshrl.u32 %v9627, 16
      %v9846 = vrot.slane %v9844, 4
      %v9847 = vshll.u32 %v9627, 16
      %v9849 = vrot.slane %v9847, 5
      %v9850 = vor.u32 %v9846, %v9849
      %v9851 = vrot.slane %v9850, 4
      %v9853 = vshll.u32 %v9628, 16
      %v9855 = vrot.slane %v9853, 5
      %v9856 = vsel %vm1271, %v9851, %v9855
      %v9857 = vshrl.u32 %v9628, 16
      %v9859 = vrot.slane %v9857, 4
      %v9860 = vor.u32 %v9859, %v9855
      %v9861 = vrot.slane %v9860, 4
      %v9863 = vshll.u32 %v9629, 16
      %v9865 = vrot.slane %v9863, 5
      %v9866 = vsel %vm1271, %v9861, %v9865
      %v9868 = vshrl.u32 %v9630, 16
      %v9870 = vrot.slane %v9868, 4
      %v9871 = vshll.u32 %v9630, 16
      %v9873 = vrot.slane %v9871, 5
      %v9874 = vor.u32 %v9870, %v9873
      %v9875 = vrot.slane %v9874, 4
      %v9877 = vshll.u32 %v9631, 16
      %v9879 = vrot.slane %v9877, 5
      %v9880 = vsel %vm1271, %v9875, %v9879
      %v9881 = vshrl.u32 %v9631, 16
      %v9883 = vrot.slane %v9881, 4
      %v9884 = vor.u32 %v9883, %v9879
      %v9885 = vrot.slane %v9884, 4
      %v9887 = vshll.u32 %v9632, 16
      %v9889 = vrot.slane %v9887, 5
      %v9890 = vsel %vm1271, %v9885, %v9889
      %v9892 = vshrl.u32 %v9633, 16
      %v9894 = vrot.slane %v9892, 4
      %v9895 = vshll.u32 %v9633, 16
      %v9897 = vrot.slane %v9895, 5
      %v9898 = vor.u32 %v9894, %v9897
      %v9899 = vrot.slane %v9898, 4
      %v9901 = vshll.u32 %v9634, 16
      %v9903 = vrot.slane %v9901, 5
      %v9904 = vsel %vm1271, %v9899, %v9903
      %v9905 = vshrl.u32 %v9634, 16
      %v9907 = vrot.slane %v9905, 4
      %v9908 = vor.u32 %v9907, %v9903
      %v9909 = vrot.slane %v9908, 4
      %v9911 = vshll.u32 %v9635, 16
      %v9913 = vrot.slane %v9911, 5
      %v9914 = vsel %vm1271, %v9909, %v9913
      %v9916 = vshrl.u32 %v9636, 16
      %v9918 = vrot.slane %v9916, 4
      %v9919 = vshll.u32 %v9636, 16
      %v9921 = vrot.slane %v9919, 5
      %v9922 = vor.u32 %v9918, %v9921
      %v9923 = vrot.slane %v9922, 4
      %v9925 = vshll.u32 %v9637, 16
      %v9927 = vrot.slane %v9925, 5
      %v9928 = vsel %vm1271, %v9923, %v9927
      %v9929 = vshrl.u32 %v9637, 16
      %v9931 = vrot.slane %v9929, 4
      %v9932 = vor.u32 %v9931, %v9927
      %v9933 = vrot.slane %v9932, 4
      %v9935 = vshll.u32 %v9638, 16
      %v9937 = vrot.slane %v9935, 5
      %v9938 = vsel %vm1271, %v9933, %v9937
      %v9940 = vshrl.u32 %v9639, 16
      %v9942 = vrot.slane %v9940, 4
      %v9943 = vshll.u32 %v9639, 16
      %v9945 = vrot.slane %v9943, 5
      %v9946 = vor.u32 %v9942, %v9945
      %v9947 = vrot.slane %v9946, 4
      %v9949 = vshll.u32 %v9640, 16
      %v9951 = vrot.slane %v9949, 5
      %v9952 = vsel %vm1271, %v9947, %v9951
      %v9953 = vshrl.u32 %v9640, 16
      %v9955 = vrot.slane %v9953, 4
      %v9956 = vor.u32 %v9955, %v9951
      %v9957 = vrot.slane %v9956, 4
      %v9959 = vshll.u32 %v9641, 16
      %v9961 = vrot.slane %v9959, 5
      %v9962 = vsel %vm1271, %v9957, %v9961
      %v9964 = vshrl.u32 %v9642, 16
      %v9966 = vrot.slane %v9964, 4
      %v9967 = vshll.u32 %v9642, 16
      %v9969 = vrot.slane %v9967, 5
      %v9970 = vor.u32 %v9966, %v9969
      %v9971 = vrot.slane %v9970, 4
      %v9973 = vshll.u32 %v9643, 16
      %v9975 = vrot.slane %v9973, 5
      %v9976 = vsel %vm1271, %v9971, %v9975
      %v9977 = vshrl.u32 %v9643, 16
      %v9979 = vrot.slane %v9977, 4
      %v9980 = vor.u32 %v9979, %v9975
      %v9981 = vrot.slane %v9980, 4
      %v9983 = vshll.u32 %v9644, 16
      %v9985 = vrot.slane %v9983, 5
      %v9986 = vsel %vm1271, %v9981, %v9985
      %v9988 = vshrl.u32 %v9645, 16
      %v9990 = vrot.slane %v9988, 4
      %v9991 = vshll.u32 %v9645, 16
      %v9993 = vrot.slane %v9991, 5
      %v9994 = vor.u32 %v9990, %v9993
      %v9995 = vrot.slane %v9994, 4
      %v9997 = vshll.u32 %v9646, 16
      %v9999 = vrot.slane %v9997, 5
      %v10000 = vsel %vm1271, %v9995, %v9999
      %v10001 = vshrl.u32 %v9646, 16
      %v10003 = vrot.slane %v10001, 4
      %v10004 = vor.u32 %v10003, %v9999
      %v10005 = vrot.slane %v10004, 4
      %v10007 = vshll.u32 %v9647, 16
      %v10009 = vrot.slane %v10007, 5
      %v10010 = vsel %vm1271, %v10005, %v10009
      %v10012 = vshrl.u32 %v9648, 16
      %v10014 = vrot.slane %v10012, 4
      %v10015 = vshll.u32 %v9648, 16
      %v10017 = vrot.slane %v10015, 5
      %v10018 = vor.u32 %v10014, %v10017
      %v10019 = vrot.slane %v10018, 4
      %v10021 = vshll.u32 %v9649, 16
      %v10023 = vrot.slane %v10021, 5
      %v10024 = vsel %vm1271, %v10019, %v10023
      %v10025 = vshrl.u32 %v9649, 16
      %v10027 = vrot.slane %v10025, 4
      %v10028 = vor.u32 %v10027, %v10023
      %v10029 = vrot.slane %v10028, 4
      %v10031 = vshll.u32 %v9650, 16
      %v10033 = vrot.slane %v10031, 5
      %v10034 = vsel %vm1271, %v10029, %v10033
      %v10035 = vunpack.c.l.b16 %v9664
      %v10036 = vunpack.c.l.b16 %v9674
      %v10037 = vunpack.c.l.b16 %v9688
      %v10038 = vunpack.c.l.b16 %v9698
      %v10039 = vunpack.c.l.b16 %v9712
      %v10040 = vunpack.c.l.b16 %v9722
      %v10041 = vunpack.c.l.b16 %v9736
      %v10042 = vunpack.c.l.b16 %v9746
      %v10043 = vunpack.c.l.b16 %v9760
      %v10044 = vunpack.c.l.b16 %v9770
      %v10045 = vunpack.c.l.b16 %v9784
      %v10046 = vunpack.c.l.b16 %v9794
      %v10047 = vunpack.c.l.b16 %v9808
      %v10048 = vunpack.c.l.b16 %v9818
      %v10049 = vunpack.c.l.b16 %v9832
      %v10050 = vunpack.c.l.b16 %v9842
      %v10051 = vunpack.c.l.b16 %v9856
      %v10052 = vunpack.c.l.b16 %v9866
      %v10053 = vunpack.c.l.b16 %v9880
      %v10054 = vunpack.c.l.b16 %v9890
      %v10055 = vunpack.c.l.b16 %v9904
      %v10056 = vunpack.c.l.b16 %v9914
      %v10057 = vunpack.c.l.b16 %v9928
      %v10058 = vunpack.c.l.b16 %v9938
      %v10059 = vunpack.c.l.b16 %v9952
      %v10060 = vunpack.c.l.b16 %v9962
      %v10061 = vunpack.c.l.b16 %v9976
      %v10062 = vunpack.c.l.b16 %v9986
      %v10063 = vunpack.c.l.b16 %v10000
      %v10064 = vunpack.c.l.b16 %v10010
      %v10065 = vunpack.c.l.b16 %v10024
      %v10066 = vunpack.c.l.b16 %v10034
      %v10067 = vpack.c.b16 %v10036, %v10035
      %v10068 = vpack.c.b16 %v10038, %v10037
      %v10069 = vpack.c.b16 %v10040, %v10039
      %v10070 = vpack.c.b16 %v10042, %v10041
      %v10071 = vpack.c.b16 %v10044, %v10043
      %v10072 = vpack.c.b16 %v10046, %v10045
      %v10073 = vpack.c.b16 %v10048, %v10047
      %v10074 = vpack.c.b16 %v10050, %v10049
      %v10075 = vpack.c.b16 %v10052, %v10051
      %v10076 = vpack.c.b16 %v10054, %v10053
      %v10077 = vpack.c.b16 %v10056, %v10055
      %v10078 = vpack.c.b16 %v10058, %v10057
      %v10079 = vpack.c.b16 %v10060, %v10059
      %v10080 = vpack.c.b16 %v10062, %v10061
      %v10081 = vpack.c.b16 %v10064, %v10063
      %v10082 = vpack.c.b16 %v10066, %v10065
      %10083 = vrot.lane.b32.xlu0 %v10067, 24
      %v10084 = vpop.permute.xlu0 %10083
      %10085 = vrot.lane.b32.xlu0 %v10068, 24
      %v10086 = vpop.permute.xlu0 %10085
      %10087 = vrot.lane.b32.xlu0 %v10069, 24
      %v10088 = vpop.permute.xlu0 %10087
      %10089 = vrot.lane.b32.xlu0 %v10070, 24
      %v10090 = vpop.permute.xlu0 %10089
      %10091 = vrot.lane.b32.xlu0 %v10071, 24
      %v10092 = vpop.permute.xlu0 %10091
      %10093 = vrot.lane.b32.xlu0 %v10072, 24
      %v10094 = vpop.permute.xlu0 %10093
      %10095 = vrot.lane.b32.xlu0 %v10073, 24
      %v10096 = vpop.permute.xlu0 %10095
      %10097 = vrot.lane.b32.xlu0 %v10074, 24
      %v10098 = vpop.permute.xlu0 %10097
      %10099 = vrot.lane.b32.xlu0 %v10075, 24
      %v10100 = vpop.permute.xlu0 %10099
      %10101 = vrot.lane.b32.xlu0 %v10076, 24
      %v10102 = vpop.permute.xlu0 %10101
      %10103 = vrot.lane.b32.xlu0 %v10077, 24
      %v10104 = vpop.permute.xlu0 %10103
      %10105 = vrot.lane.b32.xlu0 %v10078, 24
      %v10106 = vpop.permute.xlu0 %10105
      %10107 = vrot.lane.b32.xlu0 %v10079, 24
      %v10108 = vpop.permute.xlu0 %10107
      %10109 = vrot.lane.b32.xlu0 %v10080, 24
      %v10110 = vpop.permute.xlu0 %10109
      %10111 = vrot.lane.b32.xlu0 %v10081, 24
      %v10112 = vpop.permute.xlu0 %10111
      %10113 = vrot.lane.b32.xlu0 %v10082, 24
      %v10114 = vpop.permute.xlu0 %10113
      %10131 = vst.msk [vmem:[#allocation5] sm:$0xff] %vm6398, %v10084
      %10132 = vst.msk [vmem:[#allocation5 + $0x8] sm:$0xff] %vm6398, %v10086
      %10133 = vst.msk [vmem:[#allocation5 + $0x10] sm:$0xff] %vm6398, %v10088
      %10134 = vst.msk [vmem:[#allocation5 + $0x18] sm:$0xff] %vm6398, %v10090
      %10135 = vst.msk [vmem:[#allocation5 + $0x20] sm:$0xff] %vm6398, %v10092
      %10136 = vst.msk [vmem:[#allocation5 + $0x28] sm:$0xff] %vm6398, %v10094
      %10137 = vst.msk [vmem:[#allocation5 + $0x30] sm:$0xff] %vm6398, %v10096
      %10138 = vst.msk [vmem:[#allocation5 + $0x38] sm:$0xff] %vm6398, %v10098
      %10139 = vst.msk [vmem:[#allocation5 + $0x40] sm:$0xff] %vm6398, %v10100
      %10140 = vst.msk [vmem:[#allocation5 + $0x48] sm:$0xff] %vm6398, %v10102
      %10141 = vst.msk [vmem:[#allocation5 + $0x50] sm:$0xff] %vm6398, %v10104
      %10142 = vst.msk [vmem:[#allocation5 + $0x58] sm:$0xff] %vm6398, %v10106
      %10143 = vst.msk [vmem:[#allocation5 + $0x60] sm:$0xff] %vm6398, %v10108
      %10144 = vst.msk [vmem:[#allocation5 + $0x68] sm:$0xff] %vm6398, %v10110
      %10145 = vst.msk [vmem:[#allocation5 + $0x70] sm:$0xff] %vm6398, %v10112
      %10146 = vst.msk [vmem:[#allocation5 + $0x78] sm:$0xff] %vm6398, %v10114
      %v10147 = vld [vmem:[#allocation5] sm:$0xff]
      %v10148 = vld [vmem:[#allocation5 + $0x8] sm:$0xff]
      %v10149 = vld [vmem:[#allocation5 + $0x10] sm:$0xff]
      %v10150 = vld [vmem:[#allocation5 + $0x18] sm:$0xff]
      %v10151 = vld [vmem:[#allocation5 + $0x20] sm:$0xff]
      %v10152 = vld [vmem:[#allocation5 + $0x28] sm:$0xff]
      %v10153 = vld [vmem:[#allocation5 + $0x30] sm:$0xff]
      %v10154 = vld [vmem:[#allocation5 + $0x38] sm:$0xff]
      %v10155 = vld [vmem:[#allocation5 + $0x40] sm:$0xff]
      %v10156 = vld [vmem:[#allocation5 + $0x48] sm:$0xff]
      %v10157 = vld [vmem:[#allocation5 + $0x50] sm:$0xff]
      %v10158 = vld [vmem:[#allocation5 + $0x58] sm:$0xff]
      %v10159 = vld [vmem:[#allocation5 + $0x60] sm:$0xff]
      %v10160 = vld [vmem:[#allocation5 + $0x68] sm:$0xff]
      %v10161 = vld [vmem:[#allocation5 + $0x70] sm:$0xff]
      %v10162 = vld [vmem:[#allocation5 + $0x78] sm:$0xff]
      %s10163 = scalar_lea.vmem %s5, 32
      %v10164 = vld [vmem:[%s10163] sm:$0xf]
      %v10165 = vld [vmem:[%s10163 + $0x4] sm:$0xf]
      %v10166 = vld [vmem:[%s10163 + $0x8] sm:$0xf]
      %v10167 = vld [vmem:[%s10163 + $0xc] sm:$0xf]
      %v10168 = vld [vmem:[%s6] sm:$0x1]
      %v10170 = vlaneseq
      %v10171 = vshrl.u32 %v10170, 7
      %v10172 = vsub.s32 0, %v10171
      %v10173 = vrot.slane %v10168, %v10172
      %v10179 = vunpack.c.l.b16 %v10164
      %v10180 = vunpack.c.l.b16 %v10165
      %v10181 = vunpack.c.l.b16 %v10166
      %v10182 = vunpack.c.l.b16 %v10167
      %v10183 = vpack.c.b16 %v10180, %v10179
      %v10184 = vpack.c.b16 %v10182, %v10181
      %v10188 = vsel %vm6454, %v10147, 0
      %v10191 = vsel %vm6454, %v10148, 0
      %v10194 = vsel %vm6454, %v10149, 0
      %v10197 = vsel %vm6454, %v10150, 0
      %v10200 = vsel %vm6454, %v10151, 0
      %v10203 = vsel %vm6454, %v10152, 0
      %v10206 = vsel %vm6454, %v10153, 0
      %v10209 = vsel %vm6454, %v10154, 0
      %v10212 = vsel %vm6454, %v10155, 0
      %v10215 = vsel %vm6454, %v10156, 0
      %v10218 = vsel %vm6454, %v10157, 0
      %v10221 = vsel %vm6454, %v10158, 0
      %v10224 = vsel %vm6454, %v10159, 0
      %v10227 = vsel %vm6454, %v10160, 0
      %v10230 = vsel %vm6454, %v10161, 0
      %v10233 = vsel %vm6454, %v10162, 0
      %10235 = vmatprep.subr.bf16.mxu0 0
      %10236 = vmatpush1.bf16.msra.mxu0 %v10183
      %10237 = vmatprep.subr.bf16.mxu0 0
      %10238 = vmatpush1.bf16.msra.mxu0 %v10184
      %10239 = vmatprep.subr.bf16.mxu0 0
      %10240 = vmatpush1.bf16.msra.mxu0 0
      %10241 = vmatprep.subr.bf16.mxu0 0
      %10242 = vmatpush1.bf16.msra.mxu0 0
      %10243 = vmatprep.subr.bf16.mxu0 0
      %10244 = vmatpush1.bf16.msra.mxu0 0
      %10245 = vmatprep.subr.bf16.mxu0 0
      %10246 = vmatpush1.bf16.msra.mxu0 0
      %10247 = vmatprep.subr.bf16.mxu0 0
      %10248 = vmatpush1.bf16.msra.mxu0 0
      %10249 = vmatprep.subr.bf16.mxu0 0
      %10250 = vmatpush1.bf16.msra.mxu0 0
      %10251 = vmatprep.subr.bf16.mxu0 0
      %10252 = vmatpush1.bf16.msra.mxu0 0
      %10253 = vmatprep.subr.bf16.mxu0 0
      %10254 = vmatpush1.bf16.msra.mxu0 0
      %10255 = vmatprep.subr.bf16.mxu0 0
      %10256 = vmatpush1.bf16.msra.mxu0 0
      %10257 = vmatprep.subr.bf16.mxu0 0
      %10258 = vmatpush1.bf16.msra.mxu0 0
      %10259 = vmatprep.subr.bf16.mxu0 0
      %10260 = vmatpush1.bf16.msra.mxu0 0
      %10261 = vmatprep.subr.bf16.mxu0 0
      %10262 = vmatpush1.bf16.msra.mxu0 0
      %10263 = vmatprep.subr.bf16.mxu0 0
      %10264 = vmatpush1.bf16.msra.mxu0 0
      %10265 = vmatprep.subr.bf16.mxu0 0
      %10266 = vmatpush1.bf16.msra.mxu0 0
      %10267 = vmatprep.mubr.bf16.mxu0 0
      %10268 = vmatmul.mubr.bf16.gmra.mrb[0].mxu0 %v10188
      %v10269 = vpop.f32.mrb[0].mxu0
      %v10270 = vadd.f32 %v10173, %v10269
      %v10271 = vpop.f32.mrb[0].mxu0
      %v10272 = vpop.f32.mrb[0].mxu0
      %v10273 = vadd.f32 %v10173, %v10272
      %v10274 = vpop.f32.mrb[0].mxu0
      %10275 = vmatprep.mubr.bf16.mxu0 0
      %10276 = vmatmul.mubr.bf16.gmra.mrb[0].mxu0 %v10191
      %v10277 = vpop.f32.mrb[0].mxu0
      %v10278 = vadd.f32 %v10173, %v10277
      %v10279 = vpop.f32.mrb[0].mxu0
      %v10280 = vpop.f32.mrb[0].mxu0
      %v10281 = vadd.f32 %v10173, %v10280
      %v10282 = vpop.f32.mrb[0].mxu0
      %10283 = vmatprep.mubr.bf16.mxu0 0
      %10284 = vmatmul.mubr.bf16.gmra.mrb[0].mxu0 %v10194
      %v10285 = vpop.f32.mrb[0].mxu0
      %v10286 = vadd.f32 %v10173, %v10285
      %v10287 = vpop.f32.mrb[0].mxu0
      %v10288 = vpop.f32.mrb[0].mxu0
      %v10289 = vadd.f32 %v10173, %v10288
      %v10290 = vpop.f32.mrb[0].mxu0
      %10291 = vmatprep.mubr.bf16.mxu0 0
      %10292 = vmatmul.mubr.bf16.gmra.mrb[0].mxu0 %v10197
      %v10293 = vpop.f32.mrb[0].mxu0
      %v10294 = vadd.f32 %v10173, %v10293
      %v10295 = vpop.f32.mrb[0].mxu0
      %v10296 = vpop.f32.mrb[0].mxu0
      %v10297 = vadd.f32 %v10173, %v10296
      %v10298 = vpop.f32.mrb[0].mxu0
      %10299 = vmatprep.mubr.bf16.mxu0 0
      %10300 = vmatmul.mubr.bf16.gmra.mrb[0].mxu0 %v10200
      %v10301 = vpop.f32.mrb[0].mxu0
      %v10302 = vadd.f32 %v10173, %v10301
      %v10303 = vpop.f32.mrb[0].mxu0
      %v10304 = vpop.f32.mrb[0].mxu0
      %v10305 = vadd.f32 %v10173, %v10304
      %v10306 = vpop.f32.mrb[0].mxu0
      %10307 = vmatprep.mubr.bf16.mxu0 0
      %10308 = vmatmul.mubr.bf16.gmra.mrb[0].mxu0 %v10203
      %v10309 = vpop.f32.mrb[0].mxu0
      %v10310 = vadd.f32 %v10173, %v10309
      %v10311 = vpop.f32.mrb[0].mxu0
      %v10312 = vpop.f32.mrb[0].mxu0
      %v10313 = vadd.f32 %v10173, %v10312
      %v10314 = vpop.f32.mrb[0].mxu0
      %10315 = vmatprep.mubr.bf16.mxu0 0
      %10316 = vmatmul.mubr.bf16.gmra.mrb[0].mxu0 %v10206
      %v10317 = vpop.f32.mrb[0].mxu0
      %v10318 = vadd.f32 %v10173, %v10317
      %v10319 = vpop.f32.mrb[0].mxu0
      %v10320 = vpop.f32.mrb[0].mxu0
      %v10321 = vadd.f32 %v10173, %v10320
      %v10322 = vpop.f32.mrb[0].mxu0
      %10323 = vmatprep.mubr.bf16.mxu0 0
      %10324 = vmatmul.mubr.bf16.gmra.mrb[0].mxu0 %v10209
      %v10325 = vpop.f32.mrb[0].mxu0
      %v10326 = vadd.f32 %v10173, %v10325
      %v10327 = vpop.f32.mrb[0].mxu0
      %v10328 = vpop.f32.mrb[0].mxu0
      %v10329 = vadd.f32 %v10173, %v10328
      %v10330 = vpop.f32.mrb[0].mxu0
      %10331 = vmatprep.mubr.bf16.mxu0 0
      %10332 = vmatmul.mubr.bf16.gmra.mrb[0].mxu0 %v10212
      %v10333 = vpop.f32.mrb[0].mxu0
      %v10334 = vadd.f32 %v10173, %v10333
      %v10335 = vpop.f32.mrb[0].mxu0
      %v10336 = vpop.f32.mrb[0].mxu0
      %v10337 = vadd.f32 %v10173, %v10336
      %v10338 = vpop.f32.mrb[0].mxu0
      %10339 = vmatprep.mubr.bf16.mxu0 0
      %10340 = vmatmul.mubr.bf16.gmra.mrb[0].mxu0 %v10215
      %v10341 = vpop.f32.mrb[0].mxu0
      %v10342 = vadd.f32 %v10173, %v10341
      %v10343 = vpop.f32.mrb[0].mxu0
      %v10344 = vpop.f32.mrb[0].mxu0
      %v10345 = vadd.f32 %v10173, %v10344
      %v10346 = vpop.f32.mrb[0].mxu0
      %10347 = vmatprep.mubr.bf16.mxu0 0
      %10348 = vmatmul.mubr.bf16.gmra.mrb[0].mxu0 %v10218
      %v10349 = vpop.f32.mrb[0].mxu0
      %v10350 = vadd.f32 %v10173, %v10349
      %v10351 = vpop.f32.mrb[0].mxu0
      %v10352 = vpop.f32.mrb[0].mxu0
      %v10353 = vadd.f32 %v10173, %v10352
      %v10354 = vpop.f32.mrb[0].mxu0
      %10355 = vmatprep.mubr.bf16.mxu0 0
      %10356 = vmatmul.mubr.bf16.gmra.mrb[0].mxu0 %v10221
      %v10357 = vpop.f32.mrb[0].mxu0
      %v10358 = vadd.f32 %v10173, %v10357
      %v10359 = vpop.f32.mrb[0].mxu0
      %v10360 = vpop.f32.mrb[0].mxu0
      %v10361 = vadd.f32 %v10173, %v10360
      %v10362 = vpop.f32.mrb[0].mxu0
      %10363 = vmatprep.mubr.bf16.mxu0 0
      %10364 = vmatmul.mubr.bf16.gmra.mrb[0].mxu0 %v10224
      %v10365 = vpop.f32.mrb[0].mxu0
      %v10366 = vadd.f32 %v10173, %v10365
      %v10367 = vpop.f32.mrb[0].mxu0
      %v10368 = vpop.f32.mrb[0].mxu0
      %v10369 = vadd.f32 %v10173, %v10368
      %v10370 = vpop.f32.mrb[0].mxu0
      %10371 = vmatprep.mubr.bf16.mxu0 0
      %10372 = vmatmul.mubr.bf16.gmra.mrb[0].mxu0 %v10227
      %v10373 = vpop.f32.mrb[0].mxu0
      %v10374 = vadd.f32 %v10173, %v10373
      %v10375 = vpop.f32.mrb[0].mxu0
      %v10376 = vpop.f32.mrb[0].mxu0
      %v10377 = vadd.f32 %v10173, %v10376
      %v10378 = vpop.f32.mrb[0].mxu0
      %10379 = vmatprep.mubr.bf16.mxu0 0
      %10380 = vmatmul.mubr.bf16.gmra.mrb[0].mxu0 %v10230
      %v10381 = vpop.f32.mrb[0].mxu0
      %v10382 = vadd.f32 %v10173, %v10381
      %v10383 = vpop.f32.mrb[0].mxu0
      %v10384 = vpop.f32.mrb[0].mxu0
      %v10385 = vadd.f32 %v10173, %v10384
      %v10386 = vpop.f32.mrb[0].mxu0
      %10387 = vmatprep.mubr.bf16.mxu0 0
      %10388 = vmatmul.mubr.bf16.gmra.mrb[0].mxu0 %v10233
      %v10389 = vpop.f32.mrb[0].mxu0
      %v10390 = vadd.f32 %v10173, %v10389
      %v10391 = vpop.f32.mrb[0].mxu0
      %v10392 = vpop.f32.mrb[0].mxu0
      %v10393 = vadd.f32 %v10173, %v10392
      %v10394 = vpop.f32.mrb[0].mxu0
      %10395 = vdwg.mxu0
      %v10396 = vmax.f32 %v10270, 0.0
      %v10397 = vmax.f32 %v10273, 0.0
      %v10398 = vmax.f32 %v10278, 0.0
      %v10399 = vmax.f32 %v10281, 0.0
      %v10400 = vmax.f32 %v10286, 0.0
      %v10401 = vmax.f32 %v10289, 0.0
      %v10402 = vmax.f32 %v10294, 0.0
      %v10403 = vmax.f32 %v10297, 0.0
      %v10404 = vmax.f32 %v10302, 0.0
      %v10405 = vmax.f32 %v10305, 0.0
      %v10406 = vmax.f32 %v10310, 0.0
      %v10407 = vmax.f32 %v10313, 0.0
      %v10408 = vmax.f32 %v10318, 0.0
      %v10409 = vmax.f32 %v10321, 0.0
      %v10410 = vmax.f32 %v10326, 0.0
      %v10411 = vmax.f32 %v10329, 0.0
      %v10412 = vmax.f32 %v10334, 0.0
      %v10413 = vmax.f32 %v10337, 0.0
      %v10414 = vmax.f32 %v10342, 0.0
      %v10415 = vmax.f32 %v10345, 0.0
      %v10416 = vmax.f32 %v10350, 0.0
      %v10417 = vmax.f32 %v10353, 0.0
      %v10418 = vmax.f32 %v10358, 0.0
      %v10419 = vmax.f32 %v10361, 0.0
      %v10420 = vmax.f32 %v10366, 0.0
      %v10421 = vmax.f32 %v10369, 0.0
      %v10422 = vmax.f32 %v10374, 0.0
      %v10423 = vmax.f32 %v10377, 0.0
      %v10424 = vmax.f32 %v10382, 0.0
      %v10425 = vmax.f32 %v10385, 0.0
      %v10426 = vmax.f32 %v10390, 0.0
      %v10427 = vmax.f32 %v10393, 0.0
      %s10428 = scalar_lea.vmem %s278, 512
      %10429 = vst.msk [vmem:[%s10428] sm:$0xff] %vm1204, %v10396
      %10430 = vst.msk [vmem:[%s10428 + $0x8] sm:$0xff] %vm1204, %v10397
      %10431 = vst.msk [vmem:[%s10428 + $0x10] sm:$0xff] %vm1204, %v10398
      %10432 = vst.msk [vmem:[%s10428 + $0x18] sm:$0xff] %vm1204, %v10399
      %10433 = vst.msk [vmem:[%s10428 + $0x20] sm:$0xff] %vm1204, %v10400
      %10434 = vst.msk [vmem:[%s10428 + $0x28] sm:$0xff] %vm1204, %v10401
      %10435 = vst.msk [vmem:[%s10428 + $0x30] sm:$0xff] %vm1204, %v10402
      %10436 = vst.msk [vmem:[%s10428 + $0x38] sm:$0xff] %vm1204, %v10403
      %10437 = vst.msk [vmem:[%s10428 + $0x40] sm:$0xff] %vm1204, %v10404
      %10438 = vst.msk [vmem:[%s10428 + $0x48] sm:$0xff] %vm1204, %v10405
      %10439 = vst.msk [vmem:[%s10428 + $0x50] sm:$0xff] %vm1204, %v10406
      %10440 = vst.msk [vmem:[%s10428 + $0x58] sm:$0xff] %vm1204, %v10407
      %10441 = vst.msk [vmem:[%s10428 + $0x60] sm:$0xff] %vm1204, %v10408
      %10442 = vst.msk [vmem:[%s10428 + $0x68] sm:$0xff] %vm1204, %v10409
      %10443 = vst.msk [vmem:[%s10428 + $0x70] sm:$0xff] %vm1204, %v10410
      %10444 = vst.msk [vmem:[%s10428 + $0x78] sm:$0xff] %vm1204, %v10411
      %10445 = vst.msk [vmem:[%s10428 + $0x80] sm:$0xff] %vm1204, %v10412
      %10446 = vst.msk [vmem:[%s10428 + $0x88] sm:$0xff] %vm1204, %v10413
      %10447 = vst.msk [vmem:[%s10428 + $0x90] sm:$0xff] %vm1204, %v10414
      %10448 = vst.msk [vmem:[%s10428 + $0x98] sm:$0xff] %vm1204, %v10415
      %10449 = vst.msk [vmem:[%s10428 + $0xa0] sm:$0xff] %vm1204, %v10416
      %10450 = vst.msk [vmem:[%s10428 + $0xa8] sm:$0xff] %vm1204, %v10417
      %10451 = vst.msk [vmem:[%s10428 + $0xb0] sm:$0xff] %vm1204, %v10418
      %10452 = vst.msk [vmem:[%s10428 + $0xb8] sm:$0xff] %vm1204, %v10419
      %10453 = vst.msk [vmem:[%s10428 + $0xc0] sm:$0xff] %vm1204, %v10420
      %10454 = vst.msk [vmem:[%s10428 + $0xc8] sm:$0xff] %vm1204, %v10421
      %10455 = vst.msk [vmem:[%s10428 + $0xd0] sm:$0xff] %vm1204, %v10422
      %10456 = vst.msk [vmem:[%s10428 + $0xd8] sm:$0xff] %vm1204, %v10423
      %10457 = vst.msk [vmem:[%s10428 + $0xe0] sm:$0xff] %vm1204, %v10424
      %10458 = vst.msk [vmem:[%s10428 + $0xe8] sm:$0xff] %vm1204, %v10425
      %10459 = vst.msk [vmem:[%s10428 + $0xf0] sm:$0xff] %vm1204, %v10426
      %10460 = vst.msk [vmem:[%s10428 + $0xf8] sm:$0xff] %vm1204, %v10427
      %v10461 = vld [vmem:[%s4885] sm:$0xf]
      %v10462 = vld [vmem:[%s4885 + $0x4] sm:$0xf]
      %v10463 = vld [vmem:[%s4885 + $0x8] sm:$0x1]
      %v10464 = vld [vmem:[%s4885 + $0xc] sm:$0xf]
      %v10465 = vld [vmem:[%s4885 + $0x10] sm:$0xf]
      %v10466 = vld [vmem:[%s4885 + $0x14] sm:$0x1]
      %v10467 = vld [vmem:[%s4885 + $0x18] sm:$0xf]
      %v10468 = vld [vmem:[%s4885 + $0x1c] sm:$0xf]
      %v10469 = vld [vmem:[%s4885 + $0x20] sm:$0x1]
      %v10470 = vld [vmem:[%s4885 + $0x24] sm:$0xf]
      %v10471 = vld [vmem:[%s4885 + $0x28] sm:$0xf]
      %v10472 = vld [vmem:[%s4885 + $0x2c] sm:$0x1]
      %v10473 = vld [vmem:[%s4885 + $0x30] sm:$0xf]
      %v10474 = vld [vmem:[%s4885 + $0x34] sm:$0xf]
      %v10475 = vld [vmem:[%s4885 + $0x38] sm:$0x1]
      %v10476 = vld [vmem:[%s4885 + $0x3c] sm:$0xf]
      %v10477 = vld [vmem:[%s4885 + $0x40] sm:$0xf]
      %v10478 = vld [vmem:[%s4885 + $0x44] sm:$0x1]
      %v10479 = vld [vmem:[%s4885 + $0x48] sm:$0xf]
      %v10480 = vld [vmem:[%s4885 + $0x4c] sm:$0xf]
      %v10481 = vld [vmem:[%s4885 + $0x50] sm:$0x1]
      %v10482 = vld [vmem:[%s4885 + $0x54] sm:$0xf]
      %v10483 = vld [vmem:[%s4885 + $0x58] sm:$0xf]
      %v10484 = vld [vmem:[%s4885 + $0x5c] sm:$0x1]
      %v10485 = vld [vmem:[%s4885 + $0x60] sm:$0xf]
      %v10486 = vld [vmem:[%s4885 + $0x64] sm:$0xf]
      %v10487 = vld [vmem:[%s4885 + $0x68] sm:$0x1]
      %v10488 = vld [vmem:[%s4885 + $0x6c] sm:$0xf]
      %v10489 = vld [vmem:[%s4885 + $0x70] sm:$0xf]
      %v10490 = vld [vmem:[%s4885 + $0x74] sm:$0x1]
      %v10491 = vld [vmem:[%s4885 + $0x78] sm:$0xf]
      %v10492 = vld [vmem:[%s4885 + $0x7c] sm:$0xf]
      %v10493 = vld [vmem:[%s4885 + $0x80] sm:$0x1]
      %v10494 = vld [vmem:[%s4885 + $0x84] sm:$0xf]
      %v10495 = vld [vmem:[%s4885 + $0x88] sm:$0xf]
      %v10496 = vld [vmem:[%s4885 + $0x8c] sm:$0x1]
      %v10497 = vld [vmem:[%s4885 + $0x90] sm:$0xf]
      %v10498 = vld [vmem:[%s4885 + $0x94] sm:$0xf]
      %v10499 = vld [vmem:[%s4885 + $0x98] sm:$0x1]
      %v10500 = vld [vmem:[%s4885 + $0x9c] sm:$0xf]
      %v10501 = vld [vmem:[%s4885 + $0xa0] sm:$0xf]
      %v10502 = vld [vmem:[%s4885 + $0xa4] sm:$0x1]
      %v10503 = vld [vmem:[%s4885 + $0xa8] sm:$0xf]
      %v10504 = vld [vmem:[%s4885 + $0xac] sm:$0xf]
      %v10505 = vld [vmem:[%s4885 + $0xb0] sm:$0x1]
      %v10506 = vld [vmem:[%s4885 + $0xb4] sm:$0xf]
      %v10507 = vld [vmem:[%s4885 + $0xb8] sm:$0xf]
      %v10508 = vld [vmem:[%s4885 + $0xbc] sm:$0x1]
      %v10510 = vshrl.u32 %v10461, 16
      %v10512 = vrot.slane %v10510, 4
      %v10513 = vshll.u32 %v10461, 16
      %v10515 = vrot.slane %v10513, 5
      %v10516 = vor.u32 %v10512, %v10515
      %v10517 = vrot.slane %v10516, 4
      %v10519 = vshll.u32 %v10462, 16
      %v10521 = vrot.slane %v10519, 5
      %v10522 = vsel %vm1271, %v10517, %v10521
      %v10523 = vshrl.u32 %v10462, 16
      %v10525 = vrot.slane %v10523, 4
      %v10526 = vor.u32 %v10525, %v10521
      %v10527 = vrot.slane %v10526, 4
      %v10529 = vshll.u32 %v10463, 16
      %v10531 = vrot.slane %v10529, 5
      %v10532 = vsel %vm1271, %v10527, %v10531
      %v10534 = vshrl.u32 %v10464, 16
      %v10536 = vrot.slane %v10534, 4
      %v10537 = vshll.u32 %v10464, 16
      %v10539 = vrot.slane %v10537, 5
      %v10540 = vor.u32 %v10536, %v10539
      %v10541 = vrot.slane %v10540, 4
      %v10543 = vshll.u32 %v10465, 16
      %v10545 = vrot.slane %v10543, 5
      %v10546 = vsel %vm1271, %v10541, %v10545
      %v10547 = vshrl.u32 %v10465, 16
      %v10549 = vrot.slane %v10547, 4
      %v10550 = vor.u32 %v10549, %v10545
      %v10551 = vrot.slane %v10550, 4
      %v10553 = vshll.u32 %v10466, 16
      %v10555 = vrot.slane %v10553, 5
      %v10556 = vsel %vm1271, %v10551, %v10555
      %v10558 = vshrl.u32 %v10467, 16
      %v10560 = vrot.slane %v10558, 4
      %v10561 = vshll.u32 %v10467, 16
      %v10563 = vrot.slane %v10561, 5
      %v10564 = vor.u32 %v10560, %v10563
      %v10565 = vrot.slane %v10564, 4
      %v10567 = vshll.u32 %v10468, 16
      %v10569 = vrot.slane %v10567, 5
      %v10570 = vsel %vm1271, %v10565, %v10569
      %v10571 = vshrl.u32 %v10468, 16
      %v10573 = vrot.slane %v10571, 4
      %v10574 = vor.u32 %v10573, %v10569
      %v10575 = vrot.slane %v10574, 4
      %v10577 = vshll.u32 %v10469, 16
      %v10579 = vrot.slane %v10577, 5
      %v10580 = vsel %vm1271, %v10575, %v10579
      %v10582 = vshrl.u32 %v10470, 16
      %v10584 = vrot.slane %v10582, 4
      %v10585 = vshll.u32 %v10470, 16
      %v10587 = vrot.slane %v10585, 5
      %v10588 = vor.u32 %v10584, %v10587
      %v10589 = vrot.slane %v10588, 4
      %v10591 = vshll.u32 %v10471, 16
      %v10593 = vrot.slane %v10591, 5
      %v10594 = vsel %vm1271, %v10589, %v10593
      %v10595 = vshrl.u32 %v10471, 16
      %v10597 = vrot.slane %v10595, 4
      %v10598 = vor.u32 %v10597, %v10593
      %v10599 = vrot.slane %v10598, 4
      %v10601 = vshll.u32 %v10472, 16
      %v10603 = vrot.slane %v10601, 5
      %v10604 = vsel %vm1271, %v10599, %v10603
      %v10606 = vshrl.u32 %v10473, 16
      %v10608 = vrot.slane %v10606, 4
      %v10609 = vshll.u32 %v10473, 16
      %v10611 = vrot.slane %v10609, 5
      %v10612 = vor.u32 %v10608, %v10611
      %v10613 = vrot.slane %v10612, 4
      %v10615 = vshll.u32 %v10474, 16
      %v10617 = vrot.slane %v10615, 5
      %v10618 = vsel %vm1271, %v10613, %v10617
      %v10619 = vshrl.u32 %v10474, 16
      %v10621 = vrot.slane %v10619, 4
      %v10622 = vor.u32 %v10621, %v10617
      %v10623 = vrot.slane %v10622, 4
      %v10625 = vshll.u32 %v10475, 16
      %v10627 = vrot.slane %v10625, 5
      %v10628 = vsel %vm1271, %v10623, %v10627
      %v10630 = vshrl.u32 %v10476, 16
      %v10632 = vrot.slane %v10630, 4
      %v10633 = vshll.u32 %v10476, 16
      %v10635 = vrot.slane %v10633, 5
      %v10636 = vor.u32 %v10632, %v10635
      %v10637 = vrot.slane %v10636, 4
      %v10639 = vshll.u32 %v10477, 16
      %v10641 = vrot.slane %v10639, 5
      %v10642 = vsel %vm1271, %v10637, %v10641
      %v10643 = vshrl.u32 %v10477, 16
      %v10645 = vrot.slane %v10643, 4
      %v10646 = vor.u32 %v10645, %v10641
      %v10647 = vrot.slane %v10646, 4
      %v10649 = vshll.u32 %v10478, 16
      %v10651 = vrot.slane %v10649, 5
      %v10652 = vsel %vm1271, %v10647, %v10651
      %v10654 = vshrl.u32 %v10479, 16
      %v10656 = vrot.slane %v10654, 4
      %v10657 = vshll.u32 %v10479, 16
      %v10659 = vrot.slane %v10657, 5
      %v10660 = vor.u32 %v10656, %v10659
      %v10661 = vrot.slane %v10660, 4
      %v10663 = vshll.u32 %v10480, 16
      %v10665 = vrot.slane %v10663, 5
      %v10666 = vsel %vm1271, %v10661, %v10665
      %v10667 = vshrl.u32 %v10480, 16
      %v10669 = vrot.slane %v10667, 4
      %v10670 = vor.u32 %v10669, %v10665
      %v10671 = vrot.slane %v10670, 4
      %v10673 = vshll.u32 %v10481, 16
      %v10675 = vrot.slane %v10673, 5
      %v10676 = vsel %vm1271, %v10671, %v10675
      %v10678 = vshrl.u32 %v10482, 16
      %v10680 = vrot.slane %v10678, 4
      %v10681 = vshll.u32 %v10482, 16
      %v10683 = vrot.slane %v10681, 5
      %v10684 = vor.u32 %v10680, %v10683
      %v10685 = vrot.slane %v10684, 4
      %v10687 = vshll.u32 %v10483, 16
      %v10689 = vrot.slane %v10687, 5
      %v10690 = vsel %vm1271, %v10685, %v10689
      %v10691 = vshrl.u32 %v10483, 16
      %v10693 = vrot.slane %v10691, 4
      %v10694 = vor.u32 %v10693, %v10689
      %v10695 = vrot.slane %v10694, 4
      %v10697 = vshll.u32 %v10484, 16
      %v10699 = vrot.slane %v10697, 5
      %v10700 = vsel %vm1271, %v10695, %v10699
      %v10702 = vshrl.u32 %v10485, 16
      %v10704 = vrot.slane %v10702, 4
      %v10705 = vshll.u32 %v10485, 16
      %v10707 = vrot.slane %v10705, 5
      %v10708 = vor.u32 %v10704, %v10707
      %v10709 = vrot.slane %v10708, 4
      %v10711 = vshll.u32 %v10486, 16
      %v10713 = vrot.slane %v10711, 5
      %v10714 = vsel %vm1271, %v10709, %v10713
      %v10715 = vshrl.u32 %v10486, 16
      %v10717 = vrot.slane %v10715, 4
      %v10718 = vor.u32 %v10717, %v10713
      %v10719 = vrot.slane %v10718, 4
      %v10721 = vshll.u32 %v10487, 16
      %v10723 = vrot.slane %v10721, 5
      %v10724 = vsel %vm1271, %v10719, %v10723
      %v10726 = vshrl.u32 %v10488, 16
      %v10728 = vrot.slane %v10726, 4
      %v10729 = vshll.u32 %v10488, 16
      %v10731 = vrot.slane %v10729, 5
      %v10732 = vor.u32 %v10728, %v10731
      %v10733 = vrot.slane %v10732, 4
      %v10735 = vshll.u32 %v10489, 16
      %v10737 = vrot.slane %v10735, 5
      %v10738 = vsel %vm1271, %v10733, %v10737
      %v10739 = vshrl.u32 %v10489, 16
      %v10741 = vrot.slane %v10739, 4
      %v10742 = vor.u32 %v10741, %v10737
      %v10743 = vrot.slane %v10742, 4
      %v10745 = vshll.u32 %v10490, 16
      %v10747 = vrot.slane %v10745, 5
      %v10748 = vsel %vm1271, %v10743, %v10747
      %v10750 = vshrl.u32 %v10491, 16
      %v10752 = vrot.slane %v10750, 4
      %v10753 = vshll.u32 %v10491, 16
      %v10755 = vrot.slane %v10753, 5
      %v10756 = vor.u32 %v10752, %v10755
      %v10757 = vrot.slane %v10756, 4
      %v10759 = vshll.u32 %v10492, 16
      %v10761 = vrot.slane %v10759, 5
      %v10762 = vsel %vm1271, %v10757, %v10761
      %v10763 = vshrl.u32 %v10492, 16
      %v10765 = vrot.slane %v10763, 4
      %v10766 = vor.u32 %v10765, %v10761
      %v10767 = vrot.slane %v10766, 4
      %v10769 = vshll.u32 %v10493, 16
      %v10771 = vrot.slane %v10769, 5
      %v10772 = vsel %vm1271, %v10767, %v10771
      %v10774 = vshrl.u32 %v10494, 16
      %v10776 = vrot.slane %v10774, 4
      %v10777 = vshll.u32 %v10494, 16
      %v10779 = vrot.slane %v10777, 5
      %v10780 = vor.u32 %v10776, %v10779
      %v10781 = vrot.slane %v10780, 4
      %v10783 = vshll.u32 %v10495, 16
      %v10785 = vrot.slane %v10783, 5
      %v10786 = vsel %vm1271, %v10781, %v10785
      %v10787 = vshrl.u32 %v10495, 16
      %v10789 = vrot.slane %v10787, 4
      %v10790 = vor.u32 %v10789, %v10785
      %v10791 = vrot.slane %v10790, 4
      %v10793 = vshll.u32 %v10496, 16
      %v10795 = vrot.slane %v10793, 5
      %v10796 = vsel %vm1271, %v10791, %v10795
      %v10798 = vshrl.u32 %v10497, 16
      %v10800 = vrot.slane %v10798, 4
      %v10801 = vshll.u32 %v10497, 16
      %v10803 = vrot.slane %v10801, 5
      %v10804 = vor.u32 %v10800, %v10803
      %v10805 = vrot.slane %v10804, 4
      %v10807 = vshll.u32 %v10498, 16
      %v10809 = vrot.slane %v10807, 5
      %v10810 = vsel %vm1271, %v10805, %v10809
      %v10811 = vshrl.u32 %v10498, 16
      %v10813 = vrot.slane %v10811, 4
      %v10814 = vor.u32 %v10813, %v10809
      %v10815 = vrot.slane %v10814, 4
      %v10817 = vshll.u32 %v10499, 16
      %v10819 = vrot.slane %v10817, 5
      %v10820 = vsel %vm1271, %v10815, %v10819
      %v10822 = vshrl.u32 %v10500, 16
      %v10824 = vrot.slane %v10822, 4
      %v10825 = vshll.u32 %v10500, 16
      %v10827 = vrot.slane %v10825, 5
      %v10828 = vor.u32 %v10824, %v10827
      %v10829 = vrot.slane %v10828, 4
      %v10831 = vshll.u32 %v10501, 16
      %v10833 = vrot.slane %v10831, 5
      %v10834 = vsel %vm1271, %v10829, %v10833
      %v10835 = vshrl.u32 %v10501, 16
      %v10837 = vrot.slane %v10835, 4
      %v10838 = vor.u32 %v10837, %v10833
      %v10839 = vrot.slane %v10838, 4
      %v10841 = vshll.u32 %v10502, 16
      %v10843 = vrot.slane %v10841, 5
      %v10844 = vsel %vm1271, %v10839, %v10843
      %v10846 = vshrl.u32 %v10503, 16
      %v10848 = vrot.slane %v10846, 4
      %v10849 = vshll.u32 %v10503, 16
      %v10851 = vrot.slane %v10849, 5
      %v10852 = vor.u32 %v10848, %v10851
      %v10853 = vrot.slane %v10852, 4
      %v10855 = vshll.u32 %v10504, 16
      %v10857 = vrot.slane %v10855, 5
      %v10858 = vsel %vm1271, %v10853, %v10857
      %v10859 = vshrl.u32 %v10504, 16
      %v10861 = vrot.slane %v10859, 4
      %v10862 = vor.u32 %v10861, %v10857
      %v10863 = vrot.slane %v10862, 4
      %v10865 = vshll.u32 %v10505, 16
      %v10867 = vrot.slane %v10865, 5
      %v10868 = vsel %vm1271, %v10863, %v10867
      %v10870 = vshrl.u32 %v10506, 16
      %v10872 = vrot.slane %v10870, 4
      %v10873 = vshll.u32 %v10506, 16
      %v10875 = vrot.slane %v10873, 5
      %v10876 = vor.u32 %v10872, %v10875
      %v10877 = vrot.slane %v10876, 4
      %v10879 = vshll.u32 %v10507, 16
      %v10881 = vrot.slane %v10879, 5
      %v10882 = vsel %vm1271, %v10877, %v10881
      %v10883 = vshrl.u32 %v10507, 16
      %v10885 = vrot.slane %v10883, 4
      %v10886 = vor.u32 %v10885, %v10881
      %v10887 = vrot.slane %v10886, 4
      %v10889 = vshll.u32 %v10508, 16
      %v10891 = vrot.slane %v10889, 5
      %v10892 = vsel %vm1271, %v10887, %v10891
      %v10893 = vunpack.c.l.b16 %v10522
      %v10894 = vunpack.c.l.b16 %v10532
      %v10895 = vunpack.c.l.b16 %v10546
      %v10896 = vunpack.c.l.b16 %v10556
      %v10897 = vunpack.c.l.b16 %v10570
      %v10898 = vunpack.c.l.b16 %v10580
      %v10899 = vunpack.c.l.b16 %v10594
      %v10900 = vunpack.c.l.b16 %v10604
      %v10901 = vunpack.c.l.b16 %v10618
      %v10902 = vunpack.c.l.b16 %v10628
      %v10903 = vunpack.c.l.b16 %v10642
      %v10904 = vunpack.c.l.b16 %v10652
      %v10905 = vunpack.c.l.b16 %v10666
      %v10906 = vunpack.c.l.b16 %v10676
      %v10907 = vunpack.c.l.b16 %v10690
      %v10908 = vunpack.c.l.b16 %v10700
      %v10909 = vunpack.c.l.b16 %v10714
      %v10910 = vunpack.c.l.b16 %v10724
      %v10911 = vunpack.c.l.b16 %v10738
      %v10912 = vunpack.c.l.b16 %v10748
      %v10913 = vunpack.c.l.b16 %v10762
      %v10914 = vunpack.c.l.b16 %v10772
      %v10915 = vunpack.c.l.b16 %v10786
      %v10916 = vunpack.c.l.b16 %v10796
      %v10917 = vunpack.c.l.b16 %v10810
      %v10918 = vunpack.c.l.b16 %v10820
      %v10919 = vunpack.c.l.b16 %v10834
      %v10920 = vunpack.c.l.b16 %v10844
      %v10921 = vunpack.c.l.b16 %v10858
      %v10922 = vunpack.c.l.b16 %v10868
      %v10923 = vunpack.c.l.b16 %v10882
      %v10924 = vunpack.c.l.b16 %v10892
      %v10925 = vpack.c.b16 %v10894, %v10893
      %v10926 = vpack.c.b16 %v10896, %v10895
      %v10927 = vpack.c.b16 %v10898, %v10897
      %v10928 = vpack.c.b16 %v10900, %v10899
      %v10929 = vpack.c.b16 %v10902, %v10901
      %v10930 = vpack.c.b16 %v10904, %v10903
      %v10931 = vpack.c.b16 %v10906, %v10905
      %v10932 = vpack.c.b16 %v10908, %v10907
      %v10933 = vpack.c.b16 %v10910, %v10909
      %v10934 = vpack.c.b16 %v10912, %v10911
      %v10935 = vpack.c.b16 %v10914, %v10913
      %v10936 = vpack.c.b16 %v10916, %v10915
      %v10937 = vpack.c.b16 %v10918, %v10917
      %v10938 = vpack.c.b16 %v10920, %v10919
      %v10939 = vpack.c.b16 %v10922, %v10921
      %v10940 = vpack.c.b16 %v10924, %v10923
      %10957 = vst.msk [vmem:[#allocation5] sm:$0xff] %vm5131, %v10925
      %10958 = vst.msk [vmem:[#allocation5 + $0x8] sm:$0xff] %vm5131, %v10926
      %10959 = vst.msk [vmem:[#allocation5 + $0x10] sm:$0xff] %vm5131, %v10927
      %10960 = vst.msk [vmem:[#allocation5 + $0x18] sm:$0xff] %vm5131, %v10928
      %10961 = vst.msk [vmem:[#allocation5 + $0x20] sm:$0xff] %vm5131, %v10929
      %10962 = vst.msk [vmem:[#allocation5 + $0x28] sm:$0xff] %vm5131, %v10930
      %10963 = vst.msk [vmem:[#allocation5 + $0x30] sm:$0xff] %vm5131, %v10931
      %10964 = vst.msk [vmem:[#allocation5 + $0x38] sm:$0xff] %vm5131, %v10932
      %10965 = vst.msk [vmem:[#allocation5 + $0x40] sm:$0xff] %vm5131, %v10933
      %10966 = vst.msk [vmem:[#allocation5 + $0x48] sm:$0xff] %vm5131, %v10934
      %10967 = vst.msk [vmem:[#allocation5 + $0x50] sm:$0xff] %vm5131, %v10935
      %10968 = vst.msk [vmem:[#allocation5 + $0x58] sm:$0xff] %vm5131, %v10936
      %10969 = vst.msk [vmem:[#allocation5 + $0x60] sm:$0xff] %vm5131, %v10937
      %10970 = vst.msk [vmem:[#allocation5 + $0x68] sm:$0xff] %vm5131, %v10938
      %10971 = vst.msk [vmem:[#allocation5 + $0x70] sm:$0xff] %vm5131, %v10939
      %10972 = vst.msk [vmem:[#allocation5 + $0x78] sm:$0xff] %vm5131, %v10940
      %v10973 = vld [vmem:[%s4885] sm:$0xe]
      %v10974 = vld [vmem:[%s4885 + $0x4] sm:$0xf]
      %v10975 = vld [vmem:[%s4885 + $0x8] sm:$0x1]
      %v10976 = vld [vmem:[%s4885 + $0xc] sm:$0xe]
      %v10977 = vld [vmem:[%s4885 + $0x10] sm:$0xf]
      %v10978 = vld [vmem:[%s4885 + $0x14] sm:$0x1]
      %v10979 = vld [vmem:[%s4885 + $0x18] sm:$0xe]
      %v10980 = vld [vmem:[%s4885 + $0x1c] sm:$0xf]
      %v10981 = vld [vmem:[%s4885 + $0x20] sm:$0x1]
      %v10982 = vld [vmem:[%s4885 + $0x24] sm:$0xe]
      %v10983 = vld [vmem:[%s4885 + $0x28] sm:$0xf]
      %v10984 = vld [vmem:[%s4885 + $0x2c] sm:$0x1]
      %v10985 = vld [vmem:[%s4885 + $0x30] sm:$0xe]
      %v10986 = vld [vmem:[%s4885 + $0x34] sm:$0xf]
      %v10987 = vld [vmem:[%s4885 + $0x38] sm:$0x1]
      %v10988 = vld [vmem:[%s4885 + $0x3c] sm:$0xe]
      %v10989 = vld [vmem:[%s4885 + $0x40] sm:$0xf]
      %v10990 = vld [vmem:[%s4885 + $0x44] sm:$0x1]
      %v10991 = vld [vmem:[%s4885 + $0x48] sm:$0xe]
      %v10992 = vld [vmem:[%s4885 + $0x4c] sm:$0xf]
      %v10993 = vld [vmem:[%s4885 + $0x50] sm:$0x1]
      %v10994 = vld [vmem:[%s4885 + $0x54] sm:$0xe]
      %v10995 = vld [vmem:[%s4885 + $0x58] sm:$0xf]
      %v10996 = vld [vmem:[%s4885 + $0x5c] sm:$0x1]
      %v10997 = vld [vmem:[%s4885 + $0x60] sm:$0xe]
      %v10998 = vld [vmem:[%s4885 + $0x64] sm:$0xf]
      %v10999 = vld [vmem:[%s4885 + $0x68] sm:$0x1]
      %v11000 = vld [vmem:[%s4885 + $0x6c] sm:$0xe]
      %v11001 = vld [vmem:[%s4885 + $0x70] sm:$0xf]
      %v11002 = vld [vmem:[%s4885 + $0x74] sm:$0x1]
      %v11003 = vld [vmem:[%s4885 + $0x78] sm:$0xe]
      %v11004 = vld [vmem:[%s4885 + $0x7c] sm:$0xf]
      %v11005 = vld [vmem:[%s4885 + $0x80] sm:$0x1]
      %v11006 = vld [vmem:[%s4885 + $0x84] sm:$0xe]
      %v11007 = vld [vmem:[%s4885 + $0x88] sm:$0xf]
      %v11008 = vld [vmem:[%s4885 + $0x8c] sm:$0x1]
      %v11009 = vld [vmem:[%s4885 + $0x90] sm:$0xe]
      %v11010 = vld [vmem:[%s4885 + $0x94] sm:$0xf]
      %v11011 = vld [vmem:[%s4885 + $0x98] sm:$0x1]
      %v11012 = vld [vmem:[%s4885 + $0x9c] sm:$0xe]
      %v11013 = vld [vmem:[%s4885 + $0xa0] sm:$0xf]
      %v11014 = vld [vmem:[%s4885 + $0xa4] sm:$0x1]
      %v11015 = vld [vmem:[%s4885 + $0xa8] sm:$0xe]
      %v11016 = vld [vmem:[%s4885 + $0xac] sm:$0xf]
      %v11017 = vld [vmem:[%s4885 + $0xb0] sm:$0x1]
      %v11018 = vld [vmem:[%s4885 + $0xb4] sm:$0xe]
      %v11019 = vld [vmem:[%s4885 + $0xb8] sm:$0xf]
      %v11020 = vld [vmem:[%s4885 + $0xbc] sm:$0x1]
      %v11069 = vrot.slane %v10973, 5
      %v11070 = vrot.slane %v11069, 4
      %v11071 = vrot.slane %v10974, 5
      %v11072 = vsel %vm1867, %v11070, %v11071
      %v11073 = vrot.slane %v11071, 4
      %v11074 = vrot.slane %v10975, 5
      %v11075 = vsel %vm1867, %v11073, %v11074
      %v11076 = vrot.slane %v10976, 5
      %v11077 = vrot.slane %v11076, 4
      %v11078 = vrot.slane %v10977, 5
      %v11079 = vsel %vm1867, %v11077, %v11078
      %v11080 = vrot.slane %v11078, 4
      %v11081 = vrot.slane %v10978, 5
      %v11082 = vsel %vm1867, %v11080, %v11081
      %v11083 = vrot.slane %v10979, 5
      %v11084 = vrot.slane %v11083, 4
      %v11085 = vrot.slane %v10980, 5
      %v11086 = vsel %vm1867, %v11084, %v11085
      %v11087 = vrot.slane %v11085, 4
      %v11088 = vrot.slane %v10981, 5
      %v11089 = vsel %vm1867, %v11087, %v11088
      %v11090 = vrot.slane %v10982, 5
      %v11091 = vrot.slane %v11090, 4
      %v11092 = vrot.slane %v10983, 5
      %v11093 = vsel %vm1867, %v11091, %v11092
      %v11094 = vrot.slane %v11092, 4
      %v11095 = vrot.slane %v10984, 5
      %v11096 = vsel %vm1867, %v11094, %v11095
      %v11097 = vrot.slane %v10985, 5
      %v11098 = vrot.slane %v11097, 4
      %v11099 = vrot.slane %v10986, 5
      %v11100 = vsel %vm1867, %v11098, %v11099
      %v11101 = vrot.slane %v11099, 4
      %v11102 = vrot.slane %v10987, 5
      %v11103 = vsel %vm1867, %v11101, %v11102
      %v11104 = vrot.slane %v10988, 5
      %v11105 = vrot.slane %v11104, 4
      %v11106 = vrot.slane %v10989, 5
      %v11107 = vsel %vm1867, %v11105, %v11106
      %v11108 = vrot.slane %v11106, 4
      %v11109 = vrot.slane %v10990, 5
      %v11110 = vsel %vm1867, %v11108, %v11109
      %v11111 = vrot.slane %v10991, 5
      %v11112 = vrot.slane %v11111, 4
      %v11113 = vrot.slane %v10992, 5
      %v11114 = vsel %vm1867, %v11112, %v11113
      %v11115 = vrot.slane %v11113, 4
      %v11116 = vrot.slane %v10993, 5
      %v11117 = vsel %vm1867, %v11115, %v11116
      %v11118 = vrot.slane %v10994, 5
      %v11119 = vrot.slane %v11118, 4
      %v11120 = vrot.slane %v10995, 5
      %v11121 = vsel %vm1867, %v11119, %v11120
      %v11122 = vrot.slane %v11120, 4
      %v11123 = vrot.slane %v10996, 5
      %v11124 = vsel %vm1867, %v11122, %v11123
      %v11125 = vrot.slane %v10997, 5
      %v11126 = vrot.slane %v11125, 4
      %v11127 = vrot.slane %v10998, 5
      %v11128 = vsel %vm1867, %v11126, %v11127
      %v11129 = vrot.slane %v11127, 4
      %v11130 = vrot.slane %v10999, 5
      %v11131 = vsel %vm1867, %v11129, %v11130
      %v11132 = vrot.slane %v11000, 5
      %v11133 = vrot.slane %v11132, 4
      %v11134 = vrot.slane %v11001, 5
      %v11135 = vsel %vm1867, %v11133, %v11134
      %v11136 = vrot.slane %v11134, 4
      %v11137 = vrot.slane %v11002, 5
      %v11138 = vsel %vm1867, %v11136, %v11137
      %v11139 = vrot.slane %v11003, 5
      %v11140 = vrot.slane %v11139, 4
      %v11141 = vrot.slane %v11004, 5
      %v11142 = vsel %vm1867, %v11140, %v11141
      %v11143 = vrot.slane %v11141, 4
      %v11144 = vrot.slane %v11005, 5
      %v11145 = vsel %vm1867, %v11143, %v11144
      %v11146 = vrot.slane %v11006, 5
      %v11147 = vrot.slane %v11146, 4
      %v11148 = vrot.slane %v11007, 5
      %v11149 = vsel %vm1867, %v11147, %v11148
      %v11150 = vrot.slane %v11148, 4
      %v11151 = vrot.slane %v11008, 5
      %v11152 = vsel %vm1867, %v11150, %v11151
      %v11153 = vrot.slane %v11009, 5
      %v11154 = vrot.slane %v11153, 4
      %v11155 = vrot.slane %v11010, 5
      %v11156 = vsel %vm1867, %v11154, %v11155
      %v11157 = vrot.slane %v11155, 4
      %v11158 = vrot.slane %v11011, 5
      %v11159 = vsel %vm1867, %v11157, %v11158
      %v11160 = vrot.slane %v11012, 5
      %v11161 = vrot.slane %v11160, 4
      %v11162 = vrot.slane %v11013, 5
      %v11163 = vsel %vm1867, %v11161, %v11162
      %v11164 = vrot.slane %v11162, 4
      %v11165 = vrot.slane %v11014, 5
      %v11166 = vsel %vm1867, %v11164, %v11165
      %v11167 = vrot.slane %v11015, 5
      %v11168 = vrot.slane %v11167, 4
      %v11169 = vrot.slane %v11016, 5
      %v11170 = vsel %vm1867, %v11168, %v11169
      %v11171 = vrot.slane %v11169, 4
      %v11172 = vrot.slane %v11017, 5
      %v11173 = vsel %vm1867, %v11171, %v11172
      %v11174 = vrot.slane %v11018, 5
      %v11175 = vrot.slane %v11174, 4
      %v11176 = vrot.slane %v11019, 5
      %v11177 = vsel %vm1867, %v11175, %v11176
      %v11178 = vrot.slane %v11176, 4
      %v11179 = vrot.slane %v11020, 5
      %v11180 = vsel %vm1867, %v11178, %v11179
      %v11181 = vunpack.c.l.b16 %v11072
      %v11182 = vunpack.c.l.b16 %v11075
      %v11183 = vunpack.c.l.b16 %v11079
      %v11184 = vunpack.c.l.b16 %v11082
      %v11185 = vunpack.c.l.b16 %v11086
      %v11186 = vunpack.c.l.b16 %v11089
      %v11187 = vunpack.c.l.b16 %v11093
      %v11188 = vunpack.c.l.b16 %v11096
      %v11189 = vunpack.c.l.b16 %v11100
      %v11190 = vunpack.c.l.b16 %v11103
      %v11191 = vunpack.c.l.b16 %v11107
      %v11192 = vunpack.c.l.b16 %v11110
      %v11193 = vunpack.c.l.b16 %v11114
      %v11194 = vunpack.c.l.b16 %v11117
      %v11195 = vunpack.c.l.b16 %v11121
      %v11196 = vunpack.c.l.b16 %v11124
      %v11197 = vunpack.c.l.b16 %v11128
      %v11198 = vunpack.c.l.b16 %v11131
      %v11199 = vunpack.c.l.b16 %v11135
      %v11200 = vunpack.c.l.b16 %v11138
      %v11201 = vunpack.c.l.b16 %v11142
      %v11202 = vunpack.c.l.b16 %v11145
      %v11203 = vunpack.c.l.b16 %v11149
      %v11204 = vunpack.c.l.b16 %v11152
      %v11205 = vunpack.c.l.b16 %v11156
      %v11206 = vunpack.c.l.b16 %v11159
      %v11207 = vunpack.c.l.b16 %v11163
      %v11208 = vunpack.c.l.b16 %v11166
      %v11209 = vunpack.c.l.b16 %v11170
      %v11210 = vunpack.c.l.b16 %v11173
      %v11211 = vunpack.c.l.b16 %v11177
      %v11212 = vunpack.c.l.b16 %v11180
      %v11213 = vpack.c.b16 %v11182, %v11181
      %v11214 = vpack.c.b16 %v11184, %v11183
      %v11215 = vpack.c.b16 %v11186, %v11185
      %v11216 = vpack.c.b16 %v11188, %v11187
      %v11217 = vpack.c.b16 %v11190, %v11189
      %v11218 = vpack.c.b16 %v11192, %v11191
      %v11219 = vpack.c.b16 %v11194, %v11193
      %v11220 = vpack.c.b16 %v11196, %v11195
      %v11221 = vpack.c.b16 %v11198, %v11197
      %v11222 = vpack.c.b16 %v11200, %v11199
      %v11223 = vpack.c.b16 %v11202, %v11201
      %v11224 = vpack.c.b16 %v11204, %v11203
      %v11225 = vpack.c.b16 %v11206, %v11205
      %v11226 = vpack.c.b16 %v11208, %v11207
      %v11227 = vpack.c.b16 %v11210, %v11209
      %v11228 = vpack.c.b16 %v11212, %v11211
      %11229 = vrot.lane.b32.xlu0 %v11213, 8
      %v11230 = vpop.permute.xlu0 %11229
      %11231 = vrot.lane.b32.xlu0 %v11214, 8
      %v11232 = vpop.permute.xlu0 %11231
      %11233 = vrot.lane.b32.xlu0 %v11215, 8
      %v11234 = vpop.permute.xlu0 %11233
      %11235 = vrot.lane.b32.xlu0 %v11216, 8
      %v11236 = vpop.permute.xlu0 %11235
      %11237 = vrot.lane.b32.xlu0 %v11217, 8
      %v11238 = vpop.permute.xlu0 %11237
      %11239 = vrot.lane.b32.xlu0 %v11218, 8
      %v11240 = vpop.permute.xlu0 %11239
      %11241 = vrot.lane.b32.xlu0 %v11219, 8
      %v11242 = vpop.permute.xlu0 %11241
      %11243 = vrot.lane.b32.xlu0 %v11220, 8
      %v11244 = vpop.permute.xlu0 %11243
      %11245 = vrot.lane.b32.xlu0 %v11221, 8
      %v11246 = vpop.permute.xlu0 %11245
      %11247 = vrot.lane.b32.xlu0 %v11222, 8
      %v11248 = vpop.permute.xlu0 %11247
      %11249 = vrot.lane.b32.xlu0 %v11223, 8
      %v11250 = vpop.permute.xlu0 %11249
      %11251 = vrot.lane.b32.xlu0 %v11224, 8
      %v11252 = vpop.permute.xlu0 %11251
      %11253 = vrot.lane.b32.xlu0 %v11225, 8
      %v11254 = vpop.permute.xlu0 %11253
      %11255 = vrot.lane.b32.xlu0 %v11226, 8
      %v11256 = vpop.permute.xlu0 %11255
      %11257 = vrot.lane.b32.xlu0 %v11227, 8
      %v11258 = vpop.permute.xlu0 %11257
      %11259 = vrot.lane.b32.xlu0 %v11228, 8
      %v11260 = vpop.permute.xlu0 %11259
      %11277 = vst.msk [vmem:[#allocation5] sm:$0xff] %vm5676, %v11230
      %11278 = vst.msk [vmem:[#allocation5 + $0x8] sm:$0xff] %vm5676, %v11232
      %11279 = vst.msk [vmem:[#allocation5 + $0x10] sm:$0xff] %vm5676, %v11234
      %11280 = vst.msk [vmem:[#allocation5 + $0x18] sm:$0xff] %vm5676, %v11236
      %11281 = vst.msk [vmem:[#allocation5 + $0x20] sm:$0xff] %vm5676, %v11238
      %11282 = vst.msk [vmem:[#allocation5 + $0x28] sm:$0xff] %vm5676, %v11240
      %11283 = vst.msk [vmem:[#allocation5 + $0x30] sm:$0xff] %vm5676, %v11242
      %11284 = vst.msk [vmem:[#allocation5 + $0x38] sm:$0xff] %vm5676, %v11244
      %11285 = vst.msk [vmem:[#allocation5 + $0x40] sm:$0xff] %vm5676, %v11246
      %11286 = vst.msk [vmem:[#allocation5 + $0x48] sm:$0xff] %vm5676, %v11248
      %11287 = vst.msk [vmem:[#allocation5 + $0x50] sm:$0xff] %vm5676, %v11250
      %11288 = vst.msk [vmem:[#allocation5 + $0x58] sm:$0xff] %vm5676, %v11252
      %11289 = vst.msk [vmem:[#allocation5 + $0x60] sm:$0xff] %vm5676, %v11254
      %11290 = vst.msk [vmem:[#allocation5 + $0x68] sm:$0xff] %vm5676, %v11256
      %11291 = vst.msk [vmem:[#allocation5 + $0x70] sm:$0xff] %vm5676, %v11258
      %11292 = vst.msk [vmem:[#allocation5 + $0x78] sm:$0xff] %vm5676, %v11260
      %v11293 = vld [vmem:[%s9426] sm:$0xf]
      %v11294 = vld [vmem:[%s9426 + $0x4] sm:$0xf]
      %v11295 = vld [vmem:[%s9426 + $0x8] sm:$0x1]
      %v11296 = vld [vmem:[%s9426 + $0xc] sm:$0xf]
      %v11297 = vld [vmem:[%s9426 + $0x10] sm:$0xf]
      %v11298 = vld [vmem:[%s9426 + $0x14] sm:$0x1]
      %v11299 = vld [vmem:[%s9426 + $0x18] sm:$0xf]
      %v11300 = vld [vmem:[%s9426 + $0x1c] sm:$0xf]
      %v11301 = vld [vmem:[%s9426 + $0x20] sm:$0x1]
      %v11302 = vld [vmem:[%s9426 + $0x24] sm:$0xf]
      %v11303 = vld [vmem:[%s9426 + $0x28] sm:$0xf]
      %v11304 = vld [vmem:[%s9426 + $0x2c] sm:$0x1]
      %v11305 = vld [vmem:[%s9426 + $0x30] sm:$0xf]
      %v11306 = vld [vmem:[%s9426 + $0x34] sm:$0xf]
      %v11307 = vld [vmem:[%s9426 + $0x38] sm:$0x1]
      %v11308 = vld [vmem:[%s9426 + $0x3c] sm:$0xf]
      %v11309 = vld [vmem:[%s9426 + $0x40] sm:$0xf]
      %v11310 = vld [vmem:[%s9426 + $0x44] sm:$0x1]
      %v11311 = vld [vmem:[%s9426 + $0x48] sm:$0xf]
      %v11312 = vld [vmem:[%s9426 + $0x4c] sm:$0xf]
      %v11313 = vld [vmem:[%s9426 + $0x50] sm:$0x1]
      %v11314 = vld [vmem:[%s9426 + $0x54] sm:$0xf]
      %v11315 = vld [vmem:[%s9426 + $0x58] sm:$0xf]
      %v11316 = vld [vmem:[%s9426 + $0x5c] sm:$0x1]
      %v11317 = vld [vmem:[%s9426 + $0x60] sm:$0xf]
      %v11318 = vld [vmem:[%s9426 + $0x64] sm:$0xf]
      %v11319 = vld [vmem:[%s9426 + $0x68] sm:$0x1]
      %v11320 = vld [vmem:[%s9426 + $0x6c] sm:$0xf]
      %v11321 = vld [vmem:[%s9426 + $0x70] sm:$0xf]
      %v11322 = vld [vmem:[%s9426 + $0x74] sm:$0x1]
      %v11323 = vld [vmem:[%s9426 + $0x78] sm:$0xf]
      %v11324 = vld [vmem:[%s9426 + $0x7c] sm:$0xf]
      %v11325 = vld [vmem:[%s9426 + $0x80] sm:$0x1]
      %v11326 = vld [vmem:[%s9426 + $0x84] sm:$0xf]
      %v11327 = vld [vmem:[%s9426 + $0x88] sm:$0xf]
      %v11328 = vld [vmem:[%s9426 + $0x8c] sm:$0x1]
      %v11329 = vld [vmem:[%s9426 + $0x90] sm:$0xf]
      %v11330 = vld [vmem:[%s9426 + $0x94] sm:$0xf]
      %v11331 = vld [vmem:[%s9426 + $0x98] sm:$0x1]
      %v11332 = vld [vmem:[%s9426 + $0x9c] sm:$0xf]
      %v11333 = vld [vmem:[%s9426 + $0xa0] sm:$0xf]
      %v11334 = vld [vmem:[%s9426 + $0xa4] sm:$0x1]
      %v11335 = vld [vmem:[%s9426 + $0xa8] sm:$0xf]
      %v11336 = vld [vmem:[%s9426 + $0xac] sm:$0xf]
      %v11337 = vld [vmem:[%s9426 + $0xb0] sm:$0x1]
      %v11338 = vld [vmem:[%s9426 + $0xb4] sm:$0xf]
      %v11339 = vld [vmem:[%s9426 + $0xb8] sm:$0xf]
      %v11340 = vld [vmem:[%s9426 + $0xbc] sm:$0x1]
      %v11342 = vshrl.u32 %v11293, 16
      %v11344 = vrot.slane %v11342, 4
      %v11345 = vshll.u32 %v11293, 16
      %v11347 = vrot.slane %v11345, 5
      %v11348 = vor.u32 %v11344, %v11347
      %v11349 = vrot.slane %v11348, 4
      %v11351 = vshll.u32 %v11294, 16
      %v11353 = vrot.slane %v11351, 5
      %v11354 = vsel %vm1271, %v11349, %v11353
      %v11355 = vshrl.u32 %v11294, 16
      %v11357 = vrot.slane %v11355, 4
      %v11358 = vor.u32 %v11357, %v11353
      %v11359 = vrot.slane %v11358, 4
      %v11361 = vshll.u32 %v11295, 16
      %v11363 = vrot.slane %v11361, 5
      %v11364 = vsel %vm1271, %v11359, %v11363
      %v11366 = vshrl.u32 %v11296, 16
      %v11368 = vrot.slane %v11366, 4
      %v11369 = vshll.u32 %v11296, 16
      %v11371 = vrot.slane %v11369, 5
      %v11372 = vor.u32 %v11368, %v11371
      %v11373 = vrot.slane %v11372, 4
      %v11375 = vshll.u32 %v11297, 16
      %v11377 = vrot.slane %v11375, 5
      %v11378 = vsel %vm1271, %v11373, %v11377
      %v11379 = vshrl.u32 %v11297, 16
      %v11381 = vrot.slane %v11379, 4
      %v11382 = vor.u32 %v11381, %v11377
      %v11383 = vrot.slane %v11382, 4
      %v11385 = vshll.u32 %v11298, 16
      %v11387 = vrot.slane %v11385, 5
      %v11388 = vsel %vm1271, %v11383, %v11387
      %v11390 = vshrl.u32 %v11299, 16
      %v11392 = vrot.slane %v11390, 4
      %v11393 = vshll.u32 %v11299, 16
      %v11395 = vrot.slane %v11393, 5
      %v11396 = vor.u32 %v11392, %v11395
      %v11397 = vrot.slane %v11396, 4
      %v11399 = vshll.u32 %v11300, 16
      %v11401 = vrot.slane %v11399, 5
      %v11402 = vsel %vm1271, %v11397, %v11401
      %v11403 = vshrl.u32 %v11300, 16
      %v11405 = vrot.slane %v11403, 4
      %v11406 = vor.u32 %v11405, %v11401
      %v11407 = vrot.slane %v11406, 4
      %v11409 = vshll.u32 %v11301, 16
      %v11411 = vrot.slane %v11409, 5
      %v11412 = vsel %vm1271, %v11407, %v11411
      %v11414 = vshrl.u32 %v11302, 16
      %v11416 = vrot.slane %v11414, 4
      %v11417 = vshll.u32 %v11302, 16
      %v11419 = vrot.slane %v11417, 5
      %v11420 = vor.u32 %v11416, %v11419
      %v11421 = vrot.slane %v11420, 4
      %v11423 = vshll.u32 %v11303, 16
      %v11425 = vrot.slane %v11423, 5
      %v11426 = vsel %vm1271, %v11421, %v11425
      %v11427 = vshrl.u32 %v11303, 16
      %v11429 = vrot.slane %v11427, 4
      %v11430 = vor.u32 %v11429, %v11425
      %v11431 = vrot.slane %v11430, 4
      %v11433 = vshll.u32 %v11304, 16
      %v11435 = vrot.slane %v11433, 5
      %v11436 = vsel %vm1271, %v11431, %v11435
      %v11438 = vshrl.u32 %v11305, 16
      %v11440 = vrot.slane %v11438, 4
      %v11441 = vshll.u32 %v11305, 16
      %v11443 = vrot.slane %v11441, 5
      %v11444 = vor.u32 %v11440, %v11443
      %v11445 = vrot.slane %v11444, 4
      %v11447 = vshll.u32 %v11306, 16
      %v11449 = vrot.slane %v11447, 5
      %v11450 = vsel %vm1271, %v11445, %v11449
      %v11451 = vshrl.u32 %v11306, 16
      %v11453 = vrot.slane %v11451, 4
      %v11454 = vor.u32 %v11453, %v11449
      %v11455 = vrot.slane %v11454, 4
      %v11457 = vshll.u32 %v11307, 16
      %v11459 = vrot.slane %v11457, 5
      %v11460 = vsel %vm1271, %v11455, %v11459
      %v11462 = vshrl.u32 %v11308, 16
      %v11464 = vrot.slane %v11462, 4
      %v11465 = vshll.u32 %v11308, 16
      %v11467 = vrot.slane %v11465, 5
      %v11468 = vor.u32 %v11464, %v11467
      %v11469 = vrot.slane %v11468, 4
      %v11471 = vshll.u32 %v11309, 16
      %v11473 = vrot.slane %v11471, 5
      %v11474 = vsel %vm1271, %v11469, %v11473
      %v11475 = vshrl.u32 %v11309, 16
      %v11477 = vrot.slane %v11475, 4
      %v11478 = vor.u32 %v11477, %v11473
      %v11479 = vrot.slane %v11478, 4
      %v11481 = vshll.u32 %v11310, 16
      %v11483 = vrot.slane %v11481, 5
      %v11484 = vsel %vm1271, %v11479, %v11483
      %v11486 = vshrl.u32 %v11311, 16
      %v11488 = vrot.slane %v11486, 4
      %v11489 = vshll.u32 %v11311, 16
      %v11491 = vrot.slane %v11489, 5
      %v11492 = vor.u32 %v11488, %v11491
      %v11493 = vrot.slane %v11492, 4
      %v11495 = vshll.u32 %v11312, 16
      %v11497 = vrot.slane %v11495, 5
      %v11498 = vsel %vm1271, %v11493, %v11497
      %v11499 = vshrl.u32 %v11312, 16
      %v11501 = vrot.slane %v11499, 4
      %v11502 = vor.u32 %v11501, %v11497
      %v11503 = vrot.slane %v11502, 4
      %v11505 = vshll.u32 %v11313, 16
      %v11507 = vrot.slane %v11505, 5
      %v11508 = vsel %vm1271, %v11503, %v11507
      %v11510 = vshrl.u32 %v11314, 16
      %v11512 = vrot.slane %v11510, 4
      %v11513 = vshll.u32 %v11314, 16
      %v11515 = vrot.slane %v11513, 5
      %v11516 = vor.u32 %v11512, %v11515
      %v11517 = vrot.slane %v11516, 4
      %v11519 = vshll.u32 %v11315, 16
      %v11521 = vrot.slane %v11519, 5
      %v11522 = vsel %vm1271, %v11517, %v11521
      %v11523 = vshrl.u32 %v11315, 16
      %v11525 = vrot.slane %v11523, 4
      %v11526 = vor.u32 %v11525, %v11521
      %v11527 = vrot.slane %v11526, 4
      %v11529 = vshll.u32 %v11316, 16
      %v11531 = vrot.slane %v11529, 5
      %v11532 = vsel %vm1271, %v11527, %v11531
      %v11534 = vshrl.u32 %v11317, 16
      %v11536 = vrot.slane %v11534, 4
      %v11537 = vshll.u32 %v11317, 16
      %v11539 = vrot.slane %v11537, 5
      %v11540 = vor.u32 %v11536, %v11539
      %v11541 = vrot.slane %v11540, 4
      %v11543 = vshll.u32 %v11318, 16
      %v11545 = vrot.slane %v11543, 5
      %v11546 = vsel %vm1271, %v11541, %v11545
      %v11547 = vshrl.u32 %v11318, 16
      %v11549 = vrot.slane %v11547, 4
      %v11550 = vor.u32 %v11549, %v11545
      %v11551 = vrot.slane %v11550, 4
      %v11553 = vshll.u32 %v11319, 16
      %v11555 = vrot.slane %v11553, 5
      %v11556 = vsel %vm1271, %v11551, %v11555
      %v11558 = vshrl.u32 %v11320, 16
      %v11560 = vrot.slane %v11558, 4
      %v11561 = vshll.u32 %v11320, 16
      %v11563 = vrot.slane %v11561, 5
      %v11564 = vor.u32 %v11560, %v11563
      %v11565 = vrot.slane %v11564, 4
      %v11567 = vshll.u32 %v11321, 16
      %v11569 = vrot.slane %v11567, 5
      %v11570 = vsel %vm1271, %v11565, %v11569
      %v11571 = vshrl.u32 %v11321, 16
      %v11573 = vrot.slane %v11571, 4
      %v11574 = vor.u32 %v11573, %v11569
      %v11575 = vrot.slane %v11574, 4
      %v11577 = vshll.u32 %v11322, 16
      %v11579 = vrot.slane %v11577, 5
      %v11580 = vsel %vm1271, %v11575, %v11579
      %v11582 = vshrl.u32 %v11323, 16
      %v11584 = vrot.slane %v11582, 4
      %v11585 = vshll.u32 %v11323, 16
      %v11587 = vrot.slane %v11585, 5
      %v11588 = vor.u32 %v11584, %v11587
      %v11589 = vrot.slane %v11588, 4
      %v11591 = vshll.u32 %v11324, 16
      %v11593 = vrot.slane %v11591, 5
      %v11594 = vsel %vm1271, %v11589, %v11593
      %v11595 = vshrl.u32 %v11324, 16
      %v11597 = vrot.slane %v11595, 4
      %v11598 = vor.u32 %v11597, %v11593
      %v11599 = vrot.slane %v11598, 4
      %v11601 = vshll.u32 %v11325, 16
      %v11603 = vrot.slane %v11601, 5
      %v11604 = vsel %vm1271, %v11599, %v11603
      %v11606 = vshrl.u32 %v11326, 16
      %v11608 = vrot.slane %v11606, 4
      %v11609 = vshll.u32 %v11326, 16
      %v11611 = vrot.slane %v11609, 5
      %v11612 = vor.u32 %v11608, %v11611
      %v11613 = vrot.slane %v11612, 4
      %v11615 = vshll.u32 %v11327, 16
      %v11617 = vrot.slane %v11615, 5
      %v11618 = vsel %vm1271, %v11613, %v11617
      %v11619 = vshrl.u32 %v11327, 16
      %v11621 = vrot.slane %v11619, 4
      %v11622 = vor.u32 %v11621, %v11617
      %v11623 = vrot.slane %v11622, 4
      %v11625 = vshll.u32 %v11328, 16
      %v11627 = vrot.slane %v11625, 5
      %v11628 = vsel %vm1271, %v11623, %v11627
      %v11630 = vshrl.u32 %v11329, 16
      %v11632 = vrot.slane %v11630, 4
      %v11633 = vshll.u32 %v11329, 16
      %v11635 = vrot.slane %v11633, 5
      %v11636 = vor.u32 %v11632, %v11635
      %v11637 = vrot.slane %v11636, 4
      %v11639 = vshll.u32 %v11330, 16
      %v11641 = vrot.slane %v11639, 5
      %v11642 = vsel %vm1271, %v11637, %v11641
      %v11643 = vshrl.u32 %v11330, 16
      %v11645 = vrot.slane %v11643, 4
      %v11646 = vor.u32 %v11645, %v11641
      %v11647 = vrot.slane %v11646, 4
      %v11649 = vshll.u32 %v11331, 16
      %v11651 = vrot.slane %v11649, 5
      %v11652 = vsel %vm1271, %v11647, %v11651
      %v11654 = vshrl.u32 %v11332, 16
      %v11656 = vrot.slane %v11654, 4
      %v11657 = vshll.u32 %v11332, 16
      %v11659 = vrot.slane %v11657, 5
      %v11660 = vor.u32 %v11656, %v11659
      %v11661 = vrot.slane %v11660, 4
      %v11663 = vshll.u32 %v11333, 16
      %v11665 = vrot.slane %v11663, 5
      %v11666 = vsel %vm1271, %v11661, %v11665
      %v11667 = vshrl.u32 %v11333, 16
      %v11669 = vrot.slane %v11667, 4
      %v11670 = vor.u32 %v11669, %v11665
      %v11671 = vrot.slane %v11670, 4
      %v11673 = vshll.u32 %v11334, 16
      %v11675 = vrot.slane %v11673, 5
      %v11676 = vsel %vm1271, %v11671, %v11675
      %v11678 = vshrl.u32 %v11335, 16
      %v11680 = vrot.slane %v11678, 4
      %v11681 = vshll.u32 %v11335, 16
      %v11683 = vrot.slane %v11681, 5
      %v11684 = vor.u32 %v11680, %v11683
      %v11685 = vrot.slane %v11684, 4
      %v11687 = vshll.u32 %v11336, 16
      %v11689 = vrot.slane %v11687, 5
      %v11690 = vsel %vm1271, %v11685, %v11689
      %v11691 = vshrl.u32 %v11336, 16
      %v11693 = vrot.slane %v11691, 4
      %v11694 = vor.u32 %v11693, %v11689
      %v11695 = vrot.slane %v11694, 4
      %v11697 = vshll.u32 %v11337, 16
      %v11699 = vrot.slane %v11697, 5
      %v11700 = vsel %vm1271, %v11695, %v11699
      %v11702 = vshrl.u32 %v11338, 16
      %v11704 = vrot.slane %v11702, 4
      %v11705 = vshll.u32 %v11338, 16
      %v11707 = vrot.slane %v11705, 5
      %v11708 = vor.u32 %v11704, %v11707
      %v11709 = vrot.slane %v11708, 4
      %v11711 = vshll.u32 %v11339, 16
      %v11713 = vrot.slane %v11711, 5
      %v11714 = vsel %vm1271, %v11709, %v11713
      %v11715 = vshrl.u32 %v11339, 16
      %v11717 = vrot.slane %v11715, 4
      %v11718 = vor.u32 %v11717, %v11713
      %v11719 = vrot.slane %v11718, 4
      %v11721 = vshll.u32 %v11340, 16
      %v11723 = vrot.slane %v11721, 5
      %v11724 = vsel %vm1271, %v11719, %v11723
      %v11725 = vunpack.c.l.b16 %v11354
      %v11726 = vunpack.c.l.b16 %v11364
      %v11727 = vunpack.c.l.b16 %v11378
      %v11728 = vunpack.c.l.b16 %v11388
      %v11729 = vunpack.c.l.b16 %v11402
      %v11730 = vunpack.c.l.b16 %v11412
      %v11731 = vunpack.c.l.b16 %v11426
      %v11732 = vunpack.c.l.b16 %v11436
      %v11733 = vunpack.c.l.b16 %v11450
      %v11734 = vunpack.c.l.b16 %v11460
      %v11735 = vunpack.c.l.b16 %v11474
      %v11736 = vunpack.c.l.b16 %v11484
      %v11737 = vunpack.c.l.b16 %v11498
      %v11738 = vunpack.c.l.b16 %v11508
      %v11739 = vunpack.c.l.b16 %v11522
      %v11740 = vunpack.c.l.b16 %v11532
      %v11741 = vunpack.c.l.b16 %v11546
      %v11742 = vunpack.c.l.b16 %v11556
      %v11743 = vunpack.c.l.b16 %v11570
      %v11744 = vunpack.c.l.b16 %v11580
      %v11745 = vunpack.c.l.b16 %v11594
      %v11746 = vunpack.c.l.b16 %v11604
      %v11747 = vunpack.c.l.b16 %v11618
      %v11748 = vunpack.c.l.b16 %v11628
      %v11749 = vunpack.c.l.b16 %v11642
      %v11750 = vunpack.c.l.b16 %v11652
      %v11751 = vunpack.c.l.b16 %v11666
      %v11752 = vunpack.c.l.b16 %v11676
      %v11753 = vunpack.c.l.b16 %v11690
      %v11754 = vunpack.c.l.b16 %v11700
      %v11755 = vunpack.c.l.b16 %v11714
      %v11756 = vunpack.c.l.b16 %v11724
      %v11757 = vpack.c.b16 %v11726, %v11725
      %v11758 = vpack.c.b16 %v11728, %v11727
      %v11759 = vpack.c.b16 %v11730, %v11729
      %v11760 = vpack.c.b16 %v11732, %v11731
      %v11761 = vpack.c.b16 %v11734, %v11733
      %v11762 = vpack.c.b16 %v11736, %v11735
      %v11763 = vpack.c.b16 %v11738, %v11737
      %v11764 = vpack.c.b16 %v11740, %v11739
      %v11765 = vpack.c.b16 %v11742, %v11741
      %v11766 = vpack.c.b16 %v11744, %v11743
      %v11767 = vpack.c.b16 %v11746, %v11745
      %v11768 = vpack.c.b16 %v11748, %v11747
      %v11769 = vpack.c.b16 %v11750, %v11749
      %v11770 = vpack.c.b16 %v11752, %v11751
      %v11771 = vpack.c.b16 %v11754, %v11753
      %v11772 = vpack.c.b16 %v11756, %v11755
      %11773 = vrot.lane.b32.xlu0 %v11757, 16
      %v11774 = vpop.permute.xlu0 %11773
      %11775 = vrot.lane.b32.xlu0 %v11758, 16
      %v11776 = vpop.permute.xlu0 %11775
      %11777 = vrot.lane.b32.xlu0 %v11759, 16
      %v11778 = vpop.permute.xlu0 %11777
      %11779 = vrot.lane.b32.xlu0 %v11760, 16
      %v11780 = vpop.permute.xlu0 %11779
      %11781 = vrot.lane.b32.xlu0 %v11761, 16
      %v11782 = vpop.permute.xlu0 %11781
      %11783 = vrot.lane.b32.xlu0 %v11762, 16
      %v11784 = vpop.permute.xlu0 %11783
      %11785 = vrot.lane.b32.xlu0 %v11763, 16
      %v11786 = vpop.permute.xlu0 %11785
      %11787 = vrot.lane.b32.xlu0 %v11764, 16
      %v11788 = vpop.permute.xlu0 %11787
      %11789 = vrot.lane.b32.xlu0 %v11765, 16
      %v11790 = vpop.permute.xlu0 %11789
      %11791 = vrot.lane.b32.xlu0 %v11766, 16
      %v11792 = vpop.permute.xlu0 %11791
      %11793 = vrot.lane.b32.xlu0 %v11767, 16
      %v11794 = vpop.permute.xlu0 %11793
      %11795 = vrot.lane.b32.xlu0 %v11768, 16
      %v11796 = vpop.permute.xlu0 %11795
      %11797 = vrot.lane.b32.xlu0 %v11769, 16
      %v11798 = vpop.permute.xlu0 %11797
      %11799 = vrot.lane.b32.xlu0 %v11770, 16
      %v11800 = vpop.permute.xlu0 %11799
      %11801 = vrot.lane.b32.xlu0 %v11771, 16
      %v11802 = vpop.permute.xlu0 %11801
      %11803 = vrot.lane.b32.xlu0 %v11772, 16
      %v11804 = vpop.permute.xlu0 %11803
      %11821 = vst.msk [vmem:[#allocation5] sm:$0xff] %vm5853, %v11774
      %11822 = vst.msk [vmem:[#allocation5 + $0x8] sm:$0xff] %vm5853, %v11776
      %11823 = vst.msk [vmem:[#allocation5 + $0x10] sm:$0xff] %vm5853, %v11778
      %11824 = vst.msk [vmem:[#allocation5 + $0x18] sm:$0xff] %vm5853, %v11780
      %11825 = vst.msk [vmem:[#allocation5 + $0x20] sm:$0xff] %vm5853, %v11782
      %11826 = vst.msk [vmem:[#allocation5 + $0x28] sm:$0xff] %vm5853, %v11784
      %11827 = vst.msk [vmem:[#allocation5 + $0x30] sm:$0xff] %vm5853, %v11786
      %11828 = vst.msk [vmem:[#allocation5 + $0x38] sm:$0xff] %vm5853, %v11788
      %11829 = vst.msk [vmem:[#allocation5 + $0x40] sm:$0xff] %vm5853, %v11790
      %11830 = vst.msk [vmem:[#allocation5 + $0x48] sm:$0xff] %vm5853, %v11792
      %11831 = vst.msk [vmem:[#allocation5 + $0x50] sm:$0xff] %vm5853, %v11794
      %11832 = vst.msk [vmem:[#allocation5 + $0x58] sm:$0xff] %vm5853, %v11796
      %11833 = vst.msk [vmem:[#allocation5 + $0x60] sm:$0xff] %vm5853, %v11798
      %11834 = vst.msk [vmem:[#allocation5 + $0x68] sm:$0xff] %vm5853, %v11800
      %11835 = vst.msk [vmem:[#allocation5 + $0x70] sm:$0xff] %vm5853, %v11802
      %11836 = vst.msk [vmem:[#allocation5 + $0x78] sm:$0xff] %vm5853, %v11804
      %v11837 = vld [vmem:[%s9426] sm:$0xe]
      %v11838 = vld [vmem:[%s9426 + $0x4] sm:$0xf]
      %v11839 = vld [vmem:[%s9426 + $0x8] sm:$0x1]
      %v11840 = vld [vmem:[%s9426 + $0xc] sm:$0xe]
      %v11841 = vld [vmem:[%s9426 + $0x10] sm:$0xf]
      %v11842 = vld [vmem:[%s9426 + $0x14] sm:$0x1]
      %v11843 = vld [vmem:[%s9426 + $0x18] sm:$0xe]
      %v11844 = vld [vmem:[%s9426 + $0x1c] sm:$0xf]
      %v11845 = vld [vmem:[%s9426 + $0x20] sm:$0x1]
      %v11846 = vld [vmem:[%s9426 + $0x24] sm:$0xe]
      %v11847 = vld [vmem:[%s9426 + $0x28] sm:$0xf]
      %v11848 = vld [vmem:[%s9426 + $0x2c] sm:$0x1]
      %v11849 = vld [vmem:[%s9426 + $0x30] sm:$0xe]
      %v11850 = vld [vmem:[%s9426 + $0x34] sm:$0xf]
      %v11851 = vld [vmem:[%s9426 + $0x38] sm:$0x1]
      %v11852 = vld [vmem:[%s9426 + $0x3c] sm:$0xe]
      %v11853 = vld [vmem:[%s9426 + $0x40] sm:$0xf]
      %v11854 = vld [vmem:[%s9426 + $0x44] sm:$0x1]
      %v11855 = vld [vmem:[%s9426 + $0x48] sm:$0xe]
      %v11856 = vld [vmem:[%s9426 + $0x4c] sm:$0xf]
      %v11857 = vld [vmem:[%s9426 + $0x50] sm:$0x1]
      %v11858 = vld [vmem:[%s9426 + $0x54] sm:$0xe]
      %v11859 = vld [vmem:[%s9426 + $0x58] sm:$0xf]
      %v11860 = vld [vmem:[%s9426 + $0x5c] sm:$0x1]
      %v11861 = vld [vmem:[%s9426 + $0x60] sm:$0xe]
      %v11862 = vld [vmem:[%s9426 + $0x64] sm:$0xf]
      %v11863 = vld [vmem:[%s9426 + $0x68] sm:$0x1]
      %v11864 = vld [vmem:[%s9426 + $0x6c] sm:$0xe]
      %v11865 = vld [vmem:[%s9426 + $0x70] sm:$0xf]
      %v11866 = vld [vmem:[%s9426 + $0x74] sm:$0x1]
      %v11867 = vld [vmem:[%s9426 + $0x78] sm:$0xe]
      %v11868 = vld [vmem:[%s9426 + $0x7c] sm:$0xf]
      %v11869 = vld [vmem:[%s9426 + $0x80] sm:$0x1]
      %v11870 = vld [vmem:[%s9426 + $0x84] sm:$0xe]
      %v11871 = vld [vmem:[%s9426 + $0x88] sm:$0xf]
      %v11872 = vld [vmem:[%s9426 + $0x8c] sm:$0x1]
      %v11873 = vld [vmem:[%s9426 + $0x90] sm:$0xe]
      %v11874 = vld [vmem:[%s9426 + $0x94] sm:$0xf]
      %v11875 = vld [vmem:[%s9426 + $0x98] sm:$0x1]
      %v11876 = vld [vmem:[%s9426 + $0x9c] sm:$0xe]
      %v11877 = vld [vmem:[%s9426 + $0xa0] sm:$0xf]
      %v11878 = vld [vmem:[%s9426 + $0xa4] sm:$0x1]
      %v11879 = vld [vmem:[%s9426 + $0xa8] sm:$0xe]
      %v11880 = vld [vmem:[%s9426 + $0xac] sm:$0xf]
      %v11881 = vld [vmem:[%s9426 + $0xb0] sm:$0x1]
      %v11882 = vld [vmem:[%s9426 + $0xb4] sm:$0xe]
      %v11883 = vld [vmem:[%s9426 + $0xb8] sm:$0xf]
      %v11884 = vld [vmem:[%s9426 + $0xbc] sm:$0x1]
      %v11933 = vrot.slane %v11837, 5
      %v11934 = vrot.slane %v11933, 4
      %v11935 = vrot.slane %v11838, 5
      %v11936 = vsel %vm1867, %v11934, %v11935
      %v11937 = vrot.slane %v11935, 4
      %v11938 = vrot.slane %v11839, 5
      %v11939 = vsel %vm1867, %v11937, %v11938
      %v11940 = vrot.slane %v11840, 5
      %v11941 = vrot.slane %v11940, 4
      %v11942 = vrot.slane %v11841, 5
      %v11943 = vsel %vm1867, %v11941, %v11942
      %v11944 = vrot.slane %v11942, 4
      %v11945 = vrot.slane %v11842, 5
      %v11946 = vsel %vm1867, %v11944, %v11945
      %v11947 = vrot.slane %v11843, 5
      %v11948 = vrot.slane %v11947, 4
      %v11949 = vrot.slane %v11844, 5
      %v11950 = vsel %vm1867, %v11948, %v11949
      %v11951 = vrot.slane %v11949, 4
      %v11952 = vrot.slane %v11845, 5
      %v11953 = vsel %vm1867, %v11951, %v11952
      %v11954 = vrot.slane %v11846, 5
      %v11955 = vrot.slane %v11954, 4
      %v11956 = vrot.slane %v11847, 5
      %v11957 = vsel %vm1867, %v11955, %v11956
      %v11958 = vrot.slane %v11956, 4
      %v11959 = vrot.slane %v11848, 5
      %v11960 = vsel %vm1867, %v11958, %v11959
      %v11961 = vrot.slane %v11849, 5
      %v11962 = vrot.slane %v11961, 4
      %v11963 = vrot.slane %v11850, 5
      %v11964 = vsel %vm1867, %v11962, %v11963
      %v11965 = vrot.slane %v11963, 4
      %v11966 = vrot.slane %v11851, 5
      %v11967 = vsel %vm1867, %v11965, %v11966
      %v11968 = vrot.slane %v11852, 5
      %v11969 = vrot.slane %v11968, 4
      %v11970 = vrot.slane %v11853, 5
      %v11971 = vsel %vm1867, %v11969, %v11970
      %v11972 = vrot.slane %v11970, 4
      %v11973 = vrot.slane %v11854, 5
      %v11974 = vsel %vm1867, %v11972, %v11973
      %v11975 = vrot.slane %v11855, 5
      %v11976 = vrot.slane %v11975, 4
      %v11977 = vrot.slane %v11856, 5
      %v11978 = vsel %vm1867, %v11976, %v11977
      %v11979 = vrot.slane %v11977, 4
      %v11980 = vrot.slane %v11857, 5
      %v11981 = vsel %vm1867, %v11979, %v11980
      %v11982 = vrot.slane %v11858, 5
      %v11983 = vrot.slane %v11982, 4
      %v11984 = vrot.slane %v11859, 5
      %v11985 = vsel %vm1867, %v11983, %v11984
      %v11986 = vrot.slane %v11984, 4
      %v11987 = vrot.slane %v11860, 5
      %v11988 = vsel %vm1867, %v11986, %v11987
      %v11989 = vrot.slane %v11861, 5
      %v11990 = vrot.slane %v11989, 4
      %v11991 = vrot.slane %v11862, 5
      %v11992 = vsel %vm1867, %v11990, %v11991
      %v11993 = vrot.slane %v11991, 4
      %v11994 = vrot.slane %v11863, 5
      %v11995 = vsel %vm1867, %v11993, %v11994
      %v11996 = vrot.slane %v11864, 5
      %v11997 = vrot.slane %v11996, 4
      %v11998 = vrot.slane %v11865, 5
      %v11999 = vsel %vm1867, %v11997, %v11998
      %v12000 = vrot.slane %v11998, 4
      %v12001 = vrot.slane %v11866, 5
      %v12002 = vsel %vm1867, %v12000, %v12001
      %v12003 = vrot.slane %v11867, 5
      %v12004 = vrot.slane %v12003, 4
      %v12005 = vrot.slane %v11868, 5
      %v12006 = vsel %vm1867, %v12004, %v12005
      %v12007 = vrot.slane %v12005, 4
      %v12008 = vrot.slane %v11869, 5
      %v12009 = vsel %vm1867, %v12007, %v12008
      %v12010 = vrot.slane %v11870, 5
      %v12011 = vrot.slane %v12010, 4
      %v12012 = vrot.slane %v11871, 5
      %v12013 = vsel %vm1867, %v12011, %v12012
      %v12014 = vrot.slane %v12012, 4
      %v12015 = vrot.slane %v11872, 5
      %v12016 = vsel %vm1867, %v12014, %v12015
      %v12017 = vrot.slane %v11873, 5
      %v12018 = vrot.slane %v12017, 4
      %v12019 = vrot.slane %v11874, 5
      %v12020 = vsel %vm1867, %v12018, %v12019
      %v12021 = vrot.slane %v12019, 4
      %v12022 = vrot.slane %v11875, 5
      %v12023 = vsel %vm1867, %v12021, %v12022
      %v12024 = vrot.slane %v11876, 5
      %v12025 = vrot.slane %v12024, 4
      %v12026 = vrot.slane %v11877, 5
      %v12027 = vsel %vm1867, %v12025, %v12026
      %v12028 = vrot.slane %v12026, 4
      %v12029 = vrot.slane %v11878, 5
      %v12030 = vsel %vm1867, %v12028, %v12029
      %v12031 = vrot.slane %v11879, 5
      %v12032 = vrot.slane %v12031, 4
      %v12033 = vrot.slane %v11880, 5
      %v12034 = vsel %vm1867, %v12032, %v12033
      %v12035 = vrot.slane %v12033, 4
      %v12036 = vrot.slane %v11881, 5
      %v12037 = vsel %vm1867, %v12035, %v12036
      %v12038 = vrot.slane %v11882, 5
      %v12039 = vrot.slane %v12038, 4
      %v12040 = vrot.slane %v11883, 5
      %v12041 = vsel %vm1867, %v12039, %v12040
      %v12042 = vrot.slane %v12040, 4
      %v12043 = vrot.slane %v11884, 5
      %v12044 = vsel %vm1867, %v12042, %v12043
      %v12045 = vunpack.c.l.b16 %v11936
      %v12046 = vunpack.c.l.b16 %v11939
      %v12047 = vunpack.c.l.b16 %v11943
      %v12048 = vunpack.c.l.b16 %v11946
      %v12049 = vunpack.c.l.b16 %v11950
      %v12050 = vunpack.c.l.b16 %v11953
      %v12051 = vunpack.c.l.b16 %v11957
      %v12052 = vunpack.c.l.b16 %v11960
      %v12053 = vunpack.c.l.b16 %v11964
      %v12054 = vunpack.c.l.b16 %v11967
      %v12055 = vunpack.c.l.b16 %v11971
      %v12056 = vunpack.c.l.b16 %v11974
      %v12057 = vunpack.c.l.b16 %v11978
      %v12058 = vunpack.c.l.b16 %v11981
      %v12059 = vunpack.c.l.b16 %v11985
      %v12060 = vunpack.c.l.b16 %v11988
      %v12061 = vunpack.c.l.b16 %v11992
      %v12062 = vunpack.c.l.b16 %v11995
      %v12063 = vunpack.c.l.b16 %v11999
      %v12064 = vunpack.c.l.b16 %v12002
      %v12065 = vunpack.c.l.b16 %v12006
      %v12066 = vunpack.c.l.b16 %v12009
      %v12067 = vunpack.c.l.b16 %v12013
      %v12068 = vunpack.c.l.b16 %v12016
      %v12069 = vunpack.c.l.b16 %v12020
      %v12070 = vunpack.c.l.b16 %v12023
      %v12071 = vunpack.c.l.b16 %v12027
      %v12072 = vunpack.c.l.b16 %v12030
      %v12073 = vunpack.c.l.b16 %v12034
      %v12074 = vunpack.c.l.b16 %v12037
      %v12075 = vunpack.c.l.b16 %v12041
      %v12076 = vunpack.c.l.b16 %v12044
      %v12077 = vpack.c.b16 %v12046, %v12045
      %v12078 = vpack.c.b16 %v12048, %v12047
      %v12079 = vpack.c.b16 %v12050, %v12049
      %v12080 = vpack.c.b16 %v12052, %v12051
      %v12081 = vpack.c.b16 %v12054, %v12053
      %v12082 = vpack.c.b16 %v12056, %v12055
      %v12083 = vpack.c.b16 %v12058, %v12057
      %v12084 = vpack.c.b16 %v12060, %v12059
      %v12085 = vpack.c.b16 %v12062, %v12061
      %v12086 = vpack.c.b16 %v12064, %v12063
      %v12087 = vpack.c.b16 %v12066, %v12065
      %v12088 = vpack.c.b16 %v12068, %v12067
      %v12089 = vpack.c.b16 %v12070, %v12069
      %v12090 = vpack.c.b16 %v12072, %v12071
      %v12091 = vpack.c.b16 %v12074, %v12073
      %v12092 = vpack.c.b16 %v12076, %v12075
      %12093 = vrot.lane.b32.xlu0 %v12077, 24
      %v12094 = vpop.permute.xlu0 %12093
      %12095 = vrot.lane.b32.xlu0 %v12078, 24
      %v12096 = vpop.permute.xlu0 %12095
      %12097 = vrot.lane.b32.xlu0 %v12079, 24
      %v12098 = vpop.permute.xlu0 %12097
      %12099 = vrot.lane.b32.xlu0 %v12080, 24
      %v12100 = vpop.permute.xlu0 %12099
      %12101 = vrot.lane.b32.xlu0 %v12081, 24
      %v12102 = vpop.permute.xlu0 %12101
      %12103 = vrot.lane.b32.xlu0 %v12082, 24
      %v12104 = vpop.permute.xlu0 %12103
      %12105 = vrot.lane.b32.xlu0 %v12083, 24
      %v12106 = vpop.permute.xlu0 %12105
      %12107 = vrot.lane.b32.xlu0 %v12084, 24
      %v12108 = vpop.permute.xlu0 %12107
      %12109 = vrot.lane.b32.xlu0 %v12085, 24
      %v12110 = vpop.permute.xlu0 %12109
      %12111 = vrot.lane.b32.xlu0 %v12086, 24
      %v12112 = vpop.permute.xlu0 %12111
      %12113 = vrot.lane.b32.xlu0 %v12087, 24
      %v12114 = vpop.permute.xlu0 %12113
      %12115 = vrot.lane.b32.xlu0 %v12088, 24
      %v12116 = vpop.permute.xlu0 %12115
      %12117 = vrot.lane.b32.xlu0 %v12089, 24
      %v12118 = vpop.permute.xlu0 %12117
      %12119 = vrot.lane.b32.xlu0 %v12090, 24
      %v12120 = vpop.permute.xlu0 %12119
      %12121 = vrot.lane.b32.xlu0 %v12091, 24
      %v12122 = vpop.permute.xlu0 %12121
      %12123 = vrot.lane.b32.xlu0 %v12092, 24
      %v12124 = vpop.permute.xlu0 %12123
      %12141 = vst.msk [vmem:[#allocation5] sm:$0xff] %vm6398, %v12094
      %12142 = vst.msk [vmem:[#allocation5 + $0x8] sm:$0xff] %vm6398, %v12096
      %12143 = vst.msk [vmem:[#allocation5 + $0x10] sm:$0xff] %vm6398, %v12098
      %12144 = vst.msk [vmem:[#allocation5 + $0x18] sm:$0xff] %vm6398, %v12100
      %12145 = vst.msk [vmem:[#allocation5 + $0x20] sm:$0xff] %vm6398, %v12102
      %12146 = vst.msk [vmem:[#allocation5 + $0x28] sm:$0xff] %vm6398, %v12104
      %12147 = vst.msk [vmem:[#allocation5 + $0x30] sm:$0xff] %vm6398, %v12106
      %12148 = vst.msk [vmem:[#allocation5 + $0x38] sm:$0xff] %vm6398, %v12108
      %12149 = vst.msk [vmem:[#allocation5 + $0x40] sm:$0xff] %vm6398, %v12110
      %12150 = vst.msk [vmem:[#allocation5 + $0x48] sm:$0xff] %vm6398, %v12112
      %12151 = vst.msk [vmem:[#allocation5 + $0x50] sm:$0xff] %vm6398, %v12114
      %12152 = vst.msk [vmem:[#allocation5 + $0x58] sm:$0xff] %vm6398, %v12116
      %12153 = vst.msk [vmem:[#allocation5 + $0x60] sm:$0xff] %vm6398, %v12118
      %12154 = vst.msk [vmem:[#allocation5 + $0x68] sm:$0xff] %vm6398, %v12120
      %12155 = vst.msk [vmem:[#allocation5 + $0x70] sm:$0xff] %vm6398, %v12122
      %12156 = vst.msk [vmem:[#allocation5 + $0x78] sm:$0xff] %vm6398, %v12124
      %v12157 = vld [vmem:[#allocation5] sm:$0xff]
      %v12158 = vld [vmem:[#allocation5 + $0x8] sm:$0xff]
      %v12159 = vld [vmem:[#allocation5 + $0x10] sm:$0xff]
      %v12160 = vld [vmem:[#allocation5 + $0x18] sm:$0xff]
      %v12161 = vld [vmem:[#allocation5 + $0x20] sm:$0xff]
      %v12162 = vld [vmem:[#allocation5 + $0x28] sm:$0xff]
      %v12163 = vld [vmem:[#allocation5 + $0x30] sm:$0xff]
      %v12164 = vld [vmem:[#allocation5 + $0x38] sm:$0xff]
      %v12165 = vld [vmem:[#allocation5 + $0x40] sm:$0xff]
      %v12166 = vld [vmem:[#allocation5 + $0x48] sm:$0xff]
      %v12167 = vld [vmem:[#allocation5 + $0x50] sm:$0xff]
      %v12168 = vld [vmem:[#allocation5 + $0x58] sm:$0xff]
      %v12169 = vld [vmem:[#allocation5 + $0x60] sm:$0xff]
      %v12170 = vld [vmem:[#allocation5 + $0x68] sm:$0xff]
      %v12171 = vld [vmem:[#allocation5 + $0x70] sm:$0xff]
      %v12172 = vld [vmem:[#allocation5 + $0x78] sm:$0xff]
      %s12173 = scalar_lea.vmem %s5, 48
      %v12174 = vld [vmem:[%s12173] sm:$0xf]
      %v12175 = vld [vmem:[%s12173 + $0x4] sm:$0xf]
      %v12176 = vld [vmem:[%s12173 + $0x8] sm:$0xf]
      %v12177 = vld [vmem:[%s12173 + $0xc] sm:$0xf]
      %v12178 = vld [vmem:[%s6] sm:$0x1]
      %v12180 = vlaneseq
      %v12181 = vshrl.u32 %v12180, 7
      %v12182 = vsub.s32 0, %v12181
      %v12183 = vrot.slane %v12178, %v12182
      %v12189 = vunpack.c.l.b16 %v12174
      %v12190 = vunpack.c.l.b16 %v12175
      %v12191 = vunpack.c.l.b16 %v12176
      %v12192 = vunpack.c.l.b16 %v12177
      %v12193 = vpack.c.b16 %v12190, %v12189
      %v12194 = vpack.c.b16 %v12192, %v12191
      %v12198 = vsel %vm6454, %v12157, 0
      %v12201 = vsel %vm6454, %v12158, 0
      %v12204 = vsel %vm6454, %v12159, 0
      %v12207 = vsel %vm6454, %v12160, 0
      %v12210 = vsel %vm6454, %v12161, 0
      %v12213 = vsel %vm6454, %v12162, 0
      %v12216 = vsel %vm6454, %v12163, 0
      %v12219 = vsel %vm6454, %v12164, 0
      %v12222 = vsel %vm6454, %v12165, 0
      %v12225 = vsel %vm6454, %v12166, 0
      %v12228 = vsel %vm6454, %v12167, 0
      %v12231 = vsel %vm6454, %v12168, 0
      %v12234 = vsel %vm6454, %v12169, 0
      %v12237 = vsel %vm6454, %v12170, 0
      %v12240 = vsel %vm6454, %v12171, 0
      %v12243 = vsel %vm6454, %v12172, 0
      %12245 = vmatprep.subr.bf16.mxu0 0
      %12246 = vmatpush1.bf16.msra.mxu0 %v12193
      %12247 = vmatprep.subr.bf16.mxu0 0
      %12248 = vmatpush1.bf16.msra.mxu0 %v12194
      %12249 = vmatprep.subr.bf16.mxu0 0
      %12250 = vmatpush1.bf16.msra.mxu0 0
      %12251 = vmatprep.subr.bf16.mxu0 0
      %12252 = vmatpush1.bf16.msra.mxu0 0
      %12253 = vmatprep.subr.bf16.mxu0 0
      %12254 = vmatpush1.bf16.msra.mxu0 0
      %12255 = vmatprep.subr.bf16.mxu0 0
      %12256 = vmatpush1.bf16.msra.mxu0 0
      %12257 = vmatprep.subr.bf16.mxu0 0
      %12258 = vmatpush1.bf16.msra.mxu0 0
      %12259 = vmatprep.subr.bf16.mxu0 0
      %12260 = vmatpush1.bf16.msra.mxu0 0
      %12261 = vmatprep.subr.bf16.mxu0 0
      %12262 = vmatpush1.bf16.msra.mxu0 0
      %12263 = vmatprep.subr.bf16.mxu0 0
      %12264 = vmatpush1.bf16.msra.mxu0 0
      %12265 = vmatprep.subr.bf16.mxu0 0
      %12266 = vmatpush1.bf16.msra.mxu0 0
      %12267 = vmatprep.subr.bf16.mxu0 0
      %12268 = vmatpush1.bf16.msra.mxu0 0
      %12269 = vmatprep.subr.bf16.mxu0 0
      %12270 = vmatpush1.bf16.msra.mxu0 0
      %12271 = vmatprep.subr.bf16.mxu0 0
      %12272 = vmatpush1.bf16.msra.mxu0 0
      %12273 = vmatprep.subr.bf16.mxu0 0
      %12274 = vmatpush1.bf16.msra.mxu0 0
      %12275 = vmatprep.subr.bf16.mxu0 0
      %12276 = vmatpush1.bf16.msra.mxu0 0
      %12277 = vmatprep.mubr.bf16.mxu0 0
      %12278 = vmatmul.mubr.bf16.gmra.mrb[0].mxu0 %v12198
      %v12279 = vpop.f32.mrb[0].mxu0
      %v12280 = vadd.f32 %v12183, %v12279
      %v12281 = vpop.f32.mrb[0].mxu0
      %v12282 = vpop.f32.mrb[0].mxu0
      %v12283 = vadd.f32 %v12183, %v12282
      %v12284 = vpop.f32.mrb[0].mxu0
      %12285 = vmatprep.mubr.bf16.mxu0 0
      %12286 = vmatmul.mubr.bf16.gmra.mrb[0].mxu0 %v12201
      %v12287 = vpop.f32.mrb[0].mxu0
      %v12288 = vadd.f32 %v12183, %v12287
      %v12289 = vpop.f32.mrb[0].mxu0
      %v12290 = vpop.f32.mrb[0].mxu0
      %v12291 = vadd.f32 %v12183, %v12290
      %v12292 = vpop.f32.mrb[0].mxu0
      %12293 = vmatprep.mubr.bf16.mxu0 0
      %12294 = vmatmul.mubr.bf16.gmra.mrb[0].mxu0 %v12204
      %v12295 = vpop.f32.mrb[0].mxu0
      %v12296 = vadd.f32 %v12183, %v12295
      %v12297 = vpop.f32.mrb[0].mxu0
      %v12298 = vpop.f32.mrb[0].mxu0
      %v12299 = vadd.f32 %v12183, %v12298
      %v12300 = vpop.f32.mrb[0].mxu0
      %12301 = vmatprep.mubr.bf16.mxu0 0
      %12302 = vmatmul.mubr.bf16.gmra.mrb[0].mxu0 %v12207
      %v12303 = vpop.f32.mrb[0].mxu0
      %v12304 = vadd.f32 %v12183, %v12303
      %v12305 = vpop.f32.mrb[0].mxu0
      %v12306 = vpop.f32.mrb[0].mxu0
      %v12307 = vadd.f32 %v12183, %v12306
      %v12308 = vpop.f32.mrb[0].mxu0
      %12309 = vmatprep.mubr.bf16.mxu0 0
      %12310 = vmatmul.mubr.bf16.gmra.mrb[0].mxu0 %v12210
      %v12311 = vpop.f32.mrb[0].mxu0
      %v12312 = vadd.f32 %v12183, %v12311
      %v12313 = vpop.f32.mrb[0].mxu0
      %v12314 = vpop.f32.mrb[0].mxu0
      %v12315 = vadd.f32 %v12183, %v12314
      %v12316 = vpop.f32.mrb[0].mxu0
      %12317 = vmatprep.mubr.bf16.mxu0 0
      %12318 = vmatmul.mubr.bf16.gmra.mrb[0].mxu0 %v12213
      %v12319 = vpop.f32.mrb[0].mxu0
      %v12320 = vadd.f32 %v12183, %v12319
      %v12321 = vpop.f32.mrb[0].mxu0
      %v12322 = vpop.f32.mrb[0].mxu0
      %v12323 = vadd.f32 %v12183, %v12322
      %v12324 = vpop.f32.mrb[0].mxu0
      %12325 = vmatprep.mubr.bf16.mxu0 0
      %12326 = vmatmul.mubr.bf16.gmra.mrb[0].mxu0 %v12216
      %v12327 = vpop.f32.mrb[0].mxu0
      %v12328 = vadd.f32 %v12183, %v12327
      %v12329 = vpop.f32.mrb[0].mxu0
      %v12330 = vpop.f32.mrb[0].mxu0
      %v12331 = vadd.f32 %v12183, %v12330
      %v12332 = vpop.f32.mrb[0].mxu0
      %12333 = vmatprep.mubr.bf16.mxu0 0
      %12334 = vmatmul.mubr.bf16.gmra.mrb[0].mxu0 %v12219
      %v12335 = vpop.f32.mrb[0].mxu0
      %v12336 = vadd.f32 %v12183, %v12335
      %v12337 = vpop.f32.mrb[0].mxu0
      %v12338 = vpop.f32.mrb[0].mxu0
      %v12339 = vadd.f32 %v12183, %v12338
      %v12340 = vpop.f32.mrb[0].mxu0
      %12341 = vmatprep.mubr.bf16.mxu0 0
      %12342 = vmatmul.mubr.bf16.gmra.mrb[0].mxu0 %v12222
      %v12343 = vpop.f32.mrb[0].mxu0
      %v12344 = vadd.f32 %v12183, %v12343
      %v12345 = vpop.f32.mrb[0].mxu0
      %v12346 = vpop.f32.mrb[0].mxu0
      %v12347 = vadd.f32 %v12183, %v12346
      %v12348 = vpop.f32.mrb[0].mxu0
      %12349 = vmatprep.mubr.bf16.mxu0 0
      %12350 = vmatmul.mubr.bf16.gmra.mrb[0].mxu0 %v12225
      %v12351 = vpop.f32.mrb[0].mxu0
      %v12352 = vadd.f32 %v12183, %v12351
      %v12353 = vpop.f32.mrb[0].mxu0
      %v12354 = vpop.f32.mrb[0].mxu0
      %v12355 = vadd.f32 %v12183, %v12354
      %v12356 = vpop.f32.mrb[0].mxu0
      %12357 = vmatprep.mubr.bf16.mxu0 0
      %12358 = vmatmul.mubr.bf16.gmra.mrb[0].mxu0 %v12228
      %v12359 = vpop.f32.mrb[0].mxu0
      %v12360 = vadd.f32 %v12183, %v12359
      %v12361 = vpop.f32.mrb[0].mxu0
      %v12362 = vpop.f32.mrb[0].mxu0
      %v12363 = vadd.f32 %v12183, %v12362
      %v12364 = vpop.f32.mrb[0].mxu0
      %12365 = vmatprep.mubr.bf16.mxu0 0
      %12366 = vmatmul.mubr.bf16.gmra.mrb[0].mxu0 %v12231
      %v12367 = vpop.f32.mrb[0].mxu0
      %v12368 = vadd.f32 %v12183, %v12367
      %v12369 = vpop.f32.mrb[0].mxu0
      %v12370 = vpop.f32.mrb[0].mxu0
      %v12371 = vadd.f32 %v12183, %v12370
      %v12372 = vpop.f32.mrb[0].mxu0
      %12373 = vmatprep.mubr.bf16.mxu0 0
      %12374 = vmatmul.mubr.bf16.gmra.mrb[0].mxu0 %v12234
      %v12375 = vpop.f32.mrb[0].mxu0
      %v12376 = vadd.f32 %v12183, %v12375
      %v12377 = vpop.f32.mrb[0].mxu0
      %v12378 = vpop.f32.mrb[0].mxu0
      %v12379 = vadd.f32 %v12183, %v12378
      %v12380 = vpop.f32.mrb[0].mxu0
      %12381 = vmatprep.mubr.bf16.mxu0 0
      %12382 = vmatmul.mubr.bf16.gmra.mrb[0].mxu0 %v12237
      %v12383 = vpop.f32.mrb[0].mxu0
      %v12384 = vadd.f32 %v12183, %v12383
      %v12385 = vpop.f32.mrb[0].mxu0
      %v12386 = vpop.f32.mrb[0].mxu0
      %v12387 = vadd.f32 %v12183, %v12386
      %v12388 = vpop.f32.mrb[0].mxu0
      %12389 = vmatprep.mubr.bf16.mxu0 0
      %12390 = vmatmul.mubr.bf16.gmra.mrb[0].mxu0 %v12240
      %v12391 = vpop.f32.mrb[0].mxu0
      %v12392 = vadd.f32 %v12183, %v12391
      %v12393 = vpop.f32.mrb[0].mxu0
      %v12394 = vpop.f32.mrb[0].mxu0
      %v12395 = vadd.f32 %v12183, %v12394
      %v12396 = vpop.f32.mrb[0].mxu0
      %12397 = vmatprep.mubr.bf16.mxu0 0
      %12398 = vmatmul.mubr.bf16.gmra.mrb[0].mxu0 %v12243
      %v12399 = vpop.f32.mrb[0].mxu0
      %v12400 = vadd.f32 %v12183, %v12399
      %v12401 = vpop.f32.mrb[0].mxu0
      %v12402 = vpop.f32.mrb[0].mxu0
      %v12403 = vadd.f32 %v12183, %v12402
      %v12404 = vpop.f32.mrb[0].mxu0
      %12405 = vdwg.mxu0
      %v12406 = vmax.f32 %v12280, 0.0
      %v12407 = vmax.f32 %v12283, 0.0
      %v12408 = vmax.f32 %v12288, 0.0
      %v12409 = vmax.f32 %v12291, 0.0
      %v12410 = vmax.f32 %v12296, 0.0
      %v12411 = vmax.f32 %v12299, 0.0
      %v12412 = vmax.f32 %v12304, 0.0
      %v12413 = vmax.f32 %v12307, 0.0
      %v12414 = vmax.f32 %v12312, 0.0
      %v12415 = vmax.f32 %v12315, 0.0
      %v12416 = vmax.f32 %v12320, 0.0
      %v12417 = vmax.f32 %v12323, 0.0
      %v12418 = vmax.f32 %v12328, 0.0
      %v12419 = vmax.f32 %v12331, 0.0
      %v12420 = vmax.f32 %v12336, 0.0
      %v12421 = vmax.f32 %v12339, 0.0
      %v12422 = vmax.f32 %v12344, 0.0
      %v12423 = vmax.f32 %v12347, 0.0
      %v12424 = vmax.f32 %v12352, 0.0
      %v12425 = vmax.f32 %v12355, 0.0
      %v12426 = vmax.f32 %v12360, 0.0
      %v12427 = vmax.f32 %v12363, 0.0
      %v12428 = vmax.f32 %v12368, 0.0
      %v12429 = vmax.f32 %v12371, 0.0
      %v12430 = vmax.f32 %v12376, 0.0
      %v12431 = vmax.f32 %v12379, 0.0
      %v12432 = vmax.f32 %v12384, 0.0
      %v12433 = vmax.f32 %v12387, 0.0
      %v12434 = vmax.f32 %v12392, 0.0
      %v12435 = vmax.f32 %v12395, 0.0
      %v12436 = vmax.f32 %v12400, 0.0
      %v12437 = vmax.f32 %v12403, 0.0
      %s12438 = scalar_lea.vmem %s278, 768
      %12439 = vst.msk [vmem:[%s12438] sm:$0xff] %vm1204, %v12406
      %12440 = vst.msk [vmem:[%s12438 + $0x8] sm:$0xff] %vm1204, %v12407
      %12441 = vst.msk [vmem:[%s12438 + $0x10] sm:$0xff] %vm1204, %v12408
      %12442 = vst.msk [vmem:[%s12438 + $0x18] sm:$0xff] %vm1204, %v12409
      %12443 = vst.msk [vmem:[%s12438 + $0x20] sm:$0xff] %vm1204, %v12410
      %12444 = vst.msk [vmem:[%s12438 + $0x28] sm:$0xff] %vm1204, %v12411
      %12445 = vst.msk [vmem:[%s12438 + $0x30] sm:$0xff] %vm1204, %v12412
      %12446 = vst.msk [vmem:[%s12438 + $0x38] sm:$0xff] %vm1204, %v12413
      %12447 = vst.msk [vmem:[%s12438 + $0x40] sm:$0xff] %vm1204, %v12414
      %12448 = vst.msk [vmem:[%s12438 + $0x48] sm:$0xff] %vm1204, %v12415
      %12449 = vst.msk [vmem:[%s12438 + $0x50] sm:$0xff] %vm1204, %v12416
      %12450 = vst.msk [vmem:[%s12438 + $0x58] sm:$0xff] %vm1204, %v12417
      %12451 = vst.msk [vmem:[%s12438 + $0x60] sm:$0xff] %vm1204, %v12418
      %12452 = vst.msk [vmem:[%s12438 + $0x68] sm:$0xff] %vm1204, %v12419
      %12453 = vst.msk [vmem:[%s12438 + $0x70] sm:$0xff] %vm1204, %v12420
      %12454 = vst.msk [vmem:[%s12438 + $0x78] sm:$0xff] %vm1204, %v12421
      %12455 = vst.msk [vmem:[%s12438 + $0x80] sm:$0xff] %vm1204, %v12422
      %12456 = vst.msk [vmem:[%s12438 + $0x88] sm:$0xff] %vm1204, %v12423
      %12457 = vst.msk [vmem:[%s12438 + $0x90] sm:$0xff] %vm1204, %v12424
      %12458 = vst.msk [vmem:[%s12438 + $0x98] sm:$0xff] %vm1204, %v12425
      %12459 = vst.msk [vmem:[%s12438 + $0xa0] sm:$0xff] %vm1204, %v12426
      %12460 = vst.msk [vmem:[%s12438 + $0xa8] sm:$0xff] %vm1204, %v12427
      %12461 = vst.msk [vmem:[%s12438 + $0xb0] sm:$0xff] %vm1204, %v12428
      %12462 = vst.msk [vmem:[%s12438 + $0xb8] sm:$0xff] %vm1204, %v12429
      %12463 = vst.msk [vmem:[%s12438 + $0xc0] sm:$0xff] %vm1204, %v12430
      %12464 = vst.msk [vmem:[%s12438 + $0xc8] sm:$0xff] %vm1204, %v12431
      %12465 = vst.msk [vmem:[%s12438 + $0xd0] sm:$0xff] %vm1204, %v12432
      %12466 = vst.msk [vmem:[%s12438 + $0xd8] sm:$0xff] %vm1204, %v12433
      %12467 = vst.msk [vmem:[%s12438 + $0xe0] sm:$0xff] %vm1204, %v12434
      %12468 = vst.msk [vmem:[%s12438 + $0xe8] sm:$0xff] %vm1204, %v12435
      %12469 = vst.msk [vmem:[%s12438 + $0xf0] sm:$0xff] %vm1204, %v12436
      %12470 = vst.msk [vmem:[%s12438 + $0xf8] sm:$0xff] %vm1204, %v12437
      %p12471 = scmp.lt.s32.totalorder %s18, 1
      %s12472 = scalar_select %p12471, %s18, 1
      %s12473 = smul.addr %s12472, 128
      %s12474 = smul.addr %s12473, 8
      %s12475 = scalar_lea.vmem %s7, %s12474
      // Predicated region
      $region53: #{decoder_block_forward.1} parent=47 // pred_check
        %p12476 = pneg %p188
      $region54: #{decoder_block_forward.1} parent=47 // pred_check_branch
        %12478 = sbr.rel (%p12476) target = $region56
      $region55: #{decoder_block_forward.1} parent=47 // pred_region
        _
      $region56: #{decoder_block_forward.1} parent=47 // pred_fallthru
        _
    $region48: #{decoder_block_forward.1} parent=5 // pred_fallthru
      _
    %p12479 = scmp.le.s32.totalorder 2, %s13
    // Predicated region
    $region57: #{decoder_block_forward.1} parent=5 // pred_check
      %p12480 = pneg %p12479
    $region58: #{decoder_block_forward.1} parent=5 // pred_check_branch
      %12482 = sbr.rel (%p12480) target = $region60
    $region59: #{decoder_block_forward.1} parent=5 // pred_region
      %s12483 = ssub.s32 %s13, 2
      // Predicated region
      $region61: #{decoder_block_forward.1} parent=59 // pred_check
        %p12484 = pneg %p194
      $region62: #{decoder_block_forward.1} parent=59 // pred_check_branch
        %12486 = sbr.rel (%p12484) target = $region64
      $region63: #{decoder_block_forward.1} parent=59 // pred_region
        %p12487 = scmp.lt.s32.totalorder %s19, 1
        %s12488 = scalar_select %p12487, %s19, 1
        %s12489 = smul.addr %s12488, 128
        %s12490 = smul.addr %s12489, 8
        %s12491 = scalar_lea.vmem %s7, %s12490
      $region64: #{decoder_block_forward.1} parent=59 // pred_fallthru
        _
    $region60: #{decoder_block_forward.1} parent=5 // pred_fallthru
      _
  $region6: #{decoder_block_forward.1} parent=0 // loop_footer
    %s17 = sadd.s32 1, %s13
  $region7: #{decoder_block_forward.1} parent=0 // loop_footer_branch
    %12 = sbr.rel target = $region3
  $region8: #{decoder_block_forward.1} parent=0 // loop_exit
    _

</llo_original>
